<compile_context>
chip_gen: v7x
topology: tpu7x:2x2x1
jax: 0.10.0
libtpu: 0.0.40
codegen_flags: <defaults>
</compile_context>

<pallas_src>
import functools

import jax
import jax.numpy as jnp
from jax.experimental import pallas as pl
from jax.experimental.pallas import tpu as pltpu


def _round_up(x, m):
    return ((x + m - 1) // m) * m


def _lstm_kernel(num_layers, S, Bblk, Hpad, *refs):
    """refs = x, (w_ih, w_hh, bias)*num_layers, w_fc, b_fc, out, seq_scratch, gx_scratch."""
    x_ref = refs[0]
    idx = 1
    layer_refs = []
    for _ in range(num_layers):
        layer_refs.append((refs[idx], refs[idx + 1], refs[idx + 2]))
        idx += 3
    w_fc_ref = refs[idx]
    b_fc_ref = refs[idx + 1]
    out_ref = refs[idx + 2]
    seq_ref = refs[idx + 3]   # (S*Bblk, Hpad)   compute dtype: prev layer's output sequence
    gx_ref = refs[idx + 4]    # (S*Bblk, 4*Hpad) f32: hoisted input projection (+bias), all t

    cdt = seq_ref.dtype       # matmul-input (compute) dtype, e.g. bfloat16
    h = None                  # final hidden state (f32) of the current layer

    for layer in range(num_layers):
        w_ih_ref, w_hh_ref, bias_ref = layer_refs[layer]
        last_layer = layer == num_layers - 1
        inp_ref = x_ref if layer == 0 else seq_ref

        # ---- Hoisted input projection (+ folded bias) for the whole sequence,
        # one 128-lane gate block at a time (keeps the live f32 result <= 16
        # vregs; same MXU weight-load count as one wide matmul).
        for k in range(4):
            gx_ref[:, k * Hpad:(k + 1) * Hpad] = (
                jnp.dot(inp_ref[...], w_ih_ref[:, k * Hpad:(k + 1) * Hpad],
                        preferred_element_type=jnp.float32)
                + bias_ref[:, k * Hpad:(k + 1) * Hpad])

        # ---- Serial recurrence, fully unrolled (S is small & static).
        # Recurrent weights are re-streamed from VMEM per 128x128 gate slice at
        # the use site (never pinned in vregs across the unrolled loop).
        c = None
        for t in range(S):
            h_c = None if t == 0 else h.astype(cdt)   # h0 == 0 -> no dot at t == 0
            pre = []
            for k in range(4):   # PyTorch gate order: i, f, g, o (lane-aligned blocks)
                g_x = gx_ref[pl.ds(t * Bblk, Bblk), k * Hpad:(k + 1) * Hpad]
                if t == 0:
                    pre.append(g_x)
                else:
                    pre.append(
                        jnp.dot(h_c, w_hh_ref[:, k * Hpad:(k + 1) * Hpad],
                                preferred_element_type=jnp.float32) + g_x)
            i_g = jax.nn.sigmoid(pre[0])
            f_g = jax.nn.sigmoid(pre[1])
            g_g = jnp.tanh(pre[2])
            o_g = jax.nn.sigmoid(pre[3])
            c = i_g * g_g if t == 0 else f_g * c + i_g * g_g
            h = o_g * jnp.tanh(c)
            # Padded gate columns stay exactly 0 (zero-padded weights + bias),
            # so padded h/c columns stay 0 for the next layer's projection.
            if not last_layer:
                seq_ref[pl.ds(t * Bblk, Bblk), :] = h.astype(cdt)

    # fc(out[:, -1, :]) == fc(final hidden state of the last layer); tiny f32
    # matmul, lane-dense 128-wide output (sliced to output_size in the wrapper).
    out = jnp.dot(h, w_fc_ref[...], preferred_element_type=jnp.float32) + b_fc_ref[...]
    out_ref[...] = out.astype(out_ref.dtype)


def pack_lstm_params(params, input_size, hidden_size, num_layers,
                     compute_dtype=jnp.bfloat16):
    """One-time weight packing (transpose, per-gate 128-lane padding, bias fusion).

    Cached by the caller so the per-call path only runs the kernel.
    """
    H = hidden_size
    Hpad = _round_up(H, 128)
    G = 4 * Hpad
    packed = []
    for l in range(num_layers):
        w_ih, w_hh, b_ih, b_hh = params[f"layer{l}"]
        in_l = input_size if l == 0 else H
        in_pad = input_size if l == 0 else Hpad   # deeper layers consume padded h
        w_ih_t = w_ih.T                            # (in_l, 4H)
        w_hh_t = w_hh.T                            # (H,    4H)
        bias = (b_ih + b_hh).astype(jnp.float32)   # (4H,)
        w_ih_p = jnp.zeros((in_pad, G), compute_dtype)
        w_hh_p = jnp.zeros((Hpad, G), compute_dtype)
        bias_p = jnp.zeros((1, G), jnp.float32)
        for k in range(4):   # gate order i, f, g, o
            w_ih_p = w_ih_p.at[:in_l, k * Hpad:k * Hpad + H].set(
                w_ih_t[:, k * H:(k + 1) * H].astype(compute_dtype))
            w_hh_p = w_hh_p.at[:H, k * Hpad:k * Hpad + H].set(
                w_hh_t[:, k * H:(k + 1) * H].astype(compute_dtype))
            bias_p = bias_p.at[0, k * Hpad:k * Hpad + H].set(bias[k * H:(k + 1) * H])
        packed += [w_ih_p, w_hh_p, bias_p]

    w_fc, b_fc = params["fc"]
    output_size = w_fc.shape[0]
    OPAD = _round_up(output_size, 128)             # lane-dense output slab
    w_fc_p = jnp.zeros((Hpad, OPAD), jnp.float32).at[:H, :output_size].set(
        w_fc.T.astype(jnp.float32))
    b_fc_p = jnp.zeros((1, OPAD), jnp.float32).at[0, :output_size].set(
        b_fc.astype(jnp.float32))
    packed += [w_fc_p, b_fc_p]
    return packed, output_size


def lstm_model_forward(x, packed, hidden_size, num_layers, output_size,
                       compute_dtype=jnp.bfloat16):
    """x: (batch, seq, input_size) float32, like the PyTorch module (batch_first)."""
    B, S, input_size = x.shape
    Hpad = _round_up(hidden_size, 128)
    G = 4 * Hpad
    OPAD = packed[-2].shape[1]

    # Batch block: >= bf16 sublane tile so every per-timestep slice is tile
    # aligned, and extra rows ride the MXU for free.  Multiple blocks become a
    # "parallel" grid axis (sharded across TensorCores on v7x).
    B_BLOCK = 16
    Bpad = _round_up(B, B_BLOCK)
    nB = Bpad // B_BLOCK

    # (B,S,I) -> (S,B,I) -> pad batch -> (nB, S*B_BLOCK, I), time-major within each block.
    xt = jnp.transpose(x, (1, 0, 2)).astype(compute_dtype)
    xt = jnp.pad(xt, ((0, 0), (0, Bpad - B), (0, 0)))
    xt = jnp.transpose(xt.reshape(S, nB, B_BLOCK, input_size), (1, 0, 2, 3))
    xt = xt.reshape(nB, S * B_BLOCK, input_size)

    kernel = functools.partial(_lstm_kernel, num_layers, S, B_BLOCK, Hpad)

    in_specs = [pl.BlockSpec((None, S * B_BLOCK, input_size), lambda b: (b, 0, 0))]
    for w in packed:
        in_specs.append(pl.BlockSpec(w.shape, lambda b: (0, 0)))   # weights: one shared block

    out_pad = pl.pallas_call(
        kernel,
        out_shape=jax.ShapeDtypeStruct((nB, B_BLOCK, OPAD), jnp.float32),
        grid=(nB,),
        in_specs=in_specs,
        out_specs=pl.BlockSpec((None, B_BLOCK, OPAD), lambda b: (b, 0, 0)),
        scratch_shapes=[
            pltpu.VMEM((S * B_BLOCK, Hpad), compute_dtype),   # inter-layer output sequence
            pltpu.VMEM((S * B_BLOCK, G), jnp.float32),        # hoisted gates_x (+bias), all t
        ],
        compiler_params=pltpu.CompilerParams(
            dimension_semantics=("parallel",)),
    )(xt, *packed)

    return out_pad.reshape(Bpad, OPAD)[:B, :output_size]


def _reference_forward(x, params, hidden_size, num_layers):
    """Pure-JAX f32 reference matching nn.LSTM(batch_first=True) + Linear."""
    B, S, _ = x.shape
    seq = x.astype(jnp.float32)
    H = hidden_size
    for l in range(num_layers):
        w_ih, w_hh, b_ih, b_hh = params[f"layer{l}"]
        h = jnp.zeros((B, H), jnp.float32)
        c = jnp.zeros((B, H), jnp.float32)
        outs = []
        for t in range(S):
            gates = seq[:, t, :] @ w_ih.T + h @ w_hh.T + b_ih + b_hh
            i_g = jax.nn.sigmoid(gates[:, 0:H])
            f_g = jax.nn.sigmoid(gates[:, H:2 * H])
            g_g = jnp.tanh(gates[:, 2 * H:3 * H])
            o_g = jax.nn.sigmoid(gates[:, 3 * H:4 * H])
            c = f_g * c + i_g * g_g
            h = o_g * jnp.tanh(c)
            outs.append(h)
        seq = jnp.stack(outs, axis=1)
    w_fc, b_fc = params["fc"]
    return seq[:, -1, :] @ w_fc.T + b_fc


def _init_params(key, input_size, hidden_size, num_layers, output_size):
    params = {}
    k = 1.0 / jnp.sqrt(jnp.float32(hidden_size))
    for l in range(num_layers):
        in_l = input_size if l == 0 else hidden_size
        key, k1, k2, k3, k4 = jax.random.split(key, 5)
        params[f"layer{l}"] = (
            jax.random.uniform(k1, (4 * hidden_size, in_l), jnp.float32, -k, k),
            jax.random.uniform(k2, (4 * hidden_size, hidden_size), jnp.float32, -k, k),
            jax.random.uniform(k3, (4 * hidden_size,), jnp.float32, -k, k),
            jax.random.uniform(k4, (4 * hidden_size,), jnp.float32, -k, k),
        )
    key, k1, k2 = jax.random.split(key, 3)
    params["fc"] = (
        jax.random.uniform(k1, (output_size, hidden_size), jnp.float32, -k, k),
        jax.random.uniform(k2, (output_size,), jnp.float32, -k, k),
    )
    return params


if __name__ == "__main__":
    batch, seq_len = 2, 8
    input_size, hidden_size, num_layers, output_size = 4, 32, 2, 1

    root = jax.random.PRNGKey(0)
    kx, kp = jax.random.split(root)
    x = jax.random.normal(kx, (batch, seq_len, input_size), jnp.float32)
    params = _init_params(kp, input_size, hidden_size, num_layers, output_size)

    # Pack / pad weights once (cached); the jitted forward only does cheap x
    # layout prep + the Pallas kernel.
    packed, out_size = pack_lstm_params(params, input_size, hidden_size, num_layers)
    packed = jax.block_until_ready(packed)

    fwd = jax.jit(functools.partial(
        lstm_model_forward, hidden_size=hidden_size, num_layers=num_layers,
        output_size=out_size))
    out = jax.block_until_ready(fwd(x, packed))

    ref = _reference_forward(x, params, hidden_size, num_layers)
    assert out.shape == (batch, output_size)
    # bf16 matmul inputs (fp32 accumulation / fp32 gate math) => loosened tolerance.
    assert jnp.allclose(out, ref, rtol=3e-2, atol=2e-2), (out, ref)

    print("KERNEL_OK")
</pallas_src>

<mosaic_0001>
module attributes {stable_mosaic.version = 11 : i64} {
  func.func @_lstm_kernel(%arg0: i32, %arg1: memref<1x128x4xbf16, #tpu.memory_space<vmem>>, %arg2: memref<4x512xbf16, #tpu.memory_space<vmem>>, %arg3: memref<128x512xbf16, #tpu.memory_space<vmem>>, %arg4: memref<1x512xf32, #tpu.memory_space<vmem>>, %arg5: memref<128x512xbf16, #tpu.memory_space<vmem>>, %arg6: memref<128x512xbf16, #tpu.memory_space<vmem>>, %arg7: memref<1x512xf32, #tpu.memory_space<vmem>>, %arg8: memref<128x128xf32, #tpu.memory_space<vmem>>, %arg9: memref<1x128xf32, #tpu.memory_space<vmem>>, %arg10: memref<1x16x128xf32, #tpu.memory_space<vmem>>, %arg11: memref<128x128xbf16, #tpu.memory_space<vmem>>, %arg12: memref<128x512xf32, #tpu.memory_space<vmem>>) attributes {dimension_semantics = [#tpu.dimension_semantics<parallel>], iteration_bounds = array<i64: 1>, scalar_prefetch = 0 : i64, scratch_operands = 2 : i64, tpu.core_type = #tpu.core_type<tc>, window_params = [{transform_indices = @transform_0, window_bounds = array<i64: 1, 128, 4>}, {pipeline_mode = #tpu.pipeline_mode<synchronous>, transform_indices = @transform_1, window_bounds = array<i64: 4, 512>}, {pipeline_mode = #tpu.pipeline_mode<synchronous>, transform_indices = @transform_2, window_bounds = array<i64: 128, 512>}, {pipeline_mode = #tpu.pipeline_mode<synchronous>, transform_indices = @transform_3, window_bounds = array<i64: 1, 512>}, {pipeline_mode = #tpu.pipeline_mode<synchronous>, transform_indices = @transform_4, window_bounds = array<i64: 128, 512>}, {pipeline_mode = #tpu.pipeline_mode<synchronous>, transform_indices = @transform_5, window_bounds = array<i64: 128, 512>}, {pipeline_mode = #tpu.pipeline_mode<synchronous>, transform_indices = @transform_6, window_bounds = array<i64: 1, 512>}, {pipeline_mode = #tpu.pipeline_mode<synchronous>, transform_indices = @transform_7, window_bounds = array<i64: 128, 128>}, {pipeline_mode = #tpu.pipeline_mode<synchronous>, transform_indices = @transform_8, window_bounds = array<i64: 1, 128>}, {transform_indices = @transform_9, window_bounds = array<i64: 1, 16, 128>}]} {
    %c0 = arith.constant 0 : index
    %c0_0 = arith.constant 0 : index
    %c0_1 = arith.constant 0 : index
    %0 = vector.load %arg1[%c0, %c0_0, %c0_1] : memref<1x128x4xbf16, #tpu.memory_space<vmem>>, vector<1x128x4xbf16>
    %1 = vector.shape_cast %0 : vector<1x128x4xbf16> to vector<128x4xbf16>
    %c0_2 = arith.constant 0 : index
    %c0_3 = arith.constant 0 : index
    %2 = vector.load %arg2[%c0_2, %c0_3] : memref<4x512xbf16, #tpu.memory_space<vmem>>, vector<4x128xbf16>
    %cst = arith.constant dense<0.000000e+00> : vector<128x128xf32>
    %3 = tpu.matmul %1, %2, %cst {dimension_numbers = #tpu.dot_dimension_numbers<[1], [0], [0], [1], [0, 0, 1, 1], [], []>} : vector<128x4xbf16>, vector<4x128xbf16>, vector<128x128xf32> -> vector<128x128xf32>
    %c0_4 = arith.constant 0 : index
    %c0_5 = arith.constant 0 : index
    %4 = vector.load %arg4[%c0_4, %c0_5] : memref<1x512xf32, #tpu.memory_space<vmem>>, vector<1x128xf32>
    %5 = vector.broadcast %4 : vector<1x128xf32> to vector<128x128xf32>
    %6 = arith.addf %3, %5 : vector<128x128xf32>
    %c0_6 = arith.constant 0 : index
    %c0_7 = arith.constant 0 : index
    %7 = vector.load %arg12[%c0_6, %c0_7] : memref<128x512xf32, #tpu.memory_space<vmem>>, vector<128x128xf32>
    tpu.vector_store %arg12[%c0_6, %c0_7], %6 {strides = array<i32>} : memref<128x512xf32, #tpu.memory_space<vmem>>, vector<128x128xf32>,
    %c0_8 = arith.constant 0 : index
    %c0_9 = arith.constant 0 : index
    %c0_10 = arith.constant 0 : index
    %8 = vector.load %arg1[%c0_8, %c0_9, %c0_10] : memref<1x128x4xbf16, #tpu.memory_space<vmem>>, vector<1x128x4xbf16>
    %9 = vector.shape_cast %8 : vector<1x128x4xbf16> to vector<128x4xbf16>
    %c0_11 = arith.constant 0 : index
    %c128 = arith.constant 128 : index
    %10 = vector.load %arg2[%c0_11, %c128] : memref<4x512xbf16, #tpu.memory_space<vmem>>, vector<4x128xbf16>
    %cst_12 = arith.constant dense<0.000000e+00> : vector<128x128xf32>
    %11 = tpu.matmul %9, %10, %cst_12 {dimension_numbers = #tpu.dot_dimension_numbers<[1], [0], [0], [1], [0, 0, 1, 1], [], []>} : vector<128x4xbf16>, vector<4x128xbf16>, vector<128x128xf32> -> vector<128x128xf32>
    %c0_13 = arith.constant 0 : index
    %c128_14 = arith.constant 128 : index
    %12 = vector.load %arg4[%c0_13, %c128_14] : memref<1x512xf32, #tpu.memory_space<vmem>>, vector<1x128xf32>
    %13 = vector.broadcast %12 : vector<1x128xf32> to vector<128x128xf32>
    %14 = arith.addf %11, %13 : vector<128x128xf32>
    %c0_15 = arith.constant 0 : index
    %c128_16 = arith.constant 128 : index
    %15 = vector.load %arg12[%c0_15, %c128_16] : memref<128x512xf32, #tpu.memory_space<vmem>>, vector<128x128xf32>
    tpu.vector_store %arg12[%c0_15, %c128_16], %14 {strides = array<i32>} : memref<128x512xf32, #tpu.memory_space<vmem>>, vector<128x128xf32>,
    %c0_17 = arith.constant 0 : index
    %c0_18 = arith.constant 0 : index
    %c0_19 = arith.constant 0 : index
    %16 = vector.load %arg1[%c0_17, %c0_18, %c0_19] : memref<1x128x4xbf16, #tpu.memory_space<vmem>>, vector<1x128x4xbf16>
    %17 = vector.shape_cast %16 : vector<1x128x4xbf16> to vector<128x4xbf16>
    %c0_20 = arith.constant 0 : index
    %c256 = arith.constant 256 : index
    %18 = vector.load %arg2[%c0_20, %c256] : memref<4x512xbf16, #tpu.memory_space<vmem>>, vector<4x128xbf16>
    %cst_21 = arith.constant dense<0.000000e+00> : vector<128x128xf32>
    %19 = tpu.matmul %17, %18, %cst_21 {dimension_numbers = #tpu.dot_dimension_numbers<[1], [0], [0], [1], [0, 0, 1, 1], [], []>} : vector<128x4xbf16>, vector<4x128xbf16>, vector<128x128xf32> -> vector<128x128xf32>
    %c0_22 = arith.constant 0 : index
    %c256_23 = arith.constant 256 : index
    %20 = vector.load %arg4[%c0_22, %c256_23] : memref<1x512xf32, #tpu.memory_space<vmem>>, vector<1x128xf32>
    %21 = vector.broadcast %20 : vector<1x128xf32> to vector<128x128xf32>
    %22 = arith.addf %19, %21 : vector<128x128xf32>
    %c0_24 = arith.constant 0 : index
    %c256_25 = arith.constant 256 : index
    %23 = vector.load %arg12[%c0_24, %c256_25] : memref<128x512xf32, #tpu.memory_space<vmem>>, vector<128x128xf32>
    tpu.vector_store %arg12[%c0_24, %c256_25], %22 {strides = array<i32>} : memref<128x512xf32, #tpu.memory_space<vmem>>, vector<128x128xf32>,
    %c0_26 = arith.constant 0 : index
    %c0_27 = arith.constant 0 : index
    %c0_28 = arith.constant 0 : index
    %24 = vector.load %arg1[%c0_26, %c0_27, %c0_28] : memref<1x128x4xbf16, #tpu.memory_space<vmem>>, vector<1x128x4xbf16>
    %25 = vector.shape_cast %24 : vector<1x128x4xbf16> to vector<128x4xbf16>
    %c0_29 = arith.constant 0 : index
    %c384 = arith.constant 384 : index
    %26 = vector.load %arg2[%c0_29, %c384] : memref<4x512xbf16, #tpu.memory_space<vmem>>, vector<4x128xbf16>
    %cst_30 = arith.constant dense<0.000000e+00> : vector<128x128xf32>
    %27 = tpu.matmul %25, %26, %cst_30 {dimension_numbers = #tpu.dot_dimension_numbers<[1], [0], [0], [1], [0, 0, 1, 1], [], []>} : vector<128x4xbf16>, vector<4x128xbf16>, vector<128x128xf32> -> vector<128x128xf32>
    %c0_31 = arith.constant 0 : index
    %c384_32 = arith.constant 384 : index
    %28 = vector.load %arg4[%c0_31, %c384_32] : memref<1x512xf32, #tpu.memory_space<vmem>>, vector<1x128xf32>
    %29 = vector.broadcast %28 : vector<1x128xf32> to vector<128x128xf32>
    %30 = arith.addf %27, %29 : vector<128x128xf32>
    %c0_33 = arith.constant 0 : index
    %c384_34 = arith.constant 384 : index
    %31 = vector.load %arg12[%c0_33, %c384_34] : memref<128x512xf32, #tpu.memory_space<vmem>>, vector<128x128xf32>
    tpu.vector_store %arg12[%c0_33, %c384_34], %30 {strides = array<i32>} : memref<128x512xf32, #tpu.memory_space<vmem>>, vector<128x128xf32>,
    %c0_35 = arith.constant 0 : index
    %c0_36 = arith.constant 0 : index
    %32 = vector.load %arg12[%c0_35, %c0_36] : memref<128x512xf32, #tpu.memory_space<vmem>>, vector<16x128xf32>
    %c0_37 = arith.constant 0 : index
    %c256_38 = arith.constant 256 : index
    %33 = vector.load %arg12[%c0_37, %c256_38] : memref<128x512xf32, #tpu.memory_space<vmem>>, vector<16x128xf32>
    %c0_39 = arith.constant 0 : index
    %c384_40 = arith.constant 384 : index
    %34 = vector.load %arg12[%c0_39, %c384_40] : memref<128x512xf32, #tpu.memory_space<vmem>>, vector<16x128xf32>
    %35 = arith.negf %32 : vector<16x128xf32>
    %36 = math.exp %35 : vector<16x128xf32>
    %cst_41 = arith.constant 1.000000e+00 : f32
    %37 = vector.broadcast %cst_41 : f32 to vector<16x128xf32>
    %38 = arith.addf %37, %36 : vector<16x128xf32>
    %39 = arith.divf %37, %38 : vector<16x128xf32>
    %40 = math.tanh %33 : vector<16x128xf32>
    %41 = arith.negf %34 : vector<16x128xf32>
    %42 = math.exp %41 : vector<16x128xf32>
    %cst_42 = arith.constant 1.000000e+00 : f32
    %43 = vector.broadcast %cst_42 : f32 to vector<16x128xf32>
    %44 = arith.addf %43, %42 : vector<16x128xf32>
    %45 = arith.divf %43, %44 : vector<16x128xf32>
    %46 = arith.mulf %39, %40 : vector<16x128xf32>
    %47 = math.tanh %46 : vector<16x128xf32>
    %48 = arith.mulf %45, %47 : vector<16x128xf32>
    %49 = arith.truncf %48 : vector<16x128xf32> to vector<16x128xbf16>
    %c0_43 = arith.constant 0 : index
    %c0_44 = arith.constant 0 : index
    %50 = vector.load %arg11[%c0_43, %c0_44] : memref<128x128xbf16, #tpu.memory_space<vmem>>, vector<16x128xbf16>
    tpu.vector_store %arg11[%c0_43, %c0_44], %49 {strides = array<i32>} : memref<128x128xbf16, #tpu.memory_space<vmem>>, vector<16x128xbf16>,
    %51 = arith.truncf %48 : vector<16x128xf32> to vector<16x128xbf16>
    %c16 = arith.constant 16 : index
    %c0_45 = arith.constant 0 : index
    %52 = vector.load %arg12[%c16, %c0_45] : memref<128x512xf32, #tpu.memory_space<vmem>>, vector<16x128xf32>
    %c0_46 = arith.constant 0 : index
    %c0_47 = arith.constant 0 : index
    %53 = vector.load %arg3[%c0_46, %c0_47] : memref<128x512xbf16, #tpu.memory_space<vmem>>, vector<128x128xbf16>
    %cst_48 = arith.constant dense<0.000000e+00> : vector<16x128xf32>
    %54 = tpu.matmul %51, %53, %cst_48 {dimension_numbers = #tpu.dot_dimension_numbers<[1], [0], [0], [1], [0, 0, 1, 1], [], []>} : vector<16x128xbf16>, vector<128x128xbf16>, vector<16x128xf32> -> vector<16x128xf32>
    %55 = arith.addf %54, %52 : vector<16x128xf32>
    %c16_49 = arith.constant 16 : index
    %c128_50 = arith.constant 128 : index
    %56 = vector.load %arg12[%c16_49, %c128_50] : memref<128x512xf32, #tpu.memory_space<vmem>>, vector<16x128xf32>
    %c0_51 = arith.constant 0 : index
    %c128_52 = arith.constant 128 : index
    %57 = vector.load %arg3[%c0_51, %c128_52] : memref<128x512xbf16, #tpu.memory_space<vmem>>, vector<128x128xbf16>
    %cst_53 = arith.constant dense<0.000000e+00> : vector<16x128xf32>
    %58 = tpu.matmul %51, %57, %cst_53 {dimension_numbers = #tpu.dot_dimension_numbers<[1], [0], [0], [1], [0, 0, 1, 1], [], []>} : vector<16x128xbf16>, vector<128x128xbf16>, vector<16x128xf32> -> vector<16x128xf32>
    %59 = arith.addf %58, %56 : vector<16x128xf32>
    %c16_54 = arith.constant 16 : index
    %c256_55 = arith.constant 256 : index
    %60 = vector.load %arg12[%c16_54, %c256_55] : memref<128x512xf32, #tpu.memory_space<vmem>>, vector<16x128xf32>
    %c0_56 = arith.constant 0 : index
    %c256_57 = arith.constant 256 : index
    %61 = vector.load %arg3[%c0_56, %c256_57] : memref<128x512xbf16, #tpu.memory_space<vmem>>, vector<128x128xbf16>
    %cst_58 = arith.constant dense<0.000000e+00> : vector<16x128xf32>
    %62 = tpu.matmul %51, %61, %cst_58 {dimension_numbers = #tpu.dot_dimension_numbers<[1], [0], [0], [1], [0, 0, 1, 1], [], []>} : vector<16x128xbf16>, vector<128x128xbf16>, vector<16x128xf32> -> vector<16x128xf32>
    %63 = arith.addf %62, %60 : vector<16x128xf32>
    %c16_59 = arith.constant 16 : index
    %c384_60 = arith.constant 384 : index
    %64 = vector.load %arg12[%c16_59, %c384_60] : memref<128x512xf32, #tpu.memory_space<vmem>>, vector<16x128xf32>
    %c0_61 = arith.constant 0 : index
    %c384_62 = arith.constant 384 : index
    %65 = vector.load %arg3[%c0_61, %c384_62] : memref<128x512xbf16, #tpu.memory_space<vmem>>, vector<128x128xbf16>
    %cst_63 = arith.constant dense<0.000000e+00> : vector<16x128xf32>
    %66 = tpu.matmul %51, %65, %cst_63 {dimension_numbers = #tpu.dot_dimension_numbers<[1], [0], [0], [1], [0, 0, 1, 1], [], []>} : vector<16x128xbf16>, vector<128x128xbf16>, vector<16x128xf32> -> vector<16x128xf32>
    %67 = arith.addf %66, %64 : vector<16x128xf32>
    %68 = arith.negf %55 : vector<16x128xf32>
    %69 = math.exp %68 : vector<16x128xf32>
    %cst_64 = arith.constant 1.000000e+00 : f32
    %70 = vector.broadcast %cst_64 : f32 to vector<16x128xf32>
    %71 = arith.addf %70, %69 : vector<16x128xf32>
    %72 = arith.divf %70, %71 : vector<16x128xf32>
    %73 = arith.negf %59 : vector<16x128xf32>
    %74 = math.exp %73 : vector<16x128xf32>
    %cst_65 = arith.constant 1.000000e+00 : f32
    %75 = vector.broadcast %cst_65 : f32 to vector<16x128xf32>
    %76 = arith.addf %75, %74 : vector<16x128xf32>
    %77 = arith.divf %75, %76 : vector<16x128xf32>
    %78 = math.tanh %63 : vector<16x128xf32>
    %79 = arith.negf %67 : vector<16x128xf32>
    %80 = math.exp %79 : vector<16x128xf32>
    %cst_66 = arith.constant 1.000000e+00 : f32
    %81 = vector.broadcast %cst_66 : f32 to vector<16x128xf32>
    %82 = arith.addf %81, %80 : vector<16x128xf32>
    %83 = arith.divf %81, %82 : vector<16x128xf32>
    %84 = arith.mulf %77, %46 : vector<16x128xf32>
    %85 = arith.mulf %72, %78 : vector<16x128xf32>
    %86 = arith.addf %84, %85 : vector<16x128xf32>
    %87 = math.tanh %86 : vector<16x128xf32>
    %88 = arith.mulf %83, %87 : vector<16x128xf32>
    %89 = arith.truncf %88 : vector<16x128xf32> to vector<16x128xbf16>
    %c16_67 = arith.constant 16 : index
    %c0_68 = arith.constant 0 : index
    %90 = vector.load %arg11[%c16_67, %c0_68] : memref<128x128xbf16, #tpu.memory_space<vmem>>, vector<16x128xbf16>
    tpu.vector_store %arg11[%c16_67, %c0_68], %89 {strides = array<i32>} : memref<128x128xbf16, #tpu.memory_space<vmem>>, vector<16x128xbf16>,
    %91 = arith.truncf %88 : vector<16x128xf32> to vector<16x128xbf16>
    %c32 = arith.constant 32 : index
    %c0_69 = arith.constant 0 : index
    %92 = vector.load %arg12[%c32, %c0_69] : memref<128x512xf32, #tpu.memory_space<vmem>>, vector<16x128xf32>
    %c0_70 = arith.constant 0 : index
    %c0_71 = arith.constant 0 : index
    %93 = vector.load %arg3[%c0_70, %c0_71] : memref<128x512xbf16, #tpu.memory_space<vmem>>, vector<128x128xbf16>
    %cst_72 = arith.constant dense<0.000000e+00> : vector<16x128xf32>
    %94 = tpu.matmul %91, %93, %cst_72 {dimension_numbers = #tpu.dot_dimension_numbers<[1], [0], [0], [1], [0, 0, 1, 1], [], []>} : vector<16x128xbf16>, vector<128x128xbf16>, vector<16x128xf32> -> vector<16x128xf32>
    %95 = arith.addf %94, %92 : vector<16x128xf32>
    %c32_73 = arith.constant 32 : index
    %c128_74 = arith.constant 128 : index
    %96 = vector.load %arg12[%c32_73, %c128_74] : memref<128x512xf32, #tpu.memory_space<vmem>>, vector<16x128xf32>
    %c0_75 = arith.constant 0 : index
    %c128_76 = arith.constant 128 : index
    %97 = vector.load %arg3[%c0_75, %c128_76] : memref<128x512xbf16, #tpu.memory_space<vmem>>, vector<128x128xbf16>
    %cst_77 = arith.constant dense<0.000000e+00> : vector<16x128xf32>
    %98 = tpu.matmul %91, %97, %cst_77 {dimension_numbers = #tpu.dot_dimension_numbers<[1], [0], [0], [1], [0, 0, 1, 1], [], []>} : vector<16x128xbf16>, vector<128x128xbf16>, vector<16x128xf32> -> vector<16x128xf32>
    %99 = arith.addf %98, %96 : vector<16x128xf32>
    %c32_78 = arith.constant 32 : index
    %c256_79 = arith.constant 256 : index
    %100 = vector.load %arg12[%c32_78, %c256_79] : memref<128x512xf32, #tpu.memory_space<vmem>>, vector<16x128xf32>
    %c0_80 = arith.constant 0 : index
    %c256_81 = arith.constant 256 : index
    %101 = vector.load %arg3[%c0_80, %c256_81] : memref<128x512xbf16, #tpu.memory_space<vmem>>, vector<128x128xbf16>
    %cst_82 = arith.constant dense<0.000000e+00> : vector<16x128xf32>
    %102 = tpu.matmul %91, %101, %cst_82 {dimension_numbers = #tpu.dot_dimension_numbers<[1], [0], [0], [1], [0, 0, 1, 1], [], []>} : vector<16x128xbf16>, vector<128x128xbf16>, vector<16x128xf32> -> vector<16x128xf32>
    %103 = arith.addf %102, %100 : vector<16x128xf32>
    %c32_83 = arith.constant 32 : index
    %c384_84 = arith.constant 384 : index
    %104 = vector.load %arg12[%c32_83, %c384_84] : memref<128x512xf32, #tpu.memory_space<vmem>>, vector<16x128xf32>
    %c0_85 = arith.constant 0 : index
    %c384_86 = arith.constant 384 : index
    %105 = vector.load %arg3[%c0_85, %c384_86] : memref<128x512xbf16, #tpu.memory_space<vmem>>, vector<128x128xbf16>
    %cst_87 = arith.constant dense<0.000000e+00> : vector<16x128xf32>
    %106 = tpu.matmul %91, %105, %cst_87 {dimension_numbers = #tpu.dot_dimension_numbers<[1], [0], [0], [1], [0, 0, 1, 1], [], []>} : vector<16x128xbf16>, vector<128x128xbf16>, vector<16x128xf32> -> vector<16x128xf32>
    %107 = arith.addf %106, %104 : vector<16x128xf32>
    %108 = arith.negf %95 : vector<16x128xf32>
    %109 = math.exp %108 : vector<16x128xf32>
    %cst_88 = arith.constant 1.000000e+00 : f32
    %110 = vector.broadcast %cst_88 : f32 to vector<16x128xf32>
    %111 = arith.addf %110, %109 : vector<16x128xf32>
    %112 = arith.divf %110, %111 : vector<16x128xf32>
    %113 = arith.negf %99 : vector<16x128xf32>
    %114 = math.exp %113 : vector<16x128xf32>
    %cst_89 = arith.constant 1.000000e+00 : f32
    %115 = vector.broadcast %cst_89 : f32 to vector<16x128xf32>
    %116 = arith.addf %115, %114 : vector<16x128xf32>
    %117 = arith.divf %115, %116 : vector<16x128xf32>
    %118 = math.tanh %103 : vector<16x128xf32>
    %119 = arith.negf %107 : vector<16x128xf32>
    %120 = math.exp %119 : vector<16x128xf32>
    %cst_90 = arith.constant 1.000000e+00 : f32
    %121 = vector.broadcast %cst_90 : f32 to vector<16x128xf32>
    %122 = arith.addf %121, %120 : vector<16x128xf32>
    %123 = arith.divf %121, %122 : vector<16x128xf32>
    %124 = arith.mulf %117, %86 : vector<16x128xf32>
    %125 = arith.mulf %112, %118 : vector<16x128xf32>
    %126 = arith.addf %124, %125 : vector<16x128xf32>
    %127 = math.tanh %126 : vector<16x128xf32>
    %128 = arith.mulf %123, %127 : vector<16x128xf32>
    %129 = arith.truncf %128 : vector<16x128xf32> to vector<16x128xbf16>
    %c32_91 = arith.constant 32 : index
    %c0_92 = arith.constant 0 : index
    %130 = vector.load %arg11[%c32_91, %c0_92] : memref<128x128xbf16, #tpu.memory_space<vmem>>, vector<16x128xbf16>
    tpu.vector_store %arg11[%c32_91, %c0_92], %129 {strides = array<i32>} : memref<128x128xbf16, #tpu.memory_space<vmem>>, vector<16x128xbf16>,
    %131 = arith.truncf %128 : vector<16x128xf32> to vector<16x128xbf16>
    %c48 = arith.constant 48 : index
    %c0_93 = arith.constant 0 : index
    %132 = vector.load %arg12[%c48, %c0_93] : memref<128x512xf32, #tpu.memory_space<vmem>>, vector<16x128xf32>
    %c0_94 = arith.constant 0 : index
    %c0_95 = arith.constant 0 : index
    %133 = vector.load %arg3[%c0_94, %c0_95] : memref<128x512xbf16, #tpu.memory_space<vmem>>, vector<128x128xbf16>
    %cst_96 = arith.constant dense<0.000000e+00> : vector<16x128xf32>
    %134 = tpu.matmul %131, %133, %cst_96 {dimension_numbers = #tpu.dot_dimension_numbers<[1], [0], [0], [1], [0, 0, 1, 1], [], []>} : vector<16x128xbf16>, vector<128x128xbf16>, vector<16x128xf32> -> vector<16x128xf32>
    %135 = arith.addf %134, %132 : vector<16x128xf32>
    %c48_97 = arith.constant 48 : index
    %c128_98 = arith.constant 128 : index
    %136 = vector.load %arg12[%c48_97, %c128_98] : memref<128x512xf32, #tpu.memory_space<vmem>>, vector<16x128xf32>
    %c0_99 = arith.constant 0 : index
    %c128_100 = arith.constant 128 : index
    %137 = vector.load %arg3[%c0_99, %c128_100] : memref<128x512xbf16, #tpu.memory_space<vmem>>, vector<128x128xbf16>
    %cst_101 = arith.constant dense<0.000000e+00> : vector<16x128xf32>
    %138 = tpu.matmul %131, %137, %cst_101 {dimension_numbers = #tpu.dot_dimension_numbers<[1], [0], [0], [1], [0, 0, 1, 1], [], []>} : vector<16x128xbf16>, vector<128x128xbf16>, vector<16x128xf32> -> vector<16x128xf32>
    %139 = arith.addf %138, %136 : vector<16x128xf32>
    %c48_102 = arith.constant 48 : index
    %c256_103 = arith.constant 256 : index
    %140 = vector.load %arg12[%c48_102, %c256_103] : memref<128x512xf32, #tpu.memory_space<vmem>>, vector<16x128xf32>
    %c0_104 = arith.constant 0 : index
    %c256_105 = arith.constant 256 : index
    %141 = vector.load %arg3[%c0_104, %c256_105] : memref<128x512xbf16, #tpu.memory_space<vmem>>, vector<128x128xbf16>
    %cst_106 = arith.constant dense<0.000000e+00> : vector<16x128xf32>
    %142 = tpu.matmul %131, %141, %cst_106 {dimension_numbers = #tpu.dot_dimension_numbers<[1], [0], [0], [1], [0, 0, 1, 1], [], []>} : vector<16x128xbf16>, vector<128x128xbf16>, vector<16x128xf32> -> vector<16x128xf32>
    %143 = arith.addf %142, %140 : vector<16x128xf32>
    %c48_107 = arith.constant 48 : index
    %c384_108 = arith.constant 384 : index
    %144 = vector.load %arg12[%c48_107, %c384_108] : memref<128x512xf32, #tpu.memory_space<vmem>>, vector<16x128xf32>
    %c0_109 = arith.constant 0 : index
    %c384_110 = arith.constant 384 : index
    %145 = vector.load %arg3[%c0_109, %c384_110] : memref<128x512xbf16, #tpu.memory_space<vmem>>, vector<128x128xbf16>
    %cst_111 = arith.constant dense<0.000000e+00> : vector<16x128xf32>
    %146 = tpu.matmul %131, %145, %cst_111 {dimension_numbers = #tpu.dot_dimension_numbers<[1], [0], [0], [1], [0, 0, 1, 1], [], []>} : vector<16x128xbf16>, vector<128x128xbf16>, vector<16x128xf32> -> vector<16x128xf32>
    %147 = arith.addf %146, %144 : vector<16x128xf32>
    %148 = arith.negf %135 : vector<16x128xf32>
    %149 = math.exp %148 : vector<16x128xf32>
    %cst_112 = arith.constant 1.000000e+00 : f32
    %150 = vector.broadcast %cst_112 : f32 to vector<16x128xf32>
    %151 = arith.addf %150, %149 : vector<16x128xf32>
    %152 = arith.divf %150, %151 : vector<16x128xf32>
    %153 = arith.negf %139 : vector<16x128xf32>
    %154 = math.exp %153 : vector<16x128xf32>
    %cst_113 = arith.constant 1.000000e+00 : f32
    %155 = vector.broadcast %cst_113 : f32 to vector<16x128xf32>
    %156 = arith.addf %155, %154 : vector<16x128xf32>
    %157 = arith.divf %155, %156 : vector<16x128xf32>
    %158 = math.tanh %143 : vector<16x128xf32>
    %159 = arith.negf %147 : vector<16x128xf32>
    %160 = math.exp %159 : vector<16x128xf32>
    %cst_114 = arith.constant 1.000000e+00 : f32
    %161 = vector.broadcast %cst_114 : f32 to vector<16x128xf32>
    %162 = arith.addf %161, %160 : vector<16x128xf32>
    %163 = arith.divf %161, %162 : vector<16x128xf32>
    %164 = arith.mulf %157, %126 : vector<16x128xf32>
    %165 = arith.mulf %152, %158 : vector<16x128xf32>
    %166 = arith.addf %164, %165 : vector<16x128xf32>
    %167 = math.tanh %166 : vector<16x128xf32>
    %168 = arith.mulf %163, %167 : vector<16x128xf32>
    %169 = arith.truncf %168 : vector<16x128xf32> to vector<16x128xbf16>
    %c48_115 = arith.constant 48 : index
    %c0_116 = arith.constant 0 : index
    %170 = vector.load %arg11[%c48_115, %c0_116] : memref<128x128xbf16, #tpu.memory_space<vmem>>, vector<16x128xbf16>
    tpu.vector_store %arg11[%c48_115, %c0_116], %169 {strides = array<i32>} : memref<128x128xbf16, #tpu.memory_space<vmem>>, vector<16x128xbf16>,
    %171 = arith.truncf %168 : vector<16x128xf32> to vector<16x128xbf16>
    %c64 = arith.constant 64 : index
    %c0_117 = arith.constant 0 : index
    %172 = vector.load %arg12[%c64, %c0_117] : memref<128x512xf32, #tpu.memory_space<vmem>>, vector<16x128xf32>
    %c0_118 = arith.constant 0 : index
    %c0_119 = arith.constant 0 : index
    %173 = vector.load %arg3[%c0_118, %c0_119] : memref<128x512xbf16, #tpu.memory_space<vmem>>, vector<128x128xbf16>
    %cst_120 = arith.constant dense<0.000000e+00> : vector<16x128xf32>
    %174 = tpu.matmul %171, %173, %cst_120 {dimension_numbers = #tpu.dot_dimension_numbers<[1], [0], [0], [1], [0, 0, 1, 1], [], []>} : vector<16x128xbf16>, vector<128x128xbf16>, vector<16x128xf32> -> vector<16x128xf32>
    %175 = arith.addf %174, %172 : vector<16x128xf32>
    %c64_121 = arith.constant 64 : index
    %c128_122 = arith.constant 128 : index
    %176 = vector.load %arg12[%c64_121, %c128_122] : memref<128x512xf32, #tpu.memory_space<vmem>>, vector<16x128xf32>
    %c0_123 = arith.constant 0 : index
    %c128_124 = arith.constant 128 : index
    %177 = vector.load %arg3[%c0_123, %c128_124] : memref<128x512xbf16, #tpu.memory_space<vmem>>, vector<128x128xbf16>
    %cst_125 = arith.constant dense<0.000000e+00> : vector<16x128xf32>
    %178 = tpu.matmul %171, %177, %cst_125 {dimension_numbers = #tpu.dot_dimension_numbers<[1], [0], [0], [1], [0, 0, 1, 1], [], []>} : vector<16x128xbf16>, vector<128x128xbf16>, vector<16x128xf32> -> vector<16x128xf32>
    %179 = arith.addf %178, %176 : vector<16x128xf32>
    %c64_126 = arith.constant 64 : index
    %c256_127 = arith.constant 256 : index
    %180 = vector.load %arg12[%c64_126, %c256_127] : memref<128x512xf32, #tpu.memory_space<vmem>>, vector<16x128xf32>
    %c0_128 = arith.constant 0 : index
    %c256_129 = arith.constant 256 : index
    %181 = vector.load %arg3[%c0_128, %c256_129] : memref<128x512xbf16, #tpu.memory_space<vmem>>, vector<128x128xbf16>
    %cst_130 = arith.constant dense<0.000000e+00> : vector<16x128xf32>
    %182 = tpu.matmul %171, %181, %cst_130 {dimension_numbers = #tpu.dot_dimension_numbers<[1], [0], [0], [1], [0, 0, 1, 1], [], []>} : vector<16x128xbf16>, vector<128x128xbf16>, vector<16x128xf32> -> vector<16x128xf32>
    %183 = arith.addf %182, %180 : vector<16x128xf32>
    %c64_131 = arith.constant 64 : index
    %c384_132 = arith.constant 384 : index
    %184 = vector.load %arg12[%c64_131, %c384_132] : memref<128x512xf32, #tpu.memory_space<vmem>>, vector<16x128xf32>
    %c0_133 = arith.constant 0 : index
    %c384_134 = arith.constant 384 : index
    %185 = vector.load %arg3[%c0_133, %c384_134] : memref<128x512xbf16, #tpu.memory_space<vmem>>, vector<128x128xbf16>
    %cst_135 = arith.constant dense<0.000000e+00> : vector<16x128xf32>
    %186 = tpu.matmul %171, %185, %cst_135 {dimension_numbers = #tpu.dot_dimension_numbers<[1], [0], [0], [1], [0, 0, 1, 1], [], []>} : vector<16x128xbf16>, vector<128x128xbf16>, vector<16x128xf32> -> vector<16x128xf32>
    %187 = arith.addf %186, %184 : vector<16x128xf32>
    %188 = arith.negf %175 : vector<16x128xf32>
    %189 = math.exp %188 : vector<16x128xf32>
    %cst_136 = arith.constant 1.000000e+00 : f32
    %190 = vector.broadcast %cst_136 : f32 to vector<16x128xf32>
    %191 = arith.addf %190, %189 : vector<16x128xf32>
    %192 = arith.divf %190, %191 : vector<16x128xf32>
    %193 = arith.negf %179 : vector<16x128xf32>
    %194 = math.exp %193 : vector<16x128xf32>
    %cst_137 = arith.constant 1.000000e+00 : f32
    %195 = vector.broadcast %cst_137 : f32 to vector<16x128xf32>
    %196 = arith.addf %195, %194 : vector<16x128xf32>
    %197 = arith.divf %195, %196 : vector<16x128xf32>
    %198 = math.tanh %183 : vector<16x128xf32>
    %199 = arith.negf %187 : vector<16x128xf32>
    %200 = math.exp %199 : vector<16x128xf32>
    %cst_138 = arith.constant 1.000000e+00 : f32
    %201 = vector.broadcast %cst_138 : f32 to vector<16x128xf32>
    %202 = arith.addf %201, %200 : vector<16x128xf32>
    %203 = arith.divf %201, %202 : vector<16x128xf32>
    %204 = arith.mulf %197, %166 : vector<16x128xf32>
    %205 = arith.mulf %192, %198 : vector<16x128xf32>
    %206 = arith.addf %204, %205 : vector<16x128xf32>
    %207 = math.tanh %206 : vector<16x128xf32>
    %208 = arith.mulf %203, %207 : vector<16x128xf32>
    %209 = arith.truncf %208 : vector<16x128xf32> to vector<16x128xbf16>
    %c64_139 = arith.constant 64 : index
    %c0_140 = arith.constant 0 : index
    %210 = vector.load %arg11[%c64_139, %c0_140] : memref<128x128xbf16, #tpu.memory_space<vmem>>, vector<16x128xbf16>
    tpu.vector_store %arg11[%c64_139, %c0_140], %209 {strides = array<i32>} : memref<128x128xbf16, #tpu.memory_space<vmem>>, vector<16x128xbf16>,
    %211 = arith.truncf %208 : vector<16x128xf32> to vector<16x128xbf16>
    %c80 = arith.constant 80 : index
    %c0_141 = arith.constant 0 : index
    %212 = vector.load %arg12[%c80, %c0_141] : memref<128x512xf32, #tpu.memory_space<vmem>>, vector<16x128xf32>
    %c0_142 = arith.constant 0 : index
    %c0_143 = arith.constant 0 : index
    %213 = vector.load %arg3[%c0_142, %c0_143] : memref<128x512xbf16, #tpu.memory_space<vmem>>, vector<128x128xbf16>
    %cst_144 = arith.constant dense<0.000000e+00> : vector<16x128xf32>
    %214 = tpu.matmul %211, %213, %cst_144 {dimension_numbers = #tpu.dot_dimension_numbers<[1], [0], [0], [1], [0, 0, 1, 1], [], []>} : vector<16x128xbf16>, vector<128x128xbf16>, vector<16x128xf32> -> vector<16x128xf32>
    %215 = arith.addf %214, %212 : vector<16x128xf32>
    %c80_145 = arith.constant 80 : index
    %c128_146 = arith.constant 128 : index
    %216 = vector.load %arg12[%c80_145, %c128_146] : memref<128x512xf32, #tpu.memory_space<vmem>>, vector<16x128xf32>
    %c0_147 = arith.constant 0 : index
    %c128_148 = arith.constant 128 : index
    %217 = vector.load %arg3[%c0_147, %c128_148] : memref<128x512xbf16, #tpu.memory_space<vmem>>, vector<128x128xbf16>
    %cst_149 = arith.constant dense<0.000000e+00> : vector<16x128xf32>
    %218 = tpu.matmul %211, %217, %cst_149 {dimension_numbers = #tpu.dot_dimension_numbers<[1], [0], [0], [1], [0, 0, 1, 1], [], []>} : vector<16x128xbf16>, vector<128x128xbf16>, vector<16x128xf32> -> vector<16x128xf32>
    %219 = arith.addf %218, %216 : vector<16x128xf32>
    %c80_150 = arith.constant 80 : index
    %c256_151 = arith.constant 256 : index
    %220 = vector.load %arg12[%c80_150, %c256_151] : memref<128x512xf32, #tpu.memory_space<vmem>>, vector<16x128xf32>
    %c0_152 = arith.constant 0 : index
    %c256_153 = arith.constant 256 : index
    %221 = vector.load %arg3[%c0_152, %c256_153] : memref<128x512xbf16, #tpu.memory_space<vmem>>, vector<128x128xbf16>
    %cst_154 = arith.constant dense<0.000000e+00> : vector<16x128xf32>
    %222 = tpu.matmul %211, %221, %cst_154 {dimension_numbers = #tpu.dot_dimension_numbers<[1], [0], [0], [1], [0, 0, 1, 1], [], []>} : vector<16x128xbf16>, vector<128x128xbf16>, vector<16x128xf32> -> vector<16x128xf32>
    %223 = arith.addf %222, %220 : vector<16x128xf32>
    %c80_155 = arith.constant 80 : index
    %c384_156 = arith.constant 384 : index
    %224 = vector.load %arg12[%c80_155, %c384_156] : memref<128x512xf32, #tpu.memory_space<vmem>>, vector<16x128xf32>
    %c0_157 = arith.constant 0 : index
    %c384_158 = arith.constant 384 : index
    %225 = vector.load %arg3[%c0_157, %c384_158] : memref<128x512xbf16, #tpu.memory_space<vmem>>, vector<128x128xbf16>
    %cst_159 = arith.constant dense<0.000000e+00> : vector<16x128xf32>
    %226 = tpu.matmul %211, %225, %cst_159 {dimension_numbers = #tpu.dot_dimension_numbers<[1], [0], [0], [1], [0, 0, 1, 1], [], []>} : vector<16x128xbf16>, vector<128x128xbf16>, vector<16x128xf32> -> vector<16x128xf32>
    %227 = arith.addf %226, %224 : vector<16x128xf32>
    %228 = arith.negf %215 : vector<16x128xf32>
    %229 = math.exp %228 : vector<16x128xf32>
    %cst_160 = arith.constant 1.000000e+00 : f32
    %230 = vector.broadcast %cst_160 : f32 to vector<16x128xf32>
    %231 = arith.addf %230, %229 : vector<16x128xf32>
    %232 = arith.divf %230, %231 : vector<16x128xf32>
    %233 = arith.negf %219 : vector<16x128xf32>
    %234 = math.exp %233 : vector<16x128xf32>
    %cst_161 = arith.constant 1.000000e+00 : f32
    %235 = vector.broadcast %cst_161 : f32 to vector<16x128xf32>
    %236 = arith.addf %235, %234 : vector<16x128xf32>
    %237 = arith.divf %235, %236 : vector<16x128xf32>
    %238 = math.tanh %223 : vector<16x128xf32>
    %239 = arith.negf %227 : vector<16x128xf32>
    %240 = math.exp %239 : vector<16x128xf32>
    %cst_162 = arith.constant 1.000000e+00 : f32
    %241 = vector.broadcast %cst_162 : f32 to vector<16x128xf32>
    %242 = arith.addf %241, %240 : vector<16x128xf32>
    %243 = arith.divf %241, %242 : vector<16x128xf32>
    %244 = arith.mulf %237, %206 : vector<16x128xf32>
    %245 = arith.mulf %232, %238 : vector<16x128xf32>
    %246 = arith.addf %244, %245 : vector<16x128xf32>
    %247 = math.tanh %246 : vector<16x128xf32>
    %248 = arith.mulf %243, %247 : vector<16x128xf32>
    %249 = arith.truncf %248 : vector<16x128xf32> to vector<16x128xbf16>
    %c80_163 = arith.constant 80 : index
    %c0_164 = arith.constant 0 : index
    %250 = vector.load %arg11[%c80_163, %c0_164] : memref<128x128xbf16, #tpu.memory_space<vmem>>, vector<16x128xbf16>
    tpu.vector_store %arg11[%c80_163, %c0_164], %249 {strides = array<i32>} : memref<128x128xbf16, #tpu.memory_space<vmem>>, vector<16x128xbf16>,
    %251 = arith.truncf %248 : vector<16x128xf32> to vector<16x128xbf16>
    %c96 = arith.constant 96 : index
    %c0_165 = arith.constant 0 : index
    %252 = vector.load %arg12[%c96, %c0_165] : memref<128x512xf32, #tpu.memory_space<vmem>>, vector<16x128xf32>
    %c0_166 = arith.constant 0 : index
    %c0_167 = arith.constant 0 : index
    %253 = vector.load %arg3[%c0_166, %c0_167] : memref<128x512xbf16, #tpu.memory_space<vmem>>, vector<128x128xbf16>
    %cst_168 = arith.constant dense<0.000000e+00> : vector<16x128xf32>
    %254 = tpu.matmul %251, %253, %cst_168 {dimension_numbers = #tpu.dot_dimension_numbers<[1], [0], [0], [1], [0, 0, 1, 1], [], []>} : vector<16x128xbf16>, vector<128x128xbf16>, vector<16x128xf32> -> vector<16x128xf32>
    %255 = arith.addf %254, %252 : vector<16x128xf32>
    %c96_169 = arith.constant 96 : index
    %c128_170 = arith.constant 128 : index
    %256 = vector.load %arg12[%c96_169, %c128_170] : memref<128x512xf32, #tpu.memory_space<vmem>>, vector<16x128xf32>
    %c0_171 = arith.constant 0 : index
    %c128_172 = arith.constant 128 : index
    %257 = vector.load %arg3[%c0_171, %c128_172] : memref<128x512xbf16, #tpu.memory_space<vmem>>, vector<128x128xbf16>
    %cst_173 = arith.constant dense<0.000000e+00> : vector<16x128xf32>
    %258 = tpu.matmul %251, %257, %cst_173 {dimension_numbers = #tpu.dot_dimension_numbers<[1], [0], [0], [1], [0, 0, 1, 1], [], []>} : vector<16x128xbf16>, vector<128x128xbf16>, vector<16x128xf32> -> vector<16x128xf32>
    %259 = arith.addf %258, %256 : vector<16x128xf32>
    %c96_174 = arith.constant 96 : index
    %c256_175 = arith.constant 256 : index
    %260 = vector.load %arg12[%c96_174, %c256_175] : memref<128x512xf32, #tpu.memory_space<vmem>>, vector<16x128xf32>
    %c0_176 = arith.constant 0 : index
    %c256_177 = arith.constant 256 : index
    %261 = vector.load %arg3[%c0_176, %c256_177] : memref<128x512xbf16, #tpu.memory_space<vmem>>, vector<128x128xbf16>
    %cst_178 = arith.constant dense<0.000000e+00> : vector<16x128xf32>
    %262 = tpu.matmul %251, %261, %cst_178 {dimension_numbers = #tpu.dot_dimension_numbers<[1], [0], [0], [1], [0, 0, 1, 1], [], []>} : vector<16x128xbf16>, vector<128x128xbf16>, vector<16x128xf32> -> vector<16x128xf32>
    %263 = arith.addf %262, %260 : vector<16x128xf32>
    %c96_179 = arith.constant 96 : index
    %c384_180 = arith.constant 384 : index
    %264 = vector.load %arg12[%c96_179, %c384_180] : memref<128x512xf32, #tpu.memory_space<vmem>>, vector<16x128xf32>
    %c0_181 = arith.constant 0 : index
    %c384_182 = arith.constant 384 : index
    %265 = vector.load %arg3[%c0_181, %c384_182] : memref<128x512xbf16, #tpu.memory_space<vmem>>, vector<128x128xbf16>
    %cst_183 = arith.constant dense<0.000000e+00> : vector<16x128xf32>
    %266 = tpu.matmul %251, %265, %cst_183 {dimension_numbers = #tpu.dot_dimension_numbers<[1], [0], [0], [1], [0, 0, 1, 1], [], []>} : vector<16x128xbf16>, vector<128x128xbf16>, vector<16x128xf32> -> vector<16x128xf32>
    %267 = arith.addf %266, %264 : vector<16x128xf32>
    %268 = arith.negf %255 : vector<16x128xf32>
    %269 = math.exp %268 : vector<16x128xf32>
    %cst_184 = arith.constant 1.000000e+00 : f32
    %270 = vector.broadcast %cst_184 : f32 to vector<16x128xf32>
    %271 = arith.addf %270, %269 : vector<16x128xf32>
    %272 = arith.divf %270, %271 : vector<16x128xf32>
    %273 = arith.negf %259 : vector<16x128xf32>
    %274 = math.exp %273 : vector<16x128xf32>
    %cst_185 = arith.constant 1.000000e+00 : f32
    %275 = vector.broadcast %cst_185 : f32 to vector<16x128xf32>
    %276 = arith.addf %275, %274 : vector<16x128xf32>
    %277 = arith.divf %275, %276 : vector<16x128xf32>
    %278 = math.tanh %263 : vector<16x128xf32>
    %279 = arith.negf %267 : vector<16x128xf32>
    %280 = math.exp %279 : vector<16x128xf32>
    %cst_186 = arith.constant 1.000000e+00 : f32
    %281 = vector.broadcast %cst_186 : f32 to vector<16x128xf32>
    %282 = arith.addf %281, %280 : vector<16x128xf32>
    %283 = arith.divf %281, %282 : vector<16x128xf32>
    %284 = arith.mulf %277, %246 : vector<16x128xf32>
    %285 = arith.mulf %272, %278 : vector<16x128xf32>
    %286 = arith.addf %284, %285 : vector<16x128xf32>
    %287 = math.tanh %286 : vector<16x128xf32>
    %288 = arith.mulf %283, %287 : vector<16x128xf32>
    %289 = arith.truncf %288 : vector<16x128xf32> to vector<16x128xbf16>
    %c96_187 = arith.constant 96 : index
    %c0_188 = arith.constant 0 : index
    %290 = vector.load %arg11[%c96_187, %c0_188] : memref<128x128xbf16, #tpu.memory_space<vmem>>, vector<16x128xbf16>
    tpu.vector_store %arg11[%c96_187, %c0_188], %289 {strides = array<i32>} : memref<128x128xbf16, #tpu.memory_space<vmem>>, vector<16x128xbf16>,
    %291 = arith.truncf %288 : vector<16x128xf32> to vector<16x128xbf16>
    %c112 = arith.constant 112 : index
    %c0_189 = arith.constant 0 : index
    %292 = vector.load %arg12[%c112, %c0_189] : memref<128x512xf32, #tpu.memory_space<vmem>>, vector<16x128xf32>
    %c0_190 = arith.constant 0 : index
    %c0_191 = arith.constant 0 : index
    %293 = vector.load %arg3[%c0_190, %c0_191] : memref<128x512xbf16, #tpu.memory_space<vmem>>, vector<128x128xbf16>
    %cst_192 = arith.constant dense<0.000000e+00> : vector<16x128xf32>
    %294 = tpu.matmul %291, %293, %cst_192 {dimension_numbers = #tpu.dot_dimension_numbers<[1], [0], [0], [1], [0, 0, 1, 1], [], []>} : vector<16x128xbf16>, vector<128x128xbf16>, vector<16x128xf32> -> vector<16x128xf32>
    %295 = arith.addf %294, %292 : vector<16x128xf32>
    %c112_193 = arith.constant 112 : index
    %c128_194 = arith.constant 128 : index
    %296 = vector.load %arg12[%c112_193, %c128_194] : memref<128x512xf32, #tpu.memory_space<vmem>>, vector<16x128xf32>
    %c0_195 = arith.constant 0 : index
    %c128_196 = arith.constant 128 : index
    %297 = vector.load %arg3[%c0_195, %c128_196] : memref<128x512xbf16, #tpu.memory_space<vmem>>, vector<128x128xbf16>
    %cst_197 = arith.constant dense<0.000000e+00> : vector<16x128xf32>
    %298 = tpu.matmul %291, %297, %cst_197 {dimension_numbers = #tpu.dot_dimension_numbers<[1], [0], [0], [1], [0, 0, 1, 1], [], []>} : vector<16x128xbf16>, vector<128x128xbf16>, vector<16x128xf32> -> vector<16x128xf32>
    %299 = arith.addf %298, %296 : vector<16x128xf32>
    %c112_198 = arith.constant 112 : index
    %c256_199 = arith.constant 256 : index
    %300 = vector.load %arg12[%c112_198, %c256_199] : memref<128x512xf32, #tpu.memory_space<vmem>>, vector<16x128xf32>
    %c0_200 = arith.constant 0 : index
    %c256_201 = arith.constant 256 : index
    %301 = vector.load %arg3[%c0_200, %c256_201] : memref<128x512xbf16, #tpu.memory_space<vmem>>, vector<128x128xbf16>
    %cst_202 = arith.constant dense<0.000000e+00> : vector<16x128xf32>
    %302 = tpu.matmul %291, %301, %cst_202 {dimension_numbers = #tpu.dot_dimension_numbers<[1], [0], [0], [1], [0, 0, 1, 1], [], []>} : vector<16x128xbf16>, vector<128x128xbf16>, vector<16x128xf32> -> vector<16x128xf32>
    %303 = arith.addf %302, %300 : vector<16x128xf32>
    %c112_203 = arith.constant 112 : index
    %c384_204 = arith.constant 384 : index
    %304 = vector.load %arg12[%c112_203, %c384_204] : memref<128x512xf32, #tpu.memory_space<vmem>>, vector<16x128xf32>
    %c0_205 = arith.constant 0 : index
    %c384_206 = arith.constant 384 : index
    %305 = vector.load %arg3[%c0_205, %c384_206] : memref<128x512xbf16, #tpu.memory_space<vmem>>, vector<128x128xbf16>
    %cst_207 = arith.constant dense<0.000000e+00> : vector<16x128xf32>
    %306 = tpu.matmul %291, %305, %cst_207 {dimension_numbers = #tpu.dot_dimension_numbers<[1], [0], [0], [1], [0, 0, 1, 1], [], []>} : vector<16x128xbf16>, vector<128x128xbf16>, vector<16x128xf32> -> vector<16x128xf32>
    %307 = arith.addf %306, %304 : vector<16x128xf32>
    %308 = arith.negf %295 : vector<16x128xf32>
    %309 = math.exp %308 : vector<16x128xf32>
    %cst_208 = arith.constant 1.000000e+00 : f32
    %310 = vector.broadcast %cst_208 : f32 to vector<16x128xf32>
    %311 = arith.addf %310, %309 : vector<16x128xf32>
    %312 = arith.divf %310, %311 : vector<16x128xf32>
    %313 = arith.negf %299 : vector<16x128xf32>
    %314 = math.exp %313 : vector<16x128xf32>
    %cst_209 = arith.constant 1.000000e+00 : f32
    %315 = vector.broadcast %cst_209 : f32 to vector<16x128xf32>
    %316 = arith.addf %315, %314 : vector<16x128xf32>
    %317 = arith.divf %315, %316 : vector<16x128xf32>
    %318 = math.tanh %303 : vector<16x128xf32>
    %319 = arith.negf %307 : vector<16x128xf32>
    %320 = math.exp %319 : vector<16x128xf32>
    %cst_210 = arith.constant 1.000000e+00 : f32
    %321 = vector.broadcast %cst_210 : f32 to vector<16x128xf32>
    %322 = arith.addf %321, %320 : vector<16x128xf32>
    %323 = arith.divf %321, %322 : vector<16x128xf32>
    %324 = arith.mulf %317, %286 : vector<16x128xf32>
    %325 = arith.mulf %312, %318 : vector<16x128xf32>
    %326 = arith.addf %324, %325 : vector<16x128xf32>
    %327 = math.tanh %326 : vector<16x128xf32>
    %328 = arith.mulf %323, %327 : vector<16x128xf32>
    %329 = arith.truncf %328 : vector<16x128xf32> to vector<16x128xbf16>
    %c112_211 = arith.constant 112 : index
    %c0_212 = arith.constant 0 : index
    %330 = vector.load %arg11[%c112_211, %c0_212] : memref<128x128xbf16, #tpu.memory_space<vmem>>, vector<16x128xbf16>
    tpu.vector_store %arg11[%c112_211, %c0_212], %329 {strides = array<i32>} : memref<128x128xbf16, #tpu.memory_space<vmem>>, vector<16x128xbf16>,
    %c0_213 = arith.constant 0 : index
    %c0_214 = arith.constant 0 : index
    %331 = vector.load %arg11[%c0_213, %c0_214] : memref<128x128xbf16, #tpu.memory_space<vmem>>, vector<128x128xbf16>
    %c0_215 = arith.constant 0 : index
    %c0_216 = arith.constant 0 : index
    %332 = vector.load %arg5[%c0_215, %c0_216] : memref<128x512xbf16, #tpu.memory_space<vmem>>, vector<128x128xbf16>
    %cst_217 = arith.constant dense<0.000000e+00> : vector<128x128xf32>
    %333 = tpu.matmul %331, %332, %cst_217 {dimension_numbers = #tpu.dot_dimension_numbers<[1], [0], [0], [1], [0, 0, 1, 1], [], []>} : vector<128x128xbf16>, vector<128x128xbf16>, vector<128x128xf32> -> vector<128x128xf32>
    %c0_218 = arith.constant 0 : index
    %c0_219 = arith.constant 0 : index
    %334 = vector.load %arg7[%c0_218, %c0_219] : memref<1x512xf32, #tpu.memory_space<vmem>>, vector<1x128xf32>
    %335 = vector.broadcast %334 : vector<1x128xf32> to vector<128x128xf32>
    %336 = arith.addf %333, %335 : vector<128x128xf32>
    %c0_220 = arith.constant 0 : index
    %c0_221 = arith.constant 0 : index
    %337 = vector.load %arg12[%c0_220, %c0_221] : memref<128x512xf32, #tpu.memory_space<vmem>>, vector<128x128xf32>
    tpu.vector_store %arg12[%c0_220, %c0_221], %336 {strides = array<i32>} : memref<128x512xf32, #tpu.memory_space<vmem>>, vector<128x128xf32>,
    %c0_222 = arith.constant 0 : index
    %c0_223 = arith.constant 0 : index
    %338 = vector.load %arg11[%c0_222, %c0_223] : memref<128x128xbf16, #tpu.memory_space<vmem>>, vector<128x128xbf16>
    %c0_224 = arith.constant 0 : index
    %c128_225 = arith.constant 128 : index
    %339 = vector.load %arg5[%c0_224, %c128_225] : memref<128x512xbf16, #tpu.memory_space<vmem>>, vector<128x128xbf16>
    %cst_226 = arith.constant dense<0.000000e+00> : vector<128x128xf32>
    %340 = tpu.matmul %338, %339, %cst_226 {dimension_numbers = #tpu.dot_dimension_numbers<[1], [0], [0], [1], [0, 0, 1, 1], [], []>} : vector<128x128xbf16>, vector<128x128xbf16>, vector<128x128xf32> -> vector<128x128xf32>
    %c0_227 = arith.constant 0 : index
    %c128_228 = arith.constant 128 : index
    %341 = vector.load %arg7[%c0_227, %c128_228] : memref<1x512xf32, #tpu.memory_space<vmem>>, vector<1x128xf32>
    %342 = vector.broadcast %341 : vector<1x128xf32> to vector<128x128xf32>
    %343 = arith.addf %340, %342 : vector<128x128xf32>
    %c0_229 = arith.constant 0 : index
    %c128_230 = arith.constant 128 : index
    %344 = vector.load %arg12[%c0_229, %c128_230] : memref<128x512xf32, #tpu.memory_space<vmem>>, vector<128x128xf32>
    tpu.vector_store %arg12[%c0_229, %c128_230], %343 {strides = array<i32>} : memref<128x512xf32, #tpu.memory_space<vmem>>, vector<128x128xf32>,
    %c0_231 = arith.constant 0 : index
    %c0_232 = arith.constant 0 : index
    %345 = vector.load %arg11[%c0_231, %c0_232] : memref<128x128xbf16, #tpu.memory_space<vmem>>, vector<128x128xbf16>
    %c0_233 = arith.constant 0 : index
    %c256_234 = arith.constant 256 : index
    %346 = vector.load %arg5[%c0_233, %c256_234] : memref<128x512xbf16, #tpu.memory_space<vmem>>, vector<128x128xbf16>
    %cst_235 = arith.constant dense<0.000000e+00> : vector<128x128xf32>
    %347 = tpu.matmul %345, %346, %cst_235 {dimension_numbers = #tpu.dot_dimension_numbers<[1], [0], [0], [1], [0, 0, 1, 1], [], []>} : vector<128x128xbf16>, vector<128x128xbf16>, vector<128x128xf32> -> vector<128x128xf32>
    %c0_236 = arith.constant 0 : index
    %c256_237 = arith.constant 256 : index
    %348 = vector.load %arg7[%c0_236, %c256_237] : memref<1x512xf32, #tpu.memory_space<vmem>>, vector<1x128xf32>
    %349 = vector.broadcast %348 : vector<1x128xf32> to vector<128x128xf32>
    %350 = arith.addf %347, %349 : vector<128x128xf32>
    %c0_238 = arith.constant 0 : index
    %c256_239 = arith.constant 256 : index
    %351 = vector.load %arg12[%c0_238, %c256_239] : memref<128x512xf32, #tpu.memory_space<vmem>>, vector<128x128xf32>
    tpu.vector_store %arg12[%c0_238, %c256_239], %350 {strides = array<i32>} : memref<128x512xf32, #tpu.memory_space<vmem>>, vector<128x128xf32>,
    %c0_240 = arith.constant 0 : index
    %c0_241 = arith.constant 0 : index
    %352 = vector.load %arg11[%c0_240, %c0_241] : memref<128x128xbf16, #tpu.memory_space<vmem>>, vector<128x128xbf16>
    %c0_242 = arith.constant 0 : index
    %c384_243 = arith.constant 384 : index
    %353 = vector.load %arg5[%c0_242, %c384_243] : memref<128x512xbf16, #tpu.memory_space<vmem>>, vector<128x128xbf16>
    %cst_244 = arith.constant dense<0.000000e+00> : vector<128x128xf32>
    %354 = tpu.matmul %352, %353, %cst_244 {dimension_numbers = #tpu.dot_dimension_numbers<[1], [0], [0], [1], [0, 0, 1, 1], [], []>} : vector<128x128xbf16>, vector<128x128xbf16>, vector<128x128xf32> -> vector<128x128xf32>
    %c0_245 = arith.constant 0 : index
    %c384_246 = arith.constant 384 : index
    %355 = vector.load %arg7[%c0_245, %c384_246] : memref<1x512xf32, #tpu.memory_space<vmem>>, vector<1x128xf32>
    %356 = vector.broadcast %355 : vector<1x128xf32> to vector<128x128xf32>
    %357 = arith.addf %354, %356 : vector<128x128xf32>
    %c0_247 = arith.constant 0 : index
    %c384_248 = arith.constant 384 : index
    %358 = vector.load %arg12[%c0_247, %c384_248] : memref<128x512xf32, #tpu.memory_space<vmem>>, vector<128x128xf32>
    tpu.vector_store %arg12[%c0_247, %c384_248], %357 {strides = array<i32>} : memref<128x512xf32, #tpu.memory_space<vmem>>, vector<128x128xf32>,
    %c0_249 = arith.constant 0 : index
    %c0_250 = arith.constant 0 : index
    %359 = vector.load %arg12[%c0_249, %c0_250] : memref<128x512xf32, #tpu.memory_space<vmem>>, vector<16x128xf32>
    %c0_251 = arith.constant 0 : index
    %c256_252 = arith.constant 256 : index
    %360 = vector.load %arg12[%c0_251, %c256_252] : memref<128x512xf32, #tpu.memory_space<vmem>>, vector<16x128xf32>
    %c0_253 = arith.constant 0 : index
    %c384_254 = arith.constant 384 : index
    %361 = vector.load %arg12[%c0_253, %c384_254] : memref<128x512xf32, #tpu.memory_space<vmem>>, vector<16x128xf32>
    %362 = arith.negf %359 : vector<16x128xf32>
    %363 = math.exp %362 : vector<16x128xf32>
    %cst_255 = arith.constant 1.000000e+00 : f32
    %364 = vector.broadcast %cst_255 : f32 to vector<16x128xf32>
    %365 = arith.addf %364, %363 : vector<16x128xf32>
    %366 = arith.divf %364, %365 : vector<16x128xf32>
    %367 = math.tanh %360 : vector<16x128xf32>
    %368 = arith.negf %361 : vector<16x128xf32>
    %369 = math.exp %368 : vector<16x128xf32>
    %cst_256 = arith.constant 1.000000e+00 : f32
    %370 = vector.broadcast %cst_256 : f32 to vector<16x128xf32>
    %371 = arith.addf %370, %369 : vector<16x128xf32>
    %372 = arith.divf %370, %371 : vector<16x128xf32>
    %373 = arith.mulf %366, %367 : vector<16x128xf32>
    %374 = math.tanh %373 : vector<16x128xf32>
    %375 = arith.mulf %372, %374 : vector<16x128xf32>
    %376 = arith.truncf %375 : vector<16x128xf32> to vector<16x128xbf16>
    %c16_257 = arith.constant 16 : index
    %c0_258 = arith.constant 0 : index
    %377 = vector.load %arg12[%c16_257, %c0_258] : memref<128x512xf32, #tpu.memory_space<vmem>>, vector<16x128xf32>
    %c0_259 = arith.constant 0 : index
    %c0_260 = arith.constant 0 : index
    %378 = vector.load %arg6[%c0_259, %c0_260] : memref<128x512xbf16, #tpu.memory_space<vmem>>, vector<128x128xbf16>
    %cst_261 = arith.constant dense<0.000000e+00> : vector<16x128xf32>
    %379 = tpu.matmul %376, %378, %cst_261 {dimension_numbers = #tpu.dot_dimension_numbers<[1], [0], [0], [1], [0, 0, 1, 1], [], []>} : vector<16x128xbf16>, vector<128x128xbf16>, vector<16x128xf32> -> vector<16x128xf32>
    %380 = arith.addf %379, %377 : vector<16x128xf32>
    %c16_262 = arith.constant 16 : index
    %c128_263 = arith.constant 128 : index
    %381 = vector.load %arg12[%c16_262, %c128_263] : memref<128x512xf32, #tpu.memory_space<vmem>>, vector<16x128xf32>
    %c0_264 = arith.constant 0 : index
    %c128_265 = arith.constant 128 : index
    %382 = vector.load %arg6[%c0_264, %c128_265] : memref<128x512xbf16, #tpu.memory_space<vmem>>, vector<128x128xbf16>
    %cst_266 = arith.constant dense<0.000000e+00> : vector<16x128xf32>
    %383 = tpu.matmul %376, %382, %cst_266 {dimension_numbers = #tpu.dot_dimension_numbers<[1], [0], [0], [1], [0, 0, 1, 1], [], []>} : vector<16x128xbf16>, vector<128x128xbf16>, vector<16x128xf32> -> vector<16x128xf32>
    %384 = arith.addf %383, %381 : vector<16x128xf32>
    %c16_267 = arith.constant 16 : index
    %c256_268 = arith.constant 256 : index
    %385 = vector.load %arg12[%c16_267, %c256_268] : memref<128x512xf32, #tpu.memory_space<vmem>>, vector<16x128xf32>
    %c0_269 = arith.constant 0 : index
    %c256_270 = arith.constant 256 : index
    %386 = vector.load %arg6[%c0_269, %c256_270] : memref<128x512xbf16, #tpu.memory_space<vmem>>, vector<128x128xbf16>
    %cst_271 = arith.constant dense<0.000000e+00> : vector<16x128xf32>
    %387 = tpu.matmul %376, %386, %cst_271 {dimension_numbers = #tpu.dot_dimension_numbers<[1], [0], [0], [1], [0, 0, 1, 1], [], []>} : vector<16x128xbf16>, vector<128x128xbf16>, vector<16x128xf32> -> vector<16x128xf32>
    %388 = arith.addf %387, %385 : vector<16x128xf32>
    %c16_272 = arith.constant 16 : index
    %c384_273 = arith.constant 384 : index
    %389 = vector.load %arg12[%c16_272, %c384_273] : memref<128x512xf32, #tpu.memory_space<vmem>>, vector<16x128xf32>
    %c0_274 = arith.constant 0 : index
    %c384_275 = arith.constant 384 : index
    %390 = vector.load %arg6[%c0_274, %c384_275] : memref<128x512xbf16, #tpu.memory_space<vmem>>, vector<128x128xbf16>
    %cst_276 = arith.constant dense<0.000000e+00> : vector<16x128xf32>
    %391 = tpu.matmul %376, %390, %cst_276 {dimension_numbers = #tpu.dot_dimension_numbers<[1], [0], [0], [1], [0, 0, 1, 1], [], []>} : vector<16x128xbf16>, vector<128x128xbf16>, vector<16x128xf32> -> vector<16x128xf32>
    %392 = arith.addf %391, %389 : vector<16x128xf32>
    %393 = arith.negf %380 : vector<16x128xf32>
    %394 = math.exp %393 : vector<16x128xf32>
    %cst_277 = arith.constant 1.000000e+00 : f32
    %395 = vector.broadcast %cst_277 : f32 to vector<16x128xf32>
    %396 = arith.addf %395, %394 : vector<16x128xf32>
    %397 = arith.divf %395, %396 : vector<16x128xf32>
    %398 = arith.negf %384 : vector<16x128xf32>
    %399 = math.exp %398 : vector<16x128xf32>
    %cst_278 = arith.constant 1.000000e+00 : f32
    %400 = vector.broadcast %cst_278 : f32 to vector<16x128xf32>
    %401 = arith.addf %400, %399 : vector<16x128xf32>
    %402 = arith.divf %400, %401 : vector<16x128xf32>
    %403 = math.tanh %388 : vector<16x128xf32>
    %404 = arith.negf %392 : vector<16x128xf32>
    %405 = math.exp %404 : vector<16x128xf32>
    %cst_279 = arith.constant 1.000000e+00 : f32
    %406 = vector.broadcast %cst_279 : f32 to vector<16x128xf32>
    %407 = arith.addf %406, %405 : vector<16x128xf32>
    %408 = arith.divf %406, %407 : vector<16x128xf32>
    %409 = arith.mulf %402, %373 : vector<16x128xf32>
    %410 = arith.mulf %397, %403 : vector<16x128xf32>
    %411 = arith.addf %409, %410 : vector<16x128xf32>
    %412 = math.tanh %411 : vector<16x128xf32>
    %413 = arith.mulf %408, %412 : vector<16x128xf32>
    %414 = arith.truncf %413 : vector<16x128xf32> to vector<16x128xbf16>
    %c32_280 = arith.constant 32 : index
    %c0_281 = arith.constant 0 : index
    %415 = vector.load %arg12[%c32_280, %c0_281] : memref<128x512xf32, #tpu.memory_space<vmem>>, vector<16x128xf32>
    %c0_282 = arith.constant 0 : index
    %c0_283 = arith.constant 0 : index
    %416 = vector.load %arg6[%c0_282, %c0_283] : memref<128x512xbf16, #tpu.memory_space<vmem>>, vector<128x128xbf16>
    %cst_284 = arith.constant dense<0.000000e+00> : vector<16x128xf32>
    %417 = tpu.matmul %414, %416, %cst_284 {dimension_numbers = #tpu.dot_dimension_numbers<[1], [0], [0], [1], [0, 0, 1, 1], [], []>} : vector<16x128xbf16>, vector<128x128xbf16>, vector<16x128xf32> -> vector<16x128xf32>
    %418 = arith.addf %417, %415 : vector<16x128xf32>
    %c32_285 = arith.constant 32 : index
    %c128_286 = arith.constant 128 : index
    %419 = vector.load %arg12[%c32_285, %c128_286] : memref<128x512xf32, #tpu.memory_space<vmem>>, vector<16x128xf32>
    %c0_287 = arith.constant 0 : index
    %c128_288 = arith.constant 128 : index
    %420 = vector.load %arg6[%c0_287, %c128_288] : memref<128x512xbf16, #tpu.memory_space<vmem>>, vector<128x128xbf16>
    %cst_289 = arith.constant dense<0.000000e+00> : vector<16x128xf32>
    %421 = tpu.matmul %414, %420, %cst_289 {dimension_numbers = #tpu.dot_dimension_numbers<[1], [0], [0], [1], [0, 0, 1, 1], [], []>} : vector<16x128xbf16>, vector<128x128xbf16>, vector<16x128xf32> -> vector<16x128xf32>
    %422 = arith.addf %421, %419 : vector<16x128xf32>
    %c32_290 = arith.constant 32 : index
    %c256_291 = arith.constant 256 : index
    %423 = vector.load %arg12[%c32_290, %c256_291] : memref<128x512xf32, #tpu.memory_space<vmem>>, vector<16x128xf32>
    %c0_292 = arith.constant 0 : index
    %c256_293 = arith.constant 256 : index
    %424 = vector.load %arg6[%c0_292, %c256_293] : memref<128x512xbf16, #tpu.memory_space<vmem>>, vector<128x128xbf16>
    %cst_294 = arith.constant dense<0.000000e+00> : vector<16x128xf32>
    %425 = tpu.matmul %414, %424, %cst_294 {dimension_numbers = #tpu.dot_dimension_numbers<[1], [0], [0], [1], [0, 0, 1, 1], [], []>} : vector<16x128xbf16>, vector<128x128xbf16>, vector<16x128xf32> -> vector<16x128xf32>
    %426 = arith.addf %425, %423 : vector<16x128xf32>
    %c32_295 = arith.constant 32 : index
    %c384_296 = arith.constant 384 : index
    %427 = vector.load %arg12[%c32_295, %c384_296] : memref<128x512xf32, #tpu.memory_space<vmem>>, vector<16x128xf32>
    %c0_297 = arith.constant 0 : index
    %c384_298 = arith.constant 384 : index
    %428 = vector.load %arg6[%c0_297, %c384_298] : memref<128x512xbf16, #tpu.memory_space<vmem>>, vector<128x128xbf16>
    %cst_299 = arith.constant dense<0.000000e+00> : vector<16x128xf32>
    %429 = tpu.matmul %414, %428, %cst_299 {dimension_numbers = #tpu.dot_dimension_numbers<[1], [0], [0], [1], [0, 0, 1, 1], [], []>} : vector<16x128xbf16>, vector<128x128xbf16>, vector<16x128xf32> -> vector<16x128xf32>
    %430 = arith.addf %429, %427 : vector<16x128xf32>
    %431 = arith.negf %418 : vector<16x128xf32>
    %432 = math.exp %431 : vector<16x128xf32>
    %cst_300 = arith.constant 1.000000e+00 : f32
    %433 = vector.broadcast %cst_300 : f32 to vector<16x128xf32>
    %434 = arith.addf %433, %432 : vector<16x128xf32>
    %435 = arith.divf %433, %434 : vector<16x128xf32>
    %436 = arith.negf %422 : vector<16x128xf32>
    %437 = math.exp %436 : vector<16x128xf32>
    %cst_301 = arith.constant 1.000000e+00 : f32
    %438 = vector.broadcast %cst_301 : f32 to vector<16x128xf32>
    %439 = arith.addf %438, %437 : vector<16x128xf32>
    %440 = arith.divf %438, %439 : vector<16x128xf32>
    %441 = math.tanh %426 : vector<16x128xf32>
    %442 = arith.negf %430 : vector<16x128xf32>
    %443 = math.exp %442 : vector<16x128xf32>
    %cst_302 = arith.constant 1.000000e+00 : f32
    %444 = vector.broadcast %cst_302 : f32 to vector<16x128xf32>
    %445 = arith.addf %444, %443 : vector<16x128xf32>
    %446 = arith.divf %444, %445 : vector<16x128xf32>
    %447 = arith.mulf %440, %411 : vector<16x128xf32>
    %448 = arith.mulf %435, %441 : vector<16x128xf32>
    %449 = arith.addf %447, %448 : vector<16x128xf32>
    %450 = math.tanh %449 : vector<16x128xf32>
    %451 = arith.mulf %446, %450 : vector<16x128xf32>
    %452 = arith.truncf %451 : vector<16x128xf32> to vector<16x128xbf16>
    %c48_303 = arith.constant 48 : index
    %c0_304 = arith.constant 0 : index
    %453 = vector.load %arg12[%c48_303, %c0_304] : memref<128x512xf32, #tpu.memory_space<vmem>>, vector<16x128xf32>
    %c0_305 = arith.constant 0 : index
    %c0_306 = arith.constant 0 : index
    %454 = vector.load %arg6[%c0_305, %c0_306] : memref<128x512xbf16, #tpu.memory_space<vmem>>, vector<128x128xbf16>
    %cst_307 = arith.constant dense<0.000000e+00> : vector<16x128xf32>
    %455 = tpu.matmul %452, %454, %cst_307 {dimension_numbers = #tpu.dot_dimension_numbers<[1], [0], [0], [1], [0, 0, 1, 1], [], []>} : vector<16x128xbf16>, vector<128x128xbf16>, vector<16x128xf32> -> vector<16x128xf32>
    %456 = arith.addf %455, %453 : vector<16x128xf32>
    %c48_308 = arith.constant 48 : index
    %c128_309 = arith.constant 128 : index
    %457 = vector.load %arg12[%c48_308, %c128_309] : memref<128x512xf32, #tpu.memory_space<vmem>>, vector<16x128xf32>
    %c0_310 = arith.constant 0 : index
    %c128_311 = arith.constant 128 : index
    %458 = vector.load %arg6[%c0_310, %c128_311] : memref<128x512xbf16, #tpu.memory_space<vmem>>, vector<128x128xbf16>
    %cst_312 = arith.constant dense<0.000000e+00> : vector<16x128xf32>
    %459 = tpu.matmul %452, %458, %cst_312 {dimension_numbers = #tpu.dot_dimension_numbers<[1], [0], [0], [1], [0, 0, 1, 1], [], []>} : vector<16x128xbf16>, vector<128x128xbf16>, vector<16x128xf32> -> vector<16x128xf32>
    %460 = arith.addf %459, %457 : vector<16x128xf32>
    %c48_313 = arith.constant 48 : index
    %c256_314 = arith.constant 256 : index
    %461 = vector.load %arg12[%c48_313, %c256_314] : memref<128x512xf32, #tpu.memory_space<vmem>>, vector<16x128xf32>
    %c0_315 = arith.constant 0 : index
    %c256_316 = arith.constant 256 : index
    %462 = vector.load %arg6[%c0_315, %c256_316] : memref<128x512xbf16, #tpu.memory_space<vmem>>, vector<128x128xbf16>
    %cst_317 = arith.constant dense<0.000000e+00> : vector<16x128xf32>
    %463 = tpu.matmul %452, %462, %cst_317 {dimension_numbers = #tpu.dot_dimension_numbers<[1], [0], [0], [1], [0, 0, 1, 1], [], []>} : vector<16x128xbf16>, vector<128x128xbf16>, vector<16x128xf32> -> vector<16x128xf32>
    %464 = arith.addf %463, %461 : vector<16x128xf32>
    %c48_318 = arith.constant 48 : index
    %c384_319 = arith.constant 384 : index
    %465 = vector.load %arg12[%c48_318, %c384_319] : memref<128x512xf32, #tpu.memory_space<vmem>>, vector<16x128xf32>
    %c0_320 = arith.constant 0 : index
    %c384_321 = arith.constant 384 : index
    %466 = vector.load %arg6[%c0_320, %c384_321] : memref<128x512xbf16, #tpu.memory_space<vmem>>, vector<128x128xbf16>
    %cst_322 = arith.constant dense<0.000000e+00> : vector<16x128xf32>
    %467 = tpu.matmul %452, %466, %cst_322 {dimension_numbers = #tpu.dot_dimension_numbers<[1], [0], [0], [1], [0, 0, 1, 1], [], []>} : vector<16x128xbf16>, vector<128x128xbf16>, vector<16x128xf32> -> vector<16x128xf32>
    %468 = arith.addf %467, %465 : vector<16x128xf32>
    %469 = arith.negf %456 : vector<16x128xf32>
    %470 = math.exp %469 : vector<16x128xf32>
    %cst_323 = arith.constant 1.000000e+00 : f32
    %471 = vector.broadcast %cst_323 : f32 to vector<16x128xf32>
    %472 = arith.addf %471, %470 : vector<16x128xf32>
    %473 = arith.divf %471, %472 : vector<16x128xf32>
    %474 = arith.negf %460 : vector<16x128xf32>
    %475 = math.exp %474 : vector<16x128xf32>
    %cst_324 = arith.constant 1.000000e+00 : f32
    %476 = vector.broadcast %cst_324 : f32 to vector<16x128xf32>
    %477 = arith.addf %476, %475 : vector<16x128xf32>
    %478 = arith.divf %476, %477 : vector<16x128xf32>
    %479 = math.tanh %464 : vector<16x128xf32>
    %480 = arith.negf %468 : vector<16x128xf32>
    %481 = math.exp %480 : vector<16x128xf32>
    %cst_325 = arith.constant 1.000000e+00 : f32
    %482 = vector.broadcast %cst_325 : f32 to vector<16x128xf32>
    %483 = arith.addf %482, %481 : vector<16x128xf32>
    %484 = arith.divf %482, %483 : vector<16x128xf32>
    %485 = arith.mulf %478, %449 : vector<16x128xf32>
    %486 = arith.mulf %473, %479 : vector<16x128xf32>
    %487 = arith.addf %485, %486 : vector<16x128xf32>
    %488 = math.tanh %487 : vector<16x128xf32>
    %489 = arith.mulf %484, %488 : vector<16x128xf32>
    %490 = arith.truncf %489 : vector<16x128xf32> to vector<16x128xbf16>
    %c64_326 = arith.constant 64 : index
    %c0_327 = arith.constant 0 : index
    %491 = vector.load %arg12[%c64_326, %c0_327] : memref<128x512xf32, #tpu.memory_space<vmem>>, vector<16x128xf32>
    %c0_328 = arith.constant 0 : index
    %c0_329 = arith.constant 0 : index
    %492 = vector.load %arg6[%c0_328, %c0_329] : memref<128x512xbf16, #tpu.memory_space<vmem>>, vector<128x128xbf16>
    %cst_330 = arith.constant dense<0.000000e+00> : vector<16x128xf32>
    %493 = tpu.matmul %490, %492, %cst_330 {dimension_numbers = #tpu.dot_dimension_numbers<[1], [0], [0], [1], [0, 0, 1, 1], [], []>} : vector<16x128xbf16>, vector<128x128xbf16>, vector<16x128xf32> -> vector<16x128xf32>
    %494 = arith.addf %493, %491 : vector<16x128xf32>
    %c64_331 = arith.constant 64 : index
    %c128_332 = arith.constant 128 : index
    %495 = vector.load %arg12[%c64_331, %c128_332] : memref<128x512xf32, #tpu.memory_space<vmem>>, vector<16x128xf32>
    %c0_333 = arith.constant 0 : index
    %c128_334 = arith.constant 128 : index
    %496 = vector.load %arg6[%c0_333, %c128_334] : memref<128x512xbf16, #tpu.memory_space<vmem>>, vector<128x128xbf16>
    %cst_335 = arith.constant dense<0.000000e+00> : vector<16x128xf32>
    %497 = tpu.matmul %490, %496, %cst_335 {dimension_numbers = #tpu.dot_dimension_numbers<[1], [0], [0], [1], [0, 0, 1, 1], [], []>} : vector<16x128xbf16>, vector<128x128xbf16>, vector<16x128xf32> -> vector<16x128xf32>
    %498 = arith.addf %497, %495 : vector<16x128xf32>
    %c64_336 = arith.constant 64 : index
    %c256_337 = arith.constant 256 : index
    %499 = vector.load %arg12[%c64_336, %c256_337] : memref<128x512xf32, #tpu.memory_space<vmem>>, vector<16x128xf32>
    %c0_338 = arith.constant 0 : index
    %c256_339 = arith.constant 256 : index
    %500 = vector.load %arg6[%c0_338, %c256_339] : memref<128x512xbf16, #tpu.memory_space<vmem>>, vector<128x128xbf16>
    %cst_340 = arith.constant dense<0.000000e+00> : vector<16x128xf32>
    %501 = tpu.matmul %490, %500, %cst_340 {dimension_numbers = #tpu.dot_dimension_numbers<[1], [0], [0], [1], [0, 0, 1, 1], [], []>} : vector<16x128xbf16>, vector<128x128xbf16>, vector<16x128xf32> -> vector<16x128xf32>
    %502 = arith.addf %501, %499 : vector<16x128xf32>
    %c64_341 = arith.constant 64 : index
    %c384_342 = arith.constant 384 : index
    %503 = vector.load %arg12[%c64_341, %c384_342] : memref<128x512xf32, #tpu.memory_space<vmem>>, vector<16x128xf32>
    %c0_343 = arith.constant 0 : index
    %c384_344 = arith.constant 384 : index
    %504 = vector.load %arg6[%c0_343, %c384_344] : memref<128x512xbf16, #tpu.memory_space<vmem>>, vector<128x128xbf16>
    %cst_345 = arith.constant dense<0.000000e+00> : vector<16x128xf32>
    %505 = tpu.matmul %490, %504, %cst_345 {dimension_numbers = #tpu.dot_dimension_numbers<[1], [0], [0], [1], [0, 0, 1, 1], [], []>} : vector<16x128xbf16>, vector<128x128xbf16>, vector<16x128xf32> -> vector<16x128xf32>
    %506 = arith.addf %505, %503 : vector<16x128xf32>
    %507 = arith.negf %494 : vector<16x128xf32>
    %508 = math.exp %507 : vector<16x128xf32>
    %cst_346 = arith.constant 1.000000e+00 : f32
    %509 = vector.broadcast %cst_346 : f32 to vector<16x128xf32>
    %510 = arith.addf %509, %508 : vector<16x128xf32>
    %511 = arith.divf %509, %510 : vector<16x128xf32>
    %512 = arith.negf %498 : vector<16x128xf32>
    %513 = math.exp %512 : vector<16x128xf32>
    %cst_347 = arith.constant 1.000000e+00 : f32
    %514 = vector.broadcast %cst_347 : f32 to vector<16x128xf32>
    %515 = arith.addf %514, %513 : vector<16x128xf32>
    %516 = arith.divf %514, %515 : vector<16x128xf32>
    %517 = math.tanh %502 : vector<16x128xf32>
    %518 = arith.negf %506 : vector<16x128xf32>
    %519 = math.exp %518 : vector<16x128xf32>
    %cst_348 = arith.constant 1.000000e+00 : f32
    %520 = vector.broadcast %cst_348 : f32 to vector<16x128xf32>
    %521 = arith.addf %520, %519 : vector<16x128xf32>
    %522 = arith.divf %520, %521 : vector<16x128xf32>
    %523 = arith.mulf %516, %487 : vector<16x128xf32>
    %524 = arith.mulf %511, %517 : vector<16x128xf32>
    %525 = arith.addf %523, %524 : vector<16x128xf32>
    %526 = math.tanh %525 : vector<16x128xf32>
    %527 = arith.mulf %522, %526 : vector<16x128xf32>
    %528 = arith.truncf %527 : vector<16x128xf32> to vector<16x128xbf16>
    %c80_349 = arith.constant 80 : index
    %c0_350 = arith.constant 0 : index
    %529 = vector.load %arg12[%c80_349, %c0_350] : memref<128x512xf32, #tpu.memory_space<vmem>>, vector<16x128xf32>
    %c0_351 = arith.constant 0 : index
    %c0_352 = arith.constant 0 : index
    %530 = vector.load %arg6[%c0_351, %c0_352] : memref<128x512xbf16, #tpu.memory_space<vmem>>, vector<128x128xbf16>
    %cst_353 = arith.constant dense<0.000000e+00> : vector<16x128xf32>
    %531 = tpu.matmul %528, %530, %cst_353 {dimension_numbers = #tpu.dot_dimension_numbers<[1], [0], [0], [1], [0, 0, 1, 1], [], []>} : vector<16x128xbf16>, vector<128x128xbf16>, vector<16x128xf32> -> vector<16x128xf32>
    %532 = arith.addf %531, %529 : vector<16x128xf32>
    %c80_354 = arith.constant 80 : index
    %c128_355 = arith.constant 128 : index
    %533 = vector.load %arg12[%c80_354, %c128_355] : memref<128x512xf32, #tpu.memory_space<vmem>>, vector<16x128xf32>
    %c0_356 = arith.constant 0 : index
    %c128_357 = arith.constant 128 : index
    %534 = vector.load %arg6[%c0_356, %c128_357] : memref<128x512xbf16, #tpu.memory_space<vmem>>, vector<128x128xbf16>
    %cst_358 = arith.constant dense<0.000000e+00> : vector<16x128xf32>
    %535 = tpu.matmul %528, %534, %cst_358 {dimension_numbers = #tpu.dot_dimension_numbers<[1], [0], [0], [1], [0, 0, 1, 1], [], []>} : vector<16x128xbf16>, vector<128x128xbf16>, vector<16x128xf32> -> vector<16x128xf32>
    %536 = arith.addf %535, %533 : vector<16x128xf32>
    %c80_359 = arith.constant 80 : index
    %c256_360 = arith.constant 256 : index
    %537 = vector.load %arg12[%c80_359, %c256_360] : memref<128x512xf32, #tpu.memory_space<vmem>>, vector<16x128xf32>
    %c0_361 = arith.constant 0 : index
    %c256_362 = arith.constant 256 : index
    %538 = vector.load %arg6[%c0_361, %c256_362] : memref<128x512xbf16, #tpu.memory_space<vmem>>, vector<128x128xbf16>
    %cst_363 = arith.constant dense<0.000000e+00> : vector<16x128xf32>
    %539 = tpu.matmul %528, %538, %cst_363 {dimension_numbers = #tpu.dot_dimension_numbers<[1], [0], [0], [1], [0, 0, 1, 1], [], []>} : vector<16x128xbf16>, vector<128x128xbf16>, vector<16x128xf32> -> vector<16x128xf32>
    %540 = arith.addf %539, %537 : vector<16x128xf32>
    %c80_364 = arith.constant 80 : index
    %c384_365 = arith.constant 384 : index
    %541 = vector.load %arg12[%c80_364, %c384_365] : memref<128x512xf32, #tpu.memory_space<vmem>>, vector<16x128xf32>
    %c0_366 = arith.constant 0 : index
    %c384_367 = arith.constant 384 : index
    %542 = vector.load %arg6[%c0_366, %c384_367] : memref<128x512xbf16, #tpu.memory_space<vmem>>, vector<128x128xbf16>
    %cst_368 = arith.constant dense<0.000000e+00> : vector<16x128xf32>
    %543 = tpu.matmul %528, %542, %cst_368 {dimension_numbers = #tpu.dot_dimension_numbers<[1], [0], [0], [1], [0, 0, 1, 1], [], []>} : vector<16x128xbf16>, vector<128x128xbf16>, vector<16x128xf32> -> vector<16x128xf32>
    %544 = arith.addf %543, %541 : vector<16x128xf32>
    %545 = arith.negf %532 : vector<16x128xf32>
    %546 = math.exp %545 : vector<16x128xf32>
    %cst_369 = arith.constant 1.000000e+00 : f32
    %547 = vector.broadcast %cst_369 : f32 to vector<16x128xf32>
    %548 = arith.addf %547, %546 : vector<16x128xf32>
    %549 = arith.divf %547, %548 : vector<16x128xf32>
    %550 = arith.negf %536 : vector<16x128xf32>
    %551 = math.exp %550 : vector<16x128xf32>
    %cst_370 = arith.constant 1.000000e+00 : f32
    %552 = vector.broadcast %cst_370 : f32 to vector<16x128xf32>
    %553 = arith.addf %552, %551 : vector<16x128xf32>
    %554 = arith.divf %552, %553 : vector<16x128xf32>
    %555 = math.tanh %540 : vector<16x128xf32>
    %556 = arith.negf %544 : vector<16x128xf32>
    %557 = math.exp %556 : vector<16x128xf32>
    %cst_371 = arith.constant 1.000000e+00 : f32
    %558 = vector.broadcast %cst_371 : f32 to vector<16x128xf32>
    %559 = arith.addf %558, %557 : vector<16x128xf32>
    %560 = arith.divf %558, %559 : vector<16x128xf32>
    %561 = arith.mulf %554, %525 : vector<16x128xf32>
    %562 = arith.mulf %549, %555 : vector<16x128xf32>
    %563 = arith.addf %561, %562 : vector<16x128xf32>
    %564 = math.tanh %563 : vector<16x128xf32>
    %565 = arith.mulf %560, %564 : vector<16x128xf32>
    %566 = arith.truncf %565 : vector<16x128xf32> to vector<16x128xbf16>
    %c96_372 = arith.constant 96 : index
    %c0_373 = arith.constant 0 : index
    %567 = vector.load %arg12[%c96_372, %c0_373] : memref<128x512xf32, #tpu.memory_space<vmem>>, vector<16x128xf32>
    %c0_374 = arith.constant 0 : index
    %c0_375 = arith.constant 0 : index
    %568 = vector.load %arg6[%c0_374, %c0_375] : memref<128x512xbf16, #tpu.memory_space<vmem>>, vector<128x128xbf16>
    %cst_376 = arith.constant dense<0.000000e+00> : vector<16x128xf32>
    %569 = tpu.matmul %566, %568, %cst_376 {dimension_numbers = #tpu.dot_dimension_numbers<[1], [0], [0], [1], [0, 0, 1, 1], [], []>} : vector<16x128xbf16>, vector<128x128xbf16>, vector<16x128xf32> -> vector<16x128xf32>
    %570 = arith.addf %569, %567 : vector<16x128xf32>
    %c96_377 = arith.constant 96 : index
    %c128_378 = arith.constant 128 : index
    %571 = vector.load %arg12[%c96_377, %c128_378] : memref<128x512xf32, #tpu.memory_space<vmem>>, vector<16x128xf32>
    %c0_379 = arith.constant 0 : index
    %c128_380 = arith.constant 128 : index
    %572 = vector.load %arg6[%c0_379, %c128_380] : memref<128x512xbf16, #tpu.memory_space<vmem>>, vector<128x128xbf16>
    %cst_381 = arith.constant dense<0.000000e+00> : vector<16x128xf32>
    %573 = tpu.matmul %566, %572, %cst_381 {dimension_numbers = #tpu.dot_dimension_numbers<[1], [0], [0], [1], [0, 0, 1, 1], [], []>} : vector<16x128xbf16>, vector<128x128xbf16>, vector<16x128xf32> -> vector<16x128xf32>
    %574 = arith.addf %573, %571 : vector<16x128xf32>
    %c96_382 = arith.constant 96 : index
    %c256_383 = arith.constant 256 : index
    %575 = vector.load %arg12[%c96_382, %c256_383] : memref<128x512xf32, #tpu.memory_space<vmem>>, vector<16x128xf32>
    %c0_384 = arith.constant 0 : index
    %c256_385 = arith.constant 256 : index
    %576 = vector.load %arg6[%c0_384, %c256_385] : memref<128x512xbf16, #tpu.memory_space<vmem>>, vector<128x128xbf16>
    %cst_386 = arith.constant dense<0.000000e+00> : vector<16x128xf32>
    %577 = tpu.matmul %566, %576, %cst_386 {dimension_numbers = #tpu.dot_dimension_numbers<[1], [0], [0], [1], [0, 0, 1, 1], [], []>} : vector<16x128xbf16>, vector<128x128xbf16>, vector<16x128xf32> -> vector<16x128xf32>
    %578 = arith.addf %577, %575 : vector<16x128xf32>
    %c96_387 = arith.constant 96 : index
    %c384_388 = arith.constant 384 : index
    %579 = vector.load %arg12[%c96_387, %c384_388] : memref<128x512xf32, #tpu.memory_space<vmem>>, vector<16x128xf32>
    %c0_389 = arith.constant 0 : index
    %c384_390 = arith.constant 384 : index
    %580 = vector.load %arg6[%c0_389, %c384_390] : memref<128x512xbf16, #tpu.memory_space<vmem>>, vector<128x128xbf16>
    %cst_391 = arith.constant dense<0.000000e+00> : vector<16x128xf32>
    %581 = tpu.matmul %566, %580, %cst_391 {dimension_numbers = #tpu.dot_dimension_numbers<[1], [0], [0], [1], [0, 0, 1, 1], [], []>} : vector<16x128xbf16>, vector<128x128xbf16>, vector<16x128xf32> -> vector<16x128xf32>
    %582 = arith.addf %581, %579 : vector<16x128xf32>
    %583 = arith.negf %570 : vector<16x128xf32>
    %584 = math.exp %583 : vector<16x128xf32>
    %cst_392 = arith.constant 1.000000e+00 : f32
    %585 = vector.broadcast %cst_392 : f32 to vector<16x128xf32>
    %586 = arith.addf %585, %584 : vector<16x128xf32>
    %587 = arith.divf %585, %586 : vector<16x128xf32>
    %588 = arith.negf %574 : vector<16x128xf32>
    %589 = math.exp %588 : vector<16x128xf32>
    %cst_393 = arith.constant 1.000000e+00 : f32
    %590 = vector.broadcast %cst_393 : f32 to vector<16x128xf32>
    %591 = arith.addf %590, %589 : vector<16x128xf32>
    %592 = arith.divf %590, %591 : vector<16x128xf32>
    %593 = math.tanh %578 : vector<16x128xf32>
    %594 = arith.negf %582 : vector<16x128xf32>
    %595 = math.exp %594 : vector<16x128xf32>
    %cst_394 = arith.constant 1.000000e+00 : f32
    %596 = vector.broadcast %cst_394 : f32 to vector<16x128xf32>
    %597 = arith.addf %596, %595 : vector<16x128xf32>
    %598 = arith.divf %596, %597 : vector<16x128xf32>
    %599 = arith.mulf %592, %563 : vector<16x128xf32>
    %600 = arith.mulf %587, %593 : vector<16x128xf32>
    %601 = arith.addf %599, %600 : vector<16x128xf32>
    %602 = math.tanh %601 : vector<16x128xf32>
    %603 = arith.mulf %598, %602 : vector<16x128xf32>
    %604 = arith.truncf %603 : vector<16x128xf32> to vector<16x128xbf16>
    %c112_395 = arith.constant 112 : index
    %c0_396 = arith.constant 0 : index
    %605 = vector.load %arg12[%c112_395, %c0_396] : memref<128x512xf32, #tpu.memory_space<vmem>>, vector<16x128xf32>
    %c0_397 = arith.constant 0 : index
    %c0_398 = arith.constant 0 : index
    %606 = vector.load %arg6[%c0_397, %c0_398] : memref<128x512xbf16, #tpu.memory_space<vmem>>, vector<128x128xbf16>
    %cst_399 = arith.constant dense<0.000000e+00> : vector<16x128xf32>
    %607 = tpu.matmul %604, %606, %cst_399 {dimension_numbers = #tpu.dot_dimension_numbers<[1], [0], [0], [1], [0, 0, 1, 1], [], []>} : vector<16x128xbf16>, vector<128x128xbf16>, vector<16x128xf32> -> vector<16x128xf32>
    %608 = arith.addf %607, %605 : vector<16x128xf32>
    %c112_400 = arith.constant 112 : index
    %c128_401 = arith.constant 128 : index
    %609 = vector.load %arg12[%c112_400, %c128_401] : memref<128x512xf32, #tpu.memory_space<vmem>>, vector<16x128xf32>
    %c0_402 = arith.constant 0 : index
    %c128_403 = arith.constant 128 : index
    %610 = vector.load %arg6[%c0_402, %c128_403] : memref<128x512xbf16, #tpu.memory_space<vmem>>, vector<128x128xbf16>
    %cst_404 = arith.constant dense<0.000000e+00> : vector<16x128xf32>
    %611 = tpu.matmul %604, %610, %cst_404 {dimension_numbers = #tpu.dot_dimension_numbers<[1], [0], [0], [1], [0, 0, 1, 1], [], []>} : vector<16x128xbf16>, vector<128x128xbf16>, vector<16x128xf32> -> vector<16x128xf32>
    %612 = arith.addf %611, %609 : vector<16x128xf32>
    %c112_405 = arith.constant 112 : index
    %c256_406 = arith.constant 256 : index
    %613 = vector.load %arg12[%c112_405, %c256_406] : memref<128x512xf32, #tpu.memory_space<vmem>>, vector<16x128xf32>
    %c0_407 = arith.constant 0 : index
    %c256_408 = arith.constant 256 : index
    %614 = vector.load %arg6[%c0_407, %c256_408] : memref<128x512xbf16, #tpu.memory_space<vmem>>, vector<128x128xbf16>
    %cst_409 = arith.constant dense<0.000000e+00> : vector<16x128xf32>
    %615 = tpu.matmul %604, %614, %cst_409 {dimension_numbers = #tpu.dot_dimension_numbers<[1], [0], [0], [1], [0, 0, 1, 1], [], []>} : vector<16x128xbf16>, vector<128x128xbf16>, vector<16x128xf32> -> vector<16x128xf32>
    %616 = arith.addf %615, %613 : vector<16x128xf32>
    %c112_410 = arith.constant 112 : index
    %c384_411 = arith.constant 384 : index
    %617 = vector.load %arg12[%c112_410, %c384_411] : memref<128x512xf32, #tpu.memory_space<vmem>>, vector<16x128xf32>
    %c0_412 = arith.constant 0 : index
    %c384_413 = arith.constant 384 : index
    %618 = vector.load %arg6[%c0_412, %c384_413] : memref<128x512xbf16, #tpu.memory_space<vmem>>, vector<128x128xbf16>
    %cst_414 = arith.constant dense<0.000000e+00> : vector<16x128xf32>
    %619 = tpu.matmul %604, %618, %cst_414 {dimension_numbers = #tpu.dot_dimension_numbers<[1], [0], [0], [1], [0, 0, 1, 1], [], []>} : vector<16x128xbf16>, vector<128x128xbf16>, vector<16x128xf32> -> vector<16x128xf32>
    %620 = arith.addf %619, %617 : vector<16x128xf32>
    %621 = arith.negf %608 : vector<16x128xf32>
    %622 = math.exp %621 : vector<16x128xf32>
    %cst_415 = arith.constant 1.000000e+00 : f32
    %623 = vector.broadcast %cst_415 : f32 to vector<16x128xf32>
    %624 = arith.addf %623, %622 : vector<16x128xf32>
    %625 = arith.divf %623, %624 : vector<16x128xf32>
    %626 = arith.negf %612 : vector<16x128xf32>
    %627 = math.exp %626 : vector<16x128xf32>
    %cst_416 = arith.constant 1.000000e+00 : f32
    %628 = vector.broadcast %cst_416 : f32 to vector<16x128xf32>
    %629 = arith.addf %628, %627 : vector<16x128xf32>
    %630 = arith.divf %628, %629 : vector<16x128xf32>
    %631 = math.tanh %616 : vector<16x128xf32>
    %632 = arith.negf %620 : vector<16x128xf32>
    %633 = math.exp %632 : vector<16x128xf32>
    %cst_417 = arith.constant 1.000000e+00 : f32
    %634 = vector.broadcast %cst_417 : f32 to vector<16x128xf32>
    %635 = arith.addf %634, %633 : vector<16x128xf32>
    %636 = arith.divf %634, %635 : vector<16x128xf32>
    %637 = arith.mulf %630, %601 : vector<16x128xf32>
    %638 = arith.mulf %625, %631 : vector<16x128xf32>
    %639 = arith.addf %637, %638 : vector<16x128xf32>
    %640 = math.tanh %639 : vector<16x128xf32>
    %641 = arith.mulf %636, %640 : vector<16x128xf32>
    %c0_418 = arith.constant 0 : index
    %c0_419 = arith.constant 0 : index
    %642 = vector.load %arg8[%c0_418, %c0_419] : memref<128x128xf32, #tpu.memory_space<vmem>>, vector<128x128xf32>
    %cst_420 = arith.constant dense<0.000000e+00> : vector<16x128xf32>
    %643 = tpu.matmul %641, %642, %cst_420 {dimension_numbers = #tpu.dot_dimension_numbers<[1], [0], [0], [1], [0, 0, 1, 1], [], []>} : vector<16x128xf32>, vector<128x128xf32>, vector<16x128xf32> -> vector<16x128xf32>
    %c0_421 = arith.constant 0 : index
    %c0_422 = arith.constant 0 : index
    %644 = vector.load %arg9[%c0_421, %c0_422] : memref<1x128xf32, #tpu.memory_space<vmem>>, vector<1x128xf32>
    %645 = vector.broadcast %644 : vector<1x128xf32> to vector<16x128xf32>
    %646 = arith.addf %643, %645 : vector<16x128xf32>
    %c0_423 = arith.constant 0 : index
    %c0_424 = arith.constant 0 : index
    %c0_425 = arith.constant 0 : index
    %647 = vector.load %arg10[%c0_423, %c0_424, %c0_425] : memref<1x16x128xf32, #tpu.memory_space<vmem>>, vector<1x16x128xf32>
    %648 = vector.shape_cast %647 : vector<1x16x128xf32> to vector<16x128xf32>
    %649 = vector.shape_cast %646 : vector<16x128xf32> to vector<1x16x128xf32>
    tpu.vector_store %arg10[%c0_423, %c0_424, %c0_425], %649 {strides = array<i32>} : memref<1x16x128xf32, #tpu.memory_space<vmem>>, vector<1x16x128xf32>,
    return
  }
  func.func @transform_0(%arg0: i32) -> (i32, i32, i32) {
    %c0_i32 = arith.constant 0 : i32
    %c0_i32_0 = arith.constant 0 : i32
    %c0_i32_1 = arith.constant 0 : i32
    return %arg0, %c0_i32, %c0_i32_0 : i32, i32, i32
  }
  func.func @transform_1(%arg0: i32) -> (i32, i32) {
    %c0_i32 = arith.constant 0 : i32
    %c0_i32_0 = arith.constant 0 : i32
    %c0_i32_1 = arith.constant 0 : i32
    return %c0_i32, %c0_i32_0 : i32, i32
  }
  func.func @transform_2(%arg0: i32) -> (i32, i32) {
    %c0_i32 = arith.constant 0 : i32
    %c0_i32_0 = arith.constant 0 : i32
    %c0_i32_1 = arith.constant 0 : i32
    return %c0_i32, %c0_i32_0 : i32, i32
  }
  func.func @transform_3(%arg0: i32) -> (i32, i32) {
    %c0_i32 = arith.constant 0 : i32
    %c0_i32_0 = arith.constant 0 : i32
    %c0_i32_1 = arith.constant 0 : i32
    return %c0_i32, %c0_i32_0 : i32, i32
  }
  func.func @transform_4(%arg0: i32) -> (i32, i32) {
    %c0_i32 = arith.constant 0 : i32
    %c0_i32_0 = arith.constant 0 : i32
    %c0_i32_1 = arith.constant 0 : i32
    return %c0_i32, %c0_i32_0 : i32, i32
  }
  func.func @transform_5(%arg0: i32) -> (i32, i32) {
    %c0_i32 = arith.constant 0 : i32
    %c0_i32_0 = arith.constant 0 : i32
    %c0_i32_1 = arith.constant 0 : i32
    return %c0_i32, %c0_i32_0 : i32, i32
  }
  func.func @transform_6(%arg0: i32) -> (i32, i32) {
    %c0_i32 = arith.constant 0 : i32
    %c0_i32_0 = arith.constant 0 : i32
    %c0_i32_1 = arith.constant 0 : i32
    return %c0_i32, %c0_i32_0 : i32, i32
  }
  func.func @transform_7(%arg0: i32) -> (i32, i32) {
    %c0_i32 = arith.constant 0 : i32
    %c0_i32_0 = arith.constant 0 : i32
    %c0_i32_1 = arith.constant 0 : i32
    return %c0_i32, %c0_i32_0 : i32, i32
  }
  func.func @transform_8(%arg0: i32) -> (i32, i32) {
    %c0_i32 = arith.constant 0 : i32
    %c0_i32_0 = arith.constant 0 : i32
    %c0_i32_1 = arith.constant 0 : i32
    return %c0_i32, %c0_i32_0 : i32, i32
  }
  func.func @transform_9(%arg0: i32) -> (i32, i32, i32) {
    %c0_i32 = arith.constant 0 : i32
    %c0_i32_0 = arith.constant 0 : i32
    %c0_i32_1 = arith.constant 0 : i32
    return %arg0, %c0_i32, %c0_i32_0 : i32, i32, i32
  }
}

</mosaic_0001>

<llo_original>
// kernel: lstm_model_forward.1
$region0: #{lstm_model_forward.1}
  #allocation0 [shape = 'u32[]', space=smem, size = 0x4, offset = 0x4, fixed_abs, tag = 'smem constant byte address 0x4 - core index']
  #allocation1 [shape = 'u32[144,128]{1,0:T(1,128)}', space=vmem, size = 0x12000, scoped, tag = 'internal scratch']
  #allocation2 [shape = 'bf16[128,128]{1,0:T(16,128)(2,1)}', space=vmem, size = 0x8000, scoped, tag = 'scratch operand']
  #allocation3 [shape = 'f32[128,512]{1,0:T(8,128)}', space=vmem, size = 0x40000, scoped, tag = 'scratch operand']
  %s0 = inlined_call_operand.vmem [shape: bf16[1,128,4], index: 0, kind: input, shape index: {}]
  %s1 = inlined_call_operand.vmem [shape: bf16[4,512], index: 1, kind: input, shape index: {}]
  %s2 = inlined_call_operand.hbm [shape: bf16[128,512], index: 2, kind: input, shape index: {}]
  %s3 = inlined_call_operand.vmem [shape: f32[1,512], index: 3, kind: input, shape index: {}]
  %s4 = inlined_call_operand.hbm [shape: bf16[128,512], index: 4, kind: input, shape index: {}]
  %s5 = inlined_call_operand.hbm [shape: bf16[128,512], index: 5, kind: input, shape index: {}]
  %s6 = inlined_call_operand.vmem [shape: f32[1,512], index: 6, kind: input, shape index: {}]
  %s7 = inlined_call_operand.hbm [shape: f32[128,128], index: 7, kind: input, shape index: {}]
  %s8 = inlined_call_operand.vmem [shape: f32[1,128], index: 8, kind: input, shape index: {}]
  %s9 = inlined_call_operand.vmem [shape: f32[1,16,128], index: 9, kind: output, shape index: {}]
  %s10 = sld [smem:[#allocation0]]
  $region62: #{lstm_model_forward.1} parent=0
    _
  %s12 = ssub.s32 1, %s10
  %s13 = scalar_select 0, %s12, %s10
  $region1: #{lstm_model_forward.1} parent=0
    #allocation4 [shape = 'u8[131072]{0}', space=vmem, size = 0x20000, scoped, tag = 'input window, operand 2, single buffered']
    #allocation5 [shape = 's32[1]{0}', space=sflag, size = 0x4, scoped, tag = 'scoped memory for lstm_model_forward.1']
    #allocation6 [shape = 'u8[131072]{0}', space=vmem, size = 0x20000, scoped, tag = 'input window, operand 4, single buffered']
    #allocation7 [shape = 's32[1]{0}', space=sflag, size = 0x4, scoped, tag = 'scoped memory for lstm_model_forward.1']
    #allocation8 [shape = 'u8[131072]{0}', space=vmem, size = 0x20000, scoped, tag = 'input window, operand 5, single buffered']
    #allocation9 [shape = 'u8[65536]{0}', space=vmem, size = 0x10000, scoped, tag = 'input window, operand 7, single buffered']
    #allocation10 [shape = 's32[1]{0}', space=sflag, size = 0x4, scoped, tag = 'scoped memory for lstm_model_forward.1']
    %14 = vsyncpa [#allocation5], 0
    %15 = vsyncpa [#allocation7], 0
    %16 = vsyncpa [#allocation10], 0
    // Predicated region
    $region2: #{lstm_model_forward.1} parent=1 // pred_check
      _
    $region3: #{lstm_model_forward.1} parent=1 // pred_check_branch
      %18 = sbr.rel (0) target = $region5
    $region4: #{lstm_model_forward.1} parent=1 // pred_region
      _
    $region5: #{lstm_model_forward.1} parent=1 // pred_fallthru
      _
    // Predicated region
    $region6: #{lstm_model_forward.1} parent=1 // pred_check
      _
    $region7: #{lstm_model_forward.1} parent=1 // pred_check_branch
      %20 = sbr.rel (0) target = $region9
    $region8: #{lstm_model_forward.1} parent=1 // pred_region
      _
    $region9: #{lstm_model_forward.1} parent=1 // pred_fallthru
      _
    // Predicated region
    $region10: #{lstm_model_forward.1} parent=1 // pred_check
      _
    $region11: #{lstm_model_forward.1} parent=1 // pred_check_branch
      %22 = sbr.rel (0) target = $region13
    $region12: #{lstm_model_forward.1} parent=1 // pred_region
      %s24 = ssub.s32 4096, 4096
      %25 = vsyncadd [#allocation5], %s24
      %s26 = sshll.u32 [#allocation4], 4
      %s27 = int_to_ptr.vmem [resolvable:$true] %s26
      %32 = dma.hbm_to_vmem [thread:$0]  %s2, 4096, %s27, [#allocation5], 256, 256, 16
    $region13: #{lstm_model_forward.1} parent=1 // pred_fallthru
      _
    // Predicated region
    $region14: #{lstm_model_forward.1} parent=1 // pred_check
      _
    $region15: #{lstm_model_forward.1} parent=1 // pred_check_branch
      %34 = sbr.rel (0) target = $region17
    $region16: #{lstm_model_forward.1} parent=1 // pred_region
      _
    $region17: #{lstm_model_forward.1} parent=1 // pred_fallthru
      _
    // Predicated region
    $region18: #{lstm_model_forward.1} parent=1 // pred_check
      _
    $region19: #{lstm_model_forward.1} parent=1 // pred_check_branch
      %36 = sbr.rel (0) target = $region21
    $region20: #{lstm_model_forward.1} parent=1 // pred_region
      %s38 = ssub.s32 4096, 4096
      %39 = vsyncadd [#allocation7], %s38
      %s40 = sshll.u32 [#allocation6], 4
      %s41 = int_to_ptr.vmem [resolvable:$true] %s40
      %46 = dma.hbm_to_vmem [thread:$0]  %s4, 4096, %s41, [#allocation7], 256, 256, 16
    $region21: #{lstm_model_forward.1} parent=1 // pred_fallthru
      _
    // Predicated region
    $region22: #{lstm_model_forward.1} parent=1 // pred_check
      _
    $region23: #{lstm_model_forward.1} parent=1 // pred_check_branch
      %48 = sbr.rel (0) target = $region25
    $region24: #{lstm_model_forward.1} parent=1 // pred_region
      %s50 = ssub.s32 4096, 4096
      %51 = vsyncadd [#allocation7], %s50
      %s52 = sshll.u32 [#allocation8], 4
      %s53 = int_to_ptr.vmem [resolvable:$true] %s52
      %58 = dma.hbm_to_vmem [thread:$0]  %s5, 4096, %s53, [#allocation7], 256, 256, 16
    $region25: #{lstm_model_forward.1} parent=1 // pred_fallthru
      _
    // Predicated region
    $region26: #{lstm_model_forward.1} parent=1 // pred_check
      _
    $region27: #{lstm_model_forward.1} parent=1 // pred_check_branch
      %60 = sbr.rel (0) target = $region29
    $region28: #{lstm_model_forward.1} parent=1 // pred_region
      _
    $region29: #{lstm_model_forward.1} parent=1 // pred_fallthru
      _
    // Predicated region
    $region30: #{lstm_model_forward.1} parent=1 // pred_check
      _
    $region31: #{lstm_model_forward.1} parent=1 // pred_check_branch
      %62 = sbr.rel (0) target = $region33
    $region32: #{lstm_model_forward.1} parent=1 // pred_region
      %s64 = ssub.s32 2048, 2048
      %65 = vsyncadd [#allocation10], %s64
      %s66 = sshll.u32 [#allocation9], 4
      %s67 = int_to_ptr.vmem [resolvable:$true] %s66
      %72 = dma.hbm_to_vmem [thread:$0]  %s7, 2048, %s67, [#allocation10], 128, 128, 8
    $region33: #{lstm_model_forward.1} parent=1 // pred_fallthru
      _
    // Predicated region
    $region34: #{lstm_model_forward.1} parent=1 // pred_check
      _
    $region35: #{lstm_model_forward.1} parent=1 // pred_check_branch
      %74 = sbr.rel (0) target = $region37
    $region36: #{lstm_model_forward.1} parent=1 // pred_region
      _
    $region37: #{lstm_model_forward.1} parent=1 // pred_fallthru
      _
    // Predicated region
    $region38: #{lstm_model_forward.1} parent=1 // pred_check
      _
    $region39: #{lstm_model_forward.1} parent=1 // pred_check_branch
      %76 = sbr.rel (0) target = $region41
    $region40: #{lstm_model_forward.1} parent=1 // pred_region
      %77 = dma.done [#allocation5], 4096
    $region41: #{lstm_model_forward.1} parent=1 // pred_fallthru
      _
    // Predicated region
    $region42: #{lstm_model_forward.1} parent=1 // pred_check
      _
    $region43: #{lstm_model_forward.1} parent=1 // pred_check_branch
      %79 = sbr.rel (0) target = $region45
    $region44: #{lstm_model_forward.1} parent=1 // pred_region
      %80 = dma.done [#allocation7], 4096
    $region45: #{lstm_model_forward.1} parent=1 // pred_fallthru
      _
    // Predicated region
    $region46: #{lstm_model_forward.1} parent=1 // pred_check
      _
    $region47: #{lstm_model_forward.1} parent=1 // pred_check_branch
      %82 = sbr.rel (0) target = $region49
    $region48: #{lstm_model_forward.1} parent=1 // pred_region
      %83 = dma.done [#allocation7], 4096
    $region49: #{lstm_model_forward.1} parent=1 // pred_fallthru
      _
    // Predicated region
    $region50: #{lstm_model_forward.1} parent=1 // pred_check
      _
    $region51: #{lstm_model_forward.1} parent=1 // pred_check_branch
      %85 = sbr.rel (0) target = $region53
    $region52: #{lstm_model_forward.1} parent=1 // pred_region
      %86 = dma.done [#allocation10], 2048
    $region53: #{lstm_model_forward.1} parent=1 // pred_fallthru
      _
    %v88 = vld [vmem:[%s0] sm:$0xf]
    %v89 = vld [vmem:[%s0 + $0x4] sm:$0xf]
    %v90 = vld [vmem:[%s0 + $0x8] sm:$0xf]
    %v91 = vld [vmem:[%s0 + $0xc] sm:$0xf]
    %v92 = vld [vmem:[%s0 + $0x10] sm:$0xf]
    %v93 = vld [vmem:[%s0 + $0x14] sm:$0xf]
    %v94 = vld [vmem:[%s0 + $0x18] sm:$0xf]
    %v95 = vld [vmem:[%s0 + $0x1c] sm:$0xf]
    %v96 = vld [vmem:[%s0 + $0x20] sm:$0xf]
    %v97 = vld [vmem:[%s0 + $0x24] sm:$0xf]
    %v98 = vld [vmem:[%s0 + $0x28] sm:$0xf]
    %v99 = vld [vmem:[%s0 + $0x2c] sm:$0xf]
    %v100 = vld [vmem:[%s0 + $0x30] sm:$0xf]
    %v101 = vld [vmem:[%s0 + $0x34] sm:$0xf]
    %v102 = vld [vmem:[%s0 + $0x38] sm:$0xf]
    %v103 = vld [vmem:[%s0 + $0x3c] sm:$0xf]
    %v104 = vld [vmem:[%s1] sm:$0x3]
    %v105 = vld [vmem:[%s3] sm:$0x1]
    %v107 = vlaneseq
    %v108 = vshrl.u32 %v107, 7
    %v109 = vsub.s32 0, %v108
    %v110 = vrot.slane %v105, %v109
    %v128 = vunpack.c.l.b16 %v88
    %v129 = vunpack.c.l.b16 %v89
    %v130 = vunpack.c.l.b16 %v90
    %v131 = vunpack.c.l.b16 %v91
    %v132 = vunpack.c.l.b16 %v92
    %v133 = vunpack.c.l.b16 %v93
    %v134 = vunpack.c.l.b16 %v94
    %v135 = vunpack.c.l.b16 %v95
    %v136 = vunpack.c.l.b16 %v96
    %v137 = vunpack.c.l.b16 %v97
    %v138 = vunpack.c.l.b16 %v98
    %v139 = vunpack.c.l.b16 %v99
    %v140 = vunpack.c.l.b16 %v100
    %v141 = vunpack.c.l.b16 %v101
    %v142 = vunpack.c.l.b16 %v102
    %v143 = vunpack.c.l.b16 %v103
    %v144 = vpack.c.b16 %v129, %v128
    %v145 = vpack.c.b16 %v131, %v130
    %v146 = vpack.c.b16 %v133, %v132
    %v147 = vpack.c.b16 %v135, %v134
    %v148 = vpack.c.b16 %v137, %v136
    %v149 = vpack.c.b16 %v139, %v138
    %v150 = vpack.c.b16 %v141, %v140
    %v151 = vpack.c.b16 %v143, %v142
    %vm152 = vcmask 31744
    %v154 = vsel %vm152, %v144, 0
    %v157 = vsel %vm152, %v145, 0
    %v160 = vsel %vm152, %v146, 0
    %v163 = vsel %vm152, %v147, 0
    %v166 = vsel %vm152, %v148, 0
    %v169 = vsel %vm152, %v149, 0
    %v172 = vsel %vm152, %v150, 0
    %v175 = vsel %vm152, %v151, 0
    %vm177 = vcmask 1041408
    %v179 = vsel %vm177, %v104, 0
    %181 = vmatprep.subr.bf16.mxu0 0
    %182 = vmatpush1.bf16.msra.mxu0 %v179
    %183 = vmatprep.subr.bf16.mxu0 0
    %184 = vmatpush1.bf16.msra.mxu0 0
    %185 = vmatprep.subr.bf16.mxu0 0
    %186 = vmatpush1.bf16.msra.mxu0 0
    %187 = vmatprep.subr.bf16.mxu0 0
    %188 = vmatpush1.bf16.msra.mxu0 0
    %189 = vmatprep.subr.bf16.mxu0 0
    %190 = vmatpush1.bf16.msra.mxu0 0
    %191 = vmatprep.subr.bf16.mxu0 0
    %192 = vmatpush1.bf16.msra.mxu0 0
    %193 = vmatprep.subr.bf16.mxu0 0
    %194 = vmatpush1.bf16.msra.mxu0 0
    %195 = vmatprep.subr.bf16.mxu0 0
    %196 = vmatpush1.bf16.msra.mxu0 0
    %197 = vmatprep.subr.bf16.mxu0 0
    %198 = vmatpush1.bf16.msra.mxu0 0
    %199 = vmatprep.subr.bf16.mxu0 0
    %200 = vmatpush1.bf16.msra.mxu0 0
    %201 = vmatprep.subr.bf16.mxu0 0
    %202 = vmatpush1.bf16.msra.mxu0 0
    %203 = vmatprep.subr.bf16.mxu0 0
    %204 = vmatpush1.bf16.msra.mxu0 0
    %205 = vmatprep.subr.bf16.mxu0 0
    %206 = vmatpush1.bf16.msra.mxu0 0
    %207 = vmatprep.subr.bf16.mxu0 0
    %208 = vmatpush1.bf16.msra.mxu0 0
    %209 = vmatprep.subr.bf16.mxu0 0
    %210 = vmatpush1.bf16.msra.mxu0 0
    %211 = vmatprep.subr.bf16.mxu0 0
    %212 = vmatpush1.bf16.msra.mxu0 0
    %213 = vmatprep.mubr.bf16.mxu0 0
    %214 = vmatmul.mubr.bf16.gmra.mrb[0].mxu0 %v154
    %v215 = vpop.f32.mrb[0].mxu0
    %v216 = vadd.f32 %v110, %v215
    %v217 = vpop.f32.mrb[0].mxu0
    %v218 = vpop.f32.mrb[0].mxu0
    %v219 = vadd.f32 %v110, %v218
    %v220 = vpop.f32.mrb[0].mxu0
    %221 = vmatprep.mubr.bf16.mxu0 0
    %222 = vmatmul.mubr.bf16.gmra.mrb[0].mxu0 %v157
    %v223 = vpop.f32.mrb[0].mxu0
    %v224 = vadd.f32 %v110, %v223
    %v225 = vpop.f32.mrb[0].mxu0
    %v226 = vpop.f32.mrb[0].mxu0
    %v227 = vadd.f32 %v110, %v226
    %v228 = vpop.f32.mrb[0].mxu0
    %229 = vmatprep.mubr.bf16.mxu0 0
    %230 = vmatmul.mubr.bf16.gmra.mrb[0].mxu0 %v160
    %v231 = vpop.f32.mrb[0].mxu0
    %v232 = vadd.f32 %v110, %v231
    %v233 = vpop.f32.mrb[0].mxu0
    %v234 = vpop.f32.mrb[0].mxu0
    %v235 = vadd.f32 %v110, %v234
    %v236 = vpop.f32.mrb[0].mxu0
    %237 = vmatprep.mubr.bf16.mxu0 0
    %238 = vmatmul.mubr.bf16.gmra.mrb[0].mxu0 %v163
    %v239 = vpop.f32.mrb[0].mxu0
    %v240 = vadd.f32 %v110, %v239
    %v241 = vpop.f32.mrb[0].mxu0
    %v242 = vpop.f32.mrb[0].mxu0
    %v243 = vadd.f32 %v110, %v242
    %v244 = vpop.f32.mrb[0].mxu0
    %245 = vmatprep.mubr.bf16.mxu0 0
    %246 = vmatmul.mubr.bf16.gmra.mrb[0].mxu0 %v166
    %v247 = vpop.f32.mrb[0].mxu0
    %v248 = vadd.f32 %v110, %v247
    %v249 = vpop.f32.mrb[0].mxu0
    %v250 = vpop.f32.mrb[0].mxu0
    %v251 = vadd.f32 %v110, %v250
    %v252 = vpop.f32.mrb[0].mxu0
    %253 = vmatprep.mubr.bf16.mxu0 0
    %254 = vmatmul.mubr.bf16.gmra.mrb[0].mxu0 %v169
    %v255 = vpop.f32.mrb[0].mxu0
    %v256 = vadd.f32 %v110, %v255
    %v257 = vpop.f32.mrb[0].mxu0
    %v258 = vpop.f32.mrb[0].mxu0
    %v259 = vadd.f32 %v110, %v258
    %v260 = vpop.f32.mrb[0].mxu0
    %261 = vmatprep.mubr.bf16.mxu0 0
    %262 = vmatmul.mubr.bf16.gmra.mrb[0].mxu0 %v172
    %v263 = vpop.f32.mrb[0].mxu0
    %v264 = vadd.f32 %v110, %v263
    %v265 = vpop.f32.mrb[0].mxu0
    %v266 = vpop.f32.mrb[0].mxu0
    %v267 = vadd.f32 %v110, %v266
    %v268 = vpop.f32.mrb[0].mxu0
    %269 = vmatprep.mubr.bf16.mxu0 0
    %270 = vmatmul.mubr.bf16.gmra.mrb[0].mxu0 %v175
    %v271 = vpop.f32.mrb[0].mxu0
    %v272 = vadd.f32 %v110, %v271
    %v273 = vpop.f32.mrb[0].mxu0
    %v274 = vpop.f32.mrb[0].mxu0
    %v275 = vadd.f32 %v110, %v274
    %v276 = vpop.f32.mrb[0].mxu0
    %277 = vdwg.mxu0
    %278 = vst [vmem:[#allocation3] sm:$0xff] %v216
    %279 = vst [vmem:[#allocation3 + $0x20] sm:$0xff] %v219
    %280 = vst [vmem:[#allocation3 + $0x40] sm:$0xff] %v224
    %281 = vst [vmem:[#allocation3 + $0x60] sm:$0xff] %v227
    %282 = vst [vmem:[#allocation3 + $0x80] sm:$0xff] %v232
    %283 = vst [vmem:[#allocation3 + $0xa0] sm:$0xff] %v235
    %284 = vst [vmem:[#allocation3 + $0xc0] sm:$0xff] %v240
    %285 = vst [vmem:[#allocation3 + $0xe0] sm:$0xff] %v243
    %286 = vst [vmem:[#allocation3 + $0x100] sm:$0xff] %v248
    %287 = vst [vmem:[#allocation3 + $0x120] sm:$0xff] %v251
    %288 = vst [vmem:[#allocation3 + $0x140] sm:$0xff] %v256
    %289 = vst [vmem:[#allocation3 + $0x160] sm:$0xff] %v259
    %290 = vst [vmem:[#allocation3 + $0x180] sm:$0xff] %v264
    %291 = vst [vmem:[#allocation3 + $0x1a0] sm:$0xff] %v267
    %292 = vst [vmem:[#allocation3 + $0x1c0] sm:$0xff] %v272
    %293 = vst [vmem:[#allocation3 + $0x1e0] sm:$0xff] %v275
    %v294 = vld [vmem:[%s0] sm:$0xf]
    %v295 = vld [vmem:[%s0 + $0x4] sm:$0xf]
    %v296 = vld [vmem:[%s0 + $0x8] sm:$0xf]
    %v297 = vld [vmem:[%s0 + $0xc] sm:$0xf]
    %v298 = vld [vmem:[%s0 + $0x10] sm:$0xf]
    %v299 = vld [vmem:[%s0 + $0x14] sm:$0xf]
    %v300 = vld [vmem:[%s0 + $0x18] sm:$0xf]
    %v301 = vld [vmem:[%s0 + $0x1c] sm:$0xf]
    %v302 = vld [vmem:[%s0 + $0x20] sm:$0xf]
    %v303 = vld [vmem:[%s0 + $0x24] sm:$0xf]
    %v304 = vld [vmem:[%s0 + $0x28] sm:$0xf]
    %v305 = vld [vmem:[%s0 + $0x2c] sm:$0xf]
    %v306 = vld [vmem:[%s0 + $0x30] sm:$0xf]
    %v307 = vld [vmem:[%s0 + $0x34] sm:$0xf]
    %v308 = vld [vmem:[%s0 + $0x38] sm:$0xf]
    %v309 = vld [vmem:[%s0 + $0x3c] sm:$0xf]
    %v310 = vld [vmem:[%s1 + $0x2] sm:$0x3]
    %v311 = vld [vmem:[%s3 + $0x1] sm:$0x1]
    %v313 = vlaneseq
    %v314 = vshrl.u32 %v313, 7
    %v315 = vsub.s32 0, %v314
    %v316 = vrot.slane %v311, %v315
    %v334 = vunpack.c.l.b16 %v294
    %v335 = vunpack.c.l.b16 %v295
    %v336 = vunpack.c.l.b16 %v296
    %v337 = vunpack.c.l.b16 %v297
    %v338 = vunpack.c.l.b16 %v298
    %v339 = vunpack.c.l.b16 %v299
    %v340 = vunpack.c.l.b16 %v300
    %v341 = vunpack.c.l.b16 %v301
    %v342 = vunpack.c.l.b16 %v302
    %v343 = vunpack.c.l.b16 %v303
    %v344 = vunpack.c.l.b16 %v304
    %v345 = vunpack.c.l.b16 %v305
    %v346 = vunpack.c.l.b16 %v306
    %v347 = vunpack.c.l.b16 %v307
    %v348 = vunpack.c.l.b16 %v308
    %v349 = vunpack.c.l.b16 %v309
    %v350 = vpack.c.b16 %v335, %v334
    %v351 = vpack.c.b16 %v337, %v336
    %v352 = vpack.c.b16 %v339, %v338
    %v353 = vpack.c.b16 %v341, %v340
    %v354 = vpack.c.b16 %v343, %v342
    %v355 = vpack.c.b16 %v345, %v344
    %v356 = vpack.c.b16 %v347, %v346
    %v357 = vpack.c.b16 %v349, %v348
    %v359 = vsel %vm152, %v350, 0
    %v362 = vsel %vm152, %v351, 0
    %v365 = vsel %vm152, %v352, 0
    %v368 = vsel %vm152, %v353, 0
    %v371 = vsel %vm152, %v354, 0
    %v374 = vsel %vm152, %v355, 0
    %v377 = vsel %vm152, %v356, 0
    %v380 = vsel %vm152, %v357, 0
    %v383 = vsel %vm177, %v310, 0
    %385 = vmatprep.subr.bf16.mxu0 0
    %386 = vmatpush1.bf16.msra.mxu0 %v383
    %387 = vmatprep.subr.bf16.mxu0 0
    %388 = vmatpush1.bf16.msra.mxu0 0
    %389 = vmatprep.subr.bf16.mxu0 0
    %390 = vmatpush1.bf16.msra.mxu0 0
    %391 = vmatprep.subr.bf16.mxu0 0
    %392 = vmatpush1.bf16.msra.mxu0 0
    %393 = vmatprep.subr.bf16.mxu0 0
    %394 = vmatpush1.bf16.msra.mxu0 0
    %395 = vmatprep.subr.bf16.mxu0 0
    %396 = vmatpush1.bf16.msra.mxu0 0
    %397 = vmatprep.subr.bf16.mxu0 0
    %398 = vmatpush1.bf16.msra.mxu0 0
    %399 = vmatprep.subr.bf16.mxu0 0
    %400 = vmatpush1.bf16.msra.mxu0 0
    %401 = vmatprep.subr.bf16.mxu0 0
    %402 = vmatpush1.bf16.msra.mxu0 0
    %403 = vmatprep.subr.bf16.mxu0 0
    %404 = vmatpush1.bf16.msra.mxu0 0
    %405 = vmatprep.subr.bf16.mxu0 0
    %406 = vmatpush1.bf16.msra.mxu0 0
    %407 = vmatprep.subr.bf16.mxu0 0
    %408 = vmatpush1.bf16.msra.mxu0 0
    %409 = vmatprep.subr.bf16.mxu0 0
    %410 = vmatpush1.bf16.msra.mxu0 0
    %411 = vmatprep.subr.bf16.mxu0 0
    %412 = vmatpush1.bf16.msra.mxu0 0
    %413 = vmatprep.subr.bf16.mxu0 0
    %414 = vmatpush1.bf16.msra.mxu0 0
    %415 = vmatprep.subr.bf16.mxu0 0
    %416 = vmatpush1.bf16.msra.mxu0 0
    %417 = vmatprep.mubr.bf16.mxu0 0
    %418 = vmatmul.mubr.bf16.gmra.mrb[0].mxu0 %v359
    %v419 = vpop.f32.mrb[0].mxu0
    %v420 = vadd.f32 %v316, %v419
    %v421 = vpop.f32.mrb[0].mxu0
    %v422 = vpop.f32.mrb[0].mxu0
    %v423 = vadd.f32 %v316, %v422
    %v424 = vpop.f32.mrb[0].mxu0
    %425 = vmatprep.mubr.bf16.mxu0 0
    %426 = vmatmul.mubr.bf16.gmra.mrb[0].mxu0 %v362
    %v427 = vpop.f32.mrb[0].mxu0
    %v428 = vadd.f32 %v316, %v427
    %v429 = vpop.f32.mrb[0].mxu0
    %v430 = vpop.f32.mrb[0].mxu0
    %v431 = vadd.f32 %v316, %v430
    %v432 = vpop.f32.mrb[0].mxu0
    %433 = vmatprep.mubr.bf16.mxu0 0
    %434 = vmatmul.mubr.bf16.gmra.mrb[0].mxu0 %v365
    %v435 = vpop.f32.mrb[0].mxu0
    %v436 = vadd.f32 %v316, %v435
    %v437 = vpop.f32.mrb[0].mxu0
    %v438 = vpop.f32.mrb[0].mxu0
    %v439 = vadd.f32 %v316, %v438
    %v440 = vpop.f32.mrb[0].mxu0
    %441 = vmatprep.mubr.bf16.mxu0 0
    %442 = vmatmul.mubr.bf16.gmra.mrb[0].mxu0 %v368
    %v443 = vpop.f32.mrb[0].mxu0
    %v444 = vadd.f32 %v316, %v443
    %v445 = vpop.f32.mrb[0].mxu0
    %v446 = vpop.f32.mrb[0].mxu0
    %v447 = vadd.f32 %v316, %v446
    %v448 = vpop.f32.mrb[0].mxu0
    %449 = vmatprep.mubr.bf16.mxu0 0
    %450 = vmatmul.mubr.bf16.gmra.mrb[0].mxu0 %v371
    %v451 = vpop.f32.mrb[0].mxu0
    %v452 = vadd.f32 %v316, %v451
    %v453 = vpop.f32.mrb[0].mxu0
    %v454 = vpop.f32.mrb[0].mxu0
    %v455 = vadd.f32 %v316, %v454
    %v456 = vpop.f32.mrb[0].mxu0
    %457 = vmatprep.mubr.bf16.mxu0 0
    %458 = vmatmul.mubr.bf16.gmra.mrb[0].mxu0 %v374
    %v459 = vpop.f32.mrb[0].mxu0
    %v460 = vadd.f32 %v316, %v459
    %v461 = vpop.f32.mrb[0].mxu0
    %v462 = vpop.f32.mrb[0].mxu0
    %v463 = vadd.f32 %v316, %v462
    %v464 = vpop.f32.mrb[0].mxu0
    %465 = vmatprep.mubr.bf16.mxu0 0
    %466 = vmatmul.mubr.bf16.gmra.mrb[0].mxu0 %v377
    %v467 = vpop.f32.mrb[0].mxu0
    %v468 = vadd.f32 %v316, %v467
    %v469 = vpop.f32.mrb[0].mxu0
    %v470 = vpop.f32.mrb[0].mxu0
    %v471 = vadd.f32 %v316, %v470
    %v472 = vpop.f32.mrb[0].mxu0
    %473 = vmatprep.mubr.bf16.mxu0 0
    %474 = vmatmul.mubr.bf16.gmra.mrb[0].mxu0 %v380
    %v475 = vpop.f32.mrb[0].mxu0
    %v476 = vadd.f32 %v316, %v475
    %v477 = vpop.f32.mrb[0].mxu0
    %v478 = vpop.f32.mrb[0].mxu0
    %v479 = vadd.f32 %v316, %v478
    %v480 = vpop.f32.mrb[0].mxu0
    %481 = vdwg.mxu0
    %482 = vst [vmem:[#allocation3 + $0x8] sm:$0xff] %v420
    %483 = vst [vmem:[#allocation3 + $0x28] sm:$0xff] %v423
    %484 = vst [vmem:[#allocation3 + $0x48] sm:$0xff] %v428
    %485 = vst [vmem:[#allocation3 + $0x68] sm:$0xff] %v431
    %486 = vst [vmem:[#allocation3 + $0x88] sm:$0xff] %v436
    %487 = vst [vmem:[#allocation3 + $0xa8] sm:$0xff] %v439
    %488 = vst [vmem:[#allocation3 + $0xc8] sm:$0xff] %v444
    %489 = vst [vmem:[#allocation3 + $0xe8] sm:$0xff] %v447
    %490 = vst [vmem:[#allocation3 + $0x108] sm:$0xff] %v452
    %491 = vst [vmem:[#allocation3 + $0x128] sm:$0xff] %v455
    %492 = vst [vmem:[#allocation3 + $0x148] sm:$0xff] %v460
    %493 = vst [vmem:[#allocation3 + $0x168] sm:$0xff] %v463
    %494 = vst [vmem:[#allocation3 + $0x188] sm:$0xff] %v468
    %495 = vst [vmem:[#allocation3 + $0x1a8] sm:$0xff] %v471
    %496 = vst [vmem:[#allocation3 + $0x1c8] sm:$0xff] %v476
    %497 = vst [vmem:[#allocation3 + $0x1e8] sm:$0xff] %v479
    %v498 = vld [vmem:[%s0] sm:$0xf]
    %v499 = vld [vmem:[%s0 + $0x4] sm:$0xf]
    %v500 = vld [vmem:[%s0 + $0x8] sm:$0xf]
    %v501 = vld [vmem:[%s0 + $0xc] sm:$0xf]
    %v502 = vld [vmem:[%s0 + $0x10] sm:$0xf]
    %v503 = vld [vmem:[%s0 + $0x14] sm:$0xf]
    %v504 = vld [vmem:[%s0 + $0x18] sm:$0xf]
    %v505 = vld [vmem:[%s0 + $0x1c] sm:$0xf]
    %v506 = vld [vmem:[%s0 + $0x20] sm:$0xf]
    %v507 = vld [vmem:[%s0 + $0x24] sm:$0xf]
    %v508 = vld [vmem:[%s0 + $0x28] sm:$0xf]
    %v509 = vld [vmem:[%s0 + $0x2c] sm:$0xf]
    %v510 = vld [vmem:[%s0 + $0x30] sm:$0xf]
    %v511 = vld [vmem:[%s0 + $0x34] sm:$0xf]
    %v512 = vld [vmem:[%s0 + $0x38] sm:$0xf]
    %v513 = vld [vmem:[%s0 + $0x3c] sm:$0xf]
    %v514 = vld [vmem:[%s1 + $0x4] sm:$0x3]
    %v515 = vld [vmem:[%s3 + $0x2] sm:$0x1]
    %v517 = vlaneseq
    %v518 = vshrl.u32 %v517, 7
    %v519 = vsub.s32 0, %v518
    %v520 = vrot.slane %v515, %v519
    %v538 = vunpack.c.l.b16 %v498
    %v539 = vunpack.c.l.b16 %v499
    %v540 = vunpack.c.l.b16 %v500
    %v541 = vunpack.c.l.b16 %v501
    %v542 = vunpack.c.l.b16 %v502
    %v543 = vunpack.c.l.b16 %v503
    %v544 = vunpack.c.l.b16 %v504
    %v545 = vunpack.c.l.b16 %v505
    %v546 = vunpack.c.l.b16 %v506
    %v547 = vunpack.c.l.b16 %v507
    %v548 = vunpack.c.l.b16 %v508
    %v549 = vunpack.c.l.b16 %v509
    %v550 = vunpack.c.l.b16 %v510
    %v551 = vunpack.c.l.b16 %v511
    %v552 = vunpack.c.l.b16 %v512
    %v553 = vunpack.c.l.b16 %v513
    %v554 = vpack.c.b16 %v539, %v538
    %v555 = vpack.c.b16 %v541, %v540
    %v556 = vpack.c.b16 %v543, %v542
    %v557 = vpack.c.b16 %v545, %v544
    %v558 = vpack.c.b16 %v547, %v546
    %v559 = vpack.c.b16 %v549, %v548
    %v560 = vpack.c.b16 %v551, %v550
    %v561 = vpack.c.b16 %v553, %v552
    %v563 = vsel %vm152, %v554, 0
    %v566 = vsel %vm152, %v555, 0
    %v569 = vsel %vm152, %v556, 0
    %v572 = vsel %vm152, %v557, 0
    %v575 = vsel %vm152, %v558, 0
    %v578 = vsel %vm152, %v559, 0
    %v581 = vsel %vm152, %v560, 0
    %v584 = vsel %vm152, %v561, 0
    %v587 = vsel %vm177, %v514, 0
    %589 = vmatprep.subr.bf16.mxu0 0
    %590 = vmatpush1.bf16.msra.mxu0 %v587
    %591 = vmatprep.subr.bf16.mxu0 0
    %592 = vmatpush1.bf16.msra.mxu0 0
    %593 = vmatprep.subr.bf16.mxu0 0
    %594 = vmatpush1.bf16.msra.mxu0 0
    %595 = vmatprep.subr.bf16.mxu0 0
    %596 = vmatpush1.bf16.msra.mxu0 0
    %597 = vmatprep.subr.bf16.mxu0 0
    %598 = vmatpush1.bf16.msra.mxu0 0
    %599 = vmatprep.subr.bf16.mxu0 0
    %600 = vmatpush1.bf16.msra.mxu0 0
    %601 = vmatprep.subr.bf16.mxu0 0
    %602 = vmatpush1.bf16.msra.mxu0 0
    %603 = vmatprep.subr.bf16.mxu0 0
    %604 = vmatpush1.bf16.msra.mxu0 0
    %605 = vmatprep.subr.bf16.mxu0 0
    %606 = vmatpush1.bf16.msra.mxu0 0
    %607 = vmatprep.subr.bf16.mxu0 0
    %608 = vmatpush1.bf16.msra.mxu0 0
    %609 = vmatprep.subr.bf16.mxu0 0
    %610 = vmatpush1.bf16.msra.mxu0 0
    %611 = vmatprep.subr.bf16.mxu0 0
    %612 = vmatpush1.bf16.msra.mxu0 0
    %613 = vmatprep.subr.bf16.mxu0 0
    %614 = vmatpush1.bf16.msra.mxu0 0
    %615 = vmatprep.subr.bf16.mxu0 0
    %616 = vmatpush1.bf16.msra.mxu0 0
    %617 = vmatprep.subr.bf16.mxu0 0
    %618 = vmatpush1.bf16.msra.mxu0 0
    %619 = vmatprep.subr.bf16.mxu0 0
    %620 = vmatpush1.bf16.msra.mxu0 0
    %621 = vmatprep.mubr.bf16.mxu0 0
    %622 = vmatmul.mubr.bf16.gmra.mrb[0].mxu0 %v563
    %v623 = vpop.f32.mrb[0].mxu0
    %v624 = vadd.f32 %v520, %v623
    %v625 = vpop.f32.mrb[0].mxu0
    %v626 = vpop.f32.mrb[0].mxu0
    %v627 = vadd.f32 %v520, %v626
    %v628 = vpop.f32.mrb[0].mxu0
    %629 = vmatprep.mubr.bf16.mxu0 0
    %630 = vmatmul.mubr.bf16.gmra.mrb[0].mxu0 %v566
    %v631 = vpop.f32.mrb[0].mxu0
    %v632 = vadd.f32 %v520, %v631
    %v633 = vpop.f32.mrb[0].mxu0
    %v634 = vpop.f32.mrb[0].mxu0
    %v635 = vadd.f32 %v520, %v634
    %v636 = vpop.f32.mrb[0].mxu0
    %637 = vmatprep.mubr.bf16.mxu0 0
    %638 = vmatmul.mubr.bf16.gmra.mrb[0].mxu0 %v569
    %v639 = vpop.f32.mrb[0].mxu0
    %v640 = vadd.f32 %v520, %v639
    %v641 = vpop.f32.mrb[0].mxu0
    %v642 = vpop.f32.mrb[0].mxu0
    %v643 = vadd.f32 %v520, %v642
    %v644 = vpop.f32.mrb[0].mxu0
    %645 = vmatprep.mubr.bf16.mxu0 0
    %646 = vmatmul.mubr.bf16.gmra.mrb[0].mxu0 %v572
    %v647 = vpop.f32.mrb[0].mxu0
    %v648 = vadd.f32 %v520, %v647
    %v649 = vpop.f32.mrb[0].mxu0
    %v650 = vpop.f32.mrb[0].mxu0
    %v651 = vadd.f32 %v520, %v650
    %v652 = vpop.f32.mrb[0].mxu0
    %653 = vmatprep.mubr.bf16.mxu0 0
    %654 = vmatmul.mubr.bf16.gmra.mrb[0].mxu0 %v575
    %v655 = vpop.f32.mrb[0].mxu0
    %v656 = vadd.f32 %v520, %v655
    %v657 = vpop.f32.mrb[0].mxu0
    %v658 = vpop.f32.mrb[0].mxu0
    %v659 = vadd.f32 %v520, %v658
    %v660 = vpop.f32.mrb[0].mxu0
    %661 = vmatprep.mubr.bf16.mxu0 0
    %662 = vmatmul.mubr.bf16.gmra.mrb[0].mxu0 %v578
    %v663 = vpop.f32.mrb[0].mxu0
    %v664 = vadd.f32 %v520, %v663
    %v665 = vpop.f32.mrb[0].mxu0
    %v666 = vpop.f32.mrb[0].mxu0
    %v667 = vadd.f32 %v520, %v666
    %v668 = vpop.f32.mrb[0].mxu0
    %669 = vmatprep.mubr.bf16.mxu0 0
    %670 = vmatmul.mubr.bf16.gmra.mrb[0].mxu0 %v581
    %v671 = vpop.f32.mrb[0].mxu0
    %v672 = vadd.f32 %v520, %v671
    %v673 = vpop.f32.mrb[0].mxu0
    %v674 = vpop.f32.mrb[0].mxu0
    %v675 = vadd.f32 %v520, %v674
    %v676 = vpop.f32.mrb[0].mxu0
    %677 = vmatprep.mubr.bf16.mxu0 0
    %678 = vmatmul.mubr.bf16.gmra.mrb[0].mxu0 %v584
    %v679 = vpop.f32.mrb[0].mxu0
    %v680 = vadd.f32 %v520, %v679
    %v681 = vpop.f32.mrb[0].mxu0
    %v682 = vpop.f32.mrb[0].mxu0
    %v683 = vadd.f32 %v520, %v682
    %v684 = vpop.f32.mrb[0].mxu0
    %685 = vdwg.mxu0
    %686 = vst [vmem:[#allocation3 + $0x10] sm:$0xff] %v624
    %687 = vst [vmem:[#allocation3 + $0x30] sm:$0xff] %v627
    %688 = vst [vmem:[#allocation3 + $0x50] sm:$0xff] %v632
    %689 = vst [vmem:[#allocation3 + $0x70] sm:$0xff] %v635
    %690 = vst [vmem:[#allocation3 + $0x90] sm:$0xff] %v640
    %691 = vst [vmem:[#allocation3 + $0xb0] sm:$0xff] %v643
    %692 = vst [vmem:[#allocation3 + $0xd0] sm:$0xff] %v648
    %693 = vst [vmem:[#allocation3 + $0xf0] sm:$0xff] %v651
    %694 = vst [vmem:[#allocation3 + $0x110] sm:$0xff] %v656
    %695 = vst [vmem:[#allocation3 + $0x130] sm:$0xff] %v659
    %696 = vst [vmem:[#allocation3 + $0x150] sm:$0xff] %v664
    %697 = vst [vmem:[#allocation3 + $0x170] sm:$0xff] %v667
    %698 = vst [vmem:[#allocation3 + $0x190] sm:$0xff] %v672
    %699 = vst [vmem:[#allocation3 + $0x1b0] sm:$0xff] %v675
    %700 = vst [vmem:[#allocation3 + $0x1d0] sm:$0xff] %v680
    %701 = vst [vmem:[#allocation3 + $0x1f0] sm:$0xff] %v683
    %v702 = vld [vmem:[%s0] sm:$0xf]
    %v703 = vld [vmem:[%s0 + $0x4] sm:$0xf]
    %v704 = vld [vmem:[%s0 + $0x8] sm:$0xf]
    %v705 = vld [vmem:[%s0 + $0xc] sm:$0xf]
    %v706 = vld [vmem:[%s0 + $0x10] sm:$0xf]
    %v707 = vld [vmem:[%s0 + $0x14] sm:$0xf]
    %v708 = vld [vmem:[%s0 + $0x18] sm:$0xf]
    %v709 = vld [vmem:[%s0 + $0x1c] sm:$0xf]
    %v710 = vld [vmem:[%s0 + $0x20] sm:$0xf]
    %v711 = vld [vmem:[%s0 + $0x24] sm:$0xf]
    %v712 = vld [vmem:[%s0 + $0x28] sm:$0xf]
    %v713 = vld [vmem:[%s0 + $0x2c] sm:$0xf]
    %v714 = vld [vmem:[%s0 + $0x30] sm:$0xf]
    %v715 = vld [vmem:[%s0 + $0x34] sm:$0xf]
    %v716 = vld [vmem:[%s0 + $0x38] sm:$0xf]
    %v717 = vld [vmem:[%s0 + $0x3c] sm:$0xf]
    %v718 = vld [vmem:[%s1 + $0x6] sm:$0x3]
    %v719 = vld [vmem:[%s3 + $0x3] sm:$0x1]
    %v721 = vlaneseq
    %v722 = vshrl.u32 %v721, 7
    %v723 = vsub.s32 0, %v722
    %v724 = vrot.slane %v719, %v723
    %v742 = vunpack.c.l.b16 %v702
    %v743 = vunpack.c.l.b16 %v703
    %v744 = vunpack.c.l.b16 %v704
    %v745 = vunpack.c.l.b16 %v705
    %v746 = vunpack.c.l.b16 %v706
    %v747 = vunpack.c.l.b16 %v707
    %v748 = vunpack.c.l.b16 %v708
    %v749 = vunpack.c.l.b16 %v709
    %v750 = vunpack.c.l.b16 %v710
    %v751 = vunpack.c.l.b16 %v711
    %v752 = vunpack.c.l.b16 %v712
    %v753 = vunpack.c.l.b16 %v713
    %v754 = vunpack.c.l.b16 %v714
    %v755 = vunpack.c.l.b16 %v715
    %v756 = vunpack.c.l.b16 %v716
    %v757 = vunpack.c.l.b16 %v717
    %v758 = vpack.c.b16 %v743, %v742
    %v759 = vpack.c.b16 %v745, %v744
    %v760 = vpack.c.b16 %v747, %v746
    %v761 = vpack.c.b16 %v749, %v748
    %v762 = vpack.c.b16 %v751, %v750
    %v763 = vpack.c.b16 %v753, %v752
    %v764 = vpack.c.b16 %v755, %v754
    %v765 = vpack.c.b16 %v757, %v756
    %v767 = vsel %vm152, %v758, 0
    %v770 = vsel %vm152, %v759, 0
    %v773 = vsel %vm152, %v760, 0
    %v776 = vsel %vm152, %v761, 0
    %v779 = vsel %vm152, %v762, 0
    %v782 = vsel %vm152, %v763, 0
    %v785 = vsel %vm152, %v764, 0
    %v788 = vsel %vm152, %v765, 0
    %v791 = vsel %vm177, %v718, 0
    %793 = vmatprep.subr.bf16.mxu0 0
    %794 = vmatpush1.bf16.msra.mxu0 %v791
    %795 = vmatprep.subr.bf16.mxu0 0
    %796 = vmatpush1.bf16.msra.mxu0 0
    %797 = vmatprep.subr.bf16.mxu0 0
    %798 = vmatpush1.bf16.msra.mxu0 0
    %799 = vmatprep.subr.bf16.mxu0 0
    %800 = vmatpush1.bf16.msra.mxu0 0
    %801 = vmatprep.subr.bf16.mxu0 0
    %802 = vmatpush1.bf16.msra.mxu0 0
    %803 = vmatprep.subr.bf16.mxu0 0
    %804 = vmatpush1.bf16.msra.mxu0 0
    %805 = vmatprep.subr.bf16.mxu0 0
    %806 = vmatpush1.bf16.msra.mxu0 0
    %807 = vmatprep.subr.bf16.mxu0 0
    %808 = vmatpush1.bf16.msra.mxu0 0
    %809 = vmatprep.subr.bf16.mxu0 0
    %810 = vmatpush1.bf16.msra.mxu0 0
    %811 = vmatprep.subr.bf16.mxu0 0
    %812 = vmatpush1.bf16.msra.mxu0 0
    %813 = vmatprep.subr.bf16.mxu0 0
    %814 = vmatpush1.bf16.msra.mxu0 0
    %815 = vmatprep.subr.bf16.mxu0 0
    %816 = vmatpush1.bf16.msra.mxu0 0
    %817 = vmatprep.subr.bf16.mxu0 0
    %818 = vmatpush1.bf16.msra.mxu0 0
    %819 = vmatprep.subr.bf16.mxu0 0
    %820 = vmatpush1.bf16.msra.mxu0 0
    %821 = vmatprep.subr.bf16.mxu0 0
    %822 = vmatpush1.bf16.msra.mxu0 0
    %823 = vmatprep.subr.bf16.mxu0 0
    %824 = vmatpush1.bf16.msra.mxu0 0
    %825 = vmatprep.mubr.bf16.mxu0 0
    %826 = vmatmul.mubr.bf16.gmra.mrb[0].mxu0 %v767
    %v827 = vpop.f32.mrb[0].mxu0
    %v828 = vadd.f32 %v724, %v827
    %v829 = vpop.f32.mrb[0].mxu0
    %v830 = vpop.f32.mrb[0].mxu0
    %v831 = vadd.f32 %v724, %v830
    %v832 = vpop.f32.mrb[0].mxu0
    %833 = vmatprep.mubr.bf16.mxu0 0
    %834 = vmatmul.mubr.bf16.gmra.mrb[0].mxu0 %v770
    %v835 = vpop.f32.mrb[0].mxu0
    %v836 = vadd.f32 %v724, %v835
    %v837 = vpop.f32.mrb[0].mxu0
    %v838 = vpop.f32.mrb[0].mxu0
    %v839 = vadd.f32 %v724, %v838
    %v840 = vpop.f32.mrb[0].mxu0
    %841 = vmatprep.mubr.bf16.mxu0 0
    %842 = vmatmul.mubr.bf16.gmra.mrb[0].mxu0 %v773
    %v843 = vpop.f32.mrb[0].mxu0
    %v844 = vadd.f32 %v724, %v843
    %v845 = vpop.f32.mrb[0].mxu0
    %v846 = vpop.f32.mrb[0].mxu0
    %v847 = vadd.f32 %v724, %v846
    %v848 = vpop.f32.mrb[0].mxu0
    %849 = vmatprep.mubr.bf16.mxu0 0
    %850 = vmatmul.mubr.bf16.gmra.mrb[0].mxu0 %v776
    %v851 = vpop.f32.mrb[0].mxu0
    %v852 = vadd.f32 %v724, %v851
    %v853 = vpop.f32.mrb[0].mxu0
    %v854 = vpop.f32.mrb[0].mxu0
    %v855 = vadd.f32 %v724, %v854
    %v856 = vpop.f32.mrb[0].mxu0
    %857 = vmatprep.mubr.bf16.mxu0 0
    %858 = vmatmul.mubr.bf16.gmra.mrb[0].mxu0 %v779
    %v859 = vpop.f32.mrb[0].mxu0
    %v860 = vadd.f32 %v724, %v859
    %v861 = vpop.f32.mrb[0].mxu0
    %v862 = vpop.f32.mrb[0].mxu0
    %v863 = vadd.f32 %v724, %v862
    %v864 = vpop.f32.mrb[0].mxu0
    %865 = vmatprep.mubr.bf16.mxu0 0
    %866 = vmatmul.mubr.bf16.gmra.mrb[0].mxu0 %v782
    %v867 = vpop.f32.mrb[0].mxu0
    %v868 = vadd.f32 %v724, %v867
    %v869 = vpop.f32.mrb[0].mxu0
    %v870 = vpop.f32.mrb[0].mxu0
    %v871 = vadd.f32 %v724, %v870
    %v872 = vpop.f32.mrb[0].mxu0
    %873 = vmatprep.mubr.bf16.mxu0 0
    %874 = vmatmul.mubr.bf16.gmra.mrb[0].mxu0 %v785
    %v875 = vpop.f32.mrb[0].mxu0
    %v876 = vadd.f32 %v724, %v875
    %v877 = vpop.f32.mrb[0].mxu0
    %v878 = vpop.f32.mrb[0].mxu0
    %v879 = vadd.f32 %v724, %v878
    %v880 = vpop.f32.mrb[0].mxu0
    %881 = vmatprep.mubr.bf16.mxu0 0
    %882 = vmatmul.mubr.bf16.gmra.mrb[0].mxu0 %v788
    %v883 = vpop.f32.mrb[0].mxu0
    %v884 = vadd.f32 %v724, %v883
    %v885 = vpop.f32.mrb[0].mxu0
    %v886 = vpop.f32.mrb[0].mxu0
    %v887 = vadd.f32 %v724, %v886
    %v888 = vpop.f32.mrb[0].mxu0
    %889 = vdwg.mxu0
    %890 = vst [vmem:[#allocation3 + $0x18] sm:$0xff] %v828
    %891 = vst [vmem:[#allocation3 + $0x38] sm:$0xff] %v831
    %892 = vst [vmem:[#allocation3 + $0x58] sm:$0xff] %v836
    %893 = vst [vmem:[#allocation3 + $0x78] sm:$0xff] %v839
    %894 = vst [vmem:[#allocation3 + $0x98] sm:$0xff] %v844
    %895 = vst [vmem:[#allocation3 + $0xb8] sm:$0xff] %v847
    %896 = vst [vmem:[#allocation3 + $0xd8] sm:$0xff] %v852
    %897 = vst [vmem:[#allocation3 + $0xf8] sm:$0xff] %v855
    %898 = vst [vmem:[#allocation3 + $0x118] sm:$0xff] %v860
    %899 = vst [vmem:[#allocation3 + $0x138] sm:$0xff] %v863
    %900 = vst [vmem:[#allocation3 + $0x158] sm:$0xff] %v868
    %901 = vst [vmem:[#allocation3 + $0x178] sm:$0xff] %v871
    %902 = vst [vmem:[#allocation3 + $0x198] sm:$0xff] %v876
    %903 = vst [vmem:[#allocation3 + $0x1b8] sm:$0xff] %v879
    %904 = vst [vmem:[#allocation3 + $0x1d8] sm:$0xff] %v884
    %905 = vst [vmem:[#allocation3 + $0x1f8] sm:$0xff] %v887
    %v906 = vld [vmem:[#allocation3] sm:$0xff]
    %v907 = vld [vmem:[#allocation3 + $0x20] sm:$0xff]
    %v908 = vld [vmem:[#allocation3 + $0x10] sm:$0xff]
    %v909 = vld [vmem:[#allocation3 + $0x30] sm:$0xff]
    %v910 = vld [vmem:[#allocation3 + $0x18] sm:$0xff]
    %v911 = vld [vmem:[#allocation3 + $0x38] sm:$0xff]
    %v912 = vxor.u32 %v906, 2147483648
    %v913 = vxor.u32 %v907, 2147483648
    %v914 = vmul.f32 %v912, 1.442695
    %v915 = vpow.pop %v914
    %v916 = vmul.f32 %v913, 1.442695
    %v917 = vpow.pop %v916
    %v918 = vadd.f32 %v915, 1.0
    %v919 = vadd.f32 %v917, 1.0
    %v920 = vrcp.pop %v918
    %v921 = vmul.f32 1.0, %v920
    %v922 = vrcp.pop %v919
    %v923 = vmul.f32 1.0, %v922
    %v924 = vtanh.pop %v908
    %v925 = vtanh.pop %v909
    %v926 = vxor.u32 %v910, 2147483648
    %v927 = vxor.u32 %v911, 2147483648
    %v928 = vmul.f32 %v926, 1.442695
    %v929 = vpow.pop %v928
    %v930 = vmul.f32 %v927, 1.442695
    %v931 = vpow.pop %v930
    %v932 = vadd.f32 %v929, 1.0
    %v933 = vadd.f32 %v931, 1.0
    %v934 = vrcp.pop %v932
    %v935 = vmul.f32 1.0, %v934
    %v936 = vrcp.pop %v933
    %v937 = vmul.f32 1.0, %v936
    %v938 = vmul.f32 %v921, %v924
    %v939 = vmul.f32 %v923, %v925
    %v940 = vtanh.pop %v938
    %v941 = vtanh.pop %v939
    %v942 = vmul.f32 %v935, %v940
    %v943 = vmul.f32 %v937, %v941
    %v944 = vpack.c.bf16 %v943, %v942
    %945 = vst [vmem:[#allocation2] sm:$0xff] %v944
    %v946 = vld [vmem:[#allocation3 + $0x40] sm:$0xff]
    %v947 = vld [vmem:[#allocation3 + $0x60] sm:$0xff]
    %v948 = vld [vmem:[#allocation4] sm:$0xf]
    %v949 = vld [vmem:[#allocation4 + $0x10] sm:$0xf]
    %v950 = vld [vmem:[#allocation4 + $0x20] sm:$0xf]
    %v951 = vld [vmem:[#allocation4 + $0x30] sm:$0xf]
    %v952 = vld [vmem:[#allocation4 + $0x40] sm:$0xf]
    %v953 = vld [vmem:[#allocation4 + $0x50] sm:$0xf]
    %v954 = vld [vmem:[#allocation4 + $0x60] sm:$0xf]
    %v955 = vld [vmem:[#allocation4 + $0x70] sm:$0xf]
    %v956 = vld [vmem:[#allocation4 + $0x80] sm:$0xf]
    %v957 = vld [vmem:[#allocation4 + $0x90] sm:$0xf]
    %v958 = vld [vmem:[#allocation4 + $0xa0] sm:$0xf]
    %v959 = vld [vmem:[#allocation4 + $0xb0] sm:$0xf]
    %v960 = vld [vmem:[#allocation4 + $0xc0] sm:$0xf]
    %v961 = vld [vmem:[#allocation4 + $0xd0] sm:$0xf]
    %v962 = vld [vmem:[#allocation4 + $0xe0] sm:$0xf]
    %v963 = vld [vmem:[#allocation4 + $0xf0] sm:$0xf]
    %v980 = vunpack.c.l.b16 %v948
    %v981 = vunpack.c.l.b16 %v949
    %v982 = vunpack.c.l.b16 %v950
    %v983 = vunpack.c.l.b16 %v951
    %v984 = vunpack.c.l.b16 %v952
    %v985 = vunpack.c.l.b16 %v953
    %v986 = vunpack.c.l.b16 %v954
    %v987 = vunpack.c.l.b16 %v955
    %v988 = vunpack.c.l.b16 %v956
    %v989 = vunpack.c.l.b16 %v957
    %v990 = vunpack.c.l.b16 %v958
    %v991 = vunpack.c.l.b16 %v959
    %v992 = vunpack.c.l.b16 %v960
    %v993 = vunpack.c.l.b16 %v961
    %v994 = vunpack.c.l.b16 %v962
    %v995 = vunpack.c.l.b16 %v963
    %v996 = vpack.c.b16 %v981, %v980
    %v997 = vpack.c.b16 %v983, %v982
    %v998 = vpack.c.b16 %v985, %v984
    %v999 = vpack.c.b16 %v987, %v986
    %v1000 = vpack.c.b16 %v989, %v988
    %v1001 = vpack.c.b16 %v991, %v990
    %v1002 = vpack.c.b16 %v993, %v992
    %v1003 = vpack.c.b16 %v995, %v994
    %1012 = vmatprep.subr.bf16.mxu0 0
    %1013 = vmatpush1.bf16.msra.mxu0 %v996
    %1014 = vmatprep.subr.bf16.mxu0 0
    %1015 = vmatpush1.bf16.msra.mxu0 %v997
    %1016 = vmatprep.subr.bf16.mxu0 0
    %1017 = vmatpush1.bf16.msra.mxu0 %v998
    %1018 = vmatprep.subr.bf16.mxu0 0
    %1019 = vmatpush1.bf16.msra.mxu0 %v999
    %1020 = vmatprep.subr.bf16.mxu0 0
    %1021 = vmatpush1.bf16.msra.mxu0 %v1000
    %1022 = vmatprep.subr.bf16.mxu0 0
    %1023 = vmatpush1.bf16.msra.mxu0 %v1001
    %1024 = vmatprep.subr.bf16.mxu0 0
    %1025 = vmatpush1.bf16.msra.mxu0 %v1002
    %1026 = vmatprep.subr.bf16.mxu0 0
    %1027 = vmatpush1.bf16.msra.mxu0 %v1003
    %1028 = vmatprep.subr.bf16.mxu0 0
    %1029 = vmatpush1.bf16.msra.mxu0 0
    %1030 = vmatprep.subr.bf16.mxu0 0
    %1031 = vmatpush1.bf16.msra.mxu0 0
    %1032 = vmatprep.subr.bf16.mxu0 0
    %1033 = vmatpush1.bf16.msra.mxu0 0
    %1034 = vmatprep.subr.bf16.mxu0 0
    %1035 = vmatpush1.bf16.msra.mxu0 0
    %1036 = vmatprep.subr.bf16.mxu0 0
    %1037 = vmatpush1.bf16.msra.mxu0 0
    %1038 = vmatprep.subr.bf16.mxu0 0
    %1039 = vmatpush1.bf16.msra.mxu0 0
    %1040 = vmatprep.subr.bf16.mxu0 0
    %1041 = vmatpush1.bf16.msra.mxu0 0
    %1042 = vmatprep.subr.bf16.mxu0 0
    %1043 = vmatpush1.bf16.msra.mxu0 0
    %1044 = vmatprep.mubr.bf16.mxu0 0
    %1045 = vmatmul.mubr.bf16.gmra.mrb[0].mxu0 %v944
    %v1046 = vpop.f32.mrb[0].mxu0
    %v1047 = vadd.f32 %v946, %v1046
    %v1048 = vpop.f32.mrb[0].mxu0
    %v1049 = vpop.f32.mrb[0].mxu0
    %v1050 = vadd.f32 %v947, %v1049
    %v1051 = vpop.f32.mrb[0].mxu0
    %1052 = vdwg.mxu0
    %v1053 = vld [vmem:[#allocation3 + $0x48] sm:$0xff]
    %v1054 = vld [vmem:[#allocation3 + $0x68] sm:$0xff]
    %v1055 = vld [vmem:[#allocation4 + $0x4] sm:$0xf]
    %v1056 = vld [vmem:[#allocation4 + $0x14] sm:$0xf]
    %v1057 = vld [vmem:[#allocation4 + $0x24] sm:$0xf]
    %v1058 = vld [vmem:[#allocation4 + $0x34] sm:$0xf]
    %v1059 = vld [vmem:[#allocation4 + $0x44] sm:$0xf]
    %v1060 = vld [vmem:[#allocation4 + $0x54] sm:$0xf]
    %v1061 = vld [vmem:[#allocation4 + $0x64] sm:$0xf]
    %v1062 = vld [vmem:[#allocation4 + $0x74] sm:$0xf]
    %v1063 = vld [vmem:[#allocation4 + $0x84] sm:$0xf]
    %v1064 = vld [vmem:[#allocation4 + $0x94] sm:$0xf]
    %v1065 = vld [vmem:[#allocation4 + $0xa4] sm:$0xf]
    %v1066 = vld [vmem:[#allocation4 + $0xb4] sm:$0xf]
    %v1067 = vld [vmem:[#allocation4 + $0xc4] sm:$0xf]
    %v1068 = vld [vmem:[#allocation4 + $0xd4] sm:$0xf]
    %v1069 = vld [vmem:[#allocation4 + $0xe4] sm:$0xf]
    %v1070 = vld [vmem:[#allocation4 + $0xf4] sm:$0xf]
    %v1087 = vunpack.c.l.b16 %v1055
    %v1088 = vunpack.c.l.b16 %v1056
    %v1089 = vunpack.c.l.b16 %v1057
    %v1090 = vunpack.c.l.b16 %v1058
    %v1091 = vunpack.c.l.b16 %v1059
    %v1092 = vunpack.c.l.b16 %v1060
    %v1093 = vunpack.c.l.b16 %v1061
    %v1094 = vunpack.c.l.b16 %v1062
    %v1095 = vunpack.c.l.b16 %v1063
    %v1096 = vunpack.c.l.b16 %v1064
    %v1097 = vunpack.c.l.b16 %v1065
    %v1098 = vunpack.c.l.b16 %v1066
    %v1099 = vunpack.c.l.b16 %v1067
    %v1100 = vunpack.c.l.b16 %v1068
    %v1101 = vunpack.c.l.b16 %v1069
    %v1102 = vunpack.c.l.b16 %v1070
    %v1103 = vpack.c.b16 %v1088, %v1087
    %v1104 = vpack.c.b16 %v1090, %v1089
    %v1105 = vpack.c.b16 %v1092, %v1091
    %v1106 = vpack.c.b16 %v1094, %v1093
    %v1107 = vpack.c.b16 %v1096, %v1095
    %v1108 = vpack.c.b16 %v1098, %v1097
    %v1109 = vpack.c.b16 %v1100, %v1099
    %v1110 = vpack.c.b16 %v1102, %v1101
    %1119 = vmatprep.subr.bf16.mxu0 0
    %1120 = vmatpush1.bf16.msra.mxu0 %v1103
    %1121 = vmatprep.subr.bf16.mxu0 0
    %1122 = vmatpush1.bf16.msra.mxu0 %v1104
    %1123 = vmatprep.subr.bf16.mxu0 0
    %1124 = vmatpush1.bf16.msra.mxu0 %v1105
    %1125 = vmatprep.subr.bf16.mxu0 0
    %1126 = vmatpush1.bf16.msra.mxu0 %v1106
    %1127 = vmatprep.subr.bf16.mxu0 0
    %1128 = vmatpush1.bf16.msra.mxu0 %v1107
    %1129 = vmatprep.subr.bf16.mxu0 0
    %1130 = vmatpush1.bf16.msra.mxu0 %v1108
    %1131 = vmatprep.subr.bf16.mxu0 0
    %1132 = vmatpush1.bf16.msra.mxu0 %v1109
    %1133 = vmatprep.subr.bf16.mxu0 0
    %1134 = vmatpush1.bf16.msra.mxu0 %v1110
    %1135 = vmatprep.subr.bf16.mxu0 0
    %1136 = vmatpush1.bf16.msra.mxu0 0
    %1137 = vmatprep.subr.bf16.mxu0 0
    %1138 = vmatpush1.bf16.msra.mxu0 0
    %1139 = vmatprep.subr.bf16.mxu0 0
    %1140 = vmatpush1.bf16.msra.mxu0 0
    %1141 = vmatprep.subr.bf16.mxu0 0
    %1142 = vmatpush1.bf16.msra.mxu0 0
    %1143 = vmatprep.subr.bf16.mxu0 0
    %1144 = vmatpush1.bf16.msra.mxu0 0
    %1145 = vmatprep.subr.bf16.mxu0 0
    %1146 = vmatpush1.bf16.msra.mxu0 0
    %1147 = vmatprep.subr.bf16.mxu0 0
    %1148 = vmatpush1.bf16.msra.mxu0 0
    %1149 = vmatprep.subr.bf16.mxu0 0
    %1150 = vmatpush1.bf16.msra.mxu0 0
    %1151 = vmatprep.mubr.bf16.mxu0 0
    %1152 = vmatmul.mubr.bf16.gmra.mrb[0].mxu0 %v944
    %v1153 = vpop.f32.mrb[0].mxu0
    %v1154 = vadd.f32 %v1053, %v1153
    %v1155 = vpop.f32.mrb[0].mxu0
    %v1156 = vpop.f32.mrb[0].mxu0
    %v1157 = vadd.f32 %v1054, %v1156
    %v1158 = vpop.f32.mrb[0].mxu0
    %1159 = vdwg.mxu0
    %v1160 = vld [vmem:[#allocation3 + $0x50] sm:$0xff]
    %v1161 = vld [vmem:[#allocation3 + $0x70] sm:$0xff]
    %v1162 = vld [vmem:[#allocation4 + $0x8] sm:$0xf]
    %v1163 = vld [vmem:[#allocation4 + $0x18] sm:$0xf]
    %v1164 = vld [vmem:[#allocation4 + $0x28] sm:$0xf]
    %v1165 = vld [vmem:[#allocation4 + $0x38] sm:$0xf]
    %v1166 = vld [vmem:[#allocation4 + $0x48] sm:$0xf]
    %v1167 = vld [vmem:[#allocation4 + $0x58] sm:$0xf]
    %v1168 = vld [vmem:[#allocation4 + $0x68] sm:$0xf]
    %v1169 = vld [vmem:[#allocation4 + $0x78] sm:$0xf]
    %v1170 = vld [vmem:[#allocation4 + $0x88] sm:$0xf]
    %v1171 = vld [vmem:[#allocation4 + $0x98] sm:$0xf]
    %v1172 = vld [vmem:[#allocation4 + $0xa8] sm:$0xf]
    %v1173 = vld [vmem:[#allocation4 + $0xb8] sm:$0xf]
    %v1174 = vld [vmem:[#allocation4 + $0xc8] sm:$0xf]
    %v1175 = vld [vmem:[#allocation4 + $0xd8] sm:$0xf]
    %v1176 = vld [vmem:[#allocation4 + $0xe8] sm:$0xf]
    %v1177 = vld [vmem:[#allocation4 + $0xf8] sm:$0xf]
    %v1194 = vunpack.c.l.b16 %v1162
    %v1195 = vunpack.c.l.b16 %v1163
    %v1196 = vunpack.c.l.b16 %v1164
    %v1197 = vunpack.c.l.b16 %v1165
    %v1198 = vunpack.c.l.b16 %v1166
    %v1199 = vunpack.c.l.b16 %v1167
    %v1200 = vunpack.c.l.b16 %v1168
    %v1201 = vunpack.c.l.b16 %v1169
    %v1202 = vunpack.c.l.b16 %v1170
    %v1203 = vunpack.c.l.b16 %v1171
    %v1204 = vunpack.c.l.b16 %v1172
    %v1205 = vunpack.c.l.b16 %v1173
    %v1206 = vunpack.c.l.b16 %v1174
    %v1207 = vunpack.c.l.b16 %v1175
    %v1208 = vunpack.c.l.b16 %v1176
    %v1209 = vunpack.c.l.b16 %v1177
    %v1210 = vpack.c.b16 %v1195, %v1194
    %v1211 = vpack.c.b16 %v1197, %v1196
    %v1212 = vpack.c.b16 %v1199, %v1198
    %v1213 = vpack.c.b16 %v1201, %v1200
    %v1214 = vpack.c.b16 %v1203, %v1202
    %v1215 = vpack.c.b16 %v1205, %v1204
    %v1216 = vpack.c.b16 %v1207, %v1206
    %v1217 = vpack.c.b16 %v1209, %v1208
    %1226 = vmatprep.subr.bf16.mxu0 0
    %1227 = vmatpush1.bf16.msra.mxu0 %v1210
    %1228 = vmatprep.subr.bf16.mxu0 0
    %1229 = vmatpush1.bf16.msra.mxu0 %v1211
    %1230 = vmatprep.subr.bf16.mxu0 0
    %1231 = vmatpush1.bf16.msra.mxu0 %v1212
    %1232 = vmatprep.subr.bf16.mxu0 0
    %1233 = vmatpush1.bf16.msra.mxu0 %v1213
    %1234 = vmatprep.subr.bf16.mxu0 0
    %1235 = vmatpush1.bf16.msra.mxu0 %v1214
    %1236 = vmatprep.subr.bf16.mxu0 0
    %1237 = vmatpush1.bf16.msra.mxu0 %v1215
    %1238 = vmatprep.subr.bf16.mxu0 0
    %1239 = vmatpush1.bf16.msra.mxu0 %v1216
    %1240 = vmatprep.subr.bf16.mxu0 0
    %1241 = vmatpush1.bf16.msra.mxu0 %v1217
    %1242 = vmatprep.subr.bf16.mxu0 0
    %1243 = vmatpush1.bf16.msra.mxu0 0
    %1244 = vmatprep.subr.bf16.mxu0 0
    %1245 = vmatpush1.bf16.msra.mxu0 0
    %1246 = vmatprep.subr.bf16.mxu0 0
    %1247 = vmatpush1.bf16.msra.mxu0 0
    %1248 = vmatprep.subr.bf16.mxu0 0
    %1249 = vmatpush1.bf16.msra.mxu0 0
    %1250 = vmatprep.subr.bf16.mxu0 0
    %1251 = vmatpush1.bf16.msra.mxu0 0
    %1252 = vmatprep.subr.bf16.mxu0 0
    %1253 = vmatpush1.bf16.msra.mxu0 0
    %1254 = vmatprep.subr.bf16.mxu0 0
    %1255 = vmatpush1.bf16.msra.mxu0 0
    %1256 = vmatprep.subr.bf16.mxu0 0
    %1257 = vmatpush1.bf16.msra.mxu0 0
    %1258 = vmatprep.mubr.bf16.mxu0 0
    %1259 = vmatmul.mubr.bf16.gmra.mrb[0].mxu0 %v944
    %v1260 = vpop.f32.mrb[0].mxu0
    %v1261 = vadd.f32 %v1160, %v1260
    %v1262 = vpop.f32.mrb[0].mxu0
    %v1263 = vpop.f32.mrb[0].mxu0
    %v1264 = vadd.f32 %v1161, %v1263
    %v1265 = vpop.f32.mrb[0].mxu0
    %1266 = vdwg.mxu0
    %v1267 = vld [vmem:[#allocation3 + $0x58] sm:$0xff]
    %v1268 = vld [vmem:[#allocation3 + $0x78] sm:$0xff]
    %v1269 = vld [vmem:[#allocation4 + $0xc] sm:$0xf]
    %v1270 = vld [vmem:[#allocation4 + $0x1c] sm:$0xf]
    %v1271 = vld [vmem:[#allocation4 + $0x2c] sm:$0xf]
    %v1272 = vld [vmem:[#allocation4 + $0x3c] sm:$0xf]
    %v1273 = vld [vmem:[#allocation4 + $0x4c] sm:$0xf]
    %v1274 = vld [vmem:[#allocation4 + $0x5c] sm:$0xf]
    %v1275 = vld [vmem:[#allocation4 + $0x6c] sm:$0xf]
    %v1276 = vld [vmem:[#allocation4 + $0x7c] sm:$0xf]
    %v1277 = vld [vmem:[#allocation4 + $0x8c] sm:$0xf]
    %v1278 = vld [vmem:[#allocation4 + $0x9c] sm:$0xf]
    %v1279 = vld [vmem:[#allocation4 + $0xac] sm:$0xf]
    %v1280 = vld [vmem:[#allocation4 + $0xbc] sm:$0xf]
    %v1281 = vld [vmem:[#allocation4 + $0xcc] sm:$0xf]
    %v1282 = vld [vmem:[#allocation4 + $0xdc] sm:$0xf]
    %v1283 = vld [vmem:[#allocation4 + $0xec] sm:$0xf]
    %v1284 = vld [vmem:[#allocation4 + $0xfc] sm:$0xf]
    %v1301 = vunpack.c.l.b16 %v1269
    %v1302 = vunpack.c.l.b16 %v1270
    %v1303 = vunpack.c.l.b16 %v1271
    %v1304 = vunpack.c.l.b16 %v1272
    %v1305 = vunpack.c.l.b16 %v1273
    %v1306 = vunpack.c.l.b16 %v1274
    %v1307 = vunpack.c.l.b16 %v1275
    %v1308 = vunpack.c.l.b16 %v1276
    %v1309 = vunpack.c.l.b16 %v1277
    %v1310 = vunpack.c.l.b16 %v1278
    %v1311 = vunpack.c.l.b16 %v1279
    %v1312 = vunpack.c.l.b16 %v1280
    %v1313 = vunpack.c.l.b16 %v1281
    %v1314 = vunpack.c.l.b16 %v1282
    %v1315 = vunpack.c.l.b16 %v1283
    %v1316 = vunpack.c.l.b16 %v1284
    %v1317 = vpack.c.b16 %v1302, %v1301
    %v1318 = vpack.c.b16 %v1304, %v1303
    %v1319 = vpack.c.b16 %v1306, %v1305
    %v1320 = vpack.c.b16 %v1308, %v1307
    %v1321 = vpack.c.b16 %v1310, %v1309
    %v1322 = vpack.c.b16 %v1312, %v1311
    %v1323 = vpack.c.b16 %v1314, %v1313
    %v1324 = vpack.c.b16 %v1316, %v1315
    %1333 = vmatprep.subr.bf16.mxu0 0
    %1334 = vmatpush1.bf16.msra.mxu0 %v1317
    %1335 = vmatprep.subr.bf16.mxu0 0
    %1336 = vmatpush1.bf16.msra.mxu0 %v1318
    %1337 = vmatprep.subr.bf16.mxu0 0
    %1338 = vmatpush1.bf16.msra.mxu0 %v1319
    %1339 = vmatprep.subr.bf16.mxu0 0
    %1340 = vmatpush1.bf16.msra.mxu0 %v1320
    %1341 = vmatprep.subr.bf16.mxu0 0
    %1342 = vmatpush1.bf16.msra.mxu0 %v1321
    %1343 = vmatprep.subr.bf16.mxu0 0
    %1344 = vmatpush1.bf16.msra.mxu0 %v1322
    %1345 = vmatprep.subr.bf16.mxu0 0
    %1346 = vmatpush1.bf16.msra.mxu0 %v1323
    %1347 = vmatprep.subr.bf16.mxu0 0
    %1348 = vmatpush1.bf16.msra.mxu0 %v1324
    %1349 = vmatprep.subr.bf16.mxu0 0
    %1350 = vmatpush1.bf16.msra.mxu0 0
    %1351 = vmatprep.subr.bf16.mxu0 0
    %1352 = vmatpush1.bf16.msra.mxu0 0
    %1353 = vmatprep.subr.bf16.mxu0 0
    %1354 = vmatpush1.bf16.msra.mxu0 0
    %1355 = vmatprep.subr.bf16.mxu0 0
    %1356 = vmatpush1.bf16.msra.mxu0 0
    %1357 = vmatprep.subr.bf16.mxu0 0
    %1358 = vmatpush1.bf16.msra.mxu0 0
    %1359 = vmatprep.subr.bf16.mxu0 0
    %1360 = vmatpush1.bf16.msra.mxu0 0
    %1361 = vmatprep.subr.bf16.mxu0 0
    %1362 = vmatpush1.bf16.msra.mxu0 0
    %1363 = vmatprep.subr.bf16.mxu0 0
    %1364 = vmatpush1.bf16.msra.mxu0 0
    %1365 = vmatprep.mubr.bf16.mxu0 0
    %1366 = vmatmul.mubr.bf16.gmra.mrb[0].mxu0 %v944
    %v1367 = vpop.f32.mrb[0].mxu0
    %v1368 = vadd.f32 %v1267, %v1367
    %v1369 = vpop.f32.mrb[0].mxu0
    %v1370 = vpop.f32.mrb[0].mxu0
    %v1371 = vadd.f32 %v1268, %v1370
    %v1372 = vpop.f32.mrb[0].mxu0
    %1373 = vdwg.mxu0
    %v1374 = vxor.u32 %v1047, 2147483648
    %v1375 = vxor.u32 %v1050, 2147483648
    %v1376 = vmul.f32 %v1374, 1.442695
    %v1377 = vpow.pop %v1376
    %v1378 = vmul.f32 %v1375, 1.442695
    %v1379 = vpow.pop %v1378
    %v1380 = vadd.f32 %v1377, 1.0
    %v1381 = vadd.f32 %v1379, 1.0
    %v1382 = vrcp.pop %v1380
    %v1383 = vmul.f32 1.0, %v1382
    %v1384 = vrcp.pop %v1381
    %v1385 = vmul.f32 1.0, %v1384
    %v1386 = vxor.u32 %v1154, 2147483648
    %v1387 = vxor.u32 %v1157, 2147483648
    %v1388 = vmul.f32 %v1386, 1.442695
    %v1389 = vpow.pop %v1388
    %v1390 = vmul.f32 %v1387, 1.442695
    %v1391 = vpow.pop %v1390
    %v1392 = vadd.f32 %v1389, 1.0
    %v1393 = vadd.f32 %v1391, 1.0
    %v1394 = vrcp.pop %v1392
    %v1395 = vmul.f32 1.0, %v1394
    %v1396 = vrcp.pop %v1393
    %v1397 = vmul.f32 1.0, %v1396
    %v1398 = vtanh.pop %v1261
    %v1399 = vtanh.pop %v1264
    %v1400 = vxor.u32 %v1368, 2147483648
    %v1401 = vxor.u32 %v1371, 2147483648
    %v1402 = vmul.f32 %v1400, 1.442695
    %v1403 = vpow.pop %v1402
    %v1404 = vmul.f32 %v1401, 1.442695
    %v1405 = vpow.pop %v1404
    %v1406 = vadd.f32 %v1403, 1.0
    %v1407 = vadd.f32 %v1405, 1.0
    %v1408 = vrcp.pop %v1406
    %v1409 = vmul.f32 1.0, %v1408
    %v1410 = vrcp.pop %v1407
    %v1411 = vmul.f32 1.0, %v1410
    %v1412 = vmul.f32 %v1395, %v938
    %v1413 = vmul.f32 %v1397, %v939
    %v1414 = vmul.f32 %v1383, %v1398
    %v1415 = vmul.f32 %v1385, %v1399
    %v1416 = vadd.f32 %v1412, %v1414
    %v1417 = vadd.f32 %v1413, %v1415
    %v1418 = vtanh.pop %v1416
    %v1419 = vtanh.pop %v1417
    %v1420 = vmul.f32 %v1409, %v1418
    %v1421 = vmul.f32 %v1411, %v1419
    %v1422 = vpack.c.bf16 %v1421, %v1420
    %1423 = vst [vmem:[#allocation2 + $0x8] sm:$0xff] %v1422
    %v1424 = vld [vmem:[#allocation3 + $0x80] sm:$0xff]
    %v1425 = vld [vmem:[#allocation3 + $0xa0] sm:$0xff]
    %v1426 = vld [vmem:[#allocation4] sm:$0xf]
    %v1427 = vld [vmem:[#allocation4 + $0x10] sm:$0xf]
    %v1428 = vld [vmem:[#allocation4 + $0x20] sm:$0xf]
    %v1429 = vld [vmem:[#allocation4 + $0x30] sm:$0xf]
    %v1430 = vld [vmem:[#allocation4 + $0x40] sm:$0xf]
    %v1431 = vld [vmem:[#allocation4 + $0x50] sm:$0xf]
    %v1432 = vld [vmem:[#allocation4 + $0x60] sm:$0xf]
    %v1433 = vld [vmem:[#allocation4 + $0x70] sm:$0xf]
    %v1434 = vld [vmem:[#allocation4 + $0x80] sm:$0xf]
    %v1435 = vld [vmem:[#allocation4 + $0x90] sm:$0xf]
    %v1436 = vld [vmem:[#allocation4 + $0xa0] sm:$0xf]
    %v1437 = vld [vmem:[#allocation4 + $0xb0] sm:$0xf]
    %v1438 = vld [vmem:[#allocation4 + $0xc0] sm:$0xf]
    %v1439 = vld [vmem:[#allocation4 + $0xd0] sm:$0xf]
    %v1440 = vld [vmem:[#allocation4 + $0xe0] sm:$0xf]
    %v1441 = vld [vmem:[#allocation4 + $0xf0] sm:$0xf]
    %v1458 = vunpack.c.l.b16 %v1426
    %v1459 = vunpack.c.l.b16 %v1427
    %v1460 = vunpack.c.l.b16 %v1428
    %v1461 = vunpack.c.l.b16 %v1429
    %v1462 = vunpack.c.l.b16 %v1430
    %v1463 = vunpack.c.l.b16 %v1431
    %v1464 = vunpack.c.l.b16 %v1432
    %v1465 = vunpack.c.l.b16 %v1433
    %v1466 = vunpack.c.l.b16 %v1434
    %v1467 = vunpack.c.l.b16 %v1435
    %v1468 = vunpack.c.l.b16 %v1436
    %v1469 = vunpack.c.l.b16 %v1437
    %v1470 = vunpack.c.l.b16 %v1438
    %v1471 = vunpack.c.l.b16 %v1439
    %v1472 = vunpack.c.l.b16 %v1440
    %v1473 = vunpack.c.l.b16 %v1441
    %v1474 = vpack.c.b16 %v1459, %v1458
    %v1475 = vpack.c.b16 %v1461, %v1460
    %v1476 = vpack.c.b16 %v1463, %v1462
    %v1477 = vpack.c.b16 %v1465, %v1464
    %v1478 = vpack.c.b16 %v1467, %v1466
    %v1479 = vpack.c.b16 %v1469, %v1468
    %v1480 = vpack.c.b16 %v1471, %v1470
    %v1481 = vpack.c.b16 %v1473, %v1472
    %1490 = vmatprep.subr.bf16.mxu0 0
    %1491 = vmatpush1.bf16.msra.mxu0 %v1474
    %1492 = vmatprep.subr.bf16.mxu0 0
    %1493 = vmatpush1.bf16.msra.mxu0 %v1475
    %1494 = vmatprep.subr.bf16.mxu0 0
    %1495 = vmatpush1.bf16.msra.mxu0 %v1476
    %1496 = vmatprep.subr.bf16.mxu0 0
    %1497 = vmatpush1.bf16.msra.mxu0 %v1477
    %1498 = vmatprep.subr.bf16.mxu0 0
    %1499 = vmatpush1.bf16.msra.mxu0 %v1478
    %1500 = vmatprep.subr.bf16.mxu0 0
    %1501 = vmatpush1.bf16.msra.mxu0 %v1479
    %1502 = vmatprep.subr.bf16.mxu0 0
    %1503 = vmatpush1.bf16.msra.mxu0 %v1480
    %1504 = vmatprep.subr.bf16.mxu0 0
    %1505 = vmatpush1.bf16.msra.mxu0 %v1481
    %1506 = vmatprep.subr.bf16.mxu0 0
    %1507 = vmatpush1.bf16.msra.mxu0 0
    %1508 = vmatprep.subr.bf16.mxu0 0
    %1509 = vmatpush1.bf16.msra.mxu0 0
    %1510 = vmatprep.subr.bf16.mxu0 0
    %1511 = vmatpush1.bf16.msra.mxu0 0
    %1512 = vmatprep.subr.bf16.mxu0 0
    %1513 = vmatpush1.bf16.msra.mxu0 0
    %1514 = vmatprep.subr.bf16.mxu0 0
    %1515 = vmatpush1.bf16.msra.mxu0 0
    %1516 = vmatprep.subr.bf16.mxu0 0
    %1517 = vmatpush1.bf16.msra.mxu0 0
    %1518 = vmatprep.subr.bf16.mxu0 0
    %1519 = vmatpush1.bf16.msra.mxu0 0
    %1520 = vmatprep.subr.bf16.mxu0 0
    %1521 = vmatpush1.bf16.msra.mxu0 0
    %1522 = vmatprep.mubr.bf16.mxu0 0
    %1523 = vmatmul.mubr.bf16.gmra.mrb[0].mxu0 %v1422
    %v1524 = vpop.f32.mrb[0].mxu0
    %v1525 = vadd.f32 %v1424, %v1524
    %v1526 = vpop.f32.mrb[0].mxu0
    %v1527 = vpop.f32.mrb[0].mxu0
    %v1528 = vadd.f32 %v1425, %v1527
    %v1529 = vpop.f32.mrb[0].mxu0
    %1530 = vdwg.mxu0
    %v1531 = vld [vmem:[#allocation3 + $0x88] sm:$0xff]
    %v1532 = vld [vmem:[#allocation3 + $0xa8] sm:$0xff]
    %v1533 = vld [vmem:[#allocation4 + $0x4] sm:$0xf]
    %v1534 = vld [vmem:[#allocation4 + $0x14] sm:$0xf]
    %v1535 = vld [vmem:[#allocation4 + $0x24] sm:$0xf]
    %v1536 = vld [vmem:[#allocation4 + $0x34] sm:$0xf]
    %v1537 = vld [vmem:[#allocation4 + $0x44] sm:$0xf]
    %v1538 = vld [vmem:[#allocation4 + $0x54] sm:$0xf]
    %v1539 = vld [vmem:[#allocation4 + $0x64] sm:$0xf]
    %v1540 = vld [vmem:[#allocation4 + $0x74] sm:$0xf]
    %v1541 = vld [vmem:[#allocation4 + $0x84] sm:$0xf]
    %v1542 = vld [vmem:[#allocation4 + $0x94] sm:$0xf]
    %v1543 = vld [vmem:[#allocation4 + $0xa4] sm:$0xf]
    %v1544 = vld [vmem:[#allocation4 + $0xb4] sm:$0xf]
    %v1545 = vld [vmem:[#allocation4 + $0xc4] sm:$0xf]
    %v1546 = vld [vmem:[#allocation4 + $0xd4] sm:$0xf]
    %v1547 = vld [vmem:[#allocation4 + $0xe4] sm:$0xf]
    %v1548 = vld [vmem:[#allocation4 + $0xf4] sm:$0xf]
    %v1565 = vunpack.c.l.b16 %v1533
    %v1566 = vunpack.c.l.b16 %v1534
    %v1567 = vunpack.c.l.b16 %v1535
    %v1568 = vunpack.c.l.b16 %v1536
    %v1569 = vunpack.c.l.b16 %v1537
    %v1570 = vunpack.c.l.b16 %v1538
    %v1571 = vunpack.c.l.b16 %v1539
    %v1572 = vunpack.c.l.b16 %v1540
    %v1573 = vunpack.c.l.b16 %v1541
    %v1574 = vunpack.c.l.b16 %v1542
    %v1575 = vunpack.c.l.b16 %v1543
    %v1576 = vunpack.c.l.b16 %v1544
    %v1577 = vunpack.c.l.b16 %v1545
    %v1578 = vunpack.c.l.b16 %v1546
    %v1579 = vunpack.c.l.b16 %v1547
    %v1580 = vunpack.c.l.b16 %v1548
    %v1581 = vpack.c.b16 %v1566, %v1565
    %v1582 = vpack.c.b16 %v1568, %v1567
    %v1583 = vpack.c.b16 %v1570, %v1569
    %v1584 = vpack.c.b16 %v1572, %v1571
    %v1585 = vpack.c.b16 %v1574, %v1573
    %v1586 = vpack.c.b16 %v1576, %v1575
    %v1587 = vpack.c.b16 %v1578, %v1577
    %v1588 = vpack.c.b16 %v1580, %v1579
    %1597 = vmatprep.subr.bf16.mxu0 0
    %1598 = vmatpush1.bf16.msra.mxu0 %v1581
    %1599 = vmatprep.subr.bf16.mxu0 0
    %1600 = vmatpush1.bf16.msra.mxu0 %v1582
    %1601 = vmatprep.subr.bf16.mxu0 0
    %1602 = vmatpush1.bf16.msra.mxu0 %v1583
    %1603 = vmatprep.subr.bf16.mxu0 0
    %1604 = vmatpush1.bf16.msra.mxu0 %v1584
    %1605 = vmatprep.subr.bf16.mxu0 0
    %1606 = vmatpush1.bf16.msra.mxu0 %v1585
    %1607 = vmatprep.subr.bf16.mxu0 0
    %1608 = vmatpush1.bf16.msra.mxu0 %v1586
    %1609 = vmatprep.subr.bf16.mxu0 0
    %1610 = vmatpush1.bf16.msra.mxu0 %v1587
    %1611 = vmatprep.subr.bf16.mxu0 0
    %1612 = vmatpush1.bf16.msra.mxu0 %v1588
    %1613 = vmatprep.subr.bf16.mxu0 0
    %1614 = vmatpush1.bf16.msra.mxu0 0
    %1615 = vmatprep.subr.bf16.mxu0 0
    %1616 = vmatpush1.bf16.msra.mxu0 0
    %1617 = vmatprep.subr.bf16.mxu0 0
    %1618 = vmatpush1.bf16.msra.mxu0 0
    %1619 = vmatprep.subr.bf16.mxu0 0
    %1620 = vmatpush1.bf16.msra.mxu0 0
    %1621 = vmatprep.subr.bf16.mxu0 0
    %1622 = vmatpush1.bf16.msra.mxu0 0
    %1623 = vmatprep.subr.bf16.mxu0 0
    %1624 = vmatpush1.bf16.msra.mxu0 0
    %1625 = vmatprep.subr.bf16.mxu0 0
    %1626 = vmatpush1.bf16.msra.mxu0 0
    %1627 = vmatprep.subr.bf16.mxu0 0
    %1628 = vmatpush1.bf16.msra.mxu0 0
    %1629 = vmatprep.mubr.bf16.mxu0 0
    %1630 = vmatmul.mubr.bf16.gmra.mrb[0].mxu0 %v1422
    %v1631 = vpop.f32.mrb[0].mxu0
    %v1632 = vadd.f32 %v1531, %v1631
    %v1633 = vpop.f32.mrb[0].mxu0
    %v1634 = vpop.f32.mrb[0].mxu0
    %v1635 = vadd.f32 %v1532, %v1634
    %v1636 = vpop.f32.mrb[0].mxu0
    %1637 = vdwg.mxu0
    %v1638 = vld [vmem:[#allocation3 + $0x90] sm:$0xff]
    %v1639 = vld [vmem:[#allocation3 + $0xb0] sm:$0xff]
    %v1640 = vld [vmem:[#allocation4 + $0x8] sm:$0xf]
    %v1641 = vld [vmem:[#allocation4 + $0x18] sm:$0xf]
    %v1642 = vld [vmem:[#allocation4 + $0x28] sm:$0xf]
    %v1643 = vld [vmem:[#allocation4 + $0x38] sm:$0xf]
    %v1644 = vld [vmem:[#allocation4 + $0x48] sm:$0xf]
    %v1645 = vld [vmem:[#allocation4 + $0x58] sm:$0xf]
    %v1646 = vld [vmem:[#allocation4 + $0x68] sm:$0xf]
    %v1647 = vld [vmem:[#allocation4 + $0x78] sm:$0xf]
    %v1648 = vld [vmem:[#allocation4 + $0x88] sm:$0xf]
    %v1649 = vld [vmem:[#allocation4 + $0x98] sm:$0xf]
    %v1650 = vld [vmem:[#allocation4 + $0xa8] sm:$0xf]
    %v1651 = vld [vmem:[#allocation4 + $0xb8] sm:$0xf]
    %v1652 = vld [vmem:[#allocation4 + $0xc8] sm:$0xf]
    %v1653 = vld [vmem:[#allocation4 + $0xd8] sm:$0xf]
    %v1654 = vld [vmem:[#allocation4 + $0xe8] sm:$0xf]
    %v1655 = vld [vmem:[#allocation4 + $0xf8] sm:$0xf]
    %v1672 = vunpack.c.l.b16 %v1640
    %v1673 = vunpack.c.l.b16 %v1641
    %v1674 = vunpack.c.l.b16 %v1642
    %v1675 = vunpack.c.l.b16 %v1643
    %v1676 = vunpack.c.l.b16 %v1644
    %v1677 = vunpack.c.l.b16 %v1645
    %v1678 = vunpack.c.l.b16 %v1646
    %v1679 = vunpack.c.l.b16 %v1647
    %v1680 = vunpack.c.l.b16 %v1648
    %v1681 = vunpack.c.l.b16 %v1649
    %v1682 = vunpack.c.l.b16 %v1650
    %v1683 = vunpack.c.l.b16 %v1651
    %v1684 = vunpack.c.l.b16 %v1652
    %v1685 = vunpack.c.l.b16 %v1653
    %v1686 = vunpack.c.l.b16 %v1654
    %v1687 = vunpack.c.l.b16 %v1655
    %v1688 = vpack.c.b16 %v1673, %v1672
    %v1689 = vpack.c.b16 %v1675, %v1674
    %v1690 = vpack.c.b16 %v1677, %v1676
    %v1691 = vpack.c.b16 %v1679, %v1678
    %v1692 = vpack.c.b16 %v1681, %v1680
    %v1693 = vpack.c.b16 %v1683, %v1682
    %v1694 = vpack.c.b16 %v1685, %v1684
    %v1695 = vpack.c.b16 %v1687, %v1686
    %1704 = vmatprep.subr.bf16.mxu0 0
    %1705 = vmatpush1.bf16.msra.mxu0 %v1688
    %1706 = vmatprep.subr.bf16.mxu0 0
    %1707 = vmatpush1.bf16.msra.mxu0 %v1689
    %1708 = vmatprep.subr.bf16.mxu0 0
    %1709 = vmatpush1.bf16.msra.mxu0 %v1690
    %1710 = vmatprep.subr.bf16.mxu0 0
    %1711 = vmatpush1.bf16.msra.mxu0 %v1691
    %1712 = vmatprep.subr.bf16.mxu0 0
    %1713 = vmatpush1.bf16.msra.mxu0 %v1692
    %1714 = vmatprep.subr.bf16.mxu0 0
    %1715 = vmatpush1.bf16.msra.mxu0 %v1693
    %1716 = vmatprep.subr.bf16.mxu0 0
    %1717 = vmatpush1.bf16.msra.mxu0 %v1694
    %1718 = vmatprep.subr.bf16.mxu0 0
    %1719 = vmatpush1.bf16.msra.mxu0 %v1695
    %1720 = vmatprep.subr.bf16.mxu0 0
    %1721 = vmatpush1.bf16.msra.mxu0 0
    %1722 = vmatprep.subr.bf16.mxu0 0
    %1723 = vmatpush1.bf16.msra.mxu0 0
    %1724 = vmatprep.subr.bf16.mxu0 0
    %1725 = vmatpush1.bf16.msra.mxu0 0
    %1726 = vmatprep.subr.bf16.mxu0 0
    %1727 = vmatpush1.bf16.msra.mxu0 0
    %1728 = vmatprep.subr.bf16.mxu0 0
    %1729 = vmatpush1.bf16.msra.mxu0 0
    %1730 = vmatprep.subr.bf16.mxu0 0
    %1731 = vmatpush1.bf16.msra.mxu0 0
    %1732 = vmatprep.subr.bf16.mxu0 0
    %1733 = vmatpush1.bf16.msra.mxu0 0
    %1734 = vmatprep.subr.bf16.mxu0 0
    %1735 = vmatpush1.bf16.msra.mxu0 0
    %1736 = vmatprep.mubr.bf16.mxu0 0
    %1737 = vmatmul.mubr.bf16.gmra.mrb[0].mxu0 %v1422
    %v1738 = vpop.f32.mrb[0].mxu0
    %v1739 = vadd.f32 %v1638, %v1738
    %v1740 = vpop.f32.mrb[0].mxu0
    %v1741 = vpop.f32.mrb[0].mxu0
    %v1742 = vadd.f32 %v1639, %v1741
    %v1743 = vpop.f32.mrb[0].mxu0
    %1744 = vdwg.mxu0
    %v1745 = vld [vmem:[#allocation3 + $0x98] sm:$0xff]
    %v1746 = vld [vmem:[#allocation3 + $0xb8] sm:$0xff]
    %v1747 = vld [vmem:[#allocation4 + $0xc] sm:$0xf]
    %v1748 = vld [vmem:[#allocation4 + $0x1c] sm:$0xf]
    %v1749 = vld [vmem:[#allocation4 + $0x2c] sm:$0xf]
    %v1750 = vld [vmem:[#allocation4 + $0x3c] sm:$0xf]
    %v1751 = vld [vmem:[#allocation4 + $0x4c] sm:$0xf]
    %v1752 = vld [vmem:[#allocation4 + $0x5c] sm:$0xf]
    %v1753 = vld [vmem:[#allocation4 + $0x6c] sm:$0xf]
    %v1754 = vld [vmem:[#allocation4 + $0x7c] sm:$0xf]
    %v1755 = vld [vmem:[#allocation4 + $0x8c] sm:$0xf]
    %v1756 = vld [vmem:[#allocation4 + $0x9c] sm:$0xf]
    %v1757 = vld [vmem:[#allocation4 + $0xac] sm:$0xf]
    %v1758 = vld [vmem:[#allocation4 + $0xbc] sm:$0xf]
    %v1759 = vld [vmem:[#allocation4 + $0xcc] sm:$0xf]
    %v1760 = vld [vmem:[#allocation4 + $0xdc] sm:$0xf]
    %v1761 = vld [vmem:[#allocation4 + $0xec] sm:$0xf]
    %v1762 = vld [vmem:[#allocation4 + $0xfc] sm:$0xf]
    %v1779 = vunpack.c.l.b16 %v1747
    %v1780 = vunpack.c.l.b16 %v1748
    %v1781 = vunpack.c.l.b16 %v1749
    %v1782 = vunpack.c.l.b16 %v1750
    %v1783 = vunpack.c.l.b16 %v1751
    %v1784 = vunpack.c.l.b16 %v1752
    %v1785 = vunpack.c.l.b16 %v1753
    %v1786 = vunpack.c.l.b16 %v1754
    %v1787 = vunpack.c.l.b16 %v1755
    %v1788 = vunpack.c.l.b16 %v1756
    %v1789 = vunpack.c.l.b16 %v1757
    %v1790 = vunpack.c.l.b16 %v1758
    %v1791 = vunpack.c.l.b16 %v1759
    %v1792 = vunpack.c.l.b16 %v1760
    %v1793 = vunpack.c.l.b16 %v1761
    %v1794 = vunpack.c.l.b16 %v1762
    %v1795 = vpack.c.b16 %v1780, %v1779
    %v1796 = vpack.c.b16 %v1782, %v1781
    %v1797 = vpack.c.b16 %v1784, %v1783
    %v1798 = vpack.c.b16 %v1786, %v1785
    %v1799 = vpack.c.b16 %v1788, %v1787
    %v1800 = vpack.c.b16 %v1790, %v1789
    %v1801 = vpack.c.b16 %v1792, %v1791
    %v1802 = vpack.c.b16 %v1794, %v1793
    %1811 = vmatprep.subr.bf16.mxu0 0
    %1812 = vmatpush1.bf16.msra.mxu0 %v1795
    %1813 = vmatprep.subr.bf16.mxu0 0
    %1814 = vmatpush1.bf16.msra.mxu0 %v1796
    %1815 = vmatprep.subr.bf16.mxu0 0
    %1816 = vmatpush1.bf16.msra.mxu0 %v1797
    %1817 = vmatprep.subr.bf16.mxu0 0
    %1818 = vmatpush1.bf16.msra.mxu0 %v1798
    %1819 = vmatprep.subr.bf16.mxu0 0
    %1820 = vmatpush1.bf16.msra.mxu0 %v1799
    %1821 = vmatprep.subr.bf16.mxu0 0
    %1822 = vmatpush1.bf16.msra.mxu0 %v1800
    %1823 = vmatprep.subr.bf16.mxu0 0
    %1824 = vmatpush1.bf16.msra.mxu0 %v1801
    %1825 = vmatprep.subr.bf16.mxu0 0
    %1826 = vmatpush1.bf16.msra.mxu0 %v1802
    %1827 = vmatprep.subr.bf16.mxu0 0
    %1828 = vmatpush1.bf16.msra.mxu0 0
    %1829 = vmatprep.subr.bf16.mxu0 0
    %1830 = vmatpush1.bf16.msra.mxu0 0
    %1831 = vmatprep.subr.bf16.mxu0 0
    %1832 = vmatpush1.bf16.msra.mxu0 0
    %1833 = vmatprep.subr.bf16.mxu0 0
    %1834 = vmatpush1.bf16.msra.mxu0 0
    %1835 = vmatprep.subr.bf16.mxu0 0
    %1836 = vmatpush1.bf16.msra.mxu0 0
    %1837 = vmatprep.subr.bf16.mxu0 0
    %1838 = vmatpush1.bf16.msra.mxu0 0
    %1839 = vmatprep.subr.bf16.mxu0 0
    %1840 = vmatpush1.bf16.msra.mxu0 0
    %1841 = vmatprep.subr.bf16.mxu0 0
    %1842 = vmatpush1.bf16.msra.mxu0 0
    %1843 = vmatprep.mubr.bf16.mxu0 0
    %1844 = vmatmul.mubr.bf16.gmra.mrb[0].mxu0 %v1422
    %v1845 = vpop.f32.mrb[0].mxu0
    %v1846 = vadd.f32 %v1745, %v1845
    %v1847 = vpop.f32.mrb[0].mxu0
    %v1848 = vpop.f32.mrb[0].mxu0
    %v1849 = vadd.f32 %v1746, %v1848
    %v1850 = vpop.f32.mrb[0].mxu0
    %1851 = vdwg.mxu0
    %v1852 = vxor.u32 %v1525, 2147483648
    %v1853 = vxor.u32 %v1528, 2147483648
    %v1854 = vmul.f32 %v1852, 1.442695
    %v1855 = vpow.pop %v1854
    %v1856 = vmul.f32 %v1853, 1.442695
    %v1857 = vpow.pop %v1856
    %v1858 = vadd.f32 %v1855, 1.0
    %v1859 = vadd.f32 %v1857, 1.0
    %v1860 = vrcp.pop %v1858
    %v1861 = vmul.f32 1.0, %v1860
    %v1862 = vrcp.pop %v1859
    %v1863 = vmul.f32 1.0, %v1862
    %v1864 = vxor.u32 %v1632, 2147483648
    %v1865 = vxor.u32 %v1635, 2147483648
    %v1866 = vmul.f32 %v1864, 1.442695
    %v1867 = vpow.pop %v1866
    %v1868 = vmul.f32 %v1865, 1.442695
    %v1869 = vpow.pop %v1868
    %v1870 = vadd.f32 %v1867, 1.0
    %v1871 = vadd.f32 %v1869, 1.0
    %v1872 = vrcp.pop %v1870
    %v1873 = vmul.f32 1.0, %v1872
    %v1874 = vrcp.pop %v1871
    %v1875 = vmul.f32 1.0, %v1874
    %v1876 = vtanh.pop %v1739
    %v1877 = vtanh.pop %v1742
    %v1878 = vxor.u32 %v1846, 2147483648
    %v1879 = vxor.u32 %v1849, 2147483648
    %v1880 = vmul.f32 %v1878, 1.442695
    %v1881 = vpow.pop %v1880
    %v1882 = vmul.f32 %v1879, 1.442695
    %v1883 = vpow.pop %v1882
    %v1884 = vadd.f32 %v1881, 1.0
    %v1885 = vadd.f32 %v1883, 1.0
    %v1886 = vrcp.pop %v1884
    %v1887 = vmul.f32 1.0, %v1886
    %v1888 = vrcp.pop %v1885
    %v1889 = vmul.f32 1.0, %v1888
    %v1890 = vmul.f32 %v1873, %v1416
    %v1891 = vmul.f32 %v1875, %v1417
    %v1892 = vmul.f32 %v1861, %v1876
    %v1893 = vmul.f32 %v1863, %v1877
    %v1894 = vadd.f32 %v1890, %v1892
    %v1895 = vadd.f32 %v1891, %v1893
    %v1896 = vtanh.pop %v1894
    %v1897 = vtanh.pop %v1895
    %v1898 = vmul.f32 %v1887, %v1896
    %v1899 = vmul.f32 %v1889, %v1897
    %v1900 = vpack.c.bf16 %v1899, %v1898
    %1901 = vst [vmem:[#allocation2 + $0x10] sm:$0xff] %v1900
    %v1902 = vld [vmem:[#allocation3 + $0xc0] sm:$0xff]
    %v1903 = vld [vmem:[#allocation3 + $0xe0] sm:$0xff]
    %v1904 = vld [vmem:[#allocation4] sm:$0xf]
    %v1905 = vld [vmem:[#allocation4 + $0x10] sm:$0xf]
    %v1906 = vld [vmem:[#allocation4 + $0x20] sm:$0xf]
    %v1907 = vld [vmem:[#allocation4 + $0x30] sm:$0xf]
    %v1908 = vld [vmem:[#allocation4 + $0x40] sm:$0xf]
    %v1909 = vld [vmem:[#allocation4 + $0x50] sm:$0xf]
    %v1910 = vld [vmem:[#allocation4 + $0x60] sm:$0xf]
    %v1911 = vld [vmem:[#allocation4 + $0x70] sm:$0xf]
    %v1912 = vld [vmem:[#allocation4 + $0x80] sm:$0xf]
    %v1913 = vld [vmem:[#allocation4 + $0x90] sm:$0xf]
    %v1914 = vld [vmem:[#allocation4 + $0xa0] sm:$0xf]
    %v1915 = vld [vmem:[#allocation4 + $0xb0] sm:$0xf]
    %v1916 = vld [vmem:[#allocation4 + $0xc0] sm:$0xf]
    %v1917 = vld [vmem:[#allocation4 + $0xd0] sm:$0xf]
    %v1918 = vld [vmem:[#allocation4 + $0xe0] sm:$0xf]
    %v1919 = vld [vmem:[#allocation4 + $0xf0] sm:$0xf]
    %v1936 = vunpack.c.l.b16 %v1904
    %v1937 = vunpack.c.l.b16 %v1905
    %v1938 = vunpack.c.l.b16 %v1906
    %v1939 = vunpack.c.l.b16 %v1907
    %v1940 = vunpack.c.l.b16 %v1908
    %v1941 = vunpack.c.l.b16 %v1909
    %v1942 = vunpack.c.l.b16 %v1910
    %v1943 = vunpack.c.l.b16 %v1911
    %v1944 = vunpack.c.l.b16 %v1912
    %v1945 = vunpack.c.l.b16 %v1913
    %v1946 = vunpack.c.l.b16 %v1914
    %v1947 = vunpack.c.l.b16 %v1915
    %v1948 = vunpack.c.l.b16 %v1916
    %v1949 = vunpack.c.l.b16 %v1917
    %v1950 = vunpack.c.l.b16 %v1918
    %v1951 = vunpack.c.l.b16 %v1919
    %v1952 = vpack.c.b16 %v1937, %v1936
    %v1953 = vpack.c.b16 %v1939, %v1938
    %v1954 = vpack.c.b16 %v1941, %v1940
    %v1955 = vpack.c.b16 %v1943, %v1942
    %v1956 = vpack.c.b16 %v1945, %v1944
    %v1957 = vpack.c.b16 %v1947, %v1946
    %v1958 = vpack.c.b16 %v1949, %v1948
    %v1959 = vpack.c.b16 %v1951, %v1950
    %1968 = vmatprep.subr.bf16.mxu0 0
    %1969 = vmatpush1.bf16.msra.mxu0 %v1952
    %1970 = vmatprep.subr.bf16.mxu0 0
    %1971 = vmatpush1.bf16.msra.mxu0 %v1953
    %1972 = vmatprep.subr.bf16.mxu0 0
    %1973 = vmatpush1.bf16.msra.mxu0 %v1954
    %1974 = vmatprep.subr.bf16.mxu0 0
    %1975 = vmatpush1.bf16.msra.mxu0 %v1955
    %1976 = vmatprep.subr.bf16.mxu0 0
    %1977 = vmatpush1.bf16.msra.mxu0 %v1956
    %1978 = vmatprep.subr.bf16.mxu0 0
    %1979 = vmatpush1.bf16.msra.mxu0 %v1957
    %1980 = vmatprep.subr.bf16.mxu0 0
    %1981 = vmatpush1.bf16.msra.mxu0 %v1958
    %1982 = vmatprep.subr.bf16.mxu0 0
    %1983 = vmatpush1.bf16.msra.mxu0 %v1959
    %1984 = vmatprep.subr.bf16.mxu0 0
    %1985 = vmatpush1.bf16.msra.mxu0 0
    %1986 = vmatprep.subr.bf16.mxu0 0
    %1987 = vmatpush1.bf16.msra.mxu0 0
    %1988 = vmatprep.subr.bf16.mxu0 0
    %1989 = vmatpush1.bf16.msra.mxu0 0
    %1990 = vmatprep.subr.bf16.mxu0 0
    %1991 = vmatpush1.bf16.msra.mxu0 0
    %1992 = vmatprep.subr.bf16.mxu0 0
    %1993 = vmatpush1.bf16.msra.mxu0 0
    %1994 = vmatprep.subr.bf16.mxu0 0
    %1995 = vmatpush1.bf16.msra.mxu0 0
    %1996 = vmatprep.subr.bf16.mxu0 0
    %1997 = vmatpush1.bf16.msra.mxu0 0
    %1998 = vmatprep.subr.bf16.mxu0 0
    %1999 = vmatpush1.bf16.msra.mxu0 0
    %2000 = vmatprep.mubr.bf16.mxu0 0
    %2001 = vmatmul.mubr.bf16.gmra.mrb[0].mxu0 %v1900
    %v2002 = vpop.f32.mrb[0].mxu0
    %v2003 = vadd.f32 %v1902, %v2002
    %v2004 = vpop.f32.mrb[0].mxu0
    %v2005 = vpop.f32.mrb[0].mxu0
    %v2006 = vadd.f32 %v1903, %v2005
    %v2007 = vpop.f32.mrb[0].mxu0
    %2008 = vdwg.mxu0
    %v2009 = vld [vmem:[#allocation3 + $0xc8] sm:$0xff]
    %v2010 = vld [vmem:[#allocation3 + $0xe8] sm:$0xff]
    %v2011 = vld [vmem:[#allocation4 + $0x4] sm:$0xf]
    %v2012 = vld [vmem:[#allocation4 + $0x14] sm:$0xf]
    %v2013 = vld [vmem:[#allocation4 + $0x24] sm:$0xf]
    %v2014 = vld [vmem:[#allocation4 + $0x34] sm:$0xf]
    %v2015 = vld [vmem:[#allocation4 + $0x44] sm:$0xf]
    %v2016 = vld [vmem:[#allocation4 + $0x54] sm:$0xf]
    %v2017 = vld [vmem:[#allocation4 + $0x64] sm:$0xf]
    %v2018 = vld [vmem:[#allocation4 + $0x74] sm:$0xf]
    %v2019 = vld [vmem:[#allocation4 + $0x84] sm:$0xf]
    %v2020 = vld [vmem:[#allocation4 + $0x94] sm:$0xf]
    %v2021 = vld [vmem:[#allocation4 + $0xa4] sm:$0xf]
    %v2022 = vld [vmem:[#allocation4 + $0xb4] sm:$0xf]
    %v2023 = vld [vmem:[#allocation4 + $0xc4] sm:$0xf]
    %v2024 = vld [vmem:[#allocation4 + $0xd4] sm:$0xf]
    %v2025 = vld [vmem:[#allocation4 + $0xe4] sm:$0xf]
    %v2026 = vld [vmem:[#allocation4 + $0xf4] sm:$0xf]
    %v2043 = vunpack.c.l.b16 %v2011
    %v2044 = vunpack.c.l.b16 %v2012
    %v2045 = vunpack.c.l.b16 %v2013
    %v2046 = vunpack.c.l.b16 %v2014
    %v2047 = vunpack.c.l.b16 %v2015
    %v2048 = vunpack.c.l.b16 %v2016
    %v2049 = vunpack.c.l.b16 %v2017
    %v2050 = vunpack.c.l.b16 %v2018
    %v2051 = vunpack.c.l.b16 %v2019
    %v2052 = vunpack.c.l.b16 %v2020
    %v2053 = vunpack.c.l.b16 %v2021
    %v2054 = vunpack.c.l.b16 %v2022
    %v2055 = vunpack.c.l.b16 %v2023
    %v2056 = vunpack.c.l.b16 %v2024
    %v2057 = vunpack.c.l.b16 %v2025
    %v2058 = vunpack.c.l.b16 %v2026
    %v2059 = vpack.c.b16 %v2044, %v2043
    %v2060 = vpack.c.b16 %v2046, %v2045
    %v2061 = vpack.c.b16 %v2048, %v2047
    %v2062 = vpack.c.b16 %v2050, %v2049
    %v2063 = vpack.c.b16 %v2052, %v2051
    %v2064 = vpack.c.b16 %v2054, %v2053
    %v2065 = vpack.c.b16 %v2056, %v2055
    %v2066 = vpack.c.b16 %v2058, %v2057
    %2075 = vmatprep.subr.bf16.mxu0 0
    %2076 = vmatpush1.bf16.msra.mxu0 %v2059
    %2077 = vmatprep.subr.bf16.mxu0 0
    %2078 = vmatpush1.bf16.msra.mxu0 %v2060
    %2079 = vmatprep.subr.bf16.mxu0 0
    %2080 = vmatpush1.bf16.msra.mxu0 %v2061
    %2081 = vmatprep.subr.bf16.mxu0 0
    %2082 = vmatpush1.bf16.msra.mxu0 %v2062
    %2083 = vmatprep.subr.bf16.mxu0 0
    %2084 = vmatpush1.bf16.msra.mxu0 %v2063
    %2085 = vmatprep.subr.bf16.mxu0 0
    %2086 = vmatpush1.bf16.msra.mxu0 %v2064
    %2087 = vmatprep.subr.bf16.mxu0 0
    %2088 = vmatpush1.bf16.msra.mxu0 %v2065
    %2089 = vmatprep.subr.bf16.mxu0 0
    %2090 = vmatpush1.bf16.msra.mxu0 %v2066
    %2091 = vmatprep.subr.bf16.mxu0 0
    %2092 = vmatpush1.bf16.msra.mxu0 0
    %2093 = vmatprep.subr.bf16.mxu0 0
    %2094 = vmatpush1.bf16.msra.mxu0 0
    %2095 = vmatprep.subr.bf16.mxu0 0
    %2096 = vmatpush1.bf16.msra.mxu0 0
    %2097 = vmatprep.subr.bf16.mxu0 0
    %2098 = vmatpush1.bf16.msra.mxu0 0
    %2099 = vmatprep.subr.bf16.mxu0 0
    %2100 = vmatpush1.bf16.msra.mxu0 0
    %2101 = vmatprep.subr.bf16.mxu0 0
    %2102 = vmatpush1.bf16.msra.mxu0 0
    %2103 = vmatprep.subr.bf16.mxu0 0
    %2104 = vmatpush1.bf16.msra.mxu0 0
    %2105 = vmatprep.subr.bf16.mxu0 0
    %2106 = vmatpush1.bf16.msra.mxu0 0
    %2107 = vmatprep.mubr.bf16.mxu0 0
    %2108 = vmatmul.mubr.bf16.gmra.mrb[0].mxu0 %v1900
    %v2109 = vpop.f32.mrb[0].mxu0
    %v2110 = vadd.f32 %v2009, %v2109
    %v2111 = vpop.f32.mrb[0].mxu0
    %v2112 = vpop.f32.mrb[0].mxu0
    %v2113 = vadd.f32 %v2010, %v2112
    %v2114 = vpop.f32.mrb[0].mxu0
    %2115 = vdwg.mxu0
    %v2116 = vld [vmem:[#allocation3 + $0xd0] sm:$0xff]
    %v2117 = vld [vmem:[#allocation3 + $0xf0] sm:$0xff]
    %v2118 = vld [vmem:[#allocation4 + $0x8] sm:$0xf]
    %v2119 = vld [vmem:[#allocation4 + $0x18] sm:$0xf]
    %v2120 = vld [vmem:[#allocation4 + $0x28] sm:$0xf]
    %v2121 = vld [vmem:[#allocation4 + $0x38] sm:$0xf]
    %v2122 = vld [vmem:[#allocation4 + $0x48] sm:$0xf]
    %v2123 = vld [vmem:[#allocation4 + $0x58] sm:$0xf]
    %v2124 = vld [vmem:[#allocation4 + $0x68] sm:$0xf]
    %v2125 = vld [vmem:[#allocation4 + $0x78] sm:$0xf]
    %v2126 = vld [vmem:[#allocation4 + $0x88] sm:$0xf]
    %v2127 = vld [vmem:[#allocation4 + $0x98] sm:$0xf]
    %v2128 = vld [vmem:[#allocation4 + $0xa8] sm:$0xf]
    %v2129 = vld [vmem:[#allocation4 + $0xb8] sm:$0xf]
    %v2130 = vld [vmem:[#allocation4 + $0xc8] sm:$0xf]
    %v2131 = vld [vmem:[#allocation4 + $0xd8] sm:$0xf]
    %v2132 = vld [vmem:[#allocation4 + $0xe8] sm:$0xf]
    %v2133 = vld [vmem:[#allocation4 + $0xf8] sm:$0xf]
    %v2150 = vunpack.c.l.b16 %v2118
    %v2151 = vunpack.c.l.b16 %v2119
    %v2152 = vunpack.c.l.b16 %v2120
    %v2153 = vunpack.c.l.b16 %v2121
    %v2154 = vunpack.c.l.b16 %v2122
    %v2155 = vunpack.c.l.b16 %v2123
    %v2156 = vunpack.c.l.b16 %v2124
    %v2157 = vunpack.c.l.b16 %v2125
    %v2158 = vunpack.c.l.b16 %v2126
    %v2159 = vunpack.c.l.b16 %v2127
    %v2160 = vunpack.c.l.b16 %v2128
    %v2161 = vunpack.c.l.b16 %v2129
    %v2162 = vunpack.c.l.b16 %v2130
    %v2163 = vunpack.c.l.b16 %v2131
    %v2164 = vunpack.c.l.b16 %v2132
    %v2165 = vunpack.c.l.b16 %v2133
    %v2166 = vpack.c.b16 %v2151, %v2150
    %v2167 = vpack.c.b16 %v2153, %v2152
    %v2168 = vpack.c.b16 %v2155, %v2154
    %v2169 = vpack.c.b16 %v2157, %v2156
    %v2170 = vpack.c.b16 %v2159, %v2158
    %v2171 = vpack.c.b16 %v2161, %v2160
    %v2172 = vpack.c.b16 %v2163, %v2162
    %v2173 = vpack.c.b16 %v2165, %v2164
    %2182 = vmatprep.subr.bf16.mxu0 0
    %2183 = vmatpush1.bf16.msra.mxu0 %v2166
    %2184 = vmatprep.subr.bf16.mxu0 0
    %2185 = vmatpush1.bf16.msra.mxu0 %v2167
    %2186 = vmatprep.subr.bf16.mxu0 0
    %2187 = vmatpush1.bf16.msra.mxu0 %v2168
    %2188 = vmatprep.subr.bf16.mxu0 0
    %2189 = vmatpush1.bf16.msra.mxu0 %v2169
    %2190 = vmatprep.subr.bf16.mxu0 0
    %2191 = vmatpush1.bf16.msra.mxu0 %v2170
    %2192 = vmatprep.subr.bf16.mxu0 0
    %2193 = vmatpush1.bf16.msra.mxu0 %v2171
    %2194 = vmatprep.subr.bf16.mxu0 0
    %2195 = vmatpush1.bf16.msra.mxu0 %v2172
    %2196 = vmatprep.subr.bf16.mxu0 0
    %2197 = vmatpush1.bf16.msra.mxu0 %v2173
    %2198 = vmatprep.subr.bf16.mxu0 0
    %2199 = vmatpush1.bf16.msra.mxu0 0
    %2200 = vmatprep.subr.bf16.mxu0 0
    %2201 = vmatpush1.bf16.msra.mxu0 0
    %2202 = vmatprep.subr.bf16.mxu0 0
    %2203 = vmatpush1.bf16.msra.mxu0 0
    %2204 = vmatprep.subr.bf16.mxu0 0
    %2205 = vmatpush1.bf16.msra.mxu0 0
    %2206 = vmatprep.subr.bf16.mxu0 0
    %2207 = vmatpush1.bf16.msra.mxu0 0
    %2208 = vmatprep.subr.bf16.mxu0 0
    %2209 = vmatpush1.bf16.msra.mxu0 0
    %2210 = vmatprep.subr.bf16.mxu0 0
    %2211 = vmatpush1.bf16.msra.mxu0 0
    %2212 = vmatprep.subr.bf16.mxu0 0
    %2213 = vmatpush1.bf16.msra.mxu0 0
    %2214 = vmatprep.mubr.bf16.mxu0 0
    %2215 = vmatmul.mubr.bf16.gmra.mrb[0].mxu0 %v1900
    %v2216 = vpop.f32.mrb[0].mxu0
    %v2217 = vadd.f32 %v2116, %v2216
    %v2218 = vpop.f32.mrb[0].mxu0
    %v2219 = vpop.f32.mrb[0].mxu0
    %v2220 = vadd.f32 %v2117, %v2219
    %v2221 = vpop.f32.mrb[0].mxu0
    %2222 = vdwg.mxu0
    %v2223 = vld [vmem:[#allocation3 + $0xd8] sm:$0xff]
    %v2224 = vld [vmem:[#allocation3 + $0xf8] sm:$0xff]
    %v2225 = vld [vmem:[#allocation4 + $0xc] sm:$0xf]
    %v2226 = vld [vmem:[#allocation4 + $0x1c] sm:$0xf]
    %v2227 = vld [vmem:[#allocation4 + $0x2c] sm:$0xf]
    %v2228 = vld [vmem:[#allocation4 + $0x3c] sm:$0xf]
    %v2229 = vld [vmem:[#allocation4 + $0x4c] sm:$0xf]
    %v2230 = vld [vmem:[#allocation4 + $0x5c] sm:$0xf]
    %v2231 = vld [vmem:[#allocation4 + $0x6c] sm:$0xf]
    %v2232 = vld [vmem:[#allocation4 + $0x7c] sm:$0xf]
    %v2233 = vld [vmem:[#allocation4 + $0x8c] sm:$0xf]
    %v2234 = vld [vmem:[#allocation4 + $0x9c] sm:$0xf]
    %v2235 = vld [vmem:[#allocation4 + $0xac] sm:$0xf]
    %v2236 = vld [vmem:[#allocation4 + $0xbc] sm:$0xf]
    %v2237 = vld [vmem:[#allocation4 + $0xcc] sm:$0xf]
    %v2238 = vld [vmem:[#allocation4 + $0xdc] sm:$0xf]
    %v2239 = vld [vmem:[#allocation4 + $0xec] sm:$0xf]
    %v2240 = vld [vmem:[#allocation4 + $0xfc] sm:$0xf]
    %v2257 = vunpack.c.l.b16 %v2225
    %v2258 = vunpack.c.l.b16 %v2226
    %v2259 = vunpack.c.l.b16 %v2227
    %v2260 = vunpack.c.l.b16 %v2228
    %v2261 = vunpack.c.l.b16 %v2229
    %v2262 = vunpack.c.l.b16 %v2230
    %v2263 = vunpack.c.l.b16 %v2231
    %v2264 = vunpack.c.l.b16 %v2232
    %v2265 = vunpack.c.l.b16 %v2233
    %v2266 = vunpack.c.l.b16 %v2234
    %v2267 = vunpack.c.l.b16 %v2235
    %v2268 = vunpack.c.l.b16 %v2236
    %v2269 = vunpack.c.l.b16 %v2237
    %v2270 = vunpack.c.l.b16 %v2238
    %v2271 = vunpack.c.l.b16 %v2239
    %v2272 = vunpack.c.l.b16 %v2240
    %v2273 = vpack.c.b16 %v2258, %v2257
    %v2274 = vpack.c.b16 %v2260, %v2259
    %v2275 = vpack.c.b16 %v2262, %v2261
    %v2276 = vpack.c.b16 %v2264, %v2263
    %v2277 = vpack.c.b16 %v2266, %v2265
    %v2278 = vpack.c.b16 %v2268, %v2267
    %v2279 = vpack.c.b16 %v2270, %v2269
    %v2280 = vpack.c.b16 %v2272, %v2271
    %2289 = vmatprep.subr.bf16.mxu0 0
    %2290 = vmatpush1.bf16.msra.mxu0 %v2273
    %2291 = vmatprep.subr.bf16.mxu0 0
    %2292 = vmatpush1.bf16.msra.mxu0 %v2274
    %2293 = vmatprep.subr.bf16.mxu0 0
    %2294 = vmatpush1.bf16.msra.mxu0 %v2275
    %2295 = vmatprep.subr.bf16.mxu0 0
    %2296 = vmatpush1.bf16.msra.mxu0 %v2276
    %2297 = vmatprep.subr.bf16.mxu0 0
    %2298 = vmatpush1.bf16.msra.mxu0 %v2277
    %2299 = vmatprep.subr.bf16.mxu0 0
    %2300 = vmatpush1.bf16.msra.mxu0 %v2278
    %2301 = vmatprep.subr.bf16.mxu0 0
    %2302 = vmatpush1.bf16.msra.mxu0 %v2279
    %2303 = vmatprep.subr.bf16.mxu0 0
    %2304 = vmatpush1.bf16.msra.mxu0 %v2280
    %2305 = vmatprep.subr.bf16.mxu0 0
    %2306 = vmatpush1.bf16.msra.mxu0 0
    %2307 = vmatprep.subr.bf16.mxu0 0
    %2308 = vmatpush1.bf16.msra.mxu0 0
    %2309 = vmatprep.subr.bf16.mxu0 0
    %2310 = vmatpush1.bf16.msra.mxu0 0
    %2311 = vmatprep.subr.bf16.mxu0 0
    %2312 = vmatpush1.bf16.msra.mxu0 0
    %2313 = vmatprep.subr.bf16.mxu0 0
    %2314 = vmatpush1.bf16.msra.mxu0 0
    %2315 = vmatprep.subr.bf16.mxu0 0
    %2316 = vmatpush1.bf16.msra.mxu0 0
    %2317 = vmatprep.subr.bf16.mxu0 0
    %2318 = vmatpush1.bf16.msra.mxu0 0
    %2319 = vmatprep.subr.bf16.mxu0 0
    %2320 = vmatpush1.bf16.msra.mxu0 0
    %2321 = vmatprep.mubr.bf16.mxu0 0
    %2322 = vmatmul.mubr.bf16.gmra.mrb[0].mxu0 %v1900
    %v2323 = vpop.f32.mrb[0].mxu0
    %v2324 = vadd.f32 %v2223, %v2323
    %v2325 = vpop.f32.mrb[0].mxu0
    %v2326 = vpop.f32.mrb[0].mxu0
    %v2327 = vadd.f32 %v2224, %v2326
    %v2328 = vpop.f32.mrb[0].mxu0
    %2329 = vdwg.mxu0
    %v2330 = vxor.u32 %v2003, 2147483648
    %v2331 = vxor.u32 %v2006, 2147483648
    %v2332 = vmul.f32 %v2330, 1.442695
    %v2333 = vpow.pop %v2332
    %v2334 = vmul.f32 %v2331, 1.442695
    %v2335 = vpow.pop %v2334
    %v2336 = vadd.f32 %v2333, 1.0
    %v2337 = vadd.f32 %v2335, 1.0
    %v2338 = vrcp.pop %v2336
    %v2339 = vmul.f32 1.0, %v2338
    %v2340 = vrcp.pop %v2337
    %v2341 = vmul.f32 1.0, %v2340
    %v2342 = vxor.u32 %v2110, 2147483648
    %v2343 = vxor.u32 %v2113, 2147483648
    %v2344 = vmul.f32 %v2342, 1.442695
    %v2345 = vpow.pop %v2344
    %v2346 = vmul.f32 %v2343, 1.442695
    %v2347 = vpow.pop %v2346
    %v2348 = vadd.f32 %v2345, 1.0
    %v2349 = vadd.f32 %v2347, 1.0
    %v2350 = vrcp.pop %v2348
    %v2351 = vmul.f32 1.0, %v2350
    %v2352 = vrcp.pop %v2349
    %v2353 = vmul.f32 1.0, %v2352
    %v2354 = vtanh.pop %v2217
    %v2355 = vtanh.pop %v2220
    %v2356 = vxor.u32 %v2324, 2147483648
    %v2357 = vxor.u32 %v2327, 2147483648
    %v2358 = vmul.f32 %v2356, 1.442695
    %v2359 = vpow.pop %v2358
    %v2360 = vmul.f32 %v2357, 1.442695
    %v2361 = vpow.pop %v2360
    %v2362 = vadd.f32 %v2359, 1.0
    %v2363 = vadd.f32 %v2361, 1.0
    %v2364 = vrcp.pop %v2362
    %v2365 = vmul.f32 1.0, %v2364
    %v2366 = vrcp.pop %v2363
    %v2367 = vmul.f32 1.0, %v2366
    %v2368 = vmul.f32 %v2351, %v1894
    %v2369 = vmul.f32 %v2353, %v1895
    %v2370 = vmul.f32 %v2339, %v2354
    %v2371 = vmul.f32 %v2341, %v2355
    %v2372 = vadd.f32 %v2368, %v2370
    %v2373 = vadd.f32 %v2369, %v2371
    %v2374 = vtanh.pop %v2372
    %v2375 = vtanh.pop %v2373
    %v2376 = vmul.f32 %v2365, %v2374
    %v2377 = vmul.f32 %v2367, %v2375
    %v2378 = vpack.c.bf16 %v2377, %v2376
    %2379 = vst [vmem:[#allocation2 + $0x18] sm:$0xff] %v2378
    %v2380 = vld [vmem:[#allocation3 + $0x100] sm:$0xff]
    %v2381 = vld [vmem:[#allocation3 + $0x120] sm:$0xff]
    %v2382 = vld [vmem:[#allocation4] sm:$0xf]
    %v2383 = vld [vmem:[#allocation4 + $0x10] sm:$0xf]
    %v2384 = vld [vmem:[#allocation4 + $0x20] sm:$0xf]
    %v2385 = vld [vmem:[#allocation4 + $0x30] sm:$0xf]
    %v2386 = vld [vmem:[#allocation4 + $0x40] sm:$0xf]
    %v2387 = vld [vmem:[#allocation4 + $0x50] sm:$0xf]
    %v2388 = vld [vmem:[#allocation4 + $0x60] sm:$0xf]
    %v2389 = vld [vmem:[#allocation4 + $0x70] sm:$0xf]
    %v2390 = vld [vmem:[#allocation4 + $0x80] sm:$0xf]
    %v2391 = vld [vmem:[#allocation4 + $0x90] sm:$0xf]
    %v2392 = vld [vmem:[#allocation4 + $0xa0] sm:$0xf]
    %v2393 = vld [vmem:[#allocation4 + $0xb0] sm:$0xf]
    %v2394 = vld [vmem:[#allocation4 + $0xc0] sm:$0xf]
    %v2395 = vld [vmem:[#allocation4 + $0xd0] sm:$0xf]
    %v2396 = vld [vmem:[#allocation4 + $0xe0] sm:$0xf]
    %v2397 = vld [vmem:[#allocation4 + $0xf0] sm:$0xf]
    %v2414 = vunpack.c.l.b16 %v2382
    %v2415 = vunpack.c.l.b16 %v2383
    %v2416 = vunpack.c.l.b16 %v2384
    %v2417 = vunpack.c.l.b16 %v2385
    %v2418 = vunpack.c.l.b16 %v2386
    %v2419 = vunpack.c.l.b16 %v2387
    %v2420 = vunpack.c.l.b16 %v2388
    %v2421 = vunpack.c.l.b16 %v2389
    %v2422 = vunpack.c.l.b16 %v2390
    %v2423 = vunpack.c.l.b16 %v2391
    %v2424 = vunpack.c.l.b16 %v2392
    %v2425 = vunpack.c.l.b16 %v2393
    %v2426 = vunpack.c.l.b16 %v2394
    %v2427 = vunpack.c.l.b16 %v2395
    %v2428 = vunpack.c.l.b16 %v2396
    %v2429 = vunpack.c.l.b16 %v2397
    %v2430 = vpack.c.b16 %v2415, %v2414
    %v2431 = vpack.c.b16 %v2417, %v2416
    %v2432 = vpack.c.b16 %v2419, %v2418
    %v2433 = vpack.c.b16 %v2421, %v2420
    %v2434 = vpack.c.b16 %v2423, %v2422
    %v2435 = vpack.c.b16 %v2425, %v2424
    %v2436 = vpack.c.b16 %v2427, %v2426
    %v2437 = vpack.c.b16 %v2429, %v2428
    %2446 = vmatprep.subr.bf16.mxu0 0
    %2447 = vmatpush1.bf16.msra.mxu0 %v2430
    %2448 = vmatprep.subr.bf16.mxu0 0
    %2449 = vmatpush1.bf16.msra.mxu0 %v2431
    %2450 = vmatprep.subr.bf16.mxu0 0
    %2451 = vmatpush1.bf16.msra.mxu0 %v2432
    %2452 = vmatprep.subr.bf16.mxu0 0
    %2453 = vmatpush1.bf16.msra.mxu0 %v2433
    %2454 = vmatprep.subr.bf16.mxu0 0
    %2455 = vmatpush1.bf16.msra.mxu0 %v2434
    %2456 = vmatprep.subr.bf16.mxu0 0
    %2457 = vmatpush1.bf16.msra.mxu0 %v2435
    %2458 = vmatprep.subr.bf16.mxu0 0
    %2459 = vmatpush1.bf16.msra.mxu0 %v2436
    %2460 = vmatprep.subr.bf16.mxu0 0
    %2461 = vmatpush1.bf16.msra.mxu0 %v2437
    %2462 = vmatprep.subr.bf16.mxu0 0
    %2463 = vmatpush1.bf16.msra.mxu0 0
    %2464 = vmatprep.subr.bf16.mxu0 0
    %2465 = vmatpush1.bf16.msra.mxu0 0
    %2466 = vmatprep.subr.bf16.mxu0 0
    %2467 = vmatpush1.bf16.msra.mxu0 0
    %2468 = vmatprep.subr.bf16.mxu0 0
    %2469 = vmatpush1.bf16.msra.mxu0 0
    %2470 = vmatprep.subr.bf16.mxu0 0
    %2471 = vmatpush1.bf16.msra.mxu0 0
    %2472 = vmatprep.subr.bf16.mxu0 0
    %2473 = vmatpush1.bf16.msra.mxu0 0
    %2474 = vmatprep.subr.bf16.mxu0 0
    %2475 = vmatpush1.bf16.msra.mxu0 0
    %2476 = vmatprep.subr.bf16.mxu0 0
    %2477 = vmatpush1.bf16.msra.mxu0 0
    %2478 = vmatprep.mubr.bf16.mxu0 0
    %2479 = vmatmul.mubr.bf16.gmra.mrb[0].mxu0 %v2378
    %v2480 = vpop.f32.mrb[0].mxu0
    %v2481 = vadd.f32 %v2380, %v2480
    %v2482 = vpop.f32.mrb[0].mxu0
    %v2483 = vpop.f32.mrb[0].mxu0
    %v2484 = vadd.f32 %v2381, %v2483
    %v2485 = vpop.f32.mrb[0].mxu0
    %2486 = vdwg.mxu0
    %v2487 = vld [vmem:[#allocation3 + $0x108] sm:$0xff]
    %v2488 = vld [vmem:[#allocation3 + $0x128] sm:$0xff]
    %v2489 = vld [vmem:[#allocation4 + $0x4] sm:$0xf]
    %v2490 = vld [vmem:[#allocation4 + $0x14] sm:$0xf]
    %v2491 = vld [vmem:[#allocation4 + $0x24] sm:$0xf]
    %v2492 = vld [vmem:[#allocation4 + $0x34] sm:$0xf]
    %v2493 = vld [vmem:[#allocation4 + $0x44] sm:$0xf]
    %v2494 = vld [vmem:[#allocation4 + $0x54] sm:$0xf]
    %v2495 = vld [vmem:[#allocation4 + $0x64] sm:$0xf]
    %v2496 = vld [vmem:[#allocation4 + $0x74] sm:$0xf]
    %v2497 = vld [vmem:[#allocation4 + $0x84] sm:$0xf]
    %v2498 = vld [vmem:[#allocation4 + $0x94] sm:$0xf]
    %v2499 = vld [vmem:[#allocation4 + $0xa4] sm:$0xf]
    %v2500 = vld [vmem:[#allocation4 + $0xb4] sm:$0xf]
    %v2501 = vld [vmem:[#allocation4 + $0xc4] sm:$0xf]
    %v2502 = vld [vmem:[#allocation4 + $0xd4] sm:$0xf]
    %v2503 = vld [vmem:[#allocation4 + $0xe4] sm:$0xf]
    %v2504 = vld [vmem:[#allocation4 + $0xf4] sm:$0xf]
    %v2521 = vunpack.c.l.b16 %v2489
    %v2522 = vunpack.c.l.b16 %v2490
    %v2523 = vunpack.c.l.b16 %v2491
    %v2524 = vunpack.c.l.b16 %v2492
    %v2525 = vunpack.c.l.b16 %v2493
    %v2526 = vunpack.c.l.b16 %v2494
    %v2527 = vunpack.c.l.b16 %v2495
    %v2528 = vunpack.c.l.b16 %v2496
    %v2529 = vunpack.c.l.b16 %v2497
    %v2530 = vunpack.c.l.b16 %v2498
    %v2531 = vunpack.c.l.b16 %v2499
    %v2532 = vunpack.c.l.b16 %v2500
    %v2533 = vunpack.c.l.b16 %v2501
    %v2534 = vunpack.c.l.b16 %v2502
    %v2535 = vunpack.c.l.b16 %v2503
    %v2536 = vunpack.c.l.b16 %v2504
    %v2537 = vpack.c.b16 %v2522, %v2521
    %v2538 = vpack.c.b16 %v2524, %v2523
    %v2539 = vpack.c.b16 %v2526, %v2525
    %v2540 = vpack.c.b16 %v2528, %v2527
    %v2541 = vpack.c.b16 %v2530, %v2529
    %v2542 = vpack.c.b16 %v2532, %v2531
    %v2543 = vpack.c.b16 %v2534, %v2533
    %v2544 = vpack.c.b16 %v2536, %v2535
    %2553 = vmatprep.subr.bf16.mxu0 0
    %2554 = vmatpush1.bf16.msra.mxu0 %v2537
    %2555 = vmatprep.subr.bf16.mxu0 0
    %2556 = vmatpush1.bf16.msra.mxu0 %v2538
    %2557 = vmatprep.subr.bf16.mxu0 0
    %2558 = vmatpush1.bf16.msra.mxu0 %v2539
    %2559 = vmatprep.subr.bf16.mxu0 0
    %2560 = vmatpush1.bf16.msra.mxu0 %v2540
    %2561 = vmatprep.subr.bf16.mxu0 0
    %2562 = vmatpush1.bf16.msra.mxu0 %v2541
    %2563 = vmatprep.subr.bf16.mxu0 0
    %2564 = vmatpush1.bf16.msra.mxu0 %v2542
    %2565 = vmatprep.subr.bf16.mxu0 0
    %2566 = vmatpush1.bf16.msra.mxu0 %v2543
    %2567 = vmatprep.subr.bf16.mxu0 0
    %2568 = vmatpush1.bf16.msra.mxu0 %v2544
    %2569 = vmatprep.subr.bf16.mxu0 0
    %2570 = vmatpush1.bf16.msra.mxu0 0
    %2571 = vmatprep.subr.bf16.mxu0 0
    %2572 = vmatpush1.bf16.msra.mxu0 0
    %2573 = vmatprep.subr.bf16.mxu0 0
    %2574 = vmatpush1.bf16.msra.mxu0 0
    %2575 = vmatprep.subr.bf16.mxu0 0
    %2576 = vmatpush1.bf16.msra.mxu0 0
    %2577 = vmatprep.subr.bf16.mxu0 0
    %2578 = vmatpush1.bf16.msra.mxu0 0
    %2579 = vmatprep.subr.bf16.mxu0 0
    %2580 = vmatpush1.bf16.msra.mxu0 0
    %2581 = vmatprep.subr.bf16.mxu0 0
    %2582 = vmatpush1.bf16.msra.mxu0 0
    %2583 = vmatprep.subr.bf16.mxu0 0
    %2584 = vmatpush1.bf16.msra.mxu0 0
    %2585 = vmatprep.mubr.bf16.mxu0 0
    %2586 = vmatmul.mubr.bf16.gmra.mrb[0].mxu0 %v2378
    %v2587 = vpop.f32.mrb[0].mxu0
    %v2588 = vadd.f32 %v2487, %v2587
    %v2589 = vpop.f32.mrb[0].mxu0
    %v2590 = vpop.f32.mrb[0].mxu0
    %v2591 = vadd.f32 %v2488, %v2590
    %v2592 = vpop.f32.mrb[0].mxu0
    %2593 = vdwg.mxu0
    %v2594 = vld [vmem:[#allocation3 + $0x110] sm:$0xff]
    %v2595 = vld [vmem:[#allocation3 + $0x130] sm:$0xff]
    %v2596 = vld [vmem:[#allocation4 + $0x8] sm:$0xf]
    %v2597 = vld [vmem:[#allocation4 + $0x18] sm:$0xf]
    %v2598 = vld [vmem:[#allocation4 + $0x28] sm:$0xf]
    %v2599 = vld [vmem:[#allocation4 + $0x38] sm:$0xf]
    %v2600 = vld [vmem:[#allocation4 + $0x48] sm:$0xf]
    %v2601 = vld [vmem:[#allocation4 + $0x58] sm:$0xf]
    %v2602 = vld [vmem:[#allocation4 + $0x68] sm:$0xf]
    %v2603 = vld [vmem:[#allocation4 + $0x78] sm:$0xf]
    %v2604 = vld [vmem:[#allocation4 + $0x88] sm:$0xf]
    %v2605 = vld [vmem:[#allocation4 + $0x98] sm:$0xf]
    %v2606 = vld [vmem:[#allocation4 + $0xa8] sm:$0xf]
    %v2607 = vld [vmem:[#allocation4 + $0xb8] sm:$0xf]
    %v2608 = vld [vmem:[#allocation4 + $0xc8] sm:$0xf]
    %v2609 = vld [vmem:[#allocation4 + $0xd8] sm:$0xf]
    %v2610 = vld [vmem:[#allocation4 + $0xe8] sm:$0xf]
    %v2611 = vld [vmem:[#allocation4 + $0xf8] sm:$0xf]
    %v2628 = vunpack.c.l.b16 %v2596
    %v2629 = vunpack.c.l.b16 %v2597
    %v2630 = vunpack.c.l.b16 %v2598
    %v2631 = vunpack.c.l.b16 %v2599
    %v2632 = vunpack.c.l.b16 %v2600
    %v2633 = vunpack.c.l.b16 %v2601
    %v2634 = vunpack.c.l.b16 %v2602
    %v2635 = vunpack.c.l.b16 %v2603
    %v2636 = vunpack.c.l.b16 %v2604
    %v2637 = vunpack.c.l.b16 %v2605
    %v2638 = vunpack.c.l.b16 %v2606
    %v2639 = vunpack.c.l.b16 %v2607
    %v2640 = vunpack.c.l.b16 %v2608
    %v2641 = vunpack.c.l.b16 %v2609
    %v2642 = vunpack.c.l.b16 %v2610
    %v2643 = vunpack.c.l.b16 %v2611
    %v2644 = vpack.c.b16 %v2629, %v2628
    %v2645 = vpack.c.b16 %v2631, %v2630
    %v2646 = vpack.c.b16 %v2633, %v2632
    %v2647 = vpack.c.b16 %v2635, %v2634
    %v2648 = vpack.c.b16 %v2637, %v2636
    %v2649 = vpack.c.b16 %v2639, %v2638
    %v2650 = vpack.c.b16 %v2641, %v2640
    %v2651 = vpack.c.b16 %v2643, %v2642
    %2660 = vmatprep.subr.bf16.mxu0 0
    %2661 = vmatpush1.bf16.msra.mxu0 %v2644
    %2662 = vmatprep.subr.bf16.mxu0 0
    %2663 = vmatpush1.bf16.msra.mxu0 %v2645
    %2664 = vmatprep.subr.bf16.mxu0 0
    %2665 = vmatpush1.bf16.msra.mxu0 %v2646
    %2666 = vmatprep.subr.bf16.mxu0 0
    %2667 = vmatpush1.bf16.msra.mxu0 %v2647
    %2668 = vmatprep.subr.bf16.mxu0 0
    %2669 = vmatpush1.bf16.msra.mxu0 %v2648
    %2670 = vmatprep.subr.bf16.mxu0 0
    %2671 = vmatpush1.bf16.msra.mxu0 %v2649
    %2672 = vmatprep.subr.bf16.mxu0 0
    %2673 = vmatpush1.bf16.msra.mxu0 %v2650
    %2674 = vmatprep.subr.bf16.mxu0 0
    %2675 = vmatpush1.bf16.msra.mxu0 %v2651
    %2676 = vmatprep.subr.bf16.mxu0 0
    %2677 = vmatpush1.bf16.msra.mxu0 0
    %2678 = vmatprep.subr.bf16.mxu0 0
    %2679 = vmatpush1.bf16.msra.mxu0 0
    %2680 = vmatprep.subr.bf16.mxu0 0
    %2681 = vmatpush1.bf16.msra.mxu0 0
    %2682 = vmatprep.subr.bf16.mxu0 0
    %2683 = vmatpush1.bf16.msra.mxu0 0
    %2684 = vmatprep.subr.bf16.mxu0 0
    %2685 = vmatpush1.bf16.msra.mxu0 0
    %2686 = vmatprep.subr.bf16.mxu0 0
    %2687 = vmatpush1.bf16.msra.mxu0 0
    %2688 = vmatprep.subr.bf16.mxu0 0
    %2689 = vmatpush1.bf16.msra.mxu0 0
    %2690 = vmatprep.subr.bf16.mxu0 0
    %2691 = vmatpush1.bf16.msra.mxu0 0
    %2692 = vmatprep.mubr.bf16.mxu0 0
    %2693 = vmatmul.mubr.bf16.gmra.mrb[0].mxu0 %v2378
    %v2694 = vpop.f32.mrb[0].mxu0
    %v2695 = vadd.f32 %v2594, %v2694
    %v2696 = vpop.f32.mrb[0].mxu0
    %v2697 = vpop.f32.mrb[0].mxu0
    %v2698 = vadd.f32 %v2595, %v2697
    %v2699 = vpop.f32.mrb[0].mxu0
    %2700 = vdwg.mxu0
    %v2701 = vld [vmem:[#allocation3 + $0x118] sm:$0xff]
    %v2702 = vld [vmem:[#allocation3 + $0x138] sm:$0xff]
    %v2703 = vld [vmem:[#allocation4 + $0xc] sm:$0xf]
    %v2704 = vld [vmem:[#allocation4 + $0x1c] sm:$0xf]
    %v2705 = vld [vmem:[#allocation4 + $0x2c] sm:$0xf]
    %v2706 = vld [vmem:[#allocation4 + $0x3c] sm:$0xf]
    %v2707 = vld [vmem:[#allocation4 + $0x4c] sm:$0xf]
    %v2708 = vld [vmem:[#allocation4 + $0x5c] sm:$0xf]
    %v2709 = vld [vmem:[#allocation4 + $0x6c] sm:$0xf]
    %v2710 = vld [vmem:[#allocation4 + $0x7c] sm:$0xf]
    %v2711 = vld [vmem:[#allocation4 + $0x8c] sm:$0xf]
    %v2712 = vld [vmem:[#allocation4 + $0x9c] sm:$0xf]
    %v2713 = vld [vmem:[#allocation4 + $0xac] sm:$0xf]
    %v2714 = vld [vmem:[#allocation4 + $0xbc] sm:$0xf]
    %v2715 = vld [vmem:[#allocation4 + $0xcc] sm:$0xf]
    %v2716 = vld [vmem:[#allocation4 + $0xdc] sm:$0xf]
    %v2717 = vld [vmem:[#allocation4 + $0xec] sm:$0xf]
    %v2718 = vld [vmem:[#allocation4 + $0xfc] sm:$0xf]
    %v2735 = vunpack.c.l.b16 %v2703
    %v2736 = vunpack.c.l.b16 %v2704
    %v2737 = vunpack.c.l.b16 %v2705
    %v2738 = vunpack.c.l.b16 %v2706
    %v2739 = vunpack.c.l.b16 %v2707
    %v2740 = vunpack.c.l.b16 %v2708
    %v2741 = vunpack.c.l.b16 %v2709
    %v2742 = vunpack.c.l.b16 %v2710
    %v2743 = vunpack.c.l.b16 %v2711
    %v2744 = vunpack.c.l.b16 %v2712
    %v2745 = vunpack.c.l.b16 %v2713
    %v2746 = vunpack.c.l.b16 %v2714
    %v2747 = vunpack.c.l.b16 %v2715
    %v2748 = vunpack.c.l.b16 %v2716
    %v2749 = vunpack.c.l.b16 %v2717
    %v2750 = vunpack.c.l.b16 %v2718
    %v2751 = vpack.c.b16 %v2736, %v2735
    %v2752 = vpack.c.b16 %v2738, %v2737
    %v2753 = vpack.c.b16 %v2740, %v2739
    %v2754 = vpack.c.b16 %v2742, %v2741
    %v2755 = vpack.c.b16 %v2744, %v2743
    %v2756 = vpack.c.b16 %v2746, %v2745
    %v2757 = vpack.c.b16 %v2748, %v2747
    %v2758 = vpack.c.b16 %v2750, %v2749
    %2767 = vmatprep.subr.bf16.mxu0 0
    %2768 = vmatpush1.bf16.msra.mxu0 %v2751
    %2769 = vmatprep.subr.bf16.mxu0 0
    %2770 = vmatpush1.bf16.msra.mxu0 %v2752
    %2771 = vmatprep.subr.bf16.mxu0 0
    %2772 = vmatpush1.bf16.msra.mxu0 %v2753
    %2773 = vmatprep.subr.bf16.mxu0 0
    %2774 = vmatpush1.bf16.msra.mxu0 %v2754
    %2775 = vmatprep.subr.bf16.mxu0 0
    %2776 = vmatpush1.bf16.msra.mxu0 %v2755
    %2777 = vmatprep.subr.bf16.mxu0 0
    %2778 = vmatpush1.bf16.msra.mxu0 %v2756
    %2779 = vmatprep.subr.bf16.mxu0 0
    %2780 = vmatpush1.bf16.msra.mxu0 %v2757
    %2781 = vmatprep.subr.bf16.mxu0 0
    %2782 = vmatpush1.bf16.msra.mxu0 %v2758
    %2783 = vmatprep.subr.bf16.mxu0 0
    %2784 = vmatpush1.bf16.msra.mxu0 0
    %2785 = vmatprep.subr.bf16.mxu0 0
    %2786 = vmatpush1.bf16.msra.mxu0 0
    %2787 = vmatprep.subr.bf16.mxu0 0
    %2788 = vmatpush1.bf16.msra.mxu0 0
    %2789 = vmatprep.subr.bf16.mxu0 0
    %2790 = vmatpush1.bf16.msra.mxu0 0
    %2791 = vmatprep.subr.bf16.mxu0 0
    %2792 = vmatpush1.bf16.msra.mxu0 0
    %2793 = vmatprep.subr.bf16.mxu0 0
    %2794 = vmatpush1.bf16.msra.mxu0 0
    %2795 = vmatprep.subr.bf16.mxu0 0
    %2796 = vmatpush1.bf16.msra.mxu0 0
    %2797 = vmatprep.subr.bf16.mxu0 0
    %2798 = vmatpush1.bf16.msra.mxu0 0
    %2799 = vmatprep.mubr.bf16.mxu0 0
    %2800 = vmatmul.mubr.bf16.gmra.mrb[0].mxu0 %v2378
    %v2801 = vpop.f32.mrb[0].mxu0
    %v2802 = vadd.f32 %v2701, %v2801
    %v2803 = vpop.f32.mrb[0].mxu0
    %v2804 = vpop.f32.mrb[0].mxu0
    %v2805 = vadd.f32 %v2702, %v2804
    %v2806 = vpop.f32.mrb[0].mxu0
    %2807 = vdwg.mxu0
    %v2808 = vxor.u32 %v2481, 2147483648
    %v2809 = vxor.u32 %v2484, 2147483648
    %v2810 = vmul.f32 %v2808, 1.442695
    %v2811 = vpow.pop %v2810
    %v2812 = vmul.f32 %v2809, 1.442695
    %v2813 = vpow.pop %v2812
    %v2814 = vadd.f32 %v2811, 1.0
    %v2815 = vadd.f32 %v2813, 1.0
    %v2816 = vrcp.pop %v2814
    %v2817 = vmul.f32 1.0, %v2816
    %v2818 = vrcp.pop %v2815
    %v2819 = vmul.f32 1.0, %v2818
    %v2820 = vxor.u32 %v2588, 2147483648
    %v2821 = vxor.u32 %v2591, 2147483648
    %v2822 = vmul.f32 %v2820, 1.442695
    %v2823 = vpow.pop %v2822
    %v2824 = vmul.f32 %v2821, 1.442695
    %v2825 = vpow.pop %v2824
    %v2826 = vadd.f32 %v2823, 1.0
    %v2827 = vadd.f32 %v2825, 1.0
    %v2828 = vrcp.pop %v2826
    %v2829 = vmul.f32 1.0, %v2828
    %v2830 = vrcp.pop %v2827
    %v2831 = vmul.f32 1.0, %v2830
    %v2832 = vtanh.pop %v2695
    %v2833 = vtanh.pop %v2698
    %v2834 = vxor.u32 %v2802, 2147483648
    %v2835 = vxor.u32 %v2805, 2147483648
    %v2836 = vmul.f32 %v2834, 1.442695
    %v2837 = vpow.pop %v2836
    %v2838 = vmul.f32 %v2835, 1.442695
    %v2839 = vpow.pop %v2838
    %v2840 = vadd.f32 %v2837, 1.0
    %v2841 = vadd.f32 %v2839, 1.0
    %v2842 = vrcp.pop %v2840
    %v2843 = vmul.f32 1.0, %v2842
    %v2844 = vrcp.pop %v2841
    %v2845 = vmul.f32 1.0, %v2844
    %v2846 = vmul.f32 %v2829, %v2372
    %v2847 = vmul.f32 %v2831, %v2373
    %v2848 = vmul.f32 %v2817, %v2832
    %v2849 = vmul.f32 %v2819, %v2833
    %v2850 = vadd.f32 %v2846, %v2848
    %v2851 = vadd.f32 %v2847, %v2849
    %v2852 = vtanh.pop %v2850
    %v2853 = vtanh.pop %v2851
    %v2854 = vmul.f32 %v2843, %v2852
    %v2855 = vmul.f32 %v2845, %v2853
    %v2856 = vpack.c.bf16 %v2855, %v2854
    %2857 = vst [vmem:[#allocation2 + $0x20] sm:$0xff] %v2856
    %v2858 = vld [vmem:[#allocation3 + $0x140] sm:$0xff]
    %v2859 = vld [vmem:[#allocation3 + $0x160] sm:$0xff]
    %v2860 = vld [vmem:[#allocation4] sm:$0xf]
    %v2861 = vld [vmem:[#allocation4 + $0x10] sm:$0xf]
    %v2862 = vld [vmem:[#allocation4 + $0x20] sm:$0xf]
    %v2863 = vld [vmem:[#allocation4 + $0x30] sm:$0xf]
    %v2864 = vld [vmem:[#allocation4 + $0x40] sm:$0xf]
    %v2865 = vld [vmem:[#allocation4 + $0x50] sm:$0xf]
    %v2866 = vld [vmem:[#allocation4 + $0x60] sm:$0xf]
    %v2867 = vld [vmem:[#allocation4 + $0x70] sm:$0xf]
    %v2868 = vld [vmem:[#allocation4 + $0x80] sm:$0xf]
    %v2869 = vld [vmem:[#allocation4 + $0x90] sm:$0xf]
    %v2870 = vld [vmem:[#allocation4 + $0xa0] sm:$0xf]
    %v2871 = vld [vmem:[#allocation4 + $0xb0] sm:$0xf]
    %v2872 = vld [vmem:[#allocation4 + $0xc0] sm:$0xf]
    %v2873 = vld [vmem:[#allocation4 + $0xd0] sm:$0xf]
    %v2874 = vld [vmem:[#allocation4 + $0xe0] sm:$0xf]
    %v2875 = vld [vmem:[#allocation4 + $0xf0] sm:$0xf]
    %v2892 = vunpack.c.l.b16 %v2860
    %v2893 = vunpack.c.l.b16 %v2861
    %v2894 = vunpack.c.l.b16 %v2862
    %v2895 = vunpack.c.l.b16 %v2863
    %v2896 = vunpack.c.l.b16 %v2864
    %v2897 = vunpack.c.l.b16 %v2865
    %v2898 = vunpack.c.l.b16 %v2866
    %v2899 = vunpack.c.l.b16 %v2867
    %v2900 = vunpack.c.l.b16 %v2868
    %v2901 = vunpack.c.l.b16 %v2869
    %v2902 = vunpack.c.l.b16 %v2870
    %v2903 = vunpack.c.l.b16 %v2871
    %v2904 = vunpack.c.l.b16 %v2872
    %v2905 = vunpack.c.l.b16 %v2873
    %v2906 = vunpack.c.l.b16 %v2874
    %v2907 = vunpack.c.l.b16 %v2875
    %v2908 = vpack.c.b16 %v2893, %v2892
    %v2909 = vpack.c.b16 %v2895, %v2894
    %v2910 = vpack.c.b16 %v2897, %v2896
    %v2911 = vpack.c.b16 %v2899, %v2898
    %v2912 = vpack.c.b16 %v2901, %v2900
    %v2913 = vpack.c.b16 %v2903, %v2902
    %v2914 = vpack.c.b16 %v2905, %v2904
    %v2915 = vpack.c.b16 %v2907, %v2906
    %2924 = vmatprep.subr.bf16.mxu0 0
    %2925 = vmatpush1.bf16.msra.mxu0 %v2908
    %2926 = vmatprep.subr.bf16.mxu0 0
    %2927 = vmatpush1.bf16.msra.mxu0 %v2909
    %2928 = vmatprep.subr.bf16.mxu0 0
    %2929 = vmatpush1.bf16.msra.mxu0 %v2910
    %2930 = vmatprep.subr.bf16.mxu0 0
    %2931 = vmatpush1.bf16.msra.mxu0 %v2911
    %2932 = vmatprep.subr.bf16.mxu0 0
    %2933 = vmatpush1.bf16.msra.mxu0 %v2912
    %2934 = vmatprep.subr.bf16.mxu0 0
    %2935 = vmatpush1.bf16.msra.mxu0 %v2913
    %2936 = vmatprep.subr.bf16.mxu0 0
    %2937 = vmatpush1.bf16.msra.mxu0 %v2914
    %2938 = vmatprep.subr.bf16.mxu0 0
    %2939 = vmatpush1.bf16.msra.mxu0 %v2915
    %2940 = vmatprep.subr.bf16.mxu0 0
    %2941 = vmatpush1.bf16.msra.mxu0 0
    %2942 = vmatprep.subr.bf16.mxu0 0
    %2943 = vmatpush1.bf16.msra.mxu0 0
    %2944 = vmatprep.subr.bf16.mxu0 0
    %2945 = vmatpush1.bf16.msra.mxu0 0
    %2946 = vmatprep.subr.bf16.mxu0 0
    %2947 = vmatpush1.bf16.msra.mxu0 0
    %2948 = vmatprep.subr.bf16.mxu0 0
    %2949 = vmatpush1.bf16.msra.mxu0 0
    %2950 = vmatprep.subr.bf16.mxu0 0
    %2951 = vmatpush1.bf16.msra.mxu0 0
    %2952 = vmatprep.subr.bf16.mxu0 0
    %2953 = vmatpush1.bf16.msra.mxu0 0
    %2954 = vmatprep.subr.bf16.mxu0 0
    %2955 = vmatpush1.bf16.msra.mxu0 0
    %2956 = vmatprep.mubr.bf16.mxu0 0
    %2957 = vmatmul.mubr.bf16.gmra.mrb[0].mxu0 %v2856
    %v2958 = vpop.f32.mrb[0].mxu0
    %v2959 = vadd.f32 %v2858, %v2958
    %v2960 = vpop.f32.mrb[0].mxu0
    %v2961 = vpop.f32.mrb[0].mxu0
    %v2962 = vadd.f32 %v2859, %v2961
    %v2963 = vpop.f32.mrb[0].mxu0
    %2964 = vdwg.mxu0
    %v2965 = vld [vmem:[#allocation3 + $0x148] sm:$0xff]
    %v2966 = vld [vmem:[#allocation3 + $0x168] sm:$0xff]
    %v2967 = vld [vmem:[#allocation4 + $0x4] sm:$0xf]
    %v2968 = vld [vmem:[#allocation4 + $0x14] sm:$0xf]
    %v2969 = vld [vmem:[#allocation4 + $0x24] sm:$0xf]
    %v2970 = vld [vmem:[#allocation4 + $0x34] sm:$0xf]
    %v2971 = vld [vmem:[#allocation4 + $0x44] sm:$0xf]
    %v2972 = vld [vmem:[#allocation4 + $0x54] sm:$0xf]
    %v2973 = vld [vmem:[#allocation4 + $0x64] sm:$0xf]
    %v2974 = vld [vmem:[#allocation4 + $0x74] sm:$0xf]
    %v2975 = vld [vmem:[#allocation4 + $0x84] sm:$0xf]
    %v2976 = vld [vmem:[#allocation4 + $0x94] sm:$0xf]
    %v2977 = vld [vmem:[#allocation4 + $0xa4] sm:$0xf]
    %v2978 = vld [vmem:[#allocation4 + $0xb4] sm:$0xf]
    %v2979 = vld [vmem:[#allocation4 + $0xc4] sm:$0xf]
    %v2980 = vld [vmem:[#allocation4 + $0xd4] sm:$0xf]
    %v2981 = vld [vmem:[#allocation4 + $0xe4] sm:$0xf]
    %v2982 = vld [vmem:[#allocation4 + $0xf4] sm:$0xf]
    %v2999 = vunpack.c.l.b16 %v2967
    %v3000 = vunpack.c.l.b16 %v2968
    %v3001 = vunpack.c.l.b16 %v2969
    %v3002 = vunpack.c.l.b16 %v2970
    %v3003 = vunpack.c.l.b16 %v2971
    %v3004 = vunpack.c.l.b16 %v2972
    %v3005 = vunpack.c.l.b16 %v2973
    %v3006 = vunpack.c.l.b16 %v2974
    %v3007 = vunpack.c.l.b16 %v2975
    %v3008 = vunpack.c.l.b16 %v2976
    %v3009 = vunpack.c.l.b16 %v2977
    %v3010 = vunpack.c.l.b16 %v2978
    %v3011 = vunpack.c.l.b16 %v2979
    %v3012 = vunpack.c.l.b16 %v2980
    %v3013 = vunpack.c.l.b16 %v2981
    %v3014 = vunpack.c.l.b16 %v2982
    %v3015 = vpack.c.b16 %v3000, %v2999
    %v3016 = vpack.c.b16 %v3002, %v3001
    %v3017 = vpack.c.b16 %v3004, %v3003
    %v3018 = vpack.c.b16 %v3006, %v3005
    %v3019 = vpack.c.b16 %v3008, %v3007
    %v3020 = vpack.c.b16 %v3010, %v3009
    %v3021 = vpack.c.b16 %v3012, %v3011
    %v3022 = vpack.c.b16 %v3014, %v3013
    %3031 = vmatprep.subr.bf16.mxu0 0
    %3032 = vmatpush1.bf16.msra.mxu0 %v3015
    %3033 = vmatprep.subr.bf16.mxu0 0
    %3034 = vmatpush1.bf16.msra.mxu0 %v3016
    %3035 = vmatprep.subr.bf16.mxu0 0
    %3036 = vmatpush1.bf16.msra.mxu0 %v3017
    %3037 = vmatprep.subr.bf16.mxu0 0
    %3038 = vmatpush1.bf16.msra.mxu0 %v3018
    %3039 = vmatprep.subr.bf16.mxu0 0
    %3040 = vmatpush1.bf16.msra.mxu0 %v3019
    %3041 = vmatprep.subr.bf16.mxu0 0
    %3042 = vmatpush1.bf16.msra.mxu0 %v3020
    %3043 = vmatprep.subr.bf16.mxu0 0
    %3044 = vmatpush1.bf16.msra.mxu0 %v3021
    %3045 = vmatprep.subr.bf16.mxu0 0
    %3046 = vmatpush1.bf16.msra.mxu0 %v3022
    %3047 = vmatprep.subr.bf16.mxu0 0
    %3048 = vmatpush1.bf16.msra.mxu0 0
    %3049 = vmatprep.subr.bf16.mxu0 0
    %3050 = vmatpush1.bf16.msra.mxu0 0
    %3051 = vmatprep.subr.bf16.mxu0 0
    %3052 = vmatpush1.bf16.msra.mxu0 0
    %3053 = vmatprep.subr.bf16.mxu0 0
    %3054 = vmatpush1.bf16.msra.mxu0 0
    %3055 = vmatprep.subr.bf16.mxu0 0
    %3056 = vmatpush1.bf16.msra.mxu0 0
    %3057 = vmatprep.subr.bf16.mxu0 0
    %3058 = vmatpush1.bf16.msra.mxu0 0
    %3059 = vmatprep.subr.bf16.mxu0 0
    %3060 = vmatpush1.bf16.msra.mxu0 0
    %3061 = vmatprep.subr.bf16.mxu0 0
    %3062 = vmatpush1.bf16.msra.mxu0 0
    %3063 = vmatprep.mubr.bf16.mxu0 0
    %3064 = vmatmul.mubr.bf16.gmra.mrb[0].mxu0 %v2856
    %v3065 = vpop.f32.mrb[0].mxu0
    %v3066 = vadd.f32 %v2965, %v3065
    %v3067 = vpop.f32.mrb[0].mxu0
    %v3068 = vpop.f32.mrb[0].mxu0
    %v3069 = vadd.f32 %v2966, %v3068
    %v3070 = vpop.f32.mrb[0].mxu0
    %3071 = vdwg.mxu0
    %v3072 = vld [vmem:[#allocation3 + $0x150] sm:$0xff]
    %v3073 = vld [vmem:[#allocation3 + $0x170] sm:$0xff]
    %v3074 = vld [vmem:[#allocation4 + $0x8] sm:$0xf]
    %v3075 = vld [vmem:[#allocation4 + $0x18] sm:$0xf]
    %v3076 = vld [vmem:[#allocation4 + $0x28] sm:$0xf]
    %v3077 = vld [vmem:[#allocation4 + $0x38] sm:$0xf]
    %v3078 = vld [vmem:[#allocation4 + $0x48] sm:$0xf]
    %v3079 = vld [vmem:[#allocation4 + $0x58] sm:$0xf]
    %v3080 = vld [vmem:[#allocation4 + $0x68] sm:$0xf]
    %v3081 = vld [vmem:[#allocation4 + $0x78] sm:$0xf]
    %v3082 = vld [vmem:[#allocation4 + $0x88] sm:$0xf]
    %v3083 = vld [vmem:[#allocation4 + $0x98] sm:$0xf]
    %v3084 = vld [vmem:[#allocation4 + $0xa8] sm:$0xf]
    %v3085 = vld [vmem:[#allocation4 + $0xb8] sm:$0xf]
    %v3086 = vld [vmem:[#allocation4 + $0xc8] sm:$0xf]
    %v3087 = vld [vmem:[#allocation4 + $0xd8] sm:$0xf]
    %v3088 = vld [vmem:[#allocation4 + $0xe8] sm:$0xf]
    %v3089 = vld [vmem:[#allocation4 + $0xf8] sm:$0xf]
    %v3106 = vunpack.c.l.b16 %v3074
    %v3107 = vunpack.c.l.b16 %v3075
    %v3108 = vunpack.c.l.b16 %v3076
    %v3109 = vunpack.c.l.b16 %v3077
    %v3110 = vunpack.c.l.b16 %v3078
    %v3111 = vunpack.c.l.b16 %v3079
    %v3112 = vunpack.c.l.b16 %v3080
    %v3113 = vunpack.c.l.b16 %v3081
    %v3114 = vunpack.c.l.b16 %v3082
    %v3115 = vunpack.c.l.b16 %v3083
    %v3116 = vunpack.c.l.b16 %v3084
    %v3117 = vunpack.c.l.b16 %v3085
    %v3118 = vunpack.c.l.b16 %v3086
    %v3119 = vunpack.c.l.b16 %v3087
    %v3120 = vunpack.c.l.b16 %v3088
    %v3121 = vunpack.c.l.b16 %v3089
    %v3122 = vpack.c.b16 %v3107, %v3106
    %v3123 = vpack.c.b16 %v3109, %v3108
    %v3124 = vpack.c.b16 %v3111, %v3110
    %v3125 = vpack.c.b16 %v3113, %v3112
    %v3126 = vpack.c.b16 %v3115, %v3114
    %v3127 = vpack.c.b16 %v3117, %v3116
    %v3128 = vpack.c.b16 %v3119, %v3118
    %v3129 = vpack.c.b16 %v3121, %v3120
    %3138 = vmatprep.subr.bf16.mxu0 0
    %3139 = vmatpush1.bf16.msra.mxu0 %v3122
    %3140 = vmatprep.subr.bf16.mxu0 0
    %3141 = vmatpush1.bf16.msra.mxu0 %v3123
    %3142 = vmatprep.subr.bf16.mxu0 0
    %3143 = vmatpush1.bf16.msra.mxu0 %v3124
    %3144 = vmatprep.subr.bf16.mxu0 0
    %3145 = vmatpush1.bf16.msra.mxu0 %v3125
    %3146 = vmatprep.subr.bf16.mxu0 0
    %3147 = vmatpush1.bf16.msra.mxu0 %v3126
    %3148 = vmatprep.subr.bf16.mxu0 0
    %3149 = vmatpush1.bf16.msra.mxu0 %v3127
    %3150 = vmatprep.subr.bf16.mxu0 0
    %3151 = vmatpush1.bf16.msra.mxu0 %v3128
    %3152 = vmatprep.subr.bf16.mxu0 0
    %3153 = vmatpush1.bf16.msra.mxu0 %v3129
    %3154 = vmatprep.subr.bf16.mxu0 0
    %3155 = vmatpush1.bf16.msra.mxu0 0
    %3156 = vmatprep.subr.bf16.mxu0 0
    %3157 = vmatpush1.bf16.msra.mxu0 0
    %3158 = vmatprep.subr.bf16.mxu0 0
    %3159 = vmatpush1.bf16.msra.mxu0 0
    %3160 = vmatprep.subr.bf16.mxu0 0
    %3161 = vmatpush1.bf16.msra.mxu0 0
    %3162 = vmatprep.subr.bf16.mxu0 0
    %3163 = vmatpush1.bf16.msra.mxu0 0
    %3164 = vmatprep.subr.bf16.mxu0 0
    %3165 = vmatpush1.bf16.msra.mxu0 0
    %3166 = vmatprep.subr.bf16.mxu0 0
    %3167 = vmatpush1.bf16.msra.mxu0 0
    %3168 = vmatprep.subr.bf16.mxu0 0
    %3169 = vmatpush1.bf16.msra.mxu0 0
    %3170 = vmatprep.mubr.bf16.mxu0 0
    %3171 = vmatmul.mubr.bf16.gmra.mrb[0].mxu0 %v2856
    %v3172 = vpop.f32.mrb[0].mxu0
    %v3173 = vadd.f32 %v3072, %v3172
    %v3174 = vpop.f32.mrb[0].mxu0
    %v3175 = vpop.f32.mrb[0].mxu0
    %v3176 = vadd.f32 %v3073, %v3175
    %v3177 = vpop.f32.mrb[0].mxu0
    %3178 = vdwg.mxu0
    %v3179 = vld [vmem:[#allocation3 + $0x158] sm:$0xff]
    %v3180 = vld [vmem:[#allocation3 + $0x178] sm:$0xff]
    %v3181 = vld [vmem:[#allocation4 + $0xc] sm:$0xf]
    %v3182 = vld [vmem:[#allocation4 + $0x1c] sm:$0xf]
    %v3183 = vld [vmem:[#allocation4 + $0x2c] sm:$0xf]
    %v3184 = vld [vmem:[#allocation4 + $0x3c] sm:$0xf]
    %v3185 = vld [vmem:[#allocation4 + $0x4c] sm:$0xf]
    %v3186 = vld [vmem:[#allocation4 + $0x5c] sm:$0xf]
    %v3187 = vld [vmem:[#allocation4 + $0x6c] sm:$0xf]
    %v3188 = vld [vmem:[#allocation4 + $0x7c] sm:$0xf]
    %v3189 = vld [vmem:[#allocation4 + $0x8c] sm:$0xf]
    %v3190 = vld [vmem:[#allocation4 + $0x9c] sm:$0xf]
    %v3191 = vld [vmem:[#allocation4 + $0xac] sm:$0xf]
    %v3192 = vld [vmem:[#allocation4 + $0xbc] sm:$0xf]
    %v3193 = vld [vmem:[#allocation4 + $0xcc] sm:$0xf]
    %v3194 = vld [vmem:[#allocation4 + $0xdc] sm:$0xf]
    %v3195 = vld [vmem:[#allocation4 + $0xec] sm:$0xf]
    %v3196 = vld [vmem:[#allocation4 + $0xfc] sm:$0xf]
    %v3213 = vunpack.c.l.b16 %v3181
    %v3214 = vunpack.c.l.b16 %v3182
    %v3215 = vunpack.c.l.b16 %v3183
    %v3216 = vunpack.c.l.b16 %v3184
    %v3217 = vunpack.c.l.b16 %v3185
    %v3218 = vunpack.c.l.b16 %v3186
    %v3219 = vunpack.c.l.b16 %v3187
    %v3220 = vunpack.c.l.b16 %v3188
    %v3221 = vunpack.c.l.b16 %v3189
    %v3222 = vunpack.c.l.b16 %v3190
    %v3223 = vunpack.c.l.b16 %v3191
    %v3224 = vunpack.c.l.b16 %v3192
    %v3225 = vunpack.c.l.b16 %v3193
    %v3226 = vunpack.c.l.b16 %v3194
    %v3227 = vunpack.c.l.b16 %v3195
    %v3228 = vunpack.c.l.b16 %v3196
    %v3229 = vpack.c.b16 %v3214, %v3213
    %v3230 = vpack.c.b16 %v3216, %v3215
    %v3231 = vpack.c.b16 %v3218, %v3217
    %v3232 = vpack.c.b16 %v3220, %v3219
    %v3233 = vpack.c.b16 %v3222, %v3221
    %v3234 = vpack.c.b16 %v3224, %v3223
    %v3235 = vpack.c.b16 %v3226, %v3225
    %v3236 = vpack.c.b16 %v3228, %v3227
    %3245 = vmatprep.subr.bf16.mxu0 0
    %3246 = vmatpush1.bf16.msra.mxu0 %v3229
    %3247 = vmatprep.subr.bf16.mxu0 0
    %3248 = vmatpush1.bf16.msra.mxu0 %v3230
    %3249 = vmatprep.subr.bf16.mxu0 0
    %3250 = vmatpush1.bf16.msra.mxu0 %v3231
    %3251 = vmatprep.subr.bf16.mxu0 0
    %3252 = vmatpush1.bf16.msra.mxu0 %v3232
    %3253 = vmatprep.subr.bf16.mxu0 0
    %3254 = vmatpush1.bf16.msra.mxu0 %v3233
    %3255 = vmatprep.subr.bf16.mxu0 0
    %3256 = vmatpush1.bf16.msra.mxu0 %v3234
    %3257 = vmatprep.subr.bf16.mxu0 0
    %3258 = vmatpush1.bf16.msra.mxu0 %v3235
    %3259 = vmatprep.subr.bf16.mxu0 0
    %3260 = vmatpush1.bf16.msra.mxu0 %v3236
    %3261 = vmatprep.subr.bf16.mxu0 0
    %3262 = vmatpush1.bf16.msra.mxu0 0
    %3263 = vmatprep.subr.bf16.mxu0 0
    %3264 = vmatpush1.bf16.msra.mxu0 0
    %3265 = vmatprep.subr.bf16.mxu0 0
    %3266 = vmatpush1.bf16.msra.mxu0 0
    %3267 = vmatprep.subr.bf16.mxu0 0
    %3268 = vmatpush1.bf16.msra.mxu0 0
    %3269 = vmatprep.subr.bf16.mxu0 0
    %3270 = vmatpush1.bf16.msra.mxu0 0
    %3271 = vmatprep.subr.bf16.mxu0 0
    %3272 = vmatpush1.bf16.msra.mxu0 0
    %3273 = vmatprep.subr.bf16.mxu0 0
    %3274 = vmatpush1.bf16.msra.mxu0 0
    %3275 = vmatprep.subr.bf16.mxu0 0
    %3276 = vmatpush1.bf16.msra.mxu0 0
    %3277 = vmatprep.mubr.bf16.mxu0 0
    %3278 = vmatmul.mubr.bf16.gmra.mrb[0].mxu0 %v2856
    %v3279 = vpop.f32.mrb[0].mxu0
    %v3280 = vadd.f32 %v3179, %v3279
    %v3281 = vpop.f32.mrb[0].mxu0
    %v3282 = vpop.f32.mrb[0].mxu0
    %v3283 = vadd.f32 %v3180, %v3282
    %v3284 = vpop.f32.mrb[0].mxu0
    %3285 = vdwg.mxu0
    %v3286 = vxor.u32 %v2959, 2147483648
    %v3287 = vxor.u32 %v2962, 2147483648
    %v3288 = vmul.f32 %v3286, 1.442695
    %v3289 = vpow.pop %v3288
    %v3290 = vmul.f32 %v3287, 1.442695
    %v3291 = vpow.pop %v3290
    %v3292 = vadd.f32 %v3289, 1.0
    %v3293 = vadd.f32 %v3291, 1.0
    %v3294 = vrcp.pop %v3292
    %v3295 = vmul.f32 1.0, %v3294
    %v3296 = vrcp.pop %v3293
    %v3297 = vmul.f32 1.0, %v3296
    %v3298 = vxor.u32 %v3066, 2147483648
    %v3299 = vxor.u32 %v3069, 2147483648
    %v3300 = vmul.f32 %v3298, 1.442695
    %v3301 = vpow.pop %v3300
    %v3302 = vmul.f32 %v3299, 1.442695
    %v3303 = vpow.pop %v3302
    %v3304 = vadd.f32 %v3301, 1.0
    %v3305 = vadd.f32 %v3303, 1.0
    %v3306 = vrcp.pop %v3304
    %v3307 = vmul.f32 1.0, %v3306
    %v3308 = vrcp.pop %v3305
    %v3309 = vmul.f32 1.0, %v3308
    %v3310 = vtanh.pop %v3173
    %v3311 = vtanh.pop %v3176
    %v3312 = vxor.u32 %v3280, 2147483648
    %v3313 = vxor.u32 %v3283, 2147483648
    %v3314 = vmul.f32 %v3312, 1.442695
    %v3315 = vpow.pop %v3314
    %v3316 = vmul.f32 %v3313, 1.442695
    %v3317 = vpow.pop %v3316
    %v3318 = vadd.f32 %v3315, 1.0
    %v3319 = vadd.f32 %v3317, 1.0
    %v3320 = vrcp.pop %v3318
    %v3321 = vmul.f32 1.0, %v3320
    %v3322 = vrcp.pop %v3319
    %v3323 = vmul.f32 1.0, %v3322
    %v3324 = vmul.f32 %v3307, %v2850
    %v3325 = vmul.f32 %v3309, %v2851
    %v3326 = vmul.f32 %v3295, %v3310
    %v3327 = vmul.f32 %v3297, %v3311
    %v3328 = vadd.f32 %v3324, %v3326
    %v3329 = vadd.f32 %v3325, %v3327
    %v3330 = vtanh.pop %v3328
    %v3331 = vtanh.pop %v3329
    %v3332 = vmul.f32 %v3321, %v3330
    %v3333 = vmul.f32 %v3323, %v3331
    %v3334 = vpack.c.bf16 %v3333, %v3332
    %3335 = vst [vmem:[#allocation2 + $0x28] sm:$0xff] %v3334
    %v3336 = vld [vmem:[#allocation3 + $0x180] sm:$0xff]
    %v3337 = vld [vmem:[#allocation3 + $0x1a0] sm:$0xff]
    %v3338 = vld [vmem:[#allocation4] sm:$0xf]
    %v3339 = vld [vmem:[#allocation4 + $0x10] sm:$0xf]
    %v3340 = vld [vmem:[#allocation4 + $0x20] sm:$0xf]
    %v3341 = vld [vmem:[#allocation4 + $0x30] sm:$0xf]
    %v3342 = vld [vmem:[#allocation4 + $0x40] sm:$0xf]
    %v3343 = vld [vmem:[#allocation4 + $0x50] sm:$0xf]
    %v3344 = vld [vmem:[#allocation4 + $0x60] sm:$0xf]
    %v3345 = vld [vmem:[#allocation4 + $0x70] sm:$0xf]
    %v3346 = vld [vmem:[#allocation4 + $0x80] sm:$0xf]
    %v3347 = vld [vmem:[#allocation4 + $0x90] sm:$0xf]
    %v3348 = vld [vmem:[#allocation4 + $0xa0] sm:$0xf]
    %v3349 = vld [vmem:[#allocation4 + $0xb0] sm:$0xf]
    %v3350 = vld [vmem:[#allocation4 + $0xc0] sm:$0xf]
    %v3351 = vld [vmem:[#allocation4 + $0xd0] sm:$0xf]
    %v3352 = vld [vmem:[#allocation4 + $0xe0] sm:$0xf]
    %v3353 = vld [vmem:[#allocation4 + $0xf0] sm:$0xf]
    %v3370 = vunpack.c.l.b16 %v3338
    %v3371 = vunpack.c.l.b16 %v3339
    %v3372 = vunpack.c.l.b16 %v3340
    %v3373 = vunpack.c.l.b16 %v3341
    %v3374 = vunpack.c.l.b16 %v3342
    %v3375 = vunpack.c.l.b16 %v3343
    %v3376 = vunpack.c.l.b16 %v3344
    %v3377 = vunpack.c.l.b16 %v3345
    %v3378 = vunpack.c.l.b16 %v3346
    %v3379 = vunpack.c.l.b16 %v3347
    %v3380 = vunpack.c.l.b16 %v3348
    %v3381 = vunpack.c.l.b16 %v3349
    %v3382 = vunpack.c.l.b16 %v3350
    %v3383 = vunpack.c.l.b16 %v3351
    %v3384 = vunpack.c.l.b16 %v3352
    %v3385 = vunpack.c.l.b16 %v3353
    %v3386 = vpack.c.b16 %v3371, %v3370
    %v3387 = vpack.c.b16 %v3373, %v3372
    %v3388 = vpack.c.b16 %v3375, %v3374
    %v3389 = vpack.c.b16 %v3377, %v3376
    %v3390 = vpack.c.b16 %v3379, %v3378
    %v3391 = vpack.c.b16 %v3381, %v3380
    %v3392 = vpack.c.b16 %v3383, %v3382
    %v3393 = vpack.c.b16 %v3385, %v3384
    %3402 = vmatprep.subr.bf16.mxu0 0
    %3403 = vmatpush1.bf16.msra.mxu0 %v3386
    %3404 = vmatprep.subr.bf16.mxu0 0
    %3405 = vmatpush1.bf16.msra.mxu0 %v3387
    %3406 = vmatprep.subr.bf16.mxu0 0
    %3407 = vmatpush1.bf16.msra.mxu0 %v3388
    %3408 = vmatprep.subr.bf16.mxu0 0
    %3409 = vmatpush1.bf16.msra.mxu0 %v3389
    %3410 = vmatprep.subr.bf16.mxu0 0
    %3411 = vmatpush1.bf16.msra.mxu0 %v3390
    %3412 = vmatprep.subr.bf16.mxu0 0
    %3413 = vmatpush1.bf16.msra.mxu0 %v3391
    %3414 = vmatprep.subr.bf16.mxu0 0
    %3415 = vmatpush1.bf16.msra.mxu0 %v3392
    %3416 = vmatprep.subr.bf16.mxu0 0
    %3417 = vmatpush1.bf16.msra.mxu0 %v3393
    %3418 = vmatprep.subr.bf16.mxu0 0
    %3419 = vmatpush1.bf16.msra.mxu0 0
    %3420 = vmatprep.subr.bf16.mxu0 0
    %3421 = vmatpush1.bf16.msra.mxu0 0
    %3422 = vmatprep.subr.bf16.mxu0 0
    %3423 = vmatpush1.bf16.msra.mxu0 0
    %3424 = vmatprep.subr.bf16.mxu0 0
    %3425 = vmatpush1.bf16.msra.mxu0 0
    %3426 = vmatprep.subr.bf16.mxu0 0
    %3427 = vmatpush1.bf16.msra.mxu0 0
    %3428 = vmatprep.subr.bf16.mxu0 0
    %3429 = vmatpush1.bf16.msra.mxu0 0
    %3430 = vmatprep.subr.bf16.mxu0 0
    %3431 = vmatpush1.bf16.msra.mxu0 0
    %3432 = vmatprep.subr.bf16.mxu0 0
    %3433 = vmatpush1.bf16.msra.mxu0 0
    %3434 = vmatprep.mubr.bf16.mxu0 0
    %3435 = vmatmul.mubr.bf16.gmra.mrb[0].mxu0 %v3334
    %v3436 = vpop.f32.mrb[0].mxu0
    %v3437 = vadd.f32 %v3336, %v3436
    %v3438 = vpop.f32.mrb[0].mxu0
    %v3439 = vpop.f32.mrb[0].mxu0
    %v3440 = vadd.f32 %v3337, %v3439
    %v3441 = vpop.f32.mrb[0].mxu0
    %3442 = vdwg.mxu0
    %v3443 = vld [vmem:[#allocation3 + $0x188] sm:$0xff]
    %v3444 = vld [vmem:[#allocation3 + $0x1a8] sm:$0xff]
    %v3445 = vld [vmem:[#allocation4 + $0x4] sm:$0xf]
    %v3446 = vld [vmem:[#allocation4 + $0x14] sm:$0xf]
    %v3447 = vld [vmem:[#allocation4 + $0x24] sm:$0xf]
    %v3448 = vld [vmem:[#allocation4 + $0x34] sm:$0xf]
    %v3449 = vld [vmem:[#allocation4 + $0x44] sm:$0xf]
    %v3450 = vld [vmem:[#allocation4 + $0x54] sm:$0xf]
    %v3451 = vld [vmem:[#allocation4 + $0x64] sm:$0xf]
    %v3452 = vld [vmem:[#allocation4 + $0x74] sm:$0xf]
    %v3453 = vld [vmem:[#allocation4 + $0x84] sm:$0xf]
    %v3454 = vld [vmem:[#allocation4 + $0x94] sm:$0xf]
    %v3455 = vld [vmem:[#allocation4 + $0xa4] sm:$0xf]
    %v3456 = vld [vmem:[#allocation4 + $0xb4] sm:$0xf]
    %v3457 = vld [vmem:[#allocation4 + $0xc4] sm:$0xf]
    %v3458 = vld [vmem:[#allocation4 + $0xd4] sm:$0xf]
    %v3459 = vld [vmem:[#allocation4 + $0xe4] sm:$0xf]
    %v3460 = vld [vmem:[#allocation4 + $0xf4] sm:$0xf]
    %v3477 = vunpack.c.l.b16 %v3445
    %v3478 = vunpack.c.l.b16 %v3446
    %v3479 = vunpack.c.l.b16 %v3447
    %v3480 = vunpack.c.l.b16 %v3448
    %v3481 = vunpack.c.l.b16 %v3449
    %v3482 = vunpack.c.l.b16 %v3450
    %v3483 = vunpack.c.l.b16 %v3451
    %v3484 = vunpack.c.l.b16 %v3452
    %v3485 = vunpack.c.l.b16 %v3453
    %v3486 = vunpack.c.l.b16 %v3454
    %v3487 = vunpack.c.l.b16 %v3455
    %v3488 = vunpack.c.l.b16 %v3456
    %v3489 = vunpack.c.l.b16 %v3457
    %v3490 = vunpack.c.l.b16 %v3458
    %v3491 = vunpack.c.l.b16 %v3459
    %v3492 = vunpack.c.l.b16 %v3460
    %v3493 = vpack.c.b16 %v3478, %v3477
    %v3494 = vpack.c.b16 %v3480, %v3479
    %v3495 = vpack.c.b16 %v3482, %v3481
    %v3496 = vpack.c.b16 %v3484, %v3483
    %v3497 = vpack.c.b16 %v3486, %v3485
    %v3498 = vpack.c.b16 %v3488, %v3487
    %v3499 = vpack.c.b16 %v3490, %v3489
    %v3500 = vpack.c.b16 %v3492, %v3491
    %3509 = vmatprep.subr.bf16.mxu0 0
    %3510 = vmatpush1.bf16.msra.mxu0 %v3493
    %3511 = vmatprep.subr.bf16.mxu0 0
    %3512 = vmatpush1.bf16.msra.mxu0 %v3494
    %3513 = vmatprep.subr.bf16.mxu0 0
    %3514 = vmatpush1.bf16.msra.mxu0 %v3495
    %3515 = vmatprep.subr.bf16.mxu0 0
    %3516 = vmatpush1.bf16.msra.mxu0 %v3496
    %3517 = vmatprep.subr.bf16.mxu0 0
    %3518 = vmatpush1.bf16.msra.mxu0 %v3497
    %3519 = vmatprep.subr.bf16.mxu0 0
    %3520 = vmatpush1.bf16.msra.mxu0 %v3498
    %3521 = vmatprep.subr.bf16.mxu0 0
    %3522 = vmatpush1.bf16.msra.mxu0 %v3499
    %3523 = vmatprep.subr.bf16.mxu0 0
    %3524 = vmatpush1.bf16.msra.mxu0 %v3500
    %3525 = vmatprep.subr.bf16.mxu0 0
    %3526 = vmatpush1.bf16.msra.mxu0 0
    %3527 = vmatprep.subr.bf16.mxu0 0
    %3528 = vmatpush1.bf16.msra.mxu0 0
    %3529 = vmatprep.subr.bf16.mxu0 0
    %3530 = vmatpush1.bf16.msra.mxu0 0
    %3531 = vmatprep.subr.bf16.mxu0 0
    %3532 = vmatpush1.bf16.msra.mxu0 0
    %3533 = vmatprep.subr.bf16.mxu0 0
    %3534 = vmatpush1.bf16.msra.mxu0 0
    %3535 = vmatprep.subr.bf16.mxu0 0
    %3536 = vmatpush1.bf16.msra.mxu0 0
    %3537 = vmatprep.subr.bf16.mxu0 0
    %3538 = vmatpush1.bf16.msra.mxu0 0
    %3539 = vmatprep.subr.bf16.mxu0 0
    %3540 = vmatpush1.bf16.msra.mxu0 0
    %3541 = vmatprep.mubr.bf16.mxu0 0
    %3542 = vmatmul.mubr.bf16.gmra.mrb[0].mxu0 %v3334
    %v3543 = vpop.f32.mrb[0].mxu0
    %v3544 = vadd.f32 %v3443, %v3543
    %v3545 = vpop.f32.mrb[0].mxu0
    %v3546 = vpop.f32.mrb[0].mxu0
    %v3547 = vadd.f32 %v3444, %v3546
    %v3548 = vpop.f32.mrb[0].mxu0
    %3549 = vdwg.mxu0
    %v3550 = vld [vmem:[#allocation3 + $0x190] sm:$0xff]
    %v3551 = vld [vmem:[#allocation3 + $0x1b0] sm:$0xff]
    %v3552 = vld [vmem:[#allocation4 + $0x8] sm:$0xf]
    %v3553 = vld [vmem:[#allocation4 + $0x18] sm:$0xf]
    %v3554 = vld [vmem:[#allocation4 + $0x28] sm:$0xf]
    %v3555 = vld [vmem:[#allocation4 + $0x38] sm:$0xf]
    %v3556 = vld [vmem:[#allocation4 + $0x48] sm:$0xf]
    %v3557 = vld [vmem:[#allocation4 + $0x58] sm:$0xf]
    %v3558 = vld [vmem:[#allocation4 + $0x68] sm:$0xf]
    %v3559 = vld [vmem:[#allocation4 + $0x78] sm:$0xf]
    %v3560 = vld [vmem:[#allocation4 + $0x88] sm:$0xf]
    %v3561 = vld [vmem:[#allocation4 + $0x98] sm:$0xf]
    %v3562 = vld [vmem:[#allocation4 + $0xa8] sm:$0xf]
    %v3563 = vld [vmem:[#allocation4 + $0xb8] sm:$0xf]
    %v3564 = vld [vmem:[#allocation4 + $0xc8] sm:$0xf]
    %v3565 = vld [vmem:[#allocation4 + $0xd8] sm:$0xf]
    %v3566 = vld [vmem:[#allocation4 + $0xe8] sm:$0xf]
    %v3567 = vld [vmem:[#allocation4 + $0xf8] sm:$0xf]
    %v3584 = vunpack.c.l.b16 %v3552
    %v3585 = vunpack.c.l.b16 %v3553
    %v3586 = vunpack.c.l.b16 %v3554
    %v3587 = vunpack.c.l.b16 %v3555
    %v3588 = vunpack.c.l.b16 %v3556
    %v3589 = vunpack.c.l.b16 %v3557
    %v3590 = vunpack.c.l.b16 %v3558
    %v3591 = vunpack.c.l.b16 %v3559
    %v3592 = vunpack.c.l.b16 %v3560
    %v3593 = vunpack.c.l.b16 %v3561
    %v3594 = vunpack.c.l.b16 %v3562
    %v3595 = vunpack.c.l.b16 %v3563
    %v3596 = vunpack.c.l.b16 %v3564
    %v3597 = vunpack.c.l.b16 %v3565
    %v3598 = vunpack.c.l.b16 %v3566
    %v3599 = vunpack.c.l.b16 %v3567
    %v3600 = vpack.c.b16 %v3585, %v3584
    %v3601 = vpack.c.b16 %v3587, %v3586
    %v3602 = vpack.c.b16 %v3589, %v3588
    %v3603 = vpack.c.b16 %v3591, %v3590
    %v3604 = vpack.c.b16 %v3593, %v3592
    %v3605 = vpack.c.b16 %v3595, %v3594
    %v3606 = vpack.c.b16 %v3597, %v3596
    %v3607 = vpack.c.b16 %v3599, %v3598
    %3616 = vmatprep.subr.bf16.mxu0 0
    %3617 = vmatpush1.bf16.msra.mxu0 %v3600
    %3618 = vmatprep.subr.bf16.mxu0 0
    %3619 = vmatpush1.bf16.msra.mxu0 %v3601
    %3620 = vmatprep.subr.bf16.mxu0 0
    %3621 = vmatpush1.bf16.msra.mxu0 %v3602
    %3622 = vmatprep.subr.bf16.mxu0 0
    %3623 = vmatpush1.bf16.msra.mxu0 %v3603
    %3624 = vmatprep.subr.bf16.mxu0 0
    %3625 = vmatpush1.bf16.msra.mxu0 %v3604
    %3626 = vmatprep.subr.bf16.mxu0 0
    %3627 = vmatpush1.bf16.msra.mxu0 %v3605
    %3628 = vmatprep.subr.bf16.mxu0 0
    %3629 = vmatpush1.bf16.msra.mxu0 %v3606
    %3630 = vmatprep.subr.bf16.mxu0 0
    %3631 = vmatpush1.bf16.msra.mxu0 %v3607
    %3632 = vmatprep.subr.bf16.mxu0 0
    %3633 = vmatpush1.bf16.msra.mxu0 0
    %3634 = vmatprep.subr.bf16.mxu0 0
    %3635 = vmatpush1.bf16.msra.mxu0 0
    %3636 = vmatprep.subr.bf16.mxu0 0
    %3637 = vmatpush1.bf16.msra.mxu0 0
    %3638 = vmatprep.subr.bf16.mxu0 0
    %3639 = vmatpush1.bf16.msra.mxu0 0
    %3640 = vmatprep.subr.bf16.mxu0 0
    %3641 = vmatpush1.bf16.msra.mxu0 0
    %3642 = vmatprep.subr.bf16.mxu0 0
    %3643 = vmatpush1.bf16.msra.mxu0 0
    %3644 = vmatprep.subr.bf16.mxu0 0
    %3645 = vmatpush1.bf16.msra.mxu0 0
    %3646 = vmatprep.subr.bf16.mxu0 0
    %3647 = vmatpush1.bf16.msra.mxu0 0
    %3648 = vmatprep.mubr.bf16.mxu0 0
    %3649 = vmatmul.mubr.bf16.gmra.mrb[0].mxu0 %v3334
    %v3650 = vpop.f32.mrb[0].mxu0
    %v3651 = vadd.f32 %v3550, %v3650
    %v3652 = vpop.f32.mrb[0].mxu0
    %v3653 = vpop.f32.mrb[0].mxu0
    %v3654 = vadd.f32 %v3551, %v3653
    %v3655 = vpop.f32.mrb[0].mxu0
    %3656 = vdwg.mxu0
    %v3657 = vld [vmem:[#allocation3 + $0x198] sm:$0xff]
    %v3658 = vld [vmem:[#allocation3 + $0x1b8] sm:$0xff]
    %v3659 = vld [vmem:[#allocation4 + $0xc] sm:$0xf]
    %v3660 = vld [vmem:[#allocation4 + $0x1c] sm:$0xf]
    %v3661 = vld [vmem:[#allocation4 + $0x2c] sm:$0xf]
    %v3662 = vld [vmem:[#allocation4 + $0x3c] sm:$0xf]
    %v3663 = vld [vmem:[#allocation4 + $0x4c] sm:$0xf]
    %v3664 = vld [vmem:[#allocation4 + $0x5c] sm:$0xf]
    %v3665 = vld [vmem:[#allocation4 + $0x6c] sm:$0xf]
    %v3666 = vld [vmem:[#allocation4 + $0x7c] sm:$0xf]
    %v3667 = vld [vmem:[#allocation4 + $0x8c] sm:$0xf]
    %v3668 = vld [vmem:[#allocation4 + $0x9c] sm:$0xf]
    %v3669 = vld [vmem:[#allocation4 + $0xac] sm:$0xf]
    %v3670 = vld [vmem:[#allocation4 + $0xbc] sm:$0xf]
    %v3671 = vld [vmem:[#allocation4 + $0xcc] sm:$0xf]
    %v3672 = vld [vmem:[#allocation4 + $0xdc] sm:$0xf]
    %v3673 = vld [vmem:[#allocation4 + $0xec] sm:$0xf]
    %v3674 = vld [vmem:[#allocation4 + $0xfc] sm:$0xf]
    %v3691 = vunpack.c.l.b16 %v3659
    %v3692 = vunpack.c.l.b16 %v3660
    %v3693 = vunpack.c.l.b16 %v3661
    %v3694 = vunpack.c.l.b16 %v3662
    %v3695 = vunpack.c.l.b16 %v3663
    %v3696 = vunpack.c.l.b16 %v3664
    %v3697 = vunpack.c.l.b16 %v3665
    %v3698 = vunpack.c.l.b16 %v3666
    %v3699 = vunpack.c.l.b16 %v3667
    %v3700 = vunpack.c.l.b16 %v3668
    %v3701 = vunpack.c.l.b16 %v3669
    %v3702 = vunpack.c.l.b16 %v3670
    %v3703 = vunpack.c.l.b16 %v3671
    %v3704 = vunpack.c.l.b16 %v3672
    %v3705 = vunpack.c.l.b16 %v3673
    %v3706 = vunpack.c.l.b16 %v3674
    %v3707 = vpack.c.b16 %v3692, %v3691
    %v3708 = vpack.c.b16 %v3694, %v3693
    %v3709 = vpack.c.b16 %v3696, %v3695
    %v3710 = vpack.c.b16 %v3698, %v3697
    %v3711 = vpack.c.b16 %v3700, %v3699
    %v3712 = vpack.c.b16 %v3702, %v3701
    %v3713 = vpack.c.b16 %v3704, %v3703
    %v3714 = vpack.c.b16 %v3706, %v3705
    %3723 = vmatprep.subr.bf16.mxu0 0
    %3724 = vmatpush1.bf16.msra.mxu0 %v3707
    %3725 = vmatprep.subr.bf16.mxu0 0
    %3726 = vmatpush1.bf16.msra.mxu0 %v3708
    %3727 = vmatprep.subr.bf16.mxu0 0
    %3728 = vmatpush1.bf16.msra.mxu0 %v3709
    %3729 = vmatprep.subr.bf16.mxu0 0
    %3730 = vmatpush1.bf16.msra.mxu0 %v3710
    %3731 = vmatprep.subr.bf16.mxu0 0
    %3732 = vmatpush1.bf16.msra.mxu0 %v3711
    %3733 = vmatprep.subr.bf16.mxu0 0
    %3734 = vmatpush1.bf16.msra.mxu0 %v3712
    %3735 = vmatprep.subr.bf16.mxu0 0
    %3736 = vmatpush1.bf16.msra.mxu0 %v3713
    %3737 = vmatprep.subr.bf16.mxu0 0
    %3738 = vmatpush1.bf16.msra.mxu0 %v3714
    %3739 = vmatprep.subr.bf16.mxu0 0
    %3740 = vmatpush1.bf16.msra.mxu0 0
    %3741 = vmatprep.subr.bf16.mxu0 0
    %3742 = vmatpush1.bf16.msra.mxu0 0
    %3743 = vmatprep.subr.bf16.mxu0 0
    %3744 = vmatpush1.bf16.msra.mxu0 0
    %3745 = vmatprep.subr.bf16.mxu0 0
    %3746 = vmatpush1.bf16.msra.mxu0 0
    %3747 = vmatprep.subr.bf16.mxu0 0
    %3748 = vmatpush1.bf16.msra.mxu0 0
    %3749 = vmatprep.subr.bf16.mxu0 0
    %3750 = vmatpush1.bf16.msra.mxu0 0
    %3751 = vmatprep.subr.bf16.mxu0 0
    %3752 = vmatpush1.bf16.msra.mxu0 0
    %3753 = vmatprep.subr.bf16.mxu0 0
    %3754 = vmatpush1.bf16.msra.mxu0 0
    %3755 = vmatprep.mubr.bf16.mxu0 0
    %3756 = vmatmul.mubr.bf16.gmra.mrb[0].mxu0 %v3334
    %v3757 = vpop.f32.mrb[0].mxu0
    %v3758 = vadd.f32 %v3657, %v3757
    %v3759 = vpop.f32.mrb[0].mxu0
    %v3760 = vpop.f32.mrb[0].mxu0
    %v3761 = vadd.f32 %v3658, %v3760
    %v3762 = vpop.f32.mrb[0].mxu0
    %3763 = vdwg.mxu0
    %v3764 = vxor.u32 %v3437, 2147483648
    %v3765 = vxor.u32 %v3440, 2147483648
    %v3766 = vmul.f32 %v3764, 1.442695
    %v3767 = vpow.pop %v3766
    %v3768 = vmul.f32 %v3765, 1.442695
    %v3769 = vpow.pop %v3768
    %v3770 = vadd.f32 %v3767, 1.0
    %v3771 = vadd.f32 %v3769, 1.0
    %v3772 = vrcp.pop %v3770
    %v3773 = vmul.f32 1.0, %v3772
    %v3774 = vrcp.pop %v3771
    %v3775 = vmul.f32 1.0, %v3774
    %v3776 = vxor.u32 %v3544, 2147483648
    %v3777 = vxor.u32 %v3547, 2147483648
    %v3778 = vmul.f32 %v3776, 1.442695
    %v3779 = vpow.pop %v3778
    %v3780 = vmul.f32 %v3777, 1.442695
    %v3781 = vpow.pop %v3780
    %v3782 = vadd.f32 %v3779, 1.0
    %v3783 = vadd.f32 %v3781, 1.0
    %v3784 = vrcp.pop %v3782
    %v3785 = vmul.f32 1.0, %v3784
    %v3786 = vrcp.pop %v3783
    %v3787 = vmul.f32 1.0, %v3786
    %v3788 = vtanh.pop %v3651
    %v3789 = vtanh.pop %v3654
    %v3790 = vxor.u32 %v3758, 2147483648
    %v3791 = vxor.u32 %v3761, 2147483648
    %v3792 = vmul.f32 %v3790, 1.442695
    %v3793 = vpow.pop %v3792
    %v3794 = vmul.f32 %v3791, 1.442695
    %v3795 = vpow.pop %v3794
    %v3796 = vadd.f32 %v3793, 1.0
    %v3797 = vadd.f32 %v3795, 1.0
    %v3798 = vrcp.pop %v3796
    %v3799 = vmul.f32 1.0, %v3798
    %v3800 = vrcp.pop %v3797
    %v3801 = vmul.f32 1.0, %v3800
    %v3802 = vmul.f32 %v3785, %v3328
    %v3803 = vmul.f32 %v3787, %v3329
    %v3804 = vmul.f32 %v3773, %v3788
    %v3805 = vmul.f32 %v3775, %v3789
    %v3806 = vadd.f32 %v3802, %v3804
    %v3807 = vadd.f32 %v3803, %v3805
    %v3808 = vtanh.pop %v3806
    %v3809 = vtanh.pop %v3807
    %v3810 = vmul.f32 %v3799, %v3808
    %v3811 = vmul.f32 %v3801, %v3809
    %v3812 = vpack.c.bf16 %v3811, %v3810
    %3813 = vst [vmem:[#allocation2 + $0x30] sm:$0xff] %v3812
    %v3814 = vld [vmem:[#allocation3 + $0x1c0] sm:$0xff]
    %v3815 = vld [vmem:[#allocation3 + $0x1e0] sm:$0xff]
    %v3816 = vld [vmem:[#allocation4] sm:$0xf]
    %v3817 = vld [vmem:[#allocation4 + $0x10] sm:$0xf]
    %v3818 = vld [vmem:[#allocation4 + $0x20] sm:$0xf]
    %v3819 = vld [vmem:[#allocation4 + $0x30] sm:$0xf]
    %v3820 = vld [vmem:[#allocation4 + $0x40] sm:$0xf]
    %v3821 = vld [vmem:[#allocation4 + $0x50] sm:$0xf]
    %v3822 = vld [vmem:[#allocation4 + $0x60] sm:$0xf]
    %v3823 = vld [vmem:[#allocation4 + $0x70] sm:$0xf]
    %v3824 = vld [vmem:[#allocation4 + $0x80] sm:$0xf]
    %v3825 = vld [vmem:[#allocation4 + $0x90] sm:$0xf]
    %v3826 = vld [vmem:[#allocation4 + $0xa0] sm:$0xf]
    %v3827 = vld [vmem:[#allocation4 + $0xb0] sm:$0xf]
    %v3828 = vld [vmem:[#allocation4 + $0xc0] sm:$0xf]
    %v3829 = vld [vmem:[#allocation4 + $0xd0] sm:$0xf]
    %v3830 = vld [vmem:[#allocation4 + $0xe0] sm:$0xf]
    %v3831 = vld [vmem:[#allocation4 + $0xf0] sm:$0xf]
    %v3848 = vunpack.c.l.b16 %v3816
    %v3849 = vunpack.c.l.b16 %v3817
    %v3850 = vunpack.c.l.b16 %v3818
    %v3851 = vunpack.c.l.b16 %v3819
    %v3852 = vunpack.c.l.b16 %v3820
    %v3853 = vunpack.c.l.b16 %v3821
    %v3854 = vunpack.c.l.b16 %v3822
    %v3855 = vunpack.c.l.b16 %v3823
    %v3856 = vunpack.c.l.b16 %v3824
    %v3857 = vunpack.c.l.b16 %v3825
    %v3858 = vunpack.c.l.b16 %v3826
    %v3859 = vunpack.c.l.b16 %v3827
    %v3860 = vunpack.c.l.b16 %v3828
    %v3861 = vunpack.c.l.b16 %v3829
    %v3862 = vunpack.c.l.b16 %v3830
    %v3863 = vunpack.c.l.b16 %v3831
    %v3864 = vpack.c.b16 %v3849, %v3848
    %v3865 = vpack.c.b16 %v3851, %v3850
    %v3866 = vpack.c.b16 %v3853, %v3852
    %v3867 = vpack.c.b16 %v3855, %v3854
    %v3868 = vpack.c.b16 %v3857, %v3856
    %v3869 = vpack.c.b16 %v3859, %v3858
    %v3870 = vpack.c.b16 %v3861, %v3860
    %v3871 = vpack.c.b16 %v3863, %v3862
    %3880 = vmatprep.subr.bf16.mxu0 0
    %3881 = vmatpush1.bf16.msra.mxu0 %v3864
    %3882 = vmatprep.subr.bf16.mxu0 0
    %3883 = vmatpush1.bf16.msra.mxu0 %v3865
    %3884 = vmatprep.subr.bf16.mxu0 0
    %3885 = vmatpush1.bf16.msra.mxu0 %v3866
    %3886 = vmatprep.subr.bf16.mxu0 0
    %3887 = vmatpush1.bf16.msra.mxu0 %v3867
    %3888 = vmatprep.subr.bf16.mxu0 0
    %3889 = vmatpush1.bf16.msra.mxu0 %v3868
    %3890 = vmatprep.subr.bf16.mxu0 0
    %3891 = vmatpush1.bf16.msra.mxu0 %v3869
    %3892 = vmatprep.subr.bf16.mxu0 0
    %3893 = vmatpush1.bf16.msra.mxu0 %v3870
    %3894 = vmatprep.subr.bf16.mxu0 0
    %3895 = vmatpush1.bf16.msra.mxu0 %v3871
    %3896 = vmatprep.subr.bf16.mxu0 0
    %3897 = vmatpush1.bf16.msra.mxu0 0
    %3898 = vmatprep.subr.bf16.mxu0 0
    %3899 = vmatpush1.bf16.msra.mxu0 0
    %3900 = vmatprep.subr.bf16.mxu0 0
    %3901 = vmatpush1.bf16.msra.mxu0 0
    %3902 = vmatprep.subr.bf16.mxu0 0
    %3903 = vmatpush1.bf16.msra.mxu0 0
    %3904 = vmatprep.subr.bf16.mxu0 0
    %3905 = vmatpush1.bf16.msra.mxu0 0
    %3906 = vmatprep.subr.bf16.mxu0 0
    %3907 = vmatpush1.bf16.msra.mxu0 0
    %3908 = vmatprep.subr.bf16.mxu0 0
    %3909 = vmatpush1.bf16.msra.mxu0 0
    %3910 = vmatprep.subr.bf16.mxu0 0
    %3911 = vmatpush1.bf16.msra.mxu0 0
    %3912 = vmatprep.mubr.bf16.mxu0 0
    %3913 = vmatmul.mubr.bf16.gmra.mrb[0].mxu0 %v3812
    %v3914 = vpop.f32.mrb[0].mxu0
    %v3915 = vadd.f32 %v3814, %v3914
    %v3916 = vpop.f32.mrb[0].mxu0
    %v3917 = vpop.f32.mrb[0].mxu0
    %v3918 = vadd.f32 %v3815, %v3917
    %v3919 = vpop.f32.mrb[0].mxu0
    %3920 = vdwg.mxu0
    %v3921 = vld [vmem:[#allocation3 + $0x1c8] sm:$0xff]
    %v3922 = vld [vmem:[#allocation3 + $0x1e8] sm:$0xff]
    %v3923 = vld [vmem:[#allocation4 + $0x4] sm:$0xf]
    %v3924 = vld [vmem:[#allocation4 + $0x14] sm:$0xf]
    %v3925 = vld [vmem:[#allocation4 + $0x24] sm:$0xf]
    %v3926 = vld [vmem:[#allocation4 + $0x34] sm:$0xf]
    %v3927 = vld [vmem:[#allocation4 + $0x44] sm:$0xf]
    %v3928 = vld [vmem:[#allocation4 + $0x54] sm:$0xf]
    %v3929 = vld [vmem:[#allocation4 + $0x64] sm:$0xf]
    %v3930 = vld [vmem:[#allocation4 + $0x74] sm:$0xf]
    %v3931 = vld [vmem:[#allocation4 + $0x84] sm:$0xf]
    %v3932 = vld [vmem:[#allocation4 + $0x94] sm:$0xf]
    %v3933 = vld [vmem:[#allocation4 + $0xa4] sm:$0xf]
    %v3934 = vld [vmem:[#allocation4 + $0xb4] sm:$0xf]
    %v3935 = vld [vmem:[#allocation4 + $0xc4] sm:$0xf]
    %v3936 = vld [vmem:[#allocation4 + $0xd4] sm:$0xf]
    %v3937 = vld [vmem:[#allocation4 + $0xe4] sm:$0xf]
    %v3938 = vld [vmem:[#allocation4 + $0xf4] sm:$0xf]
    %v3955 = vunpack.c.l.b16 %v3923
    %v3956 = vunpack.c.l.b16 %v3924
    %v3957 = vunpack.c.l.b16 %v3925
    %v3958 = vunpack.c.l.b16 %v3926
    %v3959 = vunpack.c.l.b16 %v3927
    %v3960 = vunpack.c.l.b16 %v3928
    %v3961 = vunpack.c.l.b16 %v3929
    %v3962 = vunpack.c.l.b16 %v3930
    %v3963 = vunpack.c.l.b16 %v3931
    %v3964 = vunpack.c.l.b16 %v3932
    %v3965 = vunpack.c.l.b16 %v3933
    %v3966 = vunpack.c.l.b16 %v3934
    %v3967 = vunpack.c.l.b16 %v3935
    %v3968 = vunpack.c.l.b16 %v3936
    %v3969 = vunpack.c.l.b16 %v3937
    %v3970 = vunpack.c.l.b16 %v3938
    %v3971 = vpack.c.b16 %v3956, %v3955
    %v3972 = vpack.c.b16 %v3958, %v3957
    %v3973 = vpack.c.b16 %v3960, %v3959
    %v3974 = vpack.c.b16 %v3962, %v3961
    %v3975 = vpack.c.b16 %v3964, %v3963
    %v3976 = vpack.c.b16 %v3966, %v3965
    %v3977 = vpack.c.b16 %v3968, %v3967
    %v3978 = vpack.c.b16 %v3970, %v3969
    %3987 = vmatprep.subr.bf16.mxu0 0
    %3988 = vmatpush1.bf16.msra.mxu0 %v3971
    %3989 = vmatprep.subr.bf16.mxu0 0
    %3990 = vmatpush1.bf16.msra.mxu0 %v3972
    %3991 = vmatprep.subr.bf16.mxu0 0
    %3992 = vmatpush1.bf16.msra.mxu0 %v3973
    %3993 = vmatprep.subr.bf16.mxu0 0
    %3994 = vmatpush1.bf16.msra.mxu0 %v3974
    %3995 = vmatprep.subr.bf16.mxu0 0
    %3996 = vmatpush1.bf16.msra.mxu0 %v3975
    %3997 = vmatprep.subr.bf16.mxu0 0
    %3998 = vmatpush1.bf16.msra.mxu0 %v3976
    %3999 = vmatprep.subr.bf16.mxu0 0
    %4000 = vmatpush1.bf16.msra.mxu0 %v3977
    %4001 = vmatprep.subr.bf16.mxu0 0
    %4002 = vmatpush1.bf16.msra.mxu0 %v3978
    %4003 = vmatprep.subr.bf16.mxu0 0
    %4004 = vmatpush1.bf16.msra.mxu0 0
    %4005 = vmatprep.subr.bf16.mxu0 0
    %4006 = vmatpush1.bf16.msra.mxu0 0
    %4007 = vmatprep.subr.bf16.mxu0 0
    %4008 = vmatpush1.bf16.msra.mxu0 0
    %4009 = vmatprep.subr.bf16.mxu0 0
    %4010 = vmatpush1.bf16.msra.mxu0 0
    %4011 = vmatprep.subr.bf16.mxu0 0
    %4012 = vmatpush1.bf16.msra.mxu0 0
    %4013 = vmatprep.subr.bf16.mxu0 0
    %4014 = vmatpush1.bf16.msra.mxu0 0
    %4015 = vmatprep.subr.bf16.mxu0 0
    %4016 = vmatpush1.bf16.msra.mxu0 0
    %4017 = vmatprep.subr.bf16.mxu0 0
    %4018 = vmatpush1.bf16.msra.mxu0 0
    %4019 = vmatprep.mubr.bf16.mxu0 0
    %4020 = vmatmul.mubr.bf16.gmra.mrb[0].mxu0 %v3812
    %v4021 = vpop.f32.mrb[0].mxu0
    %v4022 = vadd.f32 %v3921, %v4021
    %v4023 = vpop.f32.mrb[0].mxu0
    %v4024 = vpop.f32.mrb[0].mxu0
    %v4025 = vadd.f32 %v3922, %v4024
    %v4026 = vpop.f32.mrb[0].mxu0
    %4027 = vdwg.mxu0
    %v4028 = vld [vmem:[#allocation3 + $0x1d0] sm:$0xff]
    %v4029 = vld [vmem:[#allocation3 + $0x1f0] sm:$0xff]
    %v4030 = vld [vmem:[#allocation4 + $0x8] sm:$0xf]
    %v4031 = vld [vmem:[#allocation4 + $0x18] sm:$0xf]
    %v4032 = vld [vmem:[#allocation4 + $0x28] sm:$0xf]
    %v4033 = vld [vmem:[#allocation4 + $0x38] sm:$0xf]
    %v4034 = vld [vmem:[#allocation4 + $0x48] sm:$0xf]
    %v4035 = vld [vmem:[#allocation4 + $0x58] sm:$0xf]
    %v4036 = vld [vmem:[#allocation4 + $0x68] sm:$0xf]
    %v4037 = vld [vmem:[#allocation4 + $0x78] sm:$0xf]
    %v4038 = vld [vmem:[#allocation4 + $0x88] sm:$0xf]
    %v4039 = vld [vmem:[#allocation4 + $0x98] sm:$0xf]
    %v4040 = vld [vmem:[#allocation4 + $0xa8] sm:$0xf]
    %v4041 = vld [vmem:[#allocation4 + $0xb8] sm:$0xf]
    %v4042 = vld [vmem:[#allocation4 + $0xc8] sm:$0xf]
    %v4043 = vld [vmem:[#allocation4 + $0xd8] sm:$0xf]
    %v4044 = vld [vmem:[#allocation4 + $0xe8] sm:$0xf]
    %v4045 = vld [vmem:[#allocation4 + $0xf8] sm:$0xf]
    %v4062 = vunpack.c.l.b16 %v4030
    %v4063 = vunpack.c.l.b16 %v4031
    %v4064 = vunpack.c.l.b16 %v4032
    %v4065 = vunpack.c.l.b16 %v4033
    %v4066 = vunpack.c.l.b16 %v4034
    %v4067 = vunpack.c.l.b16 %v4035
    %v4068 = vunpack.c.l.b16 %v4036
    %v4069 = vunpack.c.l.b16 %v4037
    %v4070 = vunpack.c.l.b16 %v4038
    %v4071 = vunpack.c.l.b16 %v4039
    %v4072 = vunpack.c.l.b16 %v4040
    %v4073 = vunpack.c.l.b16 %v4041
    %v4074 = vunpack.c.l.b16 %v4042
    %v4075 = vunpack.c.l.b16 %v4043
    %v4076 = vunpack.c.l.b16 %v4044
    %v4077 = vunpack.c.l.b16 %v4045
    %v4078 = vpack.c.b16 %v4063, %v4062
    %v4079 = vpack.c.b16 %v4065, %v4064
    %v4080 = vpack.c.b16 %v4067, %v4066
    %v4081 = vpack.c.b16 %v4069, %v4068
    %v4082 = vpack.c.b16 %v4071, %v4070
    %v4083 = vpack.c.b16 %v4073, %v4072
    %v4084 = vpack.c.b16 %v4075, %v4074
    %v4085 = vpack.c.b16 %v4077, %v4076
    %4094 = vmatprep.subr.bf16.mxu0 0
    %4095 = vmatpush1.bf16.msra.mxu0 %v4078
    %4096 = vmatprep.subr.bf16.mxu0 0
    %4097 = vmatpush1.bf16.msra.mxu0 %v4079
    %4098 = vmatprep.subr.bf16.mxu0 0
    %4099 = vmatpush1.bf16.msra.mxu0 %v4080
    %4100 = vmatprep.subr.bf16.mxu0 0
    %4101 = vmatpush1.bf16.msra.mxu0 %v4081
    %4102 = vmatprep.subr.bf16.mxu0 0
    %4103 = vmatpush1.bf16.msra.mxu0 %v4082
    %4104 = vmatprep.subr.bf16.mxu0 0
    %4105 = vmatpush1.bf16.msra.mxu0 %v4083
    %4106 = vmatprep.subr.bf16.mxu0 0
    %4107 = vmatpush1.bf16.msra.mxu0 %v4084
    %4108 = vmatprep.subr.bf16.mxu0 0
    %4109 = vmatpush1.bf16.msra.mxu0 %v4085
    %4110 = vmatprep.subr.bf16.mxu0 0
    %4111 = vmatpush1.bf16.msra.mxu0 0
    %4112 = vmatprep.subr.bf16.mxu0 0
    %4113 = vmatpush1.bf16.msra.mxu0 0
    %4114 = vmatprep.subr.bf16.mxu0 0
    %4115 = vmatpush1.bf16.msra.mxu0 0
    %4116 = vmatprep.subr.bf16.mxu0 0
    %4117 = vmatpush1.bf16.msra.mxu0 0
    %4118 = vmatprep.subr.bf16.mxu0 0
    %4119 = vmatpush1.bf16.msra.mxu0 0
    %4120 = vmatprep.subr.bf16.mxu0 0
    %4121 = vmatpush1.bf16.msra.mxu0 0
    %4122 = vmatprep.subr.bf16.mxu0 0
    %4123 = vmatpush1.bf16.msra.mxu0 0
    %4124 = vmatprep.subr.bf16.mxu0 0
    %4125 = vmatpush1.bf16.msra.mxu0 0
    %4126 = vmatprep.mubr.bf16.mxu0 0
    %4127 = vmatmul.mubr.bf16.gmra.mrb[0].mxu0 %v3812
    %v4128 = vpop.f32.mrb[0].mxu0
    %v4129 = vadd.f32 %v4028, %v4128
    %v4130 = vpop.f32.mrb[0].mxu0
    %v4131 = vpop.f32.mrb[0].mxu0
    %v4132 = vadd.f32 %v4029, %v4131
    %v4133 = vpop.f32.mrb[0].mxu0
    %4134 = vdwg.mxu0
    %v4135 = vld [vmem:[#allocation3 + $0x1d8] sm:$0xff]
    %v4136 = vld [vmem:[#allocation3 + $0x1f8] sm:$0xff]
    %v4137 = vld [vmem:[#allocation4 + $0xc] sm:$0xf]
    %v4138 = vld [vmem:[#allocation4 + $0x1c] sm:$0xf]
    %v4139 = vld [vmem:[#allocation4 + $0x2c] sm:$0xf]
    %v4140 = vld [vmem:[#allocation4 + $0x3c] sm:$0xf]
    %v4141 = vld [vmem:[#allocation4 + $0x4c] sm:$0xf]
    %v4142 = vld [vmem:[#allocation4 + $0x5c] sm:$0xf]
    %v4143 = vld [vmem:[#allocation4 + $0x6c] sm:$0xf]
    %v4144 = vld [vmem:[#allocation4 + $0x7c] sm:$0xf]
    %v4145 = vld [vmem:[#allocation4 + $0x8c] sm:$0xf]
    %v4146 = vld [vmem:[#allocation4 + $0x9c] sm:$0xf]
    %v4147 = vld [vmem:[#allocation4 + $0xac] sm:$0xf]
    %v4148 = vld [vmem:[#allocation4 + $0xbc] sm:$0xf]
    %v4149 = vld [vmem:[#allocation4 + $0xcc] sm:$0xf]
    %v4150 = vld [vmem:[#allocation4 + $0xdc] sm:$0xf]
    %v4151 = vld [vmem:[#allocation4 + $0xec] sm:$0xf]
    %v4152 = vld [vmem:[#allocation4 + $0xfc] sm:$0xf]
    %v4169 = vunpack.c.l.b16 %v4137
    %v4170 = vunpack.c.l.b16 %v4138
    %v4171 = vunpack.c.l.b16 %v4139
    %v4172 = vunpack.c.l.b16 %v4140
    %v4173 = vunpack.c.l.b16 %v4141
    %v4174 = vunpack.c.l.b16 %v4142
    %v4175 = vunpack.c.l.b16 %v4143
    %v4176 = vunpack.c.l.b16 %v4144
    %v4177 = vunpack.c.l.b16 %v4145
    %v4178 = vunpack.c.l.b16 %v4146
    %v4179 = vunpack.c.l.b16 %v4147
    %v4180 = vunpack.c.l.b16 %v4148
    %v4181 = vunpack.c.l.b16 %v4149
    %v4182 = vunpack.c.l.b16 %v4150
    %v4183 = vunpack.c.l.b16 %v4151
    %v4184 = vunpack.c.l.b16 %v4152
    %v4185 = vpack.c.b16 %v4170, %v4169
    %v4186 = vpack.c.b16 %v4172, %v4171
    %v4187 = vpack.c.b16 %v4174, %v4173
    %v4188 = vpack.c.b16 %v4176, %v4175
    %v4189 = vpack.c.b16 %v4178, %v4177
    %v4190 = vpack.c.b16 %v4180, %v4179
    %v4191 = vpack.c.b16 %v4182, %v4181
    %v4192 = vpack.c.b16 %v4184, %v4183
    %4201 = vmatprep.subr.bf16.mxu0 0
    %4202 = vmatpush1.bf16.msra.mxu0 %v4185
    %4203 = vmatprep.subr.bf16.mxu0 0
    %4204 = vmatpush1.bf16.msra.mxu0 %v4186
    %4205 = vmatprep.subr.bf16.mxu0 0
    %4206 = vmatpush1.bf16.msra.mxu0 %v4187
    %4207 = vmatprep.subr.bf16.mxu0 0
    %4208 = vmatpush1.bf16.msra.mxu0 %v4188
    %4209 = vmatprep.subr.bf16.mxu0 0
    %4210 = vmatpush1.bf16.msra.mxu0 %v4189
    %4211 = vmatprep.subr.bf16.mxu0 0
    %4212 = vmatpush1.bf16.msra.mxu0 %v4190
    %4213 = vmatprep.subr.bf16.mxu0 0
    %4214 = vmatpush1.bf16.msra.mxu0 %v4191
    %4215 = vmatprep.subr.bf16.mxu0 0
    %4216 = vmatpush1.bf16.msra.mxu0 %v4192
    %4217 = vmatprep.subr.bf16.mxu0 0
    %4218 = vmatpush1.bf16.msra.mxu0 0
    %4219 = vmatprep.subr.bf16.mxu0 0
    %4220 = vmatpush1.bf16.msra.mxu0 0
    %4221 = vmatprep.subr.bf16.mxu0 0
    %4222 = vmatpush1.bf16.msra.mxu0 0
    %4223 = vmatprep.subr.bf16.mxu0 0
    %4224 = vmatpush1.bf16.msra.mxu0 0
    %4225 = vmatprep.subr.bf16.mxu0 0
    %4226 = vmatpush1.bf16.msra.mxu0 0
    %4227 = vmatprep.subr.bf16.mxu0 0
    %4228 = vmatpush1.bf16.msra.mxu0 0
    %4229 = vmatprep.subr.bf16.mxu0 0
    %4230 = vmatpush1.bf16.msra.mxu0 0
    %4231 = vmatprep.subr.bf16.mxu0 0
    %4232 = vmatpush1.bf16.msra.mxu0 0
    %4233 = vmatprep.mubr.bf16.mxu0 0
    %4234 = vmatmul.mubr.bf16.gmra.mrb[0].mxu0 %v3812
    %v4235 = vpop.f32.mrb[0].mxu0
    %v4236 = vadd.f32 %v4135, %v4235
    %v4237 = vpop.f32.mrb[0].mxu0
    %v4238 = vpop.f32.mrb[0].mxu0
    %v4239 = vadd.f32 %v4136, %v4238
    %v4240 = vpop.f32.mrb[0].mxu0
    %4241 = vdwg.mxu0
    %v4242 = vxor.u32 %v3915, 2147483648
    %v4243 = vxor.u32 %v3918, 2147483648
    %v4244 = vmul.f32 %v4242, 1.442695
    %v4245 = vpow.pop %v4244
    %v4246 = vmul.f32 %v4243, 1.442695
    %v4247 = vpow.pop %v4246
    %v4248 = vadd.f32 %v4245, 1.0
    %v4249 = vadd.f32 %v4247, 1.0
    %v4250 = vrcp.pop %v4248
    %v4251 = vmul.f32 1.0, %v4250
    %v4252 = vrcp.pop %v4249
    %v4253 = vmul.f32 1.0, %v4252
    %v4254 = vxor.u32 %v4022, 2147483648
    %v4255 = vxor.u32 %v4025, 2147483648
    %v4256 = vmul.f32 %v4254, 1.442695
    %v4257 = vpow.pop %v4256
    %v4258 = vmul.f32 %v4255, 1.442695
    %v4259 = vpow.pop %v4258
    %v4260 = vadd.f32 %v4257, 1.0
    %v4261 = vadd.f32 %v4259, 1.0
    %v4262 = vrcp.pop %v4260
    %v4263 = vmul.f32 1.0, %v4262
    %v4264 = vrcp.pop %v4261
    %v4265 = vmul.f32 1.0, %v4264
    %v4266 = vtanh.pop %v4129
    %v4267 = vtanh.pop %v4132
    %v4268 = vxor.u32 %v4236, 2147483648
    %v4269 = vxor.u32 %v4239, 2147483648
    %v4270 = vmul.f32 %v4268, 1.442695
    %v4271 = vpow.pop %v4270
    %v4272 = vmul.f32 %v4269, 1.442695
    %v4273 = vpow.pop %v4272
    %v4274 = vadd.f32 %v4271, 1.0
    %v4275 = vadd.f32 %v4273, 1.0
    %v4276 = vrcp.pop %v4274
    %v4277 = vmul.f32 1.0, %v4276
    %v4278 = vrcp.pop %v4275
    %v4279 = vmul.f32 1.0, %v4278
    %v4280 = vmul.f32 %v4263, %v3806
    %v4281 = vmul.f32 %v4265, %v3807
    %v4282 = vmul.f32 %v4251, %v4266
    %v4283 = vmul.f32 %v4253, %v4267
    %v4284 = vadd.f32 %v4280, %v4282
    %v4285 = vadd.f32 %v4281, %v4283
    %v4286 = vtanh.pop %v4284
    %v4287 = vtanh.pop %v4285
    %v4288 = vmul.f32 %v4277, %v4286
    %v4289 = vmul.f32 %v4279, %v4287
    %v4290 = vpack.c.bf16 %v4289, %v4288
    %4291 = vst [vmem:[#allocation2 + $0x38] sm:$0xff] %v4290
    %v4292 = vld [vmem:[#allocation2] sm:$0xff]
    %v4293 = vld [vmem:[#allocation2 + $0x8] sm:$0xff]
    %v4294 = vld [vmem:[#allocation2 + $0x10] sm:$0xff]
    %v4295 = vld [vmem:[#allocation2 + $0x18] sm:$0xff]
    %v4296 = vld [vmem:[#allocation2 + $0x20] sm:$0xff]
    %v4297 = vld [vmem:[#allocation2 + $0x28] sm:$0xff]
    %v4298 = vld [vmem:[#allocation2 + $0x30] sm:$0xff]
    %v4299 = vld [vmem:[#allocation2 + $0x38] sm:$0xff]
    %v4300 = vld [vmem:[#allocation6] sm:$0xf]
    %v4301 = vld [vmem:[#allocation6 + $0x10] sm:$0xf]
    %v4302 = vld [vmem:[#allocation6 + $0x20] sm:$0xf]
    %v4303 = vld [vmem:[#allocation6 + $0x30] sm:$0xf]
    %v4304 = vld [vmem:[#allocation6 + $0x40] sm:$0xf]
    %v4305 = vld [vmem:[#allocation6 + $0x50] sm:$0xf]
    %v4306 = vld [vmem:[#allocation6 + $0x60] sm:$0xf]
    %v4307 = vld [vmem:[#allocation6 + $0x70] sm:$0xf]
    %v4308 = vld [vmem:[#allocation6 + $0x80] sm:$0xf]
    %v4309 = vld [vmem:[#allocation6 + $0x90] sm:$0xf]
    %v4310 = vld [vmem:[#allocation6 + $0xa0] sm:$0xf]
    %v4311 = vld [vmem:[#allocation6 + $0xb0] sm:$0xf]
    %v4312 = vld [vmem:[#allocation6 + $0xc0] sm:$0xf]
    %v4313 = vld [vmem:[#allocation6 + $0xd0] sm:$0xf]
    %v4314 = vld [vmem:[#allocation6 + $0xe0] sm:$0xf]
    %v4315 = vld [vmem:[#allocation6 + $0xf0] sm:$0xf]
    %v4316 = vld [vmem:[%s6] sm:$0x1]
    %v4318 = vlaneseq
    %v4319 = vshrl.u32 %v4318, 7
    %v4320 = vsub.s32 0, %v4319
    %v4321 = vrot.slane %v4316, %v4320
    %v4339 = vunpack.c.l.b16 %v4300
    %v4340 = vunpack.c.l.b16 %v4301
    %v4341 = vunpack.c.l.b16 %v4302
    %v4342 = vunpack.c.l.b16 %v4303
    %v4343 = vunpack.c.l.b16 %v4304
    %v4344 = vunpack.c.l.b16 %v4305
    %v4345 = vunpack.c.l.b16 %v4306
    %v4346 = vunpack.c.l.b16 %v4307
    %v4347 = vunpack.c.l.b16 %v4308
    %v4348 = vunpack.c.l.b16 %v4309
    %v4349 = vunpack.c.l.b16 %v4310
    %v4350 = vunpack.c.l.b16 %v4311
    %v4351 = vunpack.c.l.b16 %v4312
    %v4352 = vunpack.c.l.b16 %v4313
    %v4353 = vunpack.c.l.b16 %v4314
    %v4354 = vunpack.c.l.b16 %v4315
    %v4355 = vpack.c.b16 %v4340, %v4339
    %v4356 = vpack.c.b16 %v4342, %v4341
    %v4357 = vpack.c.b16 %v4344, %v4343
    %v4358 = vpack.c.b16 %v4346, %v4345
    %v4359 = vpack.c.b16 %v4348, %v4347
    %v4360 = vpack.c.b16 %v4350, %v4349
    %v4361 = vpack.c.b16 %v4352, %v4351
    %v4362 = vpack.c.b16 %v4354, %v4353
    %4371 = vmatprep.subr.bf16.mxu0 0
    %4372 = vmatpush1.bf16.msra.mxu0 %v4355
    %4373 = vmatprep.subr.bf16.mxu0 0
    %4374 = vmatpush1.bf16.msra.mxu0 %v4356
    %4375 = vmatprep.subr.bf16.mxu0 0
    %4376 = vmatpush1.bf16.msra.mxu0 %v4357
    %4377 = vmatprep.subr.bf16.mxu0 0
    %4378 = vmatpush1.bf16.msra.mxu0 %v4358
    %4379 = vmatprep.subr.bf16.mxu0 0
    %4380 = vmatpush1.bf16.msra.mxu0 %v4359
    %4381 = vmatprep.subr.bf16.mxu0 0
    %4382 = vmatpush1.bf16.msra.mxu0 %v4360
    %4383 = vmatprep.subr.bf16.mxu0 0
    %4384 = vmatpush1.bf16.msra.mxu0 %v4361
    %4385 = vmatprep.subr.bf16.mxu0 0
    %4386 = vmatpush1.bf16.msra.mxu0 %v4362
    %4387 = vmatprep.subr.bf16.mxu0 0
    %4388 = vmatpush1.bf16.msra.mxu0 0
    %4389 = vmatprep.subr.bf16.mxu0 0
    %4390 = vmatpush1.bf16.msra.mxu0 0
    %4391 = vmatprep.subr.bf16.mxu0 0
    %4392 = vmatpush1.bf16.msra.mxu0 0
    %4393 = vmatprep.subr.bf16.mxu0 0
    %4394 = vmatpush1.bf16.msra.mxu0 0
    %4395 = vmatprep.subr.bf16.mxu0 0
    %4396 = vmatpush1.bf16.msra.mxu0 0
    %4397 = vmatprep.subr.bf16.mxu0 0
    %4398 = vmatpush1.bf16.msra.mxu0 0
    %4399 = vmatprep.subr.bf16.mxu0 0
    %4400 = vmatpush1.bf16.msra.mxu0 0
    %4401 = vmatprep.subr.bf16.mxu0 0
    %4402 = vmatpush1.bf16.msra.mxu0 0
    %4403 = vmatprep.mubr.bf16.mxu0 0
    %4404 = vmatmul.mubr.bf16.gmra.mrb[0].mxu0 %v4292
    %v4405 = vpop.f32.mrb[0].mxu0
    %v4406 = vadd.f32 %v4321, %v4405
    %v4407 = vpop.f32.mrb[0].mxu0
    %v4408 = vpop.f32.mrb[0].mxu0
    %v4409 = vadd.f32 %v4321, %v4408
    %v4410 = vpop.f32.mrb[0].mxu0
    %4411 = vmatprep.mubr.bf16.mxu0 0
    %4412 = vmatmul.mubr.bf16.gmra.mrb[0].mxu0 %v4293
    %v4413 = vpop.f32.mrb[0].mxu0
    %v4414 = vadd.f32 %v4321, %v4413
    %v4415 = vpop.f32.mrb[0].mxu0
    %v4416 = vpop.f32.mrb[0].mxu0
    %v4417 = vadd.f32 %v4321, %v4416
    %v4418 = vpop.f32.mrb[0].mxu0
    %4419 = vmatprep.mubr.bf16.mxu0 0
    %4420 = vmatmul.mubr.bf16.gmra.mrb[0].mxu0 %v4294
    %v4421 = vpop.f32.mrb[0].mxu0
    %v4422 = vadd.f32 %v4321, %v4421
    %v4423 = vpop.f32.mrb[0].mxu0
    %v4424 = vpop.f32.mrb[0].mxu0
    %v4425 = vadd.f32 %v4321, %v4424
    %v4426 = vpop.f32.mrb[0].mxu0
    %4427 = vmatprep.mubr.bf16.mxu0 0
    %4428 = vmatmul.mubr.bf16.gmra.mrb[0].mxu0 %v4295
    %v4429 = vpop.f32.mrb[0].mxu0
    %v4430 = vadd.f32 %v4321, %v4429
    %v4431 = vpop.f32.mrb[0].mxu0
    %v4432 = vpop.f32.mrb[0].mxu0
    %v4433 = vadd.f32 %v4321, %v4432
    %v4434 = vpop.f32.mrb[0].mxu0
    %4435 = vmatprep.mubr.bf16.mxu0 0
    %4436 = vmatmul.mubr.bf16.gmra.mrb[0].mxu0 %v4296
    %v4437 = vpop.f32.mrb[0].mxu0
    %v4438 = vadd.f32 %v4321, %v4437
    %v4439 = vpop.f32.mrb[0].mxu0
    %v4440 = vpop.f32.mrb[0].mxu0
    %v4441 = vadd.f32 %v4321, %v4440
    %v4442 = vpop.f32.mrb[0].mxu0
    %4443 = vmatprep.mubr.bf16.mxu0 0
    %4444 = vmatmul.mubr.bf16.gmra.mrb[0].mxu0 %v4297
    %v4445 = vpop.f32.mrb[0].mxu0
    %v4446 = vadd.f32 %v4321, %v4445
    %v4447 = vpop.f32.mrb[0].mxu0
    %v4448 = vpop.f32.mrb[0].mxu0
    %v4449 = vadd.f32 %v4321, %v4448
    %v4450 = vpop.f32.mrb[0].mxu0
    %4451 = vmatprep.mubr.bf16.mxu0 0
    %4452 = vmatmul.mubr.bf16.gmra.mrb[0].mxu0 %v4298
    %v4453 = vpop.f32.mrb[0].mxu0
    %v4454 = vadd.f32 %v4321, %v4453
    %v4455 = vpop.f32.mrb[0].mxu0
    %v4456 = vpop.f32.mrb[0].mxu0
    %v4457 = vadd.f32 %v4321, %v4456
    %v4458 = vpop.f32.mrb[0].mxu0
    %4459 = vmatprep.mubr.bf16.mxu0 0
    %4460 = vmatmul.mubr.bf16.gmra.mrb[0].mxu0 %v4299
    %v4461 = vpop.f32.mrb[0].mxu0
    %v4462 = vadd.f32 %v4321, %v4461
    %v4463 = vpop.f32.mrb[0].mxu0
    %v4464 = vpop.f32.mrb[0].mxu0
    %v4465 = vadd.f32 %v4321, %v4464
    %v4466 = vpop.f32.mrb[0].mxu0
    %4467 = vdwg.mxu0
    %4468 = vst [vmem:[#allocation3] sm:$0xff] %v4406
    %4469 = vst [vmem:[#allocation3 + $0x20] sm:$0xff] %v4409
    %4470 = vst [vmem:[#allocation3 + $0x40] sm:$0xff] %v4414
    %4471 = vst [vmem:[#allocation3 + $0x60] sm:$0xff] %v4417
    %4472 = vst [vmem:[#allocation3 + $0x80] sm:$0xff] %v4422
    %4473 = vst [vmem:[#allocation3 + $0xa0] sm:$0xff] %v4425
    %4474 = vst [vmem:[#allocation3 + $0xc0] sm:$0xff] %v4430
    %4475 = vst [vmem:[#allocation3 + $0xe0] sm:$0xff] %v4433
    %4476 = vst [vmem:[#allocation3 + $0x100] sm:$0xff] %v4438
    %4477 = vst [vmem:[#allocation3 + $0x120] sm:$0xff] %v4441
    %4478 = vst [vmem:[#allocation3 + $0x140] sm:$0xff] %v4446
    %4479 = vst [vmem:[#allocation3 + $0x160] sm:$0xff] %v4449
    %4480 = vst [vmem:[#allocation3 + $0x180] sm:$0xff] %v4454
    %4481 = vst [vmem:[#allocation3 + $0x1a0] sm:$0xff] %v4457
    %4482 = vst [vmem:[#allocation3 + $0x1c0] sm:$0xff] %v4462
    %4483 = vst [vmem:[#allocation3 + $0x1e0] sm:$0xff] %v4465
    %v4484 = vld [vmem:[#allocation2] sm:$0xff]
    %v4485 = vld [vmem:[#allocation2 + $0x8] sm:$0xff]
    %v4486 = vld [vmem:[#allocation2 + $0x10] sm:$0xff]
    %v4487 = vld [vmem:[#allocation2 + $0x18] sm:$0xff]
    %v4488 = vld [vmem:[#allocation2 + $0x20] sm:$0xff]
    %v4489 = vld [vmem:[#allocation2 + $0x28] sm:$0xff]
    %v4490 = vld [vmem:[#allocation2 + $0x30] sm:$0xff]
    %v4491 = vld [vmem:[#allocation2 + $0x38] sm:$0xff]
    %v4492 = vld [vmem:[#allocation6 + $0x4] sm:$0xf]
    %v4493 = vld [vmem:[#allocation6 + $0x14] sm:$0xf]
    %v4494 = vld [vmem:[#allocation6 + $0x24] sm:$0xf]
    %v4495 = vld [vmem:[#allocation6 + $0x34] sm:$0xf]
    %v4496 = vld [vmem:[#allocation6 + $0x44] sm:$0xf]
    %v4497 = vld [vmem:[#allocation6 + $0x54] sm:$0xf]
    %v4498 = vld [vmem:[#allocation6 + $0x64] sm:$0xf]
    %v4499 = vld [vmem:[#allocation6 + $0x74] sm:$0xf]
    %v4500 = vld [vmem:[#allocation6 + $0x84] sm:$0xf]
    %v4501 = vld [vmem:[#allocation6 + $0x94] sm:$0xf]
    %v4502 = vld [vmem:[#allocation6 + $0xa4] sm:$0xf]
    %v4503 = vld [vmem:[#allocation6 + $0xb4] sm:$0xf]
    %v4504 = vld [vmem:[#allocation6 + $0xc4] sm:$0xf]
    %v4505 = vld [vmem:[#allocation6 + $0xd4] sm:$0xf]
    %v4506 = vld [vmem:[#allocation6 + $0xe4] sm:$0xf]
    %v4507 = vld [vmem:[#allocation6 + $0xf4] sm:$0xf]
    %v4508 = vld [vmem:[%s6 + $0x1] sm:$0x1]
    %v4510 = vlaneseq
    %v4511 = vshrl.u32 %v4510, 7
    %v4512 = vsub.s32 0, %v4511
    %v4513 = vrot.slane %v4508, %v4512
    %v4531 = vunpack.c.l.b16 %v4492
    %v4532 = vunpack.c.l.b16 %v4493
    %v4533 = vunpack.c.l.b16 %v4494
    %v4534 = vunpack.c.l.b16 %v4495
    %v4535 = vunpack.c.l.b16 %v4496
    %v4536 = vunpack.c.l.b16 %v4497
    %v4537 = vunpack.c.l.b16 %v4498
    %v4538 = vunpack.c.l.b16 %v4499
    %v4539 = vunpack.c.l.b16 %v4500
    %v4540 = vunpack.c.l.b16 %v4501
    %v4541 = vunpack.c.l.b16 %v4502
    %v4542 = vunpack.c.l.b16 %v4503
    %v4543 = vunpack.c.l.b16 %v4504
    %v4544 = vunpack.c.l.b16 %v4505
    %v4545 = vunpack.c.l.b16 %v4506
    %v4546 = vunpack.c.l.b16 %v4507
    %v4547 = vpack.c.b16 %v4532, %v4531
    %v4548 = vpack.c.b16 %v4534, %v4533
    %v4549 = vpack.c.b16 %v4536, %v4535
    %v4550 = vpack.c.b16 %v4538, %v4537
    %v4551 = vpack.c.b16 %v4540, %v4539
    %v4552 = vpack.c.b16 %v4542, %v4541
    %v4553 = vpack.c.b16 %v4544, %v4543
    %v4554 = vpack.c.b16 %v4546, %v4545
    %4563 = vmatprep.subr.bf16.mxu0 0
    %4564 = vmatpush1.bf16.msra.mxu0 %v4547
    %4565 = vmatprep.subr.bf16.mxu0 0
    %4566 = vmatpush1.bf16.msra.mxu0 %v4548
    %4567 = vmatprep.subr.bf16.mxu0 0
    %4568 = vmatpush1.bf16.msra.mxu0 %v4549
    %4569 = vmatprep.subr.bf16.mxu0 0
    %4570 = vmatpush1.bf16.msra.mxu0 %v4550
    %4571 = vmatprep.subr.bf16.mxu0 0
    %4572 = vmatpush1.bf16.msra.mxu0 %v4551
    %4573 = vmatprep.subr.bf16.mxu0 0
    %4574 = vmatpush1.bf16.msra.mxu0 %v4552
    %4575 = vmatprep.subr.bf16.mxu0 0
    %4576 = vmatpush1.bf16.msra.mxu0 %v4553
    %4577 = vmatprep.subr.bf16.mxu0 0
    %4578 = vmatpush1.bf16.msra.mxu0 %v4554
    %4579 = vmatprep.subr.bf16.mxu0 0
    %4580 = vmatpush1.bf16.msra.mxu0 0
    %4581 = vmatprep.subr.bf16.mxu0 0
    %4582 = vmatpush1.bf16.msra.mxu0 0
    %4583 = vmatprep.subr.bf16.mxu0 0
    %4584 = vmatpush1.bf16.msra.mxu0 0
    %4585 = vmatprep.subr.bf16.mxu0 0
    %4586 = vmatpush1.bf16.msra.mxu0 0
    %4587 = vmatprep.subr.bf16.mxu0 0
    %4588 = vmatpush1.bf16.msra.mxu0 0
    %4589 = vmatprep.subr.bf16.mxu0 0
    %4590 = vmatpush1.bf16.msra.mxu0 0
    %4591 = vmatprep.subr.bf16.mxu0 0
    %4592 = vmatpush1.bf16.msra.mxu0 0
    %4593 = vmatprep.subr.bf16.mxu0 0
    %4594 = vmatpush1.bf16.msra.mxu0 0
    %4595 = vmatprep.mubr.bf16.mxu0 0
    %4596 = vmatmul.mubr.bf16.gmra.mrb[0].mxu0 %v4484
    %v4597 = vpop.f32.mrb[0].mxu0
    %v4598 = vadd.f32 %v4513, %v4597
    %v4599 = vpop.f32.mrb[0].mxu0
    %v4600 = vpop.f32.mrb[0].mxu0
    %v4601 = vadd.f32 %v4513, %v4600
    %v4602 = vpop.f32.mrb[0].mxu0
    %4603 = vmatprep.mubr.bf16.mxu0 0
    %4604 = vmatmul.mubr.bf16.gmra.mrb[0].mxu0 %v4485
    %v4605 = vpop.f32.mrb[0].mxu0
    %v4606 = vadd.f32 %v4513, %v4605
    %v4607 = vpop.f32.mrb[0].mxu0
    %v4608 = vpop.f32.mrb[0].mxu0
    %v4609 = vadd.f32 %v4513, %v4608
    %v4610 = vpop.f32.mrb[0].mxu0
    %4611 = vmatprep.mubr.bf16.mxu0 0
    %4612 = vmatmul.mubr.bf16.gmra.mrb[0].mxu0 %v4486
    %v4613 = vpop.f32.mrb[0].mxu0
    %v4614 = vadd.f32 %v4513, %v4613
    %v4615 = vpop.f32.mrb[0].mxu0
    %v4616 = vpop.f32.mrb[0].mxu0
    %v4617 = vadd.f32 %v4513, %v4616
    %v4618 = vpop.f32.mrb[0].mxu0
    %4619 = vmatprep.mubr.bf16.mxu0 0
    %4620 = vmatmul.mubr.bf16.gmra.mrb[0].mxu0 %v4487
    %v4621 = vpop.f32.mrb[0].mxu0
    %v4622 = vadd.f32 %v4513, %v4621
    %v4623 = vpop.f32.mrb[0].mxu0
    %v4624 = vpop.f32.mrb[0].mxu0
    %v4625 = vadd.f32 %v4513, %v4624
    %v4626 = vpop.f32.mrb[0].mxu0
    %4627 = vmatprep.mubr.bf16.mxu0 0
    %4628 = vmatmul.mubr.bf16.gmra.mrb[0].mxu0 %v4488
    %v4629 = vpop.f32.mrb[0].mxu0
    %v4630 = vadd.f32 %v4513, %v4629
    %v4631 = vpop.f32.mrb[0].mxu0
    %v4632 = vpop.f32.mrb[0].mxu0
    %v4633 = vadd.f32 %v4513, %v4632
    %v4634 = vpop.f32.mrb[0].mxu0
    %4635 = vmatprep.mubr.bf16.mxu0 0
    %4636 = vmatmul.mubr.bf16.gmra.mrb[0].mxu0 %v4489
    %v4637 = vpop.f32.mrb[0].mxu0
    %v4638 = vadd.f32 %v4513, %v4637
    %v4639 = vpop.f32.mrb[0].mxu0
    %v4640 = vpop.f32.mrb[0].mxu0
    %v4641 = vadd.f32 %v4513, %v4640
    %v4642 = vpop.f32.mrb[0].mxu0
    %4643 = vmatprep.mubr.bf16.mxu0 0
    %4644 = vmatmul.mubr.bf16.gmra.mrb[0].mxu0 %v4490
    %v4645 = vpop.f32.mrb[0].mxu0
    %v4646 = vadd.f32 %v4513, %v4645
    %v4647 = vpop.f32.mrb[0].mxu0
    %v4648 = vpop.f32.mrb[0].mxu0
    %v4649 = vadd.f32 %v4513, %v4648
    %v4650 = vpop.f32.mrb[0].mxu0
    %4651 = vmatprep.mubr.bf16.mxu0 0
    %4652 = vmatmul.mubr.bf16.gmra.mrb[0].mxu0 %v4491
    %v4653 = vpop.f32.mrb[0].mxu0
    %v4654 = vadd.f32 %v4513, %v4653
    %v4655 = vpop.f32.mrb[0].mxu0
    %v4656 = vpop.f32.mrb[0].mxu0
    %v4657 = vadd.f32 %v4513, %v4656
    %v4658 = vpop.f32.mrb[0].mxu0
    %4659 = vdwg.mxu0
    %4660 = vst [vmem:[#allocation3 + $0x8] sm:$0xff] %v4598
    %4661 = vst [vmem:[#allocation3 + $0x28] sm:$0xff] %v4601
    %4662 = vst [vmem:[#allocation3 + $0x48] sm:$0xff] %v4606
    %4663 = vst [vmem:[#allocation3 + $0x68] sm:$0xff] %v4609
    %4664 = vst [vmem:[#allocation3 + $0x88] sm:$0xff] %v4614
    %4665 = vst [vmem:[#allocation3 + $0xa8] sm:$0xff] %v4617
    %4666 = vst [vmem:[#allocation3 + $0xc8] sm:$0xff] %v4622
    %4667 = vst [vmem:[#allocation3 + $0xe8] sm:$0xff] %v4625
    %4668 = vst [vmem:[#allocation3 + $0x108] sm:$0xff] %v4630
    %4669 = vst [vmem:[#allocation3 + $0x128] sm:$0xff] %v4633
    %4670 = vst [vmem:[#allocation3 + $0x148] sm:$0xff] %v4638
    %4671 = vst [vmem:[#allocation3 + $0x168] sm:$0xff] %v4641
    %4672 = vst [vmem:[#allocation3 + $0x188] sm:$0xff] %v4646
    %4673 = vst [vmem:[#allocation3 + $0x1a8] sm:$0xff] %v4649
    %4674 = vst [vmem:[#allocation3 + $0x1c8] sm:$0xff] %v4654
    %4675 = vst [vmem:[#allocation3 + $0x1e8] sm:$0xff] %v4657
    %v4676 = vld [vmem:[#allocation2] sm:$0xff]
    %v4677 = vld [vmem:[#allocation2 + $0x8] sm:$0xff]
    %v4678 = vld [vmem:[#allocation2 + $0x10] sm:$0xff]
    %v4679 = vld [vmem:[#allocation2 + $0x18] sm:$0xff]
    %v4680 = vld [vmem:[#allocation2 + $0x20] sm:$0xff]
    %v4681 = vld [vmem:[#allocation2 + $0x28] sm:$0xff]
    %v4682 = vld [vmem:[#allocation2 + $0x30] sm:$0xff]
    %v4683 = vld [vmem:[#allocation2 + $0x38] sm:$0xff]
    %v4684 = vld [vmem:[#allocation6 + $0x8] sm:$0xf]
    %v4685 = vld [vmem:[#allocation6 + $0x18] sm:$0xf]
    %v4686 = vld [vmem:[#allocation6 + $0x28] sm:$0xf]
    %v4687 = vld [vmem:[#allocation6 + $0x38] sm:$0xf]
    %v4688 = vld [vmem:[#allocation6 + $0x48] sm:$0xf]
    %v4689 = vld [vmem:[#allocation6 + $0x58] sm:$0xf]
    %v4690 = vld [vmem:[#allocation6 + $0x68] sm:$0xf]
    %v4691 = vld [vmem:[#allocation6 + $0x78] sm:$0xf]
    %v4692 = vld [vmem:[#allocation6 + $0x88] sm:$0xf]
    %v4693 = vld [vmem:[#allocation6 + $0x98] sm:$0xf]
    %v4694 = vld [vmem:[#allocation6 + $0xa8] sm:$0xf]
    %v4695 = vld [vmem:[#allocation6 + $0xb8] sm:$0xf]
    %v4696 = vld [vmem:[#allocation6 + $0xc8] sm:$0xf]
    %v4697 = vld [vmem:[#allocation6 + $0xd8] sm:$0xf]
    %v4698 = vld [vmem:[#allocation6 + $0xe8] sm:$0xf]
    %v4699 = vld [vmem:[#allocation6 + $0xf8] sm:$0xf]
    %v4700 = vld [vmem:[%s6 + $0x2] sm:$0x1]
    %v4702 = vlaneseq
    %v4703 = vshrl.u32 %v4702, 7
    %v4704 = vsub.s32 0, %v4703
    %v4705 = vrot.slane %v4700, %v4704
    %v4723 = vunpack.c.l.b16 %v4684
    %v4724 = vunpack.c.l.b16 %v4685
    %v4725 = vunpack.c.l.b16 %v4686
    %v4726 = vunpack.c.l.b16 %v4687
    %v4727 = vunpack.c.l.b16 %v4688
    %v4728 = vunpack.c.l.b16 %v4689
    %v4729 = vunpack.c.l.b16 %v4690
    %v4730 = vunpack.c.l.b16 %v4691
    %v4731 = vunpack.c.l.b16 %v4692
    %v4732 = vunpack.c.l.b16 %v4693
    %v4733 = vunpack.c.l.b16 %v4694
    %v4734 = vunpack.c.l.b16 %v4695
    %v4735 = vunpack.c.l.b16 %v4696
    %v4736 = vunpack.c.l.b16 %v4697
    %v4737 = vunpack.c.l.b16 %v4698
    %v4738 = vunpack.c.l.b16 %v4699
    %v4739 = vpack.c.b16 %v4724, %v4723
    %v4740 = vpack.c.b16 %v4726, %v4725
    %v4741 = vpack.c.b16 %v4728, %v4727
    %v4742 = vpack.c.b16 %v4730, %v4729
    %v4743 = vpack.c.b16 %v4732, %v4731
    %v4744 = vpack.c.b16 %v4734, %v4733
    %v4745 = vpack.c.b16 %v4736, %v4735
    %v4746 = vpack.c.b16 %v4738, %v4737
    %4755 = vmatprep.subr.bf16.mxu0 0
    %4756 = vmatpush1.bf16.msra.mxu0 %v4739
    %4757 = vmatprep.subr.bf16.mxu0 0
    %4758 = vmatpush1.bf16.msra.mxu0 %v4740
    %4759 = vmatprep.subr.bf16.mxu0 0
    %4760 = vmatpush1.bf16.msra.mxu0 %v4741
    %4761 = vmatprep.subr.bf16.mxu0 0
    %4762 = vmatpush1.bf16.msra.mxu0 %v4742
    %4763 = vmatprep.subr.bf16.mxu0 0
    %4764 = vmatpush1.bf16.msra.mxu0 %v4743
    %4765 = vmatprep.subr.bf16.mxu0 0
    %4766 = vmatpush1.bf16.msra.mxu0 %v4744
    %4767 = vmatprep.subr.bf16.mxu0 0
    %4768 = vmatpush1.bf16.msra.mxu0 %v4745
    %4769 = vmatprep.subr.bf16.mxu0 0
    %4770 = vmatpush1.bf16.msra.mxu0 %v4746
    %4771 = vmatprep.subr.bf16.mxu0 0
    %4772 = vmatpush1.bf16.msra.mxu0 0
    %4773 = vmatprep.subr.bf16.mxu0 0
    %4774 = vmatpush1.bf16.msra.mxu0 0
    %4775 = vmatprep.subr.bf16.mxu0 0
    %4776 = vmatpush1.bf16.msra.mxu0 0
    %4777 = vmatprep.subr.bf16.mxu0 0
    %4778 = vmatpush1.bf16.msra.mxu0 0
    %4779 = vmatprep.subr.bf16.mxu0 0
    %4780 = vmatpush1.bf16.msra.mxu0 0
    %4781 = vmatprep.subr.bf16.mxu0 0
    %4782 = vmatpush1.bf16.msra.mxu0 0
    %4783 = vmatprep.subr.bf16.mxu0 0
    %4784 = vmatpush1.bf16.msra.mxu0 0
    %4785 = vmatprep.subr.bf16.mxu0 0
    %4786 = vmatpush1.bf16.msra.mxu0 0
    %4787 = vmatprep.mubr.bf16.mxu0 0
    %4788 = vmatmul.mubr.bf16.gmra.mrb[0].mxu0 %v4676
    %v4789 = vpop.f32.mrb[0].mxu0
    %v4790 = vadd.f32 %v4705, %v4789
    %v4791 = vpop.f32.mrb[0].mxu0
    %v4792 = vpop.f32.mrb[0].mxu0
    %v4793 = vadd.f32 %v4705, %v4792
    %v4794 = vpop.f32.mrb[0].mxu0
    %4795 = vmatprep.mubr.bf16.mxu0 0
    %4796 = vmatmul.mubr.bf16.gmra.mrb[0].mxu0 %v4677
    %v4797 = vpop.f32.mrb[0].mxu0
    %v4798 = vadd.f32 %v4705, %v4797
    %v4799 = vpop.f32.mrb[0].mxu0
    %v4800 = vpop.f32.mrb[0].mxu0
    %v4801 = vadd.f32 %v4705, %v4800
    %v4802 = vpop.f32.mrb[0].mxu0
    %4803 = vmatprep.mubr.bf16.mxu0 0
    %4804 = vmatmul.mubr.bf16.gmra.mrb[0].mxu0 %v4678
    %v4805 = vpop.f32.mrb[0].mxu0
    %v4806 = vadd.f32 %v4705, %v4805
    %v4807 = vpop.f32.mrb[0].mxu0
    %v4808 = vpop.f32.mrb[0].mxu0
    %v4809 = vadd.f32 %v4705, %v4808
    %v4810 = vpop.f32.mrb[0].mxu0
    %4811 = vmatprep.mubr.bf16.mxu0 0
    %4812 = vmatmul.mubr.bf16.gmra.mrb[0].mxu0 %v4679
    %v4813 = vpop.f32.mrb[0].mxu0
    %v4814 = vadd.f32 %v4705, %v4813
    %v4815 = vpop.f32.mrb[0].mxu0
    %v4816 = vpop.f32.mrb[0].mxu0
    %v4817 = vadd.f32 %v4705, %v4816
    %v4818 = vpop.f32.mrb[0].mxu0
    %4819 = vmatprep.mubr.bf16.mxu0 0
    %4820 = vmatmul.mubr.bf16.gmra.mrb[0].mxu0 %v4680
    %v4821 = vpop.f32.mrb[0].mxu0
    %v4822 = vadd.f32 %v4705, %v4821
    %v4823 = vpop.f32.mrb[0].mxu0
    %v4824 = vpop.f32.mrb[0].mxu0
    %v4825 = vadd.f32 %v4705, %v4824
    %v4826 = vpop.f32.mrb[0].mxu0
    %4827 = vmatprep.mubr.bf16.mxu0 0
    %4828 = vmatmul.mubr.bf16.gmra.mrb[0].mxu0 %v4681
    %v4829 = vpop.f32.mrb[0].mxu0
    %v4830 = vadd.f32 %v4705, %v4829
    %v4831 = vpop.f32.mrb[0].mxu0
    %v4832 = vpop.f32.mrb[0].mxu0
    %v4833 = vadd.f32 %v4705, %v4832
    %v4834 = vpop.f32.mrb[0].mxu0
    %4835 = vmatprep.mubr.bf16.mxu0 0
    %4836 = vmatmul.mubr.bf16.gmra.mrb[0].mxu0 %v4682
    %v4837 = vpop.f32.mrb[0].mxu0
    %v4838 = vadd.f32 %v4705, %v4837
    %v4839 = vpop.f32.mrb[0].mxu0
    %v4840 = vpop.f32.mrb[0].mxu0
    %v4841 = vadd.f32 %v4705, %v4840
    %v4842 = vpop.f32.mrb[0].mxu0
    %4843 = vmatprep.mubr.bf16.mxu0 0
    %4844 = vmatmul.mubr.bf16.gmra.mrb[0].mxu0 %v4683
    %v4845 = vpop.f32.mrb[0].mxu0
    %v4846 = vadd.f32 %v4705, %v4845
    %v4847 = vpop.f32.mrb[0].mxu0
    %v4848 = vpop.f32.mrb[0].mxu0
    %v4849 = vadd.f32 %v4705, %v4848
    %v4850 = vpop.f32.mrb[0].mxu0
    %4851 = vdwg.mxu0
    %4852 = vst [vmem:[#allocation3 + $0x10] sm:$0xff] %v4790
    %4853 = vst [vmem:[#allocation3 + $0x30] sm:$0xff] %v4793
    %4854 = vst [vmem:[#allocation3 + $0x50] sm:$0xff] %v4798
    %4855 = vst [vmem:[#allocation3 + $0x70] sm:$0xff] %v4801
    %4856 = vst [vmem:[#allocation3 + $0x90] sm:$0xff] %v4806
    %4857 = vst [vmem:[#allocation3 + $0xb0] sm:$0xff] %v4809
    %4858 = vst [vmem:[#allocation3 + $0xd0] sm:$0xff] %v4814
    %4859 = vst [vmem:[#allocation3 + $0xf0] sm:$0xff] %v4817
    %4860 = vst [vmem:[#allocation3 + $0x110] sm:$0xff] %v4822
    %4861 = vst [vmem:[#allocation3 + $0x130] sm:$0xff] %v4825
    %4862 = vst [vmem:[#allocation3 + $0x150] sm:$0xff] %v4830
    %4863 = vst [vmem:[#allocation3 + $0x170] sm:$0xff] %v4833
    %4864 = vst [vmem:[#allocation3 + $0x190] sm:$0xff] %v4838
    %4865 = vst [vmem:[#allocation3 + $0x1b0] sm:$0xff] %v4841
    %4866 = vst [vmem:[#allocation3 + $0x1d0] sm:$0xff] %v4846
    %4867 = vst [vmem:[#allocation3 + $0x1f0] sm:$0xff] %v4849
    %v4868 = vld [vmem:[#allocation2] sm:$0xff]
    %v4869 = vld [vmem:[#allocation2 + $0x8] sm:$0xff]
    %v4870 = vld [vmem:[#allocation2 + $0x10] sm:$0xff]
    %v4871 = vld [vmem:[#allocation2 + $0x18] sm:$0xff]
    %v4872 = vld [vmem:[#allocation2 + $0x20] sm:$0xff]
    %v4873 = vld [vmem:[#allocation2 + $0x28] sm:$0xff]
    %v4874 = vld [vmem:[#allocation2 + $0x30] sm:$0xff]
    %v4875 = vld [vmem:[#allocation2 + $0x38] sm:$0xff]
    %v4876 = vld [vmem:[#allocation6 + $0xc] sm:$0xf]
    %v4877 = vld [vmem:[#allocation6 + $0x1c] sm:$0xf]
    %v4878 = vld [vmem:[#allocation6 + $0x2c] sm:$0xf]
    %v4879 = vld [vmem:[#allocation6 + $0x3c] sm:$0xf]
    %v4880 = vld [vmem:[#allocation6 + $0x4c] sm:$0xf]
    %v4881 = vld [vmem:[#allocation6 + $0x5c] sm:$0xf]
    %v4882 = vld [vmem:[#allocation6 + $0x6c] sm:$0xf]
    %v4883 = vld [vmem:[#allocation6 + $0x7c] sm:$0xf]
    %v4884 = vld [vmem:[#allocation6 + $0x8c] sm:$0xf]
    %v4885 = vld [vmem:[#allocation6 + $0x9c] sm:$0xf]
    %v4886 = vld [vmem:[#allocation6 + $0xac] sm:$0xf]
    %v4887 = vld [vmem:[#allocation6 + $0xbc] sm:$0xf]
    %v4888 = vld [vmem:[#allocation6 + $0xcc] sm:$0xf]
    %v4889 = vld [vmem:[#allocation6 + $0xdc] sm:$0xf]
    %v4890 = vld [vmem:[#allocation6 + $0xec] sm:$0xf]
    %v4891 = vld [vmem:[#allocation6 + $0xfc] sm:$0xf]
    %v4892 = vld [vmem:[%s6 + $0x3] sm:$0x1]
    %v4894 = vlaneseq
    %v4895 = vshrl.u32 %v4894, 7
    %v4896 = vsub.s32 0, %v4895
    %v4897 = vrot.slane %v4892, %v4896
    %v4915 = vunpack.c.l.b16 %v4876
    %v4916 = vunpack.c.l.b16 %v4877
    %v4917 = vunpack.c.l.b16 %v4878
    %v4918 = vunpack.c.l.b16 %v4879
    %v4919 = vunpack.c.l.b16 %v4880
    %v4920 = vunpack.c.l.b16 %v4881
    %v4921 = vunpack.c.l.b16 %v4882
    %v4922 = vunpack.c.l.b16 %v4883
    %v4923 = vunpack.c.l.b16 %v4884
    %v4924 = vunpack.c.l.b16 %v4885
    %v4925 = vunpack.c.l.b16 %v4886
    %v4926 = vunpack.c.l.b16 %v4887
    %v4927 = vunpack.c.l.b16 %v4888
    %v4928 = vunpack.c.l.b16 %v4889
    %v4929 = vunpack.c.l.b16 %v4890
    %v4930 = vunpack.c.l.b16 %v4891
    %v4931 = vpack.c.b16 %v4916, %v4915
    %v4932 = vpack.c.b16 %v4918, %v4917
    %v4933 = vpack.c.b16 %v4920, %v4919
    %v4934 = vpack.c.b16 %v4922, %v4921
    %v4935 = vpack.c.b16 %v4924, %v4923
    %v4936 = vpack.c.b16 %v4926, %v4925
    %v4937 = vpack.c.b16 %v4928, %v4927
    %v4938 = vpack.c.b16 %v4930, %v4929
    %4947 = vmatprep.subr.bf16.mxu0 0
    %4948 = vmatpush1.bf16.msra.mxu0 %v4931
    %4949 = vmatprep.subr.bf16.mxu0 0
    %4950 = vmatpush1.bf16.msra.mxu0 %v4932
    %4951 = vmatprep.subr.bf16.mxu0 0
    %4952 = vmatpush1.bf16.msra.mxu0 %v4933
    %4953 = vmatprep.subr.bf16.mxu0 0
    %4954 = vmatpush1.bf16.msra.mxu0 %v4934
    %4955 = vmatprep.subr.bf16.mxu0 0
    %4956 = vmatpush1.bf16.msra.mxu0 %v4935
    %4957 = vmatprep.subr.bf16.mxu0 0
    %4958 = vmatpush1.bf16.msra.mxu0 %v4936
    %4959 = vmatprep.subr.bf16.mxu0 0
    %4960 = vmatpush1.bf16.msra.mxu0 %v4937
    %4961 = vmatprep.subr.bf16.mxu0 0
    %4962 = vmatpush1.bf16.msra.mxu0 %v4938
    %4963 = vmatprep.subr.bf16.mxu0 0
    %4964 = vmatpush1.bf16.msra.mxu0 0
    %4965 = vmatprep.subr.bf16.mxu0 0
    %4966 = vmatpush1.bf16.msra.mxu0 0
    %4967 = vmatprep.subr.bf16.mxu0 0
    %4968 = vmatpush1.bf16.msra.mxu0 0
    %4969 = vmatprep.subr.bf16.mxu0 0
    %4970 = vmatpush1.bf16.msra.mxu0 0
    %4971 = vmatprep.subr.bf16.mxu0 0
    %4972 = vmatpush1.bf16.msra.mxu0 0
    %4973 = vmatprep.subr.bf16.mxu0 0
    %4974 = vmatpush1.bf16.msra.mxu0 0
    %4975 = vmatprep.subr.bf16.mxu0 0
    %4976 = vmatpush1.bf16.msra.mxu0 0
    %4977 = vmatprep.subr.bf16.mxu0 0
    %4978 = vmatpush1.bf16.msra.mxu0 0
    %4979 = vmatprep.mubr.bf16.mxu0 0
    %4980 = vmatmul.mubr.bf16.gmra.mrb[0].mxu0 %v4868
    %v4981 = vpop.f32.mrb[0].mxu0
    %v4982 = vadd.f32 %v4897, %v4981
    %v4983 = vpop.f32.mrb[0].mxu0
    %v4984 = vpop.f32.mrb[0].mxu0
    %v4985 = vadd.f32 %v4897, %v4984
    %v4986 = vpop.f32.mrb[0].mxu0
    %4987 = vmatprep.mubr.bf16.mxu0 0
    %4988 = vmatmul.mubr.bf16.gmra.mrb[0].mxu0 %v4869
    %v4989 = vpop.f32.mrb[0].mxu0
    %v4990 = vadd.f32 %v4897, %v4989
    %v4991 = vpop.f32.mrb[0].mxu0
    %v4992 = vpop.f32.mrb[0].mxu0
    %v4993 = vadd.f32 %v4897, %v4992
    %v4994 = vpop.f32.mrb[0].mxu0
    %4995 = vmatprep.mubr.bf16.mxu0 0
    %4996 = vmatmul.mubr.bf16.gmra.mrb[0].mxu0 %v4870
    %v4997 = vpop.f32.mrb[0].mxu0
    %v4998 = vadd.f32 %v4897, %v4997
    %v4999 = vpop.f32.mrb[0].mxu0
    %v5000 = vpop.f32.mrb[0].mxu0
    %v5001 = vadd.f32 %v4897, %v5000
    %v5002 = vpop.f32.mrb[0].mxu0
    %5003 = vmatprep.mubr.bf16.mxu0 0
    %5004 = vmatmul.mubr.bf16.gmra.mrb[0].mxu0 %v4871
    %v5005 = vpop.f32.mrb[0].mxu0
    %v5006 = vadd.f32 %v4897, %v5005
    %v5007 = vpop.f32.mrb[0].mxu0
    %v5008 = vpop.f32.mrb[0].mxu0
    %v5009 = vadd.f32 %v4897, %v5008
    %v5010 = vpop.f32.mrb[0].mxu0
    %5011 = vmatprep.mubr.bf16.mxu0 0
    %5012 = vmatmul.mubr.bf16.gmra.mrb[0].mxu0 %v4872
    %v5013 = vpop.f32.mrb[0].mxu0
    %v5014 = vadd.f32 %v4897, %v5013
    %v5015 = vpop.f32.mrb[0].mxu0
    %v5016 = vpop.f32.mrb[0].mxu0
    %v5017 = vadd.f32 %v4897, %v5016
    %v5018 = vpop.f32.mrb[0].mxu0
    %5019 = vmatprep.mubr.bf16.mxu0 0
    %5020 = vmatmul.mubr.bf16.gmra.mrb[0].mxu0 %v4873
    %v5021 = vpop.f32.mrb[0].mxu0
    %v5022 = vadd.f32 %v4897, %v5021
    %v5023 = vpop.f32.mrb[0].mxu0
    %v5024 = vpop.f32.mrb[0].mxu0
    %v5025 = vadd.f32 %v4897, %v5024
    %v5026 = vpop.f32.mrb[0].mxu0
    %5027 = vmatprep.mubr.bf16.mxu0 0
    %5028 = vmatmul.mubr.bf16.gmra.mrb[0].mxu0 %v4874
    %v5029 = vpop.f32.mrb[0].mxu0
    %v5030 = vadd.f32 %v4897, %v5029
    %v5031 = vpop.f32.mrb[0].mxu0
    %v5032 = vpop.f32.mrb[0].mxu0
    %v5033 = vadd.f32 %v4897, %v5032
    %v5034 = vpop.f32.mrb[0].mxu0
    %5035 = vmatprep.mubr.bf16.mxu0 0
    %5036 = vmatmul.mubr.bf16.gmra.mrb[0].mxu0 %v4875
    %v5037 = vpop.f32.mrb[0].mxu0
    %v5038 = vadd.f32 %v4897, %v5037
    %v5039 = vpop.f32.mrb[0].mxu0
    %v5040 = vpop.f32.mrb[0].mxu0
    %v5041 = vadd.f32 %v4897, %v5040
    %v5042 = vpop.f32.mrb[0].mxu0
    %5043 = vdwg.mxu0
    %5044 = vst [vmem:[#allocation3 + $0x18] sm:$0xff] %v4982
    %5045 = vst [vmem:[#allocation3 + $0x38] sm:$0xff] %v4985
    %5046 = vst [vmem:[#allocation3 + $0x58] sm:$0xff] %v4990
    %5047 = vst [vmem:[#allocation3 + $0x78] sm:$0xff] %v4993
    %5048 = vst [vmem:[#allocation3 + $0x98] sm:$0xff] %v4998
    %5049 = vst [vmem:[#allocation3 + $0xb8] sm:$0xff] %v5001
    %5050 = vst [vmem:[#allocation3 + $0xd8] sm:$0xff] %v5006
    %5051 = vst [vmem:[#allocation3 + $0xf8] sm:$0xff] %v5009
    %5052 = vst [vmem:[#allocation3 + $0x118] sm:$0xff] %v5014
    %5053 = vst [vmem:[#allocation3 + $0x138] sm:$0xff] %v5017
    %5054 = vst [vmem:[#allocation3 + $0x158] sm:$0xff] %v5022
    %5055 = vst [vmem:[#allocation3 + $0x178] sm:$0xff] %v5025
    %5056 = vst [vmem:[#allocation3 + $0x198] sm:$0xff] %v5030
    %5057 = vst [vmem:[#allocation3 + $0x1b8] sm:$0xff] %v5033
    %5058 = vst [vmem:[#allocation3 + $0x1d8] sm:$0xff] %v5038
    %5059 = vst [vmem:[#allocation3 + $0x1f8] sm:$0xff] %v5041
    %v5060 = vld [vmem:[#allocation3] sm:$0xff]
    %v5061 = vld [vmem:[#allocation3 + $0x20] sm:$0xff]
    %v5062 = vld [vmem:[#allocation3 + $0x10] sm:$0xff]
    %v5063 = vld [vmem:[#allocation3 + $0x30] sm:$0xff]
    %v5064 = vld [vmem:[#allocation3 + $0x18] sm:$0xff]
    %v5065 = vld [vmem:[#allocation3 + $0x38] sm:$0xff]
    %v5066 = vxor.u32 %v5060, 2147483648
    %v5067 = vxor.u32 %v5061, 2147483648
    %v5068 = vmul.f32 %v5066, 1.442695
    %v5069 = vpow.pop %v5068
    %v5070 = vmul.f32 %v5067, 1.442695
    %v5071 = vpow.pop %v5070
    %v5072 = vadd.f32 %v5069, 1.0
    %v5073 = vadd.f32 %v5071, 1.0
    %v5074 = vrcp.pop %v5072
    %v5075 = vmul.f32 1.0, %v5074
    %v5076 = vrcp.pop %v5073
    %v5077 = vmul.f32 1.0, %v5076
    %v5078 = vtanh.pop %v5062
    %v5079 = vtanh.pop %v5063
    %v5080 = vxor.u32 %v5064, 2147483648
    %v5081 = vxor.u32 %v5065, 2147483648
    %v5082 = vmul.f32 %v5080, 1.442695
    %v5083 = vpow.pop %v5082
    %v5084 = vmul.f32 %v5081, 1.442695
    %v5085 = vpow.pop %v5084
    %v5086 = vadd.f32 %v5083, 1.0
    %v5087 = vadd.f32 %v5085, 1.0
    %v5088 = vrcp.pop %v5086
    %v5089 = vmul.f32 1.0, %v5088
    %v5090 = vrcp.pop %v5087
    %v5091 = vmul.f32 1.0, %v5090
    %v5092 = vmul.f32 %v5075, %v5078
    %v5093 = vmul.f32 %v5077, %v5079
    %v5094 = vtanh.pop %v5092
    %v5095 = vtanh.pop %v5093
    %v5096 = vmul.f32 %v5089, %v5094
    %v5097 = vmul.f32 %v5091, %v5095
    %v5098 = vpack.c.bf16 %v5097, %v5096
    %v5099 = vld [vmem:[#allocation3 + $0x40] sm:$0xff]
    %v5100 = vld [vmem:[#allocation3 + $0x60] sm:$0xff]
    %v5101 = vld [vmem:[#allocation8] sm:$0xf]
    %v5102 = vld [vmem:[#allocation8 + $0x10] sm:$0xf]
    %v5103 = vld [vmem:[#allocation8 + $0x20] sm:$0xf]
    %v5104 = vld [vmem:[#allocation8 + $0x30] sm:$0xf]
    %v5105 = vld [vmem:[#allocation8 + $0x40] sm:$0xf]
    %v5106 = vld [vmem:[#allocation8 + $0x50] sm:$0xf]
    %v5107 = vld [vmem:[#allocation8 + $0x60] sm:$0xf]
    %v5108 = vld [vmem:[#allocation8 + $0x70] sm:$0xf]
    %v5109 = vld [vmem:[#allocation8 + $0x80] sm:$0xf]
    %v5110 = vld [vmem:[#allocation8 + $0x90] sm:$0xf]
    %v5111 = vld [vmem:[#allocation8 + $0xa0] sm:$0xf]
    %v5112 = vld [vmem:[#allocation8 + $0xb0] sm:$0xf]
    %v5113 = vld [vmem:[#allocation8 + $0xc0] sm:$0xf]
    %v5114 = vld [vmem:[#allocation8 + $0xd0] sm:$0xf]
    %v5115 = vld [vmem:[#allocation8 + $0xe0] sm:$0xf]
    %v5116 = vld [vmem:[#allocation8 + $0xf0] sm:$0xf]
    %v5133 = vunpack.c.l.b16 %v5101
    %v5134 = vunpack.c.l.b16 %v5102
    %v5135 = vunpack.c.l.b16 %v5103
    %v5136 = vunpack.c.l.b16 %v5104
    %v5137 = vunpack.c.l.b16 %v5105
    %v5138 = vunpack.c.l.b16 %v5106
    %v5139 = vunpack.c.l.b16 %v5107
    %v5140 = vunpack.c.l.b16 %v5108
    %v5141 = vunpack.c.l.b16 %v5109
    %v5142 = vunpack.c.l.b16 %v5110
    %v5143 = vunpack.c.l.b16 %v5111
    %v5144 = vunpack.c.l.b16 %v5112
    %v5145 = vunpack.c.l.b16 %v5113
    %v5146 = vunpack.c.l.b16 %v5114
    %v5147 = vunpack.c.l.b16 %v5115
    %v5148 = vunpack.c.l.b16 %v5116
    %v5149 = vpack.c.b16 %v5134, %v5133
    %v5150 = vpack.c.b16 %v5136, %v5135
    %v5151 = vpack.c.b16 %v5138, %v5137
    %v5152 = vpack.c.b16 %v5140, %v5139
    %v5153 = vpack.c.b16 %v5142, %v5141
    %v5154 = vpack.c.b16 %v5144, %v5143
    %v5155 = vpack.c.b16 %v5146, %v5145
    %v5156 = vpack.c.b16 %v5148, %v5147
    %5165 = vmatprep.subr.bf16.mxu0 0
    %5166 = vmatpush1.bf16.msra.mxu0 %v5149
    %5167 = vmatprep.subr.bf16.mxu0 0
    %5168 = vmatpush1.bf16.msra.mxu0 %v5150
    %5169 = vmatprep.subr.bf16.mxu0 0
    %5170 = vmatpush1.bf16.msra.mxu0 %v5151
    %5171 = vmatprep.subr.bf16.mxu0 0
    %5172 = vmatpush1.bf16.msra.mxu0 %v5152
    %5173 = vmatprep.subr.bf16.mxu0 0
    %5174 = vmatpush1.bf16.msra.mxu0 %v5153
    %5175 = vmatprep.subr.bf16.mxu0 0
    %5176 = vmatpush1.bf16.msra.mxu0 %v5154
    %5177 = vmatprep.subr.bf16.mxu0 0
    %5178 = vmatpush1.bf16.msra.mxu0 %v5155
    %5179 = vmatprep.subr.bf16.mxu0 0
    %5180 = vmatpush1.bf16.msra.mxu0 %v5156
    %5181 = vmatprep.subr.bf16.mxu0 0
    %5182 = vmatpush1.bf16.msra.mxu0 0
    %5183 = vmatprep.subr.bf16.mxu0 0
    %5184 = vmatpush1.bf16.msra.mxu0 0
    %5185 = vmatprep.subr.bf16.mxu0 0
    %5186 = vmatpush1.bf16.msra.mxu0 0
    %5187 = vmatprep.subr.bf16.mxu0 0
    %5188 = vmatpush1.bf16.msra.mxu0 0
    %5189 = vmatprep.subr.bf16.mxu0 0
    %5190 = vmatpush1.bf16.msra.mxu0 0
    %5191 = vmatprep.subr.bf16.mxu0 0
    %5192 = vmatpush1.bf16.msra.mxu0 0
    %5193 = vmatprep.subr.bf16.mxu0 0
    %5194 = vmatpush1.bf16.msra.mxu0 0
    %5195 = vmatprep.subr.bf16.mxu0 0
    %5196 = vmatpush1.bf16.msra.mxu0 0
    %5197 = vmatprep.mubr.bf16.mxu0 0
    %5198 = vmatmul.mubr.bf16.gmra.mrb[0].mxu0 %v5098
    %v5199 = vpop.f32.mrb[0].mxu0
    %v5200 = vadd.f32 %v5099, %v5199
    %v5201 = vpop.f32.mrb[0].mxu0
    %v5202 = vpop.f32.mrb[0].mxu0
    %v5203 = vadd.f32 %v5100, %v5202
    %v5204 = vpop.f32.mrb[0].mxu0
    %5205 = vdwg.mxu0
    %v5206 = vld [vmem:[#allocation3 + $0x48] sm:$0xff]
    %v5207 = vld [vmem:[#allocation3 + $0x68] sm:$0xff]
    %v5208 = vld [vmem:[#allocation8 + $0x4] sm:$0xf]
    %v5209 = vld [vmem:[#allocation8 + $0x14] sm:$0xf]
    %v5210 = vld [vmem:[#allocation8 + $0x24] sm:$0xf]
    %v5211 = vld [vmem:[#allocation8 + $0x34] sm:$0xf]
    %v5212 = vld [vmem:[#allocation8 + $0x44] sm:$0xf]
    %v5213 = vld [vmem:[#allocation8 + $0x54] sm:$0xf]
    %v5214 = vld [vmem:[#allocation8 + $0x64] sm:$0xf]
    %v5215 = vld [vmem:[#allocation8 + $0x74] sm:$0xf]
    %v5216 = vld [vmem:[#allocation8 + $0x84] sm:$0xf]
    %v5217 = vld [vmem:[#allocation8 + $0x94] sm:$0xf]
    %v5218 = vld [vmem:[#allocation8 + $0xa4] sm:$0xf]
    %v5219 = vld [vmem:[#allocation8 + $0xb4] sm:$0xf]
    %v5220 = vld [vmem:[#allocation8 + $0xc4] sm:$0xf]
    %v5221 = vld [vmem:[#allocation8 + $0xd4] sm:$0xf]
    %v5222 = vld [vmem:[#allocation8 + $0xe4] sm:$0xf]
    %v5223 = vld [vmem:[#allocation8 + $0xf4] sm:$0xf]
    %v5240 = vunpack.c.l.b16 %v5208
    %v5241 = vunpack.c.l.b16 %v5209
    %v5242 = vunpack.c.l.b16 %v5210
    %v5243 = vunpack.c.l.b16 %v5211
    %v5244 = vunpack.c.l.b16 %v5212
    %v5245 = vunpack.c.l.b16 %v5213
    %v5246 = vunpack.c.l.b16 %v5214
    %v5247 = vunpack.c.l.b16 %v5215
    %v5248 = vunpack.c.l.b16 %v5216
    %v5249 = vunpack.c.l.b16 %v5217
    %v5250 = vunpack.c.l.b16 %v5218
    %v5251 = vunpack.c.l.b16 %v5219
    %v5252 = vunpack.c.l.b16 %v5220
    %v5253 = vunpack.c.l.b16 %v5221
    %v5254 = vunpack.c.l.b16 %v5222
    %v5255 = vunpack.c.l.b16 %v5223
    %v5256 = vpack.c.b16 %v5241, %v5240
    %v5257 = vpack.c.b16 %v5243, %v5242
    %v5258 = vpack.c.b16 %v5245, %v5244
    %v5259 = vpack.c.b16 %v5247, %v5246
    %v5260 = vpack.c.b16 %v5249, %v5248
    %v5261 = vpack.c.b16 %v5251, %v5250
    %v5262 = vpack.c.b16 %v5253, %v5252
    %v5263 = vpack.c.b16 %v5255, %v5254
    %5272 = vmatprep.subr.bf16.mxu0 0
    %5273 = vmatpush1.bf16.msra.mxu0 %v5256
    %5274 = vmatprep.subr.bf16.mxu0 0
    %5275 = vmatpush1.bf16.msra.mxu0 %v5257
    %5276 = vmatprep.subr.bf16.mxu0 0
    %5277 = vmatpush1.bf16.msra.mxu0 %v5258
    %5278 = vmatprep.subr.bf16.mxu0 0
    %5279 = vmatpush1.bf16.msra.mxu0 %v5259
    %5280 = vmatprep.subr.bf16.mxu0 0
    %5281 = vmatpush1.bf16.msra.mxu0 %v5260
    %5282 = vmatprep.subr.bf16.mxu0 0
    %5283 = vmatpush1.bf16.msra.mxu0 %v5261
    %5284 = vmatprep.subr.bf16.mxu0 0
    %5285 = vmatpush1.bf16.msra.mxu0 %v5262
    %5286 = vmatprep.subr.bf16.mxu0 0
    %5287 = vmatpush1.bf16.msra.mxu0 %v5263
    %5288 = vmatprep.subr.bf16.mxu0 0
    %5289 = vmatpush1.bf16.msra.mxu0 0
    %5290 = vmatprep.subr.bf16.mxu0 0
    %5291 = vmatpush1.bf16.msra.mxu0 0
    %5292 = vmatprep.subr.bf16.mxu0 0
    %5293 = vmatpush1.bf16.msra.mxu0 0
    %5294 = vmatprep.subr.bf16.mxu0 0
    %5295 = vmatpush1.bf16.msra.mxu0 0
    %5296 = vmatprep.subr.bf16.mxu0 0
    %5297 = vmatpush1.bf16.msra.mxu0 0
    %5298 = vmatprep.subr.bf16.mxu0 0
    %5299 = vmatpush1.bf16.msra.mxu0 0
    %5300 = vmatprep.subr.bf16.mxu0 0
    %5301 = vmatpush1.bf16.msra.mxu0 0
    %5302 = vmatprep.subr.bf16.mxu0 0
    %5303 = vmatpush1.bf16.msra.mxu0 0
    %5304 = vmatprep.mubr.bf16.mxu0 0
    %5305 = vmatmul.mubr.bf16.gmra.mrb[0].mxu0 %v5098
    %v5306 = vpop.f32.mrb[0].mxu0
    %v5307 = vadd.f32 %v5206, %v5306
    %v5308 = vpop.f32.mrb[0].mxu0
    %v5309 = vpop.f32.mrb[0].mxu0
    %v5310 = vadd.f32 %v5207, %v5309
    %v5311 = vpop.f32.mrb[0].mxu0
    %5312 = vdwg.mxu0
    %v5313 = vld [vmem:[#allocation3 + $0x50] sm:$0xff]
    %v5314 = vld [vmem:[#allocation3 + $0x70] sm:$0xff]
    %v5315 = vld [vmem:[#allocation8 + $0x8] sm:$0xf]
    %v5316 = vld [vmem:[#allocation8 + $0x18] sm:$0xf]
    %v5317 = vld [vmem:[#allocation8 + $0x28] sm:$0xf]
    %v5318 = vld [vmem:[#allocation8 + $0x38] sm:$0xf]
    %v5319 = vld [vmem:[#allocation8 + $0x48] sm:$0xf]
    %v5320 = vld [vmem:[#allocation8 + $0x58] sm:$0xf]
    %v5321 = vld [vmem:[#allocation8 + $0x68] sm:$0xf]
    %v5322 = vld [vmem:[#allocation8 + $0x78] sm:$0xf]
    %v5323 = vld [vmem:[#allocation8 + $0x88] sm:$0xf]
    %v5324 = vld [vmem:[#allocation8 + $0x98] sm:$0xf]
    %v5325 = vld [vmem:[#allocation8 + $0xa8] sm:$0xf]
    %v5326 = vld [vmem:[#allocation8 + $0xb8] sm:$0xf]
    %v5327 = vld [vmem:[#allocation8 + $0xc8] sm:$0xf]
    %v5328 = vld [vmem:[#allocation8 + $0xd8] sm:$0xf]
    %v5329 = vld [vmem:[#allocation8 + $0xe8] sm:$0xf]
    %v5330 = vld [vmem:[#allocation8 + $0xf8] sm:$0xf]
    %v5347 = vunpack.c.l.b16 %v5315
    %v5348 = vunpack.c.l.b16 %v5316
    %v5349 = vunpack.c.l.b16 %v5317
    %v5350 = vunpack.c.l.b16 %v5318
    %v5351 = vunpack.c.l.b16 %v5319
    %v5352 = vunpack.c.l.b16 %v5320
    %v5353 = vunpack.c.l.b16 %v5321
    %v5354 = vunpack.c.l.b16 %v5322
    %v5355 = vunpack.c.l.b16 %v5323
    %v5356 = vunpack.c.l.b16 %v5324
    %v5357 = vunpack.c.l.b16 %v5325
    %v5358 = vunpack.c.l.b16 %v5326
    %v5359 = vunpack.c.l.b16 %v5327
    %v5360 = vunpack.c.l.b16 %v5328
    %v5361 = vunpack.c.l.b16 %v5329
    %v5362 = vunpack.c.l.b16 %v5330
    %v5363 = vpack.c.b16 %v5348, %v5347
    %v5364 = vpack.c.b16 %v5350, %v5349
    %v5365 = vpack.c.b16 %v5352, %v5351
    %v5366 = vpack.c.b16 %v5354, %v5353
    %v5367 = vpack.c.b16 %v5356, %v5355
    %v5368 = vpack.c.b16 %v5358, %v5357
    %v5369 = vpack.c.b16 %v5360, %v5359
    %v5370 = vpack.c.b16 %v5362, %v5361
    %5379 = vmatprep.subr.bf16.mxu0 0
    %5380 = vmatpush1.bf16.msra.mxu0 %v5363
    %5381 = vmatprep.subr.bf16.mxu0 0
    %5382 = vmatpush1.bf16.msra.mxu0 %v5364
    %5383 = vmatprep.subr.bf16.mxu0 0
    %5384 = vmatpush1.bf16.msra.mxu0 %v5365
    %5385 = vmatprep.subr.bf16.mxu0 0
    %5386 = vmatpush1.bf16.msra.mxu0 %v5366
    %5387 = vmatprep.subr.bf16.mxu0 0
    %5388 = vmatpush1.bf16.msra.mxu0 %v5367
    %5389 = vmatprep.subr.bf16.mxu0 0
    %5390 = vmatpush1.bf16.msra.mxu0 %v5368
    %5391 = vmatprep.subr.bf16.mxu0 0
    %5392 = vmatpush1.bf16.msra.mxu0 %v5369
    %5393 = vmatprep.subr.bf16.mxu0 0
    %5394 = vmatpush1.bf16.msra.mxu0 %v5370
    %5395 = vmatprep.subr.bf16.mxu0 0
    %5396 = vmatpush1.bf16.msra.mxu0 0
    %5397 = vmatprep.subr.bf16.mxu0 0
    %5398 = vmatpush1.bf16.msra.mxu0 0
    %5399 = vmatprep.subr.bf16.mxu0 0
    %5400 = vmatpush1.bf16.msra.mxu0 0
    %5401 = vmatprep.subr.bf16.mxu0 0
    %5402 = vmatpush1.bf16.msra.mxu0 0
    %5403 = vmatprep.subr.bf16.mxu0 0
    %5404 = vmatpush1.bf16.msra.mxu0 0
    %5405 = vmatprep.subr.bf16.mxu0 0
    %5406 = vmatpush1.bf16.msra.mxu0 0
    %5407 = vmatprep.subr.bf16.mxu0 0
    %5408 = vmatpush1.bf16.msra.mxu0 0
    %5409 = vmatprep.subr.bf16.mxu0 0
    %5410 = vmatpush1.bf16.msra.mxu0 0
    %5411 = vmatprep.mubr.bf16.mxu0 0
    %5412 = vmatmul.mubr.bf16.gmra.mrb[0].mxu0 %v5098
    %v5413 = vpop.f32.mrb[0].mxu0
    %v5414 = vadd.f32 %v5313, %v5413
    %v5415 = vpop.f32.mrb[0].mxu0
    %v5416 = vpop.f32.mrb[0].mxu0
    %v5417 = vadd.f32 %v5314, %v5416
    %v5418 = vpop.f32.mrb[0].mxu0
    %5419 = vdwg.mxu0
    %v5420 = vld [vmem:[#allocation3 + $0x58] sm:$0xff]
    %v5421 = vld [vmem:[#allocation3 + $0x78] sm:$0xff]
    %v5422 = vld [vmem:[#allocation8 + $0xc] sm:$0xf]
    %v5423 = vld [vmem:[#allocation8 + $0x1c] sm:$0xf]
    %v5424 = vld [vmem:[#allocation8 + $0x2c] sm:$0xf]
    %v5425 = vld [vmem:[#allocation8 + $0x3c] sm:$0xf]
    %v5426 = vld [vmem:[#allocation8 + $0x4c] sm:$0xf]
    %v5427 = vld [vmem:[#allocation8 + $0x5c] sm:$0xf]
    %v5428 = vld [vmem:[#allocation8 + $0x6c] sm:$0xf]
    %v5429 = vld [vmem:[#allocation8 + $0x7c] sm:$0xf]
    %v5430 = vld [vmem:[#allocation8 + $0x8c] sm:$0xf]
    %v5431 = vld [vmem:[#allocation8 + $0x9c] sm:$0xf]
    %v5432 = vld [vmem:[#allocation8 + $0xac] sm:$0xf]
    %v5433 = vld [vmem:[#allocation8 + $0xbc] sm:$0xf]
    %v5434 = vld [vmem:[#allocation8 + $0xcc] sm:$0xf]
    %v5435 = vld [vmem:[#allocation8 + $0xdc] sm:$0xf]
    %v5436 = vld [vmem:[#allocation8 + $0xec] sm:$0xf]
    %v5437 = vld [vmem:[#allocation8 + $0xfc] sm:$0xf]
    %v5454 = vunpack.c.l.b16 %v5422
    %v5455 = vunpack.c.l.b16 %v5423
    %v5456 = vunpack.c.l.b16 %v5424
    %v5457 = vunpack.c.l.b16 %v5425
    %v5458 = vunpack.c.l.b16 %v5426
    %v5459 = vunpack.c.l.b16 %v5427
    %v5460 = vunpack.c.l.b16 %v5428
    %v5461 = vunpack.c.l.b16 %v5429
    %v5462 = vunpack.c.l.b16 %v5430
    %v5463 = vunpack.c.l.b16 %v5431
    %v5464 = vunpack.c.l.b16 %v5432
    %v5465 = vunpack.c.l.b16 %v5433
    %v5466 = vunpack.c.l.b16 %v5434
    %v5467 = vunpack.c.l.b16 %v5435
    %v5468 = vunpack.c.l.b16 %v5436
    %v5469 = vunpack.c.l.b16 %v5437
    %v5470 = vpack.c.b16 %v5455, %v5454
    %v5471 = vpack.c.b16 %v5457, %v5456
    %v5472 = vpack.c.b16 %v5459, %v5458
    %v5473 = vpack.c.b16 %v5461, %v5460
    %v5474 = vpack.c.b16 %v5463, %v5462
    %v5475 = vpack.c.b16 %v5465, %v5464
    %v5476 = vpack.c.b16 %v5467, %v5466
    %v5477 = vpack.c.b16 %v5469, %v5468
    %5486 = vmatprep.subr.bf16.mxu0 0
    %5487 = vmatpush1.bf16.msra.mxu0 %v5470
    %5488 = vmatprep.subr.bf16.mxu0 0
    %5489 = vmatpush1.bf16.msra.mxu0 %v5471
    %5490 = vmatprep.subr.bf16.mxu0 0
    %5491 = vmatpush1.bf16.msra.mxu0 %v5472
    %5492 = vmatprep.subr.bf16.mxu0 0
    %5493 = vmatpush1.bf16.msra.mxu0 %v5473
    %5494 = vmatprep.subr.bf16.mxu0 0
    %5495 = vmatpush1.bf16.msra.mxu0 %v5474
    %5496 = vmatprep.subr.bf16.mxu0 0
    %5497 = vmatpush1.bf16.msra.mxu0 %v5475
    %5498 = vmatprep.subr.bf16.mxu0 0
    %5499 = vmatpush1.bf16.msra.mxu0 %v5476
    %5500 = vmatprep.subr.bf16.mxu0 0
    %5501 = vmatpush1.bf16.msra.mxu0 %v5477
    %5502 = vmatprep.subr.bf16.mxu0 0
    %5503 = vmatpush1.bf16.msra.mxu0 0
    %5504 = vmatprep.subr.bf16.mxu0 0
    %5505 = vmatpush1.bf16.msra.mxu0 0
    %5506 = vmatprep.subr.bf16.mxu0 0
    %5507 = vmatpush1.bf16.msra.mxu0 0
    %5508 = vmatprep.subr.bf16.mxu0 0
    %5509 = vmatpush1.bf16.msra.mxu0 0
    %5510 = vmatprep.subr.bf16.mxu0 0
    %5511 = vmatpush1.bf16.msra.mxu0 0
    %5512 = vmatprep.subr.bf16.mxu0 0
    %5513 = vmatpush1.bf16.msra.mxu0 0
    %5514 = vmatprep.subr.bf16.mxu0 0
    %5515 = vmatpush1.bf16.msra.mxu0 0
    %5516 = vmatprep.subr.bf16.mxu0 0
    %5517 = vmatpush1.bf16.msra.mxu0 0
    %5518 = vmatprep.mubr.bf16.mxu0 0
    %5519 = vmatmul.mubr.bf16.gmra.mrb[0].mxu0 %v5098
    %v5520 = vpop.f32.mrb[0].mxu0
    %v5521 = vadd.f32 %v5420, %v5520
    %v5522 = vpop.f32.mrb[0].mxu0
    %v5523 = vpop.f32.mrb[0].mxu0
    %v5524 = vadd.f32 %v5421, %v5523
    %v5525 = vpop.f32.mrb[0].mxu0
    %5526 = vdwg.mxu0
    %v5527 = vxor.u32 %v5200, 2147483648
    %v5528 = vxor.u32 %v5203, 2147483648
    %v5529 = vmul.f32 %v5527, 1.442695
    %v5530 = vpow.pop %v5529
    %v5531 = vmul.f32 %v5528, 1.442695
    %v5532 = vpow.pop %v5531
    %v5533 = vadd.f32 %v5530, 1.0
    %v5534 = vadd.f32 %v5532, 1.0
    %v5535 = vrcp.pop %v5533
    %v5536 = vmul.f32 1.0, %v5535
    %v5537 = vrcp.pop %v5534
    %v5538 = vmul.f32 1.0, %v5537
    %v5539 = vxor.u32 %v5307, 2147483648
    %v5540 = vxor.u32 %v5310, 2147483648
    %v5541 = vmul.f32 %v5539, 1.442695
    %v5542 = vpow.pop %v5541
    %v5543 = vmul.f32 %v5540, 1.442695
    %v5544 = vpow.pop %v5543
    %v5545 = vadd.f32 %v5542, 1.0
    %v5546 = vadd.f32 %v5544, 1.0
    %v5547 = vrcp.pop %v5545
    %v5548 = vmul.f32 1.0, %v5547
    %v5549 = vrcp.pop %v5546
    %v5550 = vmul.f32 1.0, %v5549
    %v5551 = vtanh.pop %v5414
    %v5552 = vtanh.pop %v5417
    %v5553 = vxor.u32 %v5521, 2147483648
    %v5554 = vxor.u32 %v5524, 2147483648
    %v5555 = vmul.f32 %v5553, 1.442695
    %v5556 = vpow.pop %v5555
    %v5557 = vmul.f32 %v5554, 1.442695
    %v5558 = vpow.pop %v5557
    %v5559 = vadd.f32 %v5556, 1.0
    %v5560 = vadd.f32 %v5558, 1.0
    %v5561 = vrcp.pop %v5559
    %v5562 = vmul.f32 1.0, %v5561
    %v5563 = vrcp.pop %v5560
    %v5564 = vmul.f32 1.0, %v5563
    %v5565 = vmul.f32 %v5548, %v5092
    %v5566 = vmul.f32 %v5550, %v5093
    %v5567 = vmul.f32 %v5536, %v5551
    %v5568 = vmul.f32 %v5538, %v5552
    %v5569 = vadd.f32 %v5565, %v5567
    %v5570 = vadd.f32 %v5566, %v5568
    %v5571 = vtanh.pop %v5569
    %v5572 = vtanh.pop %v5570
    %v5573 = vmul.f32 %v5562, %v5571
    %v5574 = vmul.f32 %v5564, %v5572
    %v5575 = vpack.c.bf16 %v5574, %v5573
    %v5576 = vld [vmem:[#allocation3 + $0x80] sm:$0xff]
    %v5577 = vld [vmem:[#allocation3 + $0xa0] sm:$0xff]
    %5578 = vmatprep.subr.bf16.mxu0 0
    %5579 = vmatpush1.bf16.msra.mxu0 %v5149
    %5580 = vmatprep.subr.bf16.mxu0 0
    %5581 = vmatpush1.bf16.msra.mxu0 %v5150
    %5582 = vmatprep.subr.bf16.mxu0 0
    %5583 = vmatpush1.bf16.msra.mxu0 %v5151
    %5584 = vmatprep.subr.bf16.mxu0 0
    %5585 = vmatpush1.bf16.msra.mxu0 %v5152
    %5586 = vmatprep.subr.bf16.mxu0 0
    %5587 = vmatpush1.bf16.msra.mxu0 %v5153
    %5588 = vmatprep.subr.bf16.mxu0 0
    %5589 = vmatpush1.bf16.msra.mxu0 %v5154
    %5590 = vmatprep.subr.bf16.mxu0 0
    %5591 = vmatpush1.bf16.msra.mxu0 %v5155
    %5592 = vmatprep.subr.bf16.mxu0 0
    %5593 = vmatpush1.bf16.msra.mxu0 %v5156
    %5594 = vmatprep.subr.bf16.mxu0 0
    %5595 = vmatpush1.bf16.msra.mxu0 0
    %5596 = vmatprep.subr.bf16.mxu0 0
    %5597 = vmatpush1.bf16.msra.mxu0 0
    %5598 = vmatprep.subr.bf16.mxu0 0
    %5599 = vmatpush1.bf16.msra.mxu0 0
    %5600 = vmatprep.subr.bf16.mxu0 0
    %5601 = vmatpush1.bf16.msra.mxu0 0
    %5602 = vmatprep.subr.bf16.mxu0 0
    %5603 = vmatpush1.bf16.msra.mxu0 0
    %5604 = vmatprep.subr.bf16.mxu0 0
    %5605 = vmatpush1.bf16.msra.mxu0 0
    %5606 = vmatprep.subr.bf16.mxu0 0
    %5607 = vmatpush1.bf16.msra.mxu0 0
    %5608 = vmatprep.subr.bf16.mxu0 0
    %5609 = vmatpush1.bf16.msra.mxu0 0
    %5610 = vmatprep.mubr.bf16.mxu0 0
    %5611 = vmatmul.mubr.bf16.gmra.mrb[0].mxu0 %v5575
    %v5612 = vpop.f32.mrb[0].mxu0
    %v5613 = vadd.f32 %v5576, %v5612
    %v5614 = vpop.f32.mrb[0].mxu0
    %v5615 = vpop.f32.mrb[0].mxu0
    %v5616 = vadd.f32 %v5577, %v5615
    %v5617 = vpop.f32.mrb[0].mxu0
    %5618 = vdwg.mxu0
    %v5619 = vld [vmem:[#allocation3 + $0x88] sm:$0xff]
    %v5620 = vld [vmem:[#allocation3 + $0xa8] sm:$0xff]
    %5621 = vmatprep.subr.bf16.mxu0 0
    %5622 = vmatpush1.bf16.msra.mxu0 %v5256
    %5623 = vmatprep.subr.bf16.mxu0 0
    %5624 = vmatpush1.bf16.msra.mxu0 %v5257
    %5625 = vmatprep.subr.bf16.mxu0 0
    %5626 = vmatpush1.bf16.msra.mxu0 %v5258
    %5627 = vmatprep.subr.bf16.mxu0 0
    %5628 = vmatpush1.bf16.msra.mxu0 %v5259
    %5629 = vmatprep.subr.bf16.mxu0 0
    %5630 = vmatpush1.bf16.msra.mxu0 %v5260
    %5631 = vmatprep.subr.bf16.mxu0 0
    %5632 = vmatpush1.bf16.msra.mxu0 %v5261
    %5633 = vmatprep.subr.bf16.mxu0 0
    %5634 = vmatpush1.bf16.msra.mxu0 %v5262
    %5635 = vmatprep.subr.bf16.mxu0 0
    %5636 = vmatpush1.bf16.msra.mxu0 %v5263
    %5637 = vmatprep.subr.bf16.mxu0 0
    %5638 = vmatpush1.bf16.msra.mxu0 0
    %5639 = vmatprep.subr.bf16.mxu0 0
    %5640 = vmatpush1.bf16.msra.mxu0 0
    %5641 = vmatprep.subr.bf16.mxu0 0
    %5642 = vmatpush1.bf16.msra.mxu0 0
    %5643 = vmatprep.subr.bf16.mxu0 0
    %5644 = vmatpush1.bf16.msra.mxu0 0
    %5645 = vmatprep.subr.bf16.mxu0 0
    %5646 = vmatpush1.bf16.msra.mxu0 0
    %5647 = vmatprep.subr.bf16.mxu0 0
    %5648 = vmatpush1.bf16.msra.mxu0 0
    %5649 = vmatprep.subr.bf16.mxu0 0
    %5650 = vmatpush1.bf16.msra.mxu0 0
    %5651 = vmatprep.subr.bf16.mxu0 0
    %5652 = vmatpush1.bf16.msra.mxu0 0
    %5653 = vmatprep.mubr.bf16.mxu0 0
    %5654 = vmatmul.mubr.bf16.gmra.mrb[0].mxu0 %v5575
    %v5655 = vpop.f32.mrb[0].mxu0
    %v5656 = vadd.f32 %v5619, %v5655
    %v5657 = vpop.f32.mrb[0].mxu0
    %v5658 = vpop.f32.mrb[0].mxu0
    %v5659 = vadd.f32 %v5620, %v5658
    %v5660 = vpop.f32.mrb[0].mxu0
    %5661 = vdwg.mxu0
    %v5662 = vld [vmem:[#allocation3 + $0x90] sm:$0xff]
    %v5663 = vld [vmem:[#allocation3 + $0xb0] sm:$0xff]
    %5664 = vmatprep.subr.bf16.mxu0 0
    %5665 = vmatpush1.bf16.msra.mxu0 %v5363
    %5666 = vmatprep.subr.bf16.mxu0 0
    %5667 = vmatpush1.bf16.msra.mxu0 %v5364
    %5668 = vmatprep.subr.bf16.mxu0 0
    %5669 = vmatpush1.bf16.msra.mxu0 %v5365
    %5670 = vmatprep.subr.bf16.mxu0 0
    %5671 = vmatpush1.bf16.msra.mxu0 %v5366
    %5672 = vmatprep.subr.bf16.mxu0 0
    %5673 = vmatpush1.bf16.msra.mxu0 %v5367
    %5674 = vmatprep.subr.bf16.mxu0 0
    %5675 = vmatpush1.bf16.msra.mxu0 %v5368
    %5676 = vmatprep.subr.bf16.mxu0 0
    %5677 = vmatpush1.bf16.msra.mxu0 %v5369
    %5678 = vmatprep.subr.bf16.mxu0 0
    %5679 = vmatpush1.bf16.msra.mxu0 %v5370
    %5680 = vmatprep.subr.bf16.mxu0 0
    %5681 = vmatpush1.bf16.msra.mxu0 0
    %5682 = vmatprep.subr.bf16.mxu0 0
    %5683 = vmatpush1.bf16.msra.mxu0 0
    %5684 = vmatprep.subr.bf16.mxu0 0
    %5685 = vmatpush1.bf16.msra.mxu0 0
    %5686 = vmatprep.subr.bf16.mxu0 0
    %5687 = vmatpush1.bf16.msra.mxu0 0
    %5688 = vmatprep.subr.bf16.mxu0 0
    %5689 = vmatpush1.bf16.msra.mxu0 0
    %5690 = vmatprep.subr.bf16.mxu0 0
    %5691 = vmatpush1.bf16.msra.mxu0 0
    %5692 = vmatprep.subr.bf16.mxu0 0
    %5693 = vmatpush1.bf16.msra.mxu0 0
    %5694 = vmatprep.subr.bf16.mxu0 0
    %5695 = vmatpush1.bf16.msra.mxu0 0
    %5696 = vmatprep.mubr.bf16.mxu0 0
    %5697 = vmatmul.mubr.bf16.gmra.mrb[0].mxu0 %v5575
    %v5698 = vpop.f32.mrb[0].mxu0
    %v5699 = vadd.f32 %v5662, %v5698
    %v5700 = vpop.f32.mrb[0].mxu0
    %v5701 = vpop.f32.mrb[0].mxu0
    %v5702 = vadd.f32 %v5663, %v5701
    %v5703 = vpop.f32.mrb[0].mxu0
    %5704 = vdwg.mxu0
    %v5705 = vld [vmem:[#allocation3 + $0x98] sm:$0xff]
    %v5706 = vld [vmem:[#allocation3 + $0xb8] sm:$0xff]
    %5707 = vmatprep.subr.bf16.mxu0 0
    %5708 = vmatpush1.bf16.msra.mxu0 %v5470
    %5709 = vmatprep.subr.bf16.mxu0 0
    %5710 = vmatpush1.bf16.msra.mxu0 %v5471
    %5711 = vmatprep.subr.bf16.mxu0 0
    %5712 = vmatpush1.bf16.msra.mxu0 %v5472
    %5713 = vmatprep.subr.bf16.mxu0 0
    %5714 = vmatpush1.bf16.msra.mxu0 %v5473
    %5715 = vmatprep.subr.bf16.mxu0 0
    %5716 = vmatpush1.bf16.msra.mxu0 %v5474
    %5717 = vmatprep.subr.bf16.mxu0 0
    %5718 = vmatpush1.bf16.msra.mxu0 %v5475
    %5719 = vmatprep.subr.bf16.mxu0 0
    %5720 = vmatpush1.bf16.msra.mxu0 %v5476
    %5721 = vmatprep.subr.bf16.mxu0 0
    %5722 = vmatpush1.bf16.msra.mxu0 %v5477
    %5723 = vmatprep.subr.bf16.mxu0 0
    %5724 = vmatpush1.bf16.msra.mxu0 0
    %5725 = vmatprep.subr.bf16.mxu0 0
    %5726 = vmatpush1.bf16.msra.mxu0 0
    %5727 = vmatprep.subr.bf16.mxu0 0
    %5728 = vmatpush1.bf16.msra.mxu0 0
    %5729 = vmatprep.subr.bf16.mxu0 0
    %5730 = vmatpush1.bf16.msra.mxu0 0
    %5731 = vmatprep.subr.bf16.mxu0 0
    %5732 = vmatpush1.bf16.msra.mxu0 0
    %5733 = vmatprep.subr.bf16.mxu0 0
    %5734 = vmatpush1.bf16.msra.mxu0 0
    %5735 = vmatprep.subr.bf16.mxu0 0
    %5736 = vmatpush1.bf16.msra.mxu0 0
    %5737 = vmatprep.subr.bf16.mxu0 0
    %5738 = vmatpush1.bf16.msra.mxu0 0
    %5739 = vmatprep.mubr.bf16.mxu0 0
    %5740 = vmatmul.mubr.bf16.gmra.mrb[0].mxu0 %v5575
    %v5741 = vpop.f32.mrb[0].mxu0
    %v5742 = vadd.f32 %v5705, %v5741
    %v5743 = vpop.f32.mrb[0].mxu0
    %v5744 = vpop.f32.mrb[0].mxu0
    %v5745 = vadd.f32 %v5706, %v5744
    %v5746 = vpop.f32.mrb[0].mxu0
    %5747 = vdwg.mxu0
    %v5748 = vxor.u32 %v5613, 2147483648
    %v5749 = vxor.u32 %v5616, 2147483648
    %v5750 = vmul.f32 %v5748, 1.442695
    %v5751 = vpow.pop %v5750
    %v5752 = vmul.f32 %v5749, 1.442695
    %v5753 = vpow.pop %v5752
    %v5754 = vadd.f32 %v5751, 1.0
    %v5755 = vadd.f32 %v5753, 1.0
    %v5756 = vrcp.pop %v5754
    %v5757 = vmul.f32 1.0, %v5756
    %v5758 = vrcp.pop %v5755
    %v5759 = vmul.f32 1.0, %v5758
    %v5760 = vxor.u32 %v5656, 2147483648
    %v5761 = vxor.u32 %v5659, 2147483648
    %v5762 = vmul.f32 %v5760, 1.442695
    %v5763 = vpow.pop %v5762
    %v5764 = vmul.f32 %v5761, 1.442695
    %v5765 = vpow.pop %v5764
    %v5766 = vadd.f32 %v5763, 1.0
    %v5767 = vadd.f32 %v5765, 1.0
    %v5768 = vrcp.pop %v5766
    %v5769 = vmul.f32 1.0, %v5768
    %v5770 = vrcp.pop %v5767
    %v5771 = vmul.f32 1.0, %v5770
    %v5772 = vtanh.pop %v5699
    %v5773 = vtanh.pop %v5702
    %v5774 = vxor.u32 %v5742, 2147483648
    %v5775 = vxor.u32 %v5745, 2147483648
    %v5776 = vmul.f32 %v5774, 1.442695
    %v5777 = vpow.pop %v5776
    %v5778 = vmul.f32 %v5775, 1.442695
    %v5779 = vpow.pop %v5778
    %v5780 = vadd.f32 %v5777, 1.0
    %v5781 = vadd.f32 %v5779, 1.0
    %v5782 = vrcp.pop %v5780
    %v5783 = vmul.f32 1.0, %v5782
    %v5784 = vrcp.pop %v5781
    %v5785 = vmul.f32 1.0, %v5784
    %v5786 = vmul.f32 %v5769, %v5569
    %v5787 = vmul.f32 %v5771, %v5570
    %v5788 = vmul.f32 %v5757, %v5772
    %v5789 = vmul.f32 %v5759, %v5773
    %v5790 = vadd.f32 %v5786, %v5788
    %v5791 = vadd.f32 %v5787, %v5789
    %v5792 = vtanh.pop %v5790
    %v5793 = vtanh.pop %v5791
    %v5794 = vmul.f32 %v5783, %v5792
    %v5795 = vmul.f32 %v5785, %v5793
    %v5796 = vpack.c.bf16 %v5795, %v5794
    %v5797 = vld [vmem:[#allocation3 + $0xc0] sm:$0xff]
    %v5798 = vld [vmem:[#allocation3 + $0xe0] sm:$0xff]
    %5799 = vmatprep.subr.bf16.mxu0 0
    %5800 = vmatpush1.bf16.msra.mxu0 %v5149
    %5801 = vmatprep.subr.bf16.mxu0 0
    %5802 = vmatpush1.bf16.msra.mxu0 %v5150
    %5803 = vmatprep.subr.bf16.mxu0 0
    %5804 = vmatpush1.bf16.msra.mxu0 %v5151
    %5805 = vmatprep.subr.bf16.mxu0 0
    %5806 = vmatpush1.bf16.msra.mxu0 %v5152
    %5807 = vmatprep.subr.bf16.mxu0 0
    %5808 = vmatpush1.bf16.msra.mxu0 %v5153
    %5809 = vmatprep.subr.bf16.mxu0 0
    %5810 = vmatpush1.bf16.msra.mxu0 %v5154
    %5811 = vmatprep.subr.bf16.mxu0 0
    %5812 = vmatpush1.bf16.msra.mxu0 %v5155
    %5813 = vmatprep.subr.bf16.mxu0 0
    %5814 = vmatpush1.bf16.msra.mxu0 %v5156
    %5815 = vmatprep.subr.bf16.mxu0 0
    %5816 = vmatpush1.bf16.msra.mxu0 0
    %5817 = vmatprep.subr.bf16.mxu0 0
    %5818 = vmatpush1.bf16.msra.mxu0 0
    %5819 = vmatprep.subr.bf16.mxu0 0
    %5820 = vmatpush1.bf16.msra.mxu0 0
    %5821 = vmatprep.subr.bf16.mxu0 0
    %5822 = vmatpush1.bf16.msra.mxu0 0
    %5823 = vmatprep.subr.bf16.mxu0 0
    %5824 = vmatpush1.bf16.msra.mxu0 0
    %5825 = vmatprep.subr.bf16.mxu0 0
    %5826 = vmatpush1.bf16.msra.mxu0 0
    %5827 = vmatprep.subr.bf16.mxu0 0
    %5828 = vmatpush1.bf16.msra.mxu0 0
    %5829 = vmatprep.subr.bf16.mxu0 0
    %5830 = vmatpush1.bf16.msra.mxu0 0
    %5831 = vmatprep.mubr.bf16.mxu0 0
    %5832 = vmatmul.mubr.bf16.gmra.mrb[0].mxu0 %v5796
    %v5833 = vpop.f32.mrb[0].mxu0
    %v5834 = vadd.f32 %v5797, %v5833
    %v5835 = vpop.f32.mrb[0].mxu0
    %v5836 = vpop.f32.mrb[0].mxu0
    %v5837 = vadd.f32 %v5798, %v5836
    %v5838 = vpop.f32.mrb[0].mxu0
    %5839 = vdwg.mxu0
    %v5840 = vld [vmem:[#allocation3 + $0xc8] sm:$0xff]
    %v5841 = vld [vmem:[#allocation3 + $0xe8] sm:$0xff]
    %5842 = vmatprep.subr.bf16.mxu0 0
    %5843 = vmatpush1.bf16.msra.mxu0 %v5256
    %5844 = vmatprep.subr.bf16.mxu0 0
    %5845 = vmatpush1.bf16.msra.mxu0 %v5257
    %5846 = vmatprep.subr.bf16.mxu0 0
    %5847 = vmatpush1.bf16.msra.mxu0 %v5258
    %5848 = vmatprep.subr.bf16.mxu0 0
    %5849 = vmatpush1.bf16.msra.mxu0 %v5259
    %5850 = vmatprep.subr.bf16.mxu0 0
    %5851 = vmatpush1.bf16.msra.mxu0 %v5260
    %5852 = vmatprep.subr.bf16.mxu0 0
    %5853 = vmatpush1.bf16.msra.mxu0 %v5261
    %5854 = vmatprep.subr.bf16.mxu0 0
    %5855 = vmatpush1.bf16.msra.mxu0 %v5262
    %5856 = vmatprep.subr.bf16.mxu0 0
    %5857 = vmatpush1.bf16.msra.mxu0 %v5263
    %5858 = vmatprep.subr.bf16.mxu0 0
    %5859 = vmatpush1.bf16.msra.mxu0 0
    %5860 = vmatprep.subr.bf16.mxu0 0
    %5861 = vmatpush1.bf16.msra.mxu0 0
    %5862 = vmatprep.subr.bf16.mxu0 0
    %5863 = vmatpush1.bf16.msra.mxu0 0
    %5864 = vmatprep.subr.bf16.mxu0 0
    %5865 = vmatpush1.bf16.msra.mxu0 0
    %5866 = vmatprep.subr.bf16.mxu0 0
    %5867 = vmatpush1.bf16.msra.mxu0 0
    %5868 = vmatprep.subr.bf16.mxu0 0
    %5869 = vmatpush1.bf16.msra.mxu0 0
    %5870 = vmatprep.subr.bf16.mxu0 0
    %5871 = vmatpush1.bf16.msra.mxu0 0
    %5872 = vmatprep.subr.bf16.mxu0 0
    %5873 = vmatpush1.bf16.msra.mxu0 0
    %5874 = vmatprep.mubr.bf16.mxu0 0
    %5875 = vmatmul.mubr.bf16.gmra.mrb[0].mxu0 %v5796
    %v5876 = vpop.f32.mrb[0].mxu0
    %v5877 = vadd.f32 %v5840, %v5876
    %v5878 = vpop.f32.mrb[0].mxu0
    %v5879 = vpop.f32.mrb[0].mxu0
    %v5880 = vadd.f32 %v5841, %v5879
    %v5881 = vpop.f32.mrb[0].mxu0
    %5882 = vdwg.mxu0
    %v5883 = vld [vmem:[#allocation3 + $0xd0] sm:$0xff]
    %v5884 = vld [vmem:[#allocation3 + $0xf0] sm:$0xff]
    %5885 = vmatprep.subr.bf16.mxu0 0
    %5886 = vmatpush1.bf16.msra.mxu0 %v5363
    %5887 = vmatprep.subr.bf16.mxu0 0
    %5888 = vmatpush1.bf16.msra.mxu0 %v5364
    %5889 = vmatprep.subr.bf16.mxu0 0
    %5890 = vmatpush1.bf16.msra.mxu0 %v5365
    %5891 = vmatprep.subr.bf16.mxu0 0
    %5892 = vmatpush1.bf16.msra.mxu0 %v5366
    %5893 = vmatprep.subr.bf16.mxu0 0
    %5894 = vmatpush1.bf16.msra.mxu0 %v5367
    %5895 = vmatprep.subr.bf16.mxu0 0
    %5896 = vmatpush1.bf16.msra.mxu0 %v5368
    %5897 = vmatprep.subr.bf16.mxu0 0
    %5898 = vmatpush1.bf16.msra.mxu0 %v5369
    %5899 = vmatprep.subr.bf16.mxu0 0
    %5900 = vmatpush1.bf16.msra.mxu0 %v5370
    %5901 = vmatprep.subr.bf16.mxu0 0
    %5902 = vmatpush1.bf16.msra.mxu0 0
    %5903 = vmatprep.subr.bf16.mxu0 0
    %5904 = vmatpush1.bf16.msra.mxu0 0
    %5905 = vmatprep.subr.bf16.mxu0 0
    %5906 = vmatpush1.bf16.msra.mxu0 0
    %5907 = vmatprep.subr.bf16.mxu0 0
    %5908 = vmatpush1.bf16.msra.mxu0 0
    %5909 = vmatprep.subr.bf16.mxu0 0
    %5910 = vmatpush1.bf16.msra.mxu0 0
    %5911 = vmatprep.subr.bf16.mxu0 0
    %5912 = vmatpush1.bf16.msra.mxu0 0
    %5913 = vmatprep.subr.bf16.mxu0 0
    %5914 = vmatpush1.bf16.msra.mxu0 0
    %5915 = vmatprep.subr.bf16.mxu0 0
    %5916 = vmatpush1.bf16.msra.mxu0 0
    %5917 = vmatprep.mubr.bf16.mxu0 0
    %5918 = vmatmul.mubr.bf16.gmra.mrb[0].mxu0 %v5796
    %v5919 = vpop.f32.mrb[0].mxu0
    %v5920 = vadd.f32 %v5883, %v5919
    %v5921 = vpop.f32.mrb[0].mxu0
    %v5922 = vpop.f32.mrb[0].mxu0
    %v5923 = vadd.f32 %v5884, %v5922
    %v5924 = vpop.f32.mrb[0].mxu0
    %5925 = vdwg.mxu0
    %v5926 = vld [vmem:[#allocation3 + $0xd8] sm:$0xff]
    %v5927 = vld [vmem:[#allocation3 + $0xf8] sm:$0xff]
    %5928 = vmatprep.subr.bf16.mxu0 0
    %5929 = vmatpush1.bf16.msra.mxu0 %v5470
    %5930 = vmatprep.subr.bf16.mxu0 0
    %5931 = vmatpush1.bf16.msra.mxu0 %v5471
    %5932 = vmatprep.subr.bf16.mxu0 0
    %5933 = vmatpush1.bf16.msra.mxu0 %v5472
    %5934 = vmatprep.subr.bf16.mxu0 0
    %5935 = vmatpush1.bf16.msra.mxu0 %v5473
    %5936 = vmatprep.subr.bf16.mxu0 0
    %5937 = vmatpush1.bf16.msra.mxu0 %v5474
    %5938 = vmatprep.subr.bf16.mxu0 0
    %5939 = vmatpush1.bf16.msra.mxu0 %v5475
    %5940 = vmatprep.subr.bf16.mxu0 0
    %5941 = vmatpush1.bf16.msra.mxu0 %v5476
    %5942 = vmatprep.subr.bf16.mxu0 0
    %5943 = vmatpush1.bf16.msra.mxu0 %v5477
    %5944 = vmatprep.subr.bf16.mxu0 0
    %5945 = vmatpush1.bf16.msra.mxu0 0
    %5946 = vmatprep.subr.bf16.mxu0 0
    %5947 = vmatpush1.bf16.msra.mxu0 0
    %5948 = vmatprep.subr.bf16.mxu0 0
    %5949 = vmatpush1.bf16.msra.mxu0 0
    %5950 = vmatprep.subr.bf16.mxu0 0
    %5951 = vmatpush1.bf16.msra.mxu0 0
    %5952 = vmatprep.subr.bf16.mxu0 0
    %5953 = vmatpush1.bf16.msra.mxu0 0
    %5954 = vmatprep.subr.bf16.mxu0 0
    %5955 = vmatpush1.bf16.msra.mxu0 0
    %5956 = vmatprep.subr.bf16.mxu0 0
    %5957 = vmatpush1.bf16.msra.mxu0 0
    %5958 = vmatprep.subr.bf16.mxu0 0
    %5959 = vmatpush1.bf16.msra.mxu0 0
    %5960 = vmatprep.mubr.bf16.mxu0 0
    %5961 = vmatmul.mubr.bf16.gmra.mrb[0].mxu0 %v5796
    %v5962 = vpop.f32.mrb[0].mxu0
    %v5963 = vadd.f32 %v5926, %v5962
    %v5964 = vpop.f32.mrb[0].mxu0
    %v5965 = vpop.f32.mrb[0].mxu0
    %v5966 = vadd.f32 %v5927, %v5965
    %v5967 = vpop.f32.mrb[0].mxu0
    %5968 = vdwg.mxu0
    %v5969 = vxor.u32 %v5834, 2147483648
    %v5970 = vxor.u32 %v5837, 2147483648
    %v5971 = vmul.f32 %v5969, 1.442695
    %v5972 = vpow.pop %v5971
    %v5973 = vmul.f32 %v5970, 1.442695
    %v5974 = vpow.pop %v5973
    %v5975 = vadd.f32 %v5972, 1.0
    %v5976 = vadd.f32 %v5974, 1.0
    %v5977 = vrcp.pop %v5975
    %v5978 = vmul.f32 1.0, %v5977
    %v5979 = vrcp.pop %v5976
    %v5980 = vmul.f32 1.0, %v5979
    %v5981 = vxor.u32 %v5877, 2147483648
    %v5982 = vxor.u32 %v5880, 2147483648
    %v5983 = vmul.f32 %v5981, 1.442695
    %v5984 = vpow.pop %v5983
    %v5985 = vmul.f32 %v5982, 1.442695
    %v5986 = vpow.pop %v5985
    %v5987 = vadd.f32 %v5984, 1.0
    %v5988 = vadd.f32 %v5986, 1.0
    %v5989 = vrcp.pop %v5987
    %v5990 = vmul.f32 1.0, %v5989
    %v5991 = vrcp.pop %v5988
    %v5992 = vmul.f32 1.0, %v5991
    %v5993 = vtanh.pop %v5920
    %v5994 = vtanh.pop %v5923
    %v5995 = vxor.u32 %v5963, 2147483648
    %v5996 = vxor.u32 %v5966, 2147483648
    %v5997 = vmul.f32 %v5995, 1.442695
    %v5998 = vpow.pop %v5997
    %v5999 = vmul.f32 %v5996, 1.442695
    %v6000 = vpow.pop %v5999
    %v6001 = vadd.f32 %v5998, 1.0
    %v6002 = vadd.f32 %v6000, 1.0
    %v6003 = vrcp.pop %v6001
    %v6004 = vmul.f32 1.0, %v6003
    %v6005 = vrcp.pop %v6002
    %v6006 = vmul.f32 1.0, %v6005
    %v6007 = vmul.f32 %v5990, %v5790
    %v6008 = vmul.f32 %v5992, %v5791
    %v6009 = vmul.f32 %v5978, %v5993
    %v6010 = vmul.f32 %v5980, %v5994
    %v6011 = vadd.f32 %v6007, %v6009
    %v6012 = vadd.f32 %v6008, %v6010
    %v6013 = vtanh.pop %v6011
    %v6014 = vtanh.pop %v6012
    %v6015 = vmul.f32 %v6004, %v6013
    %v6016 = vmul.f32 %v6006, %v6014
    %v6017 = vpack.c.bf16 %v6016, %v6015
    %v6018 = vld [vmem:[#allocation3 + $0x100] sm:$0xff]
    %v6019 = vld [vmem:[#allocation3 + $0x120] sm:$0xff]
    %6020 = vmatprep.subr.bf16.mxu0 0
    %6021 = vmatpush1.bf16.msra.mxu0 %v5149
    %6022 = vmatprep.subr.bf16.mxu0 0
    %6023 = vmatpush1.bf16.msra.mxu0 %v5150
    %6024 = vmatprep.subr.bf16.mxu0 0
    %6025 = vmatpush1.bf16.msra.mxu0 %v5151
    %6026 = vmatprep.subr.bf16.mxu0 0
    %6027 = vmatpush1.bf16.msra.mxu0 %v5152
    %6028 = vmatprep.subr.bf16.mxu0 0
    %6029 = vmatpush1.bf16.msra.mxu0 %v5153
    %6030 = vmatprep.subr.bf16.mxu0 0
    %6031 = vmatpush1.bf16.msra.mxu0 %v5154
    %6032 = vmatprep.subr.bf16.mxu0 0
    %6033 = vmatpush1.bf16.msra.mxu0 %v5155
    %6034 = vmatprep.subr.bf16.mxu0 0
    %6035 = vmatpush1.bf16.msra.mxu0 %v5156
    %6036 = vmatprep.subr.bf16.mxu0 0
    %6037 = vmatpush1.bf16.msra.mxu0 0
    %6038 = vmatprep.subr.bf16.mxu0 0
    %6039 = vmatpush1.bf16.msra.mxu0 0
    %6040 = vmatprep.subr.bf16.mxu0 0
    %6041 = vmatpush1.bf16.msra.mxu0 0
    %6042 = vmatprep.subr.bf16.mxu0 0
    %6043 = vmatpush1.bf16.msra.mxu0 0
    %6044 = vmatprep.subr.bf16.mxu0 0
    %6045 = vmatpush1.bf16.msra.mxu0 0
    %6046 = vmatprep.subr.bf16.mxu0 0
    %6047 = vmatpush1.bf16.msra.mxu0 0
    %6048 = vmatprep.subr.bf16.mxu0 0
    %6049 = vmatpush1.bf16.msra.mxu0 0
    %6050 = vmatprep.subr.bf16.mxu0 0
    %6051 = vmatpush1.bf16.msra.mxu0 0
    %6052 = vmatprep.mubr.bf16.mxu0 0
    %6053 = vmatmul.mubr.bf16.gmra.mrb[0].mxu0 %v6017
    %v6054 = vpop.f32.mrb[0].mxu0
    %v6055 = vadd.f32 %v6018, %v6054
    %v6056 = vpop.f32.mrb[0].mxu0
    %v6057 = vpop.f32.mrb[0].mxu0
    %v6058 = vadd.f32 %v6019, %v6057
    %v6059 = vpop.f32.mrb[0].mxu0
    %6060 = vdwg.mxu0
    %v6061 = vld [vmem:[#allocation3 + $0x108] sm:$0xff]
    %v6062 = vld [vmem:[#allocation3 + $0x128] sm:$0xff]
    %6063 = vmatprep.subr.bf16.mxu0 0
    %6064 = vmatpush1.bf16.msra.mxu0 %v5256
    %6065 = vmatprep.subr.bf16.mxu0 0
    %6066 = vmatpush1.bf16.msra.mxu0 %v5257
    %6067 = vmatprep.subr.bf16.mxu0 0
    %6068 = vmatpush1.bf16.msra.mxu0 %v5258
    %6069 = vmatprep.subr.bf16.mxu0 0
    %6070 = vmatpush1.bf16.msra.mxu0 %v5259
    %6071 = vmatprep.subr.bf16.mxu0 0
    %6072 = vmatpush1.bf16.msra.mxu0 %v5260
    %6073 = vmatprep.subr.bf16.mxu0 0
    %6074 = vmatpush1.bf16.msra.mxu0 %v5261
    %6075 = vmatprep.subr.bf16.mxu0 0
    %6076 = vmatpush1.bf16.msra.mxu0 %v5262
    %6077 = vmatprep.subr.bf16.mxu0 0
    %6078 = vmatpush1.bf16.msra.mxu0 %v5263
    %6079 = vmatprep.subr.bf16.mxu0 0
    %6080 = vmatpush1.bf16.msra.mxu0 0
    %6081 = vmatprep.subr.bf16.mxu0 0
    %6082 = vmatpush1.bf16.msra.mxu0 0
    %6083 = vmatprep.subr.bf16.mxu0 0
    %6084 = vmatpush1.bf16.msra.mxu0 0
    %6085 = vmatprep.subr.bf16.mxu0 0
    %6086 = vmatpush1.bf16.msra.mxu0 0
    %6087 = vmatprep.subr.bf16.mxu0 0
    %6088 = vmatpush1.bf16.msra.mxu0 0
    %6089 = vmatprep.subr.bf16.mxu0 0
    %6090 = vmatpush1.bf16.msra.mxu0 0
    %6091 = vmatprep.subr.bf16.mxu0 0
    %6092 = vmatpush1.bf16.msra.mxu0 0
    %6093 = vmatprep.subr.bf16.mxu0 0
    %6094 = vmatpush1.bf16.msra.mxu0 0
    %6095 = vmatprep.mubr.bf16.mxu0 0
    %6096 = vmatmul.mubr.bf16.gmra.mrb[0].mxu0 %v6017
    %v6097 = vpop.f32.mrb[0].mxu0
    %v6098 = vadd.f32 %v6061, %v6097
    %v6099 = vpop.f32.mrb[0].mxu0
    %v6100 = vpop.f32.mrb[0].mxu0
    %v6101 = vadd.f32 %v6062, %v6100
    %v6102 = vpop.f32.mrb[0].mxu0
    %6103 = vdwg.mxu0
    %v6104 = vld [vmem:[#allocation3 + $0x110] sm:$0xff]
    %v6105 = vld [vmem:[#allocation3 + $0x130] sm:$0xff]
    %6106 = vmatprep.subr.bf16.mxu0 0
    %6107 = vmatpush1.bf16.msra.mxu0 %v5363
    %6108 = vmatprep.subr.bf16.mxu0 0
    %6109 = vmatpush1.bf16.msra.mxu0 %v5364
    %6110 = vmatprep.subr.bf16.mxu0 0
    %6111 = vmatpush1.bf16.msra.mxu0 %v5365
    %6112 = vmatprep.subr.bf16.mxu0 0
    %6113 = vmatpush1.bf16.msra.mxu0 %v5366
    %6114 = vmatprep.subr.bf16.mxu0 0
    %6115 = vmatpush1.bf16.msra.mxu0 %v5367
    %6116 = vmatprep.subr.bf16.mxu0 0
    %6117 = vmatpush1.bf16.msra.mxu0 %v5368
    %6118 = vmatprep.subr.bf16.mxu0 0
    %6119 = vmatpush1.bf16.msra.mxu0 %v5369
    %6120 = vmatprep.subr.bf16.mxu0 0
    %6121 = vmatpush1.bf16.msra.mxu0 %v5370
    %6122 = vmatprep.subr.bf16.mxu0 0
    %6123 = vmatpush1.bf16.msra.mxu0 0
    %6124 = vmatprep.subr.bf16.mxu0 0
    %6125 = vmatpush1.bf16.msra.mxu0 0
    %6126 = vmatprep.subr.bf16.mxu0 0
    %6127 = vmatpush1.bf16.msra.mxu0 0
    %6128 = vmatprep.subr.bf16.mxu0 0
    %6129 = vmatpush1.bf16.msra.mxu0 0
    %6130 = vmatprep.subr.bf16.mxu0 0
    %6131 = vmatpush1.bf16.msra.mxu0 0
    %6132 = vmatprep.subr.bf16.mxu0 0
    %6133 = vmatpush1.bf16.msra.mxu0 0
    %6134 = vmatprep.subr.bf16.mxu0 0
    %6135 = vmatpush1.bf16.msra.mxu0 0
    %6136 = vmatprep.subr.bf16.mxu0 0
    %6137 = vmatpush1.bf16.msra.mxu0 0
    %6138 = vmatprep.mubr.bf16.mxu0 0
    %6139 = vmatmul.mubr.bf16.gmra.mrb[0].mxu0 %v6017
    %v6140 = vpop.f32.mrb[0].mxu0
    %v6141 = vadd.f32 %v6104, %v6140
    %v6142 = vpop.f32.mrb[0].mxu0
    %v6143 = vpop.f32.mrb[0].mxu0
    %v6144 = vadd.f32 %v6105, %v6143
    %v6145 = vpop.f32.mrb[0].mxu0
    %6146 = vdwg.mxu0
    %v6147 = vld [vmem:[#allocation3 + $0x118] sm:$0xff]
    %v6148 = vld [vmem:[#allocation3 + $0x138] sm:$0xff]
    %6149 = vmatprep.subr.bf16.mxu0 0
    %6150 = vmatpush1.bf16.msra.mxu0 %v5470
    %6151 = vmatprep.subr.bf16.mxu0 0
    %6152 = vmatpush1.bf16.msra.mxu0 %v5471
    %6153 = vmatprep.subr.bf16.mxu0 0
    %6154 = vmatpush1.bf16.msra.mxu0 %v5472
    %6155 = vmatprep.subr.bf16.mxu0 0
    %6156 = vmatpush1.bf16.msra.mxu0 %v5473
    %6157 = vmatprep.subr.bf16.mxu0 0
    %6158 = vmatpush1.bf16.msra.mxu0 %v5474
    %6159 = vmatprep.subr.bf16.mxu0 0
    %6160 = vmatpush1.bf16.msra.mxu0 %v5475
    %6161 = vmatprep.subr.bf16.mxu0 0
    %6162 = vmatpush1.bf16.msra.mxu0 %v5476
    %6163 = vmatprep.subr.bf16.mxu0 0
    %6164 = vmatpush1.bf16.msra.mxu0 %v5477
    %6165 = vmatprep.subr.bf16.mxu0 0
    %6166 = vmatpush1.bf16.msra.mxu0 0
    %6167 = vmatprep.subr.bf16.mxu0 0
    %6168 = vmatpush1.bf16.msra.mxu0 0
    %6169 = vmatprep.subr.bf16.mxu0 0
    %6170 = vmatpush1.bf16.msra.mxu0 0
    %6171 = vmatprep.subr.bf16.mxu0 0
    %6172 = vmatpush1.bf16.msra.mxu0 0
    %6173 = vmatprep.subr.bf16.mxu0 0
    %6174 = vmatpush1.bf16.msra.mxu0 0
    %6175 = vmatprep.subr.bf16.mxu0 0
    %6176 = vmatpush1.bf16.msra.mxu0 0
    %6177 = vmatprep.subr.bf16.mxu0 0
    %6178 = vmatpush1.bf16.msra.mxu0 0
    %6179 = vmatprep.subr.bf16.mxu0 0
    %6180 = vmatpush1.bf16.msra.mxu0 0
    %6181 = vmatprep.mubr.bf16.mxu0 0
    %6182 = vmatmul.mubr.bf16.gmra.mrb[0].mxu0 %v6017
    %v6183 = vpop.f32.mrb[0].mxu0
    %v6184 = vadd.f32 %v6147, %v6183
    %v6185 = vpop.f32.mrb[0].mxu0
    %v6186 = vpop.f32.mrb[0].mxu0
    %v6187 = vadd.f32 %v6148, %v6186
    %v6188 = vpop.f32.mrb[0].mxu0
    %6189 = vdwg.mxu0
    %v6190 = vxor.u32 %v6055, 2147483648
    %v6191 = vxor.u32 %v6058, 2147483648
    %v6192 = vmul.f32 %v6190, 1.442695
    %v6193 = vpow.pop %v6192
    %v6194 = vmul.f32 %v6191, 1.442695
    %v6195 = vpow.pop %v6194
    %v6196 = vadd.f32 %v6193, 1.0
    %v6197 = vadd.f32 %v6195, 1.0
    %v6198 = vrcp.pop %v6196
    %v6199 = vmul.f32 1.0, %v6198
    %v6200 = vrcp.pop %v6197
    %v6201 = vmul.f32 1.0, %v6200
    %v6202 = vxor.u32 %v6098, 2147483648
    %v6203 = vxor.u32 %v6101, 2147483648
    %v6204 = vmul.f32 %v6202, 1.442695
    %v6205 = vpow.pop %v6204
    %v6206 = vmul.f32 %v6203, 1.442695
    %v6207 = vpow.pop %v6206
    %v6208 = vadd.f32 %v6205, 1.0
    %v6209 = vadd.f32 %v6207, 1.0
    %v6210 = vrcp.pop %v6208
    %v6211 = vmul.f32 1.0, %v6210
    %v6212 = vrcp.pop %v6209
    %v6213 = vmul.f32 1.0, %v6212
    %v6214 = vtanh.pop %v6141
    %v6215 = vtanh.pop %v6144
    %v6216 = vxor.u32 %v6184, 2147483648
    %v6217 = vxor.u32 %v6187, 2147483648
    %v6218 = vmul.f32 %v6216, 1.442695
    %v6219 = vpow.pop %v6218
    %v6220 = vmul.f32 %v6217, 1.442695
    %v6221 = vpow.pop %v6220
    %v6222 = vadd.f32 %v6219, 1.0
    %v6223 = vadd.f32 %v6221, 1.0
    %v6224 = vrcp.pop %v6222
    %v6225 = vmul.f32 1.0, %v6224
    %v6226 = vrcp.pop %v6223
    %v6227 = vmul.f32 1.0, %v6226
    %v6228 = vmul.f32 %v6211, %v6011
    %v6229 = vmul.f32 %v6213, %v6012
    %v6230 = vmul.f32 %v6199, %v6214
    %v6231 = vmul.f32 %v6201, %v6215
    %v6232 = vadd.f32 %v6228, %v6230
    %v6233 = vadd.f32 %v6229, %v6231
    %v6234 = vtanh.pop %v6232
    %v6235 = vtanh.pop %v6233
    %v6236 = vmul.f32 %v6225, %v6234
    %v6237 = vmul.f32 %v6227, %v6235
    %v6238 = vpack.c.bf16 %v6237, %v6236
    %v6239 = vld [vmem:[#allocation3 + $0x140] sm:$0xff]
    %v6240 = vld [vmem:[#allocation3 + $0x160] sm:$0xff]
    %6241 = vmatprep.subr.bf16.mxu0 0
    %6242 = vmatpush1.bf16.msra.mxu0 %v5149
    %6243 = vmatprep.subr.bf16.mxu0 0
    %6244 = vmatpush1.bf16.msra.mxu0 %v5150
    %6245 = vmatprep.subr.bf16.mxu0 0
    %6246 = vmatpush1.bf16.msra.mxu0 %v5151
    %6247 = vmatprep.subr.bf16.mxu0 0
    %6248 = vmatpush1.bf16.msra.mxu0 %v5152
    %6249 = vmatprep.subr.bf16.mxu0 0
    %6250 = vmatpush1.bf16.msra.mxu0 %v5153
    %6251 = vmatprep.subr.bf16.mxu0 0
    %6252 = vmatpush1.bf16.msra.mxu0 %v5154
    %6253 = vmatprep.subr.bf16.mxu0 0
    %6254 = vmatpush1.bf16.msra.mxu0 %v5155
    %6255 = vmatprep.subr.bf16.mxu0 0
    %6256 = vmatpush1.bf16.msra.mxu0 %v5156
    %6257 = vmatprep.subr.bf16.mxu0 0
    %6258 = vmatpush1.bf16.msra.mxu0 0
    %6259 = vmatprep.subr.bf16.mxu0 0
    %6260 = vmatpush1.bf16.msra.mxu0 0
    %6261 = vmatprep.subr.bf16.mxu0 0
    %6262 = vmatpush1.bf16.msra.mxu0 0
    %6263 = vmatprep.subr.bf16.mxu0 0
    %6264 = vmatpush1.bf16.msra.mxu0 0
    %6265 = vmatprep.subr.bf16.mxu0 0
    %6266 = vmatpush1.bf16.msra.mxu0 0
    %6267 = vmatprep.subr.bf16.mxu0 0
    %6268 = vmatpush1.bf16.msra.mxu0 0
    %6269 = vmatprep.subr.bf16.mxu0 0
    %6270 = vmatpush1.bf16.msra.mxu0 0
    %6271 = vmatprep.subr.bf16.mxu0 0
    %6272 = vmatpush1.bf16.msra.mxu0 0
    %6273 = vmatprep.mubr.bf16.mxu0 0
    %6274 = vmatmul.mubr.bf16.gmra.mrb[0].mxu0 %v6238
    %v6275 = vpop.f32.mrb[0].mxu0
    %v6276 = vadd.f32 %v6239, %v6275
    %v6277 = vpop.f32.mrb[0].mxu0
    %v6278 = vpop.f32.mrb[0].mxu0
    %v6279 = vadd.f32 %v6240, %v6278
    %v6280 = vpop.f32.mrb[0].mxu0
    %6281 = vdwg.mxu0
    %v6282 = vld [vmem:[#allocation3 + $0x148] sm:$0xff]
    %v6283 = vld [vmem:[#allocation3 + $0x168] sm:$0xff]
    %6284 = vmatprep.subr.bf16.mxu0 0
    %6285 = vmatpush1.bf16.msra.mxu0 %v5256
    %6286 = vmatprep.subr.bf16.mxu0 0
    %6287 = vmatpush1.bf16.msra.mxu0 %v5257
    %6288 = vmatprep.subr.bf16.mxu0 0
    %6289 = vmatpush1.bf16.msra.mxu0 %v5258
    %6290 = vmatprep.subr.bf16.mxu0 0
    %6291 = vmatpush1.bf16.msra.mxu0 %v5259
    %6292 = vmatprep.subr.bf16.mxu0 0
    %6293 = vmatpush1.bf16.msra.mxu0 %v5260
    %6294 = vmatprep.subr.bf16.mxu0 0
    %6295 = vmatpush1.bf16.msra.mxu0 %v5261
    %6296 = vmatprep.subr.bf16.mxu0 0
    %6297 = vmatpush1.bf16.msra.mxu0 %v5262
    %6298 = vmatprep.subr.bf16.mxu0 0
    %6299 = vmatpush1.bf16.msra.mxu0 %v5263
    %6300 = vmatprep.subr.bf16.mxu0 0
    %6301 = vmatpush1.bf16.msra.mxu0 0
    %6302 = vmatprep.subr.bf16.mxu0 0
    %6303 = vmatpush1.bf16.msra.mxu0 0
    %6304 = vmatprep.subr.bf16.mxu0 0
    %6305 = vmatpush1.bf16.msra.mxu0 0
    %6306 = vmatprep.subr.bf16.mxu0 0
    %6307 = vmatpush1.bf16.msra.mxu0 0
    %6308 = vmatprep.subr.bf16.mxu0 0
    %6309 = vmatpush1.bf16.msra.mxu0 0
    %6310 = vmatprep.subr.bf16.mxu0 0
    %6311 = vmatpush1.bf16.msra.mxu0 0
    %6312 = vmatprep.subr.bf16.mxu0 0
    %6313 = vmatpush1.bf16.msra.mxu0 0
    %6314 = vmatprep.subr.bf16.mxu0 0
    %6315 = vmatpush1.bf16.msra.mxu0 0
    %6316 = vmatprep.mubr.bf16.mxu0 0
    %6317 = vmatmul.mubr.bf16.gmra.mrb[0].mxu0 %v6238
    %v6318 = vpop.f32.mrb[0].mxu0
    %v6319 = vadd.f32 %v6282, %v6318
    %v6320 = vpop.f32.mrb[0].mxu0
    %v6321 = vpop.f32.mrb[0].mxu0
    %v6322 = vadd.f32 %v6283, %v6321
    %v6323 = vpop.f32.mrb[0].mxu0
    %6324 = vdwg.mxu0
    %v6325 = vld [vmem:[#allocation3 + $0x150] sm:$0xff]
    %v6326 = vld [vmem:[#allocation3 + $0x170] sm:$0xff]
    %6327 = vmatprep.subr.bf16.mxu0 0
    %6328 = vmatpush1.bf16.msra.mxu0 %v5363
    %6329 = vmatprep.subr.bf16.mxu0 0
    %6330 = vmatpush1.bf16.msra.mxu0 %v5364
    %6331 = vmatprep.subr.bf16.mxu0 0
    %6332 = vmatpush1.bf16.msra.mxu0 %v5365
    %6333 = vmatprep.subr.bf16.mxu0 0
    %6334 = vmatpush1.bf16.msra.mxu0 %v5366
    %6335 = vmatprep.subr.bf16.mxu0 0
    %6336 = vmatpush1.bf16.msra.mxu0 %v5367
    %6337 = vmatprep.subr.bf16.mxu0 0
    %6338 = vmatpush1.bf16.msra.mxu0 %v5368
    %6339 = vmatprep.subr.bf16.mxu0 0
    %6340 = vmatpush1.bf16.msra.mxu0 %v5369
    %6341 = vmatprep.subr.bf16.mxu0 0
    %6342 = vmatpush1.bf16.msra.mxu0 %v5370
    %6343 = vmatprep.subr.bf16.mxu0 0
    %6344 = vmatpush1.bf16.msra.mxu0 0
    %6345 = vmatprep.subr.bf16.mxu0 0
    %6346 = vmatpush1.bf16.msra.mxu0 0
    %6347 = vmatprep.subr.bf16.mxu0 0
    %6348 = vmatpush1.bf16.msra.mxu0 0
    %6349 = vmatprep.subr.bf16.mxu0 0
    %6350 = vmatpush1.bf16.msra.mxu0 0
    %6351 = vmatprep.subr.bf16.mxu0 0
    %6352 = vmatpush1.bf16.msra.mxu0 0
    %6353 = vmatprep.subr.bf16.mxu0 0
    %6354 = vmatpush1.bf16.msra.mxu0 0
    %6355 = vmatprep.subr.bf16.mxu0 0
    %6356 = vmatpush1.bf16.msra.mxu0 0
    %6357 = vmatprep.subr.bf16.mxu0 0
    %6358 = vmatpush1.bf16.msra.mxu0 0
    %6359 = vmatprep.mubr.bf16.mxu0 0
    %6360 = vmatmul.mubr.bf16.gmra.mrb[0].mxu0 %v6238
    %v6361 = vpop.f32.mrb[0].mxu0
    %v6362 = vadd.f32 %v6325, %v6361
    %v6363 = vpop.f32.mrb[0].mxu0
    %v6364 = vpop.f32.mrb[0].mxu0
    %v6365 = vadd.f32 %v6326, %v6364
    %v6366 = vpop.f32.mrb[0].mxu0
    %6367 = vdwg.mxu0
    %v6368 = vld [vmem:[#allocation3 + $0x158] sm:$0xff]
    %v6369 = vld [vmem:[#allocation3 + $0x178] sm:$0xff]
    %6370 = vmatprep.subr.bf16.mxu0 0
    %6371 = vmatpush1.bf16.msra.mxu0 %v5470
    %6372 = vmatprep.subr.bf16.mxu0 0
    %6373 = vmatpush1.bf16.msra.mxu0 %v5471
    %6374 = vmatprep.subr.bf16.mxu0 0
    %6375 = vmatpush1.bf16.msra.mxu0 %v5472
    %6376 = vmatprep.subr.bf16.mxu0 0
    %6377 = vmatpush1.bf16.msra.mxu0 %v5473
    %6378 = vmatprep.subr.bf16.mxu0 0
    %6379 = vmatpush1.bf16.msra.mxu0 %v5474
    %6380 = vmatprep.subr.bf16.mxu0 0
    %6381 = vmatpush1.bf16.msra.mxu0 %v5475
    %6382 = vmatprep.subr.bf16.mxu0 0
    %6383 = vmatpush1.bf16.msra.mxu0 %v5476
    %6384 = vmatprep.subr.bf16.mxu0 0
    %6385 = vmatpush1.bf16.msra.mxu0 %v5477
    %6386 = vmatprep.subr.bf16.mxu0 0
    %6387 = vmatpush1.bf16.msra.mxu0 0
    %6388 = vmatprep.subr.bf16.mxu0 0
    %6389 = vmatpush1.bf16.msra.mxu0 0
    %6390 = vmatprep.subr.bf16.mxu0 0
    %6391 = vmatpush1.bf16.msra.mxu0 0
    %6392 = vmatprep.subr.bf16.mxu0 0
    %6393 = vmatpush1.bf16.msra.mxu0 0
    %6394 = vmatprep.subr.bf16.mxu0 0
    %6395 = vmatpush1.bf16.msra.mxu0 0
    %6396 = vmatprep.subr.bf16.mxu0 0
    %6397 = vmatpush1.bf16.msra.mxu0 0
    %6398 = vmatprep.subr.bf16.mxu0 0
    %6399 = vmatpush1.bf16.msra.mxu0 0
    %6400 = vmatprep.subr.bf16.mxu0 0
    %6401 = vmatpush1.bf16.msra.mxu0 0
    %6402 = vmatprep.mubr.bf16.mxu0 0
    %6403 = vmatmul.mubr.bf16.gmra.mrb[0].mxu0 %v6238
    %v6404 = vpop.f32.mrb[0].mxu0
    %v6405 = vadd.f32 %v6368, %v6404
    %v6406 = vpop.f32.mrb[0].mxu0
    %v6407 = vpop.f32.mrb[0].mxu0
    %v6408 = vadd.f32 %v6369, %v6407
    %v6409 = vpop.f32.mrb[0].mxu0
    %6410 = vdwg.mxu0
    %v6411 = vxor.u32 %v6276, 2147483648
    %v6412 = vxor.u32 %v6279, 2147483648
    %v6413 = vmul.f32 %v6411, 1.442695
    %v6414 = vpow.pop %v6413
    %v6415 = vmul.f32 %v6412, 1.442695
    %v6416 = vpow.pop %v6415
    %v6417 = vadd.f32 %v6414, 1.0
    %v6418 = vadd.f32 %v6416, 1.0
    %v6419 = vrcp.pop %v6417
    %v6420 = vmul.f32 1.0, %v6419
    %v6421 = vrcp.pop %v6418
    %v6422 = vmul.f32 1.0, %v6421
    %v6423 = vxor.u32 %v6319, 2147483648
    %v6424 = vxor.u32 %v6322, 2147483648
    %v6425 = vmul.f32 %v6423, 1.442695
    %v6426 = vpow.pop %v6425
    %v6427 = vmul.f32 %v6424, 1.442695
    %v6428 = vpow.pop %v6427
    %v6429 = vadd.f32 %v6426, 1.0
    %v6430 = vadd.f32 %v6428, 1.0
    %v6431 = vrcp.pop %v6429
    %v6432 = vmul.f32 1.0, %v6431
    %v6433 = vrcp.pop %v6430
    %v6434 = vmul.f32 1.0, %v6433
    %v6435 = vtanh.pop %v6362
    %v6436 = vtanh.pop %v6365
    %v6437 = vxor.u32 %v6405, 2147483648
    %v6438 = vxor.u32 %v6408, 2147483648
    %v6439 = vmul.f32 %v6437, 1.442695
    %v6440 = vpow.pop %v6439
    %v6441 = vmul.f32 %v6438, 1.442695
    %v6442 = vpow.pop %v6441
    %v6443 = vadd.f32 %v6440, 1.0
    %v6444 = vadd.f32 %v6442, 1.0
    %v6445 = vrcp.pop %v6443
    %v6446 = vmul.f32 1.0, %v6445
    %v6447 = vrcp.pop %v6444
    %v6448 = vmul.f32 1.0, %v6447
    %v6449 = vmul.f32 %v6432, %v6232
    %v6450 = vmul.f32 %v6434, %v6233
    %v6451 = vmul.f32 %v6420, %v6435
    %v6452 = vmul.f32 %v6422, %v6436
    %v6453 = vadd.f32 %v6449, %v6451
    %v6454 = vadd.f32 %v6450, %v6452
    %v6455 = vtanh.pop %v6453
    %v6456 = vtanh.pop %v6454
    %v6457 = vmul.f32 %v6446, %v6455
    %v6458 = vmul.f32 %v6448, %v6456
    %v6459 = vpack.c.bf16 %v6458, %v6457
    %v6460 = vld [vmem:[#allocation3 + $0x180] sm:$0xff]
    %v6461 = vld [vmem:[#allocation3 + $0x1a0] sm:$0xff]
    %6462 = vmatprep.subr.bf16.mxu0 0
    %6463 = vmatpush1.bf16.msra.mxu0 %v5149
    %6464 = vmatprep.subr.bf16.mxu0 0
    %6465 = vmatpush1.bf16.msra.mxu0 %v5150
    %6466 = vmatprep.subr.bf16.mxu0 0
    %6467 = vmatpush1.bf16.msra.mxu0 %v5151
    %6468 = vmatprep.subr.bf16.mxu0 0
    %6469 = vmatpush1.bf16.msra.mxu0 %v5152
    %6470 = vmatprep.subr.bf16.mxu0 0
    %6471 = vmatpush1.bf16.msra.mxu0 %v5153
    %6472 = vmatprep.subr.bf16.mxu0 0
    %6473 = vmatpush1.bf16.msra.mxu0 %v5154
    %6474 = vmatprep.subr.bf16.mxu0 0
    %6475 = vmatpush1.bf16.msra.mxu0 %v5155
    %6476 = vmatprep.subr.bf16.mxu0 0
    %6477 = vmatpush1.bf16.msra.mxu0 %v5156
    %6478 = vmatprep.subr.bf16.mxu0 0
    %6479 = vmatpush1.bf16.msra.mxu0 0
    %6480 = vmatprep.subr.bf16.mxu0 0
    %6481 = vmatpush1.bf16.msra.mxu0 0
    %6482 = vmatprep.subr.bf16.mxu0 0
    %6483 = vmatpush1.bf16.msra.mxu0 0
    %6484 = vmatprep.subr.bf16.mxu0 0
    %6485 = vmatpush1.bf16.msra.mxu0 0
    %6486 = vmatprep.subr.bf16.mxu0 0
    %6487 = vmatpush1.bf16.msra.mxu0 0
    %6488 = vmatprep.subr.bf16.mxu0 0
    %6489 = vmatpush1.bf16.msra.mxu0 0
    %6490 = vmatprep.subr.bf16.mxu0 0
    %6491 = vmatpush1.bf16.msra.mxu0 0
    %6492 = vmatprep.subr.bf16.mxu0 0
    %6493 = vmatpush1.bf16.msra.mxu0 0
    %6494 = vmatprep.mubr.bf16.mxu0 0
    %6495 = vmatmul.mubr.bf16.gmra.mrb[0].mxu0 %v6459
    %v6496 = vpop.f32.mrb[0].mxu0
    %v6497 = vadd.f32 %v6460, %v6496
    %v6498 = vpop.f32.mrb[0].mxu0
    %v6499 = vpop.f32.mrb[0].mxu0
    %v6500 = vadd.f32 %v6461, %v6499
    %v6501 = vpop.f32.mrb[0].mxu0
    %6502 = vdwg.mxu0
    %v6503 = vld [vmem:[#allocation3 + $0x188] sm:$0xff]
    %v6504 = vld [vmem:[#allocation3 + $0x1a8] sm:$0xff]
    %6505 = vmatprep.subr.bf16.mxu0 0
    %6506 = vmatpush1.bf16.msra.mxu0 %v5256
    %6507 = vmatprep.subr.bf16.mxu0 0
    %6508 = vmatpush1.bf16.msra.mxu0 %v5257
    %6509 = vmatprep.subr.bf16.mxu0 0
    %6510 = vmatpush1.bf16.msra.mxu0 %v5258
    %6511 = vmatprep.subr.bf16.mxu0 0
    %6512 = vmatpush1.bf16.msra.mxu0 %v5259
    %6513 = vmatprep.subr.bf16.mxu0 0
    %6514 = vmatpush1.bf16.msra.mxu0 %v5260
    %6515 = vmatprep.subr.bf16.mxu0 0
    %6516 = vmatpush1.bf16.msra.mxu0 %v5261
    %6517 = vmatprep.subr.bf16.mxu0 0
    %6518 = vmatpush1.bf16.msra.mxu0 %v5262
    %6519 = vmatprep.subr.bf16.mxu0 0
    %6520 = vmatpush1.bf16.msra.mxu0 %v5263
    %6521 = vmatprep.subr.bf16.mxu0 0
    %6522 = vmatpush1.bf16.msra.mxu0 0
    %6523 = vmatprep.subr.bf16.mxu0 0
    %6524 = vmatpush1.bf16.msra.mxu0 0
    %6525 = vmatprep.subr.bf16.mxu0 0
    %6526 = vmatpush1.bf16.msra.mxu0 0
    %6527 = vmatprep.subr.bf16.mxu0 0
    %6528 = vmatpush1.bf16.msra.mxu0 0
    %6529 = vmatprep.subr.bf16.mxu0 0
    %6530 = vmatpush1.bf16.msra.mxu0 0
    %6531 = vmatprep.subr.bf16.mxu0 0
    %6532 = vmatpush1.bf16.msra.mxu0 0
    %6533 = vmatprep.subr.bf16.mxu0 0
    %6534 = vmatpush1.bf16.msra.mxu0 0
    %6535 = vmatprep.subr.bf16.mxu0 0
    %6536 = vmatpush1.bf16.msra.mxu0 0
    %6537 = vmatprep.mubr.bf16.mxu0 0
    %6538 = vmatmul.mubr.bf16.gmra.mrb[0].mxu0 %v6459
    %v6539 = vpop.f32.mrb[0].mxu0
    %v6540 = vadd.f32 %v6503, %v6539
    %v6541 = vpop.f32.mrb[0].mxu0
    %v6542 = vpop.f32.mrb[0].mxu0
    %v6543 = vadd.f32 %v6504, %v6542
    %v6544 = vpop.f32.mrb[0].mxu0
    %6545 = vdwg.mxu0
    %v6546 = vld [vmem:[#allocation3 + $0x190] sm:$0xff]
    %v6547 = vld [vmem:[#allocation3 + $0x1b0] sm:$0xff]
    %6548 = vmatprep.subr.bf16.mxu0 0
    %6549 = vmatpush1.bf16.msra.mxu0 %v5363
    %6550 = vmatprep.subr.bf16.mxu0 0
    %6551 = vmatpush1.bf16.msra.mxu0 %v5364
    %6552 = vmatprep.subr.bf16.mxu0 0
    %6553 = vmatpush1.bf16.msra.mxu0 %v5365
    %6554 = vmatprep.subr.bf16.mxu0 0
    %6555 = vmatpush1.bf16.msra.mxu0 %v5366
    %6556 = vmatprep.subr.bf16.mxu0 0
    %6557 = vmatpush1.bf16.msra.mxu0 %v5367
    %6558 = vmatprep.subr.bf16.mxu0 0
    %6559 = vmatpush1.bf16.msra.mxu0 %v5368
    %6560 = vmatprep.subr.bf16.mxu0 0
    %6561 = vmatpush1.bf16.msra.mxu0 %v5369
    %6562 = vmatprep.subr.bf16.mxu0 0
    %6563 = vmatpush1.bf16.msra.mxu0 %v5370
    %6564 = vmatprep.subr.bf16.mxu0 0
    %6565 = vmatpush1.bf16.msra.mxu0 0
    %6566 = vmatprep.subr.bf16.mxu0 0
    %6567 = vmatpush1.bf16.msra.mxu0 0
    %6568 = vmatprep.subr.bf16.mxu0 0
    %6569 = vmatpush1.bf16.msra.mxu0 0
    %6570 = vmatprep.subr.bf16.mxu0 0
    %6571 = vmatpush1.bf16.msra.mxu0 0
    %6572 = vmatprep.subr.bf16.mxu0 0
    %6573 = vmatpush1.bf16.msra.mxu0 0
    %6574 = vmatprep.subr.bf16.mxu0 0
    %6575 = vmatpush1.bf16.msra.mxu0 0
    %6576 = vmatprep.subr.bf16.mxu0 0
    %6577 = vmatpush1.bf16.msra.mxu0 0
    %6578 = vmatprep.subr.bf16.mxu0 0
    %6579 = vmatpush1.bf16.msra.mxu0 0
    %6580 = vmatprep.mubr.bf16.mxu0 0
    %6581 = vmatmul.mubr.bf16.gmra.mrb[0].mxu0 %v6459
    %v6582 = vpop.f32.mrb[0].mxu0
    %v6583 = vadd.f32 %v6546, %v6582
    %v6584 = vpop.f32.mrb[0].mxu0
    %v6585 = vpop.f32.mrb[0].mxu0
    %v6586 = vadd.f32 %v6547, %v6585
    %v6587 = vpop.f32.mrb[0].mxu0
    %6588 = vdwg.mxu0
    %v6589 = vld [vmem:[#allocation3 + $0x198] sm:$0xff]
    %v6590 = vld [vmem:[#allocation3 + $0x1b8] sm:$0xff]
    %6591 = vmatprep.subr.bf16.mxu0 0
    %6592 = vmatpush1.bf16.msra.mxu0 %v5470
    %6593 = vmatprep.subr.bf16.mxu0 0
    %6594 = vmatpush1.bf16.msra.mxu0 %v5471
    %6595 = vmatprep.subr.bf16.mxu0 0
    %6596 = vmatpush1.bf16.msra.mxu0 %v5472
    %6597 = vmatprep.subr.bf16.mxu0 0
    %6598 = vmatpush1.bf16.msra.mxu0 %v5473
    %6599 = vmatprep.subr.bf16.mxu0 0
    %6600 = vmatpush1.bf16.msra.mxu0 %v5474
    %6601 = vmatprep.subr.bf16.mxu0 0
    %6602 = vmatpush1.bf16.msra.mxu0 %v5475
    %6603 = vmatprep.subr.bf16.mxu0 0
    %6604 = vmatpush1.bf16.msra.mxu0 %v5476
    %6605 = vmatprep.subr.bf16.mxu0 0
    %6606 = vmatpush1.bf16.msra.mxu0 %v5477
    %6607 = vmatprep.subr.bf16.mxu0 0
    %6608 = vmatpush1.bf16.msra.mxu0 0
    %6609 = vmatprep.subr.bf16.mxu0 0
    %6610 = vmatpush1.bf16.msra.mxu0 0
    %6611 = vmatprep.subr.bf16.mxu0 0
    %6612 = vmatpush1.bf16.msra.mxu0 0
    %6613 = vmatprep.subr.bf16.mxu0 0
    %6614 = vmatpush1.bf16.msra.mxu0 0
    %6615 = vmatprep.subr.bf16.mxu0 0
    %6616 = vmatpush1.bf16.msra.mxu0 0
    %6617 = vmatprep.subr.bf16.mxu0 0
    %6618 = vmatpush1.bf16.msra.mxu0 0
    %6619 = vmatprep.subr.bf16.mxu0 0
    %6620 = vmatpush1.bf16.msra.mxu0 0
    %6621 = vmatprep.subr.bf16.mxu0 0
    %6622 = vmatpush1.bf16.msra.mxu0 0
    %6623 = vmatprep.mubr.bf16.mxu0 0
    %6624 = vmatmul.mubr.bf16.gmra.mrb[0].mxu0 %v6459
    %v6625 = vpop.f32.mrb[0].mxu0
    %v6626 = vadd.f32 %v6589, %v6625
    %v6627 = vpop.f32.mrb[0].mxu0
    %v6628 = vpop.f32.mrb[0].mxu0
    %v6629 = vadd.f32 %v6590, %v6628
    %v6630 = vpop.f32.mrb[0].mxu0
    %6631 = vdwg.mxu0
    %v6632 = vxor.u32 %v6497, 2147483648
    %v6633 = vxor.u32 %v6500, 2147483648
    %v6634 = vmul.f32 %v6632, 1.442695
    %v6635 = vpow.pop %v6634
    %v6636 = vmul.f32 %v6633, 1.442695
    %v6637 = vpow.pop %v6636
    %v6638 = vadd.f32 %v6635, 1.0
    %v6639 = vadd.f32 %v6637, 1.0
    %v6640 = vrcp.pop %v6638
    %v6641 = vmul.f32 1.0, %v6640
    %v6642 = vrcp.pop %v6639
    %v6643 = vmul.f32 1.0, %v6642
    %v6644 = vxor.u32 %v6540, 2147483648
    %v6645 = vxor.u32 %v6543, 2147483648
    %v6646 = vmul.f32 %v6644, 1.442695
    %v6647 = vpow.pop %v6646
    %v6648 = vmul.f32 %v6645, 1.442695
    %v6649 = vpow.pop %v6648
    %v6650 = vadd.f32 %v6647, 1.0
    %v6651 = vadd.f32 %v6649, 1.0
    %v6652 = vrcp.pop %v6650
    %v6653 = vmul.f32 1.0, %v6652
    %v6654 = vrcp.pop %v6651
    %v6655 = vmul.f32 1.0, %v6654
    %v6656 = vtanh.pop %v6583
    %v6657 = vtanh.pop %v6586
    %v6658 = vxor.u32 %v6626, 2147483648
    %v6659 = vxor.u32 %v6629, 2147483648
    %v6660 = vmul.f32 %v6658, 1.442695
    %v6661 = vpow.pop %v6660
    %v6662 = vmul.f32 %v6659, 1.442695
    %v6663 = vpow.pop %v6662
    %v6664 = vadd.f32 %v6661, 1.0
    %v6665 = vadd.f32 %v6663, 1.0
    %v6666 = vrcp.pop %v6664
    %v6667 = vmul.f32 1.0, %v6666
    %v6668 = vrcp.pop %v6665
    %v6669 = vmul.f32 1.0, %v6668
    %v6670 = vmul.f32 %v6653, %v6453
    %v6671 = vmul.f32 %v6655, %v6454
    %v6672 = vmul.f32 %v6641, %v6656
    %v6673 = vmul.f32 %v6643, %v6657
    %v6674 = vadd.f32 %v6670, %v6672
    %v6675 = vadd.f32 %v6671, %v6673
    %v6676 = vtanh.pop %v6674
    %v6677 = vtanh.pop %v6675
    %v6678 = vmul.f32 %v6667, %v6676
    %v6679 = vmul.f32 %v6669, %v6677
    %v6680 = vpack.c.bf16 %v6679, %v6678
    %v6681 = vld [vmem:[#allocation3 + $0x1c0] sm:$0xff]
    %v6682 = vld [vmem:[#allocation3 + $0x1e0] sm:$0xff]
    %6683 = vmatprep.subr.bf16.mxu0 0
    %6684 = vmatpush1.bf16.msra.mxu0 %v5149
    %6685 = vmatprep.subr.bf16.mxu0 0
    %6686 = vmatpush1.bf16.msra.mxu0 %v5150
    %6687 = vmatprep.subr.bf16.mxu0 0
    %6688 = vmatpush1.bf16.msra.mxu0 %v5151
    %6689 = vmatprep.subr.bf16.mxu0 0
    %6690 = vmatpush1.bf16.msra.mxu0 %v5152
    %6691 = vmatprep.subr.bf16.mxu0 0
    %6692 = vmatpush1.bf16.msra.mxu0 %v5153
    %6693 = vmatprep.subr.bf16.mxu0 0
    %6694 = vmatpush1.bf16.msra.mxu0 %v5154
    %6695 = vmatprep.subr.bf16.mxu0 0
    %6696 = vmatpush1.bf16.msra.mxu0 %v5155
    %6697 = vmatprep.subr.bf16.mxu0 0
    %6698 = vmatpush1.bf16.msra.mxu0 %v5156
    %6699 = vmatprep.subr.bf16.mxu0 0
    %6700 = vmatpush1.bf16.msra.mxu0 0
    %6701 = vmatprep.subr.bf16.mxu0 0
    %6702 = vmatpush1.bf16.msra.mxu0 0
    %6703 = vmatprep.subr.bf16.mxu0 0
    %6704 = vmatpush1.bf16.msra.mxu0 0
    %6705 = vmatprep.subr.bf16.mxu0 0
    %6706 = vmatpush1.bf16.msra.mxu0 0
    %6707 = vmatprep.subr.bf16.mxu0 0
    %6708 = vmatpush1.bf16.msra.mxu0 0
    %6709 = vmatprep.subr.bf16.mxu0 0
    %6710 = vmatpush1.bf16.msra.mxu0 0
    %6711 = vmatprep.subr.bf16.mxu0 0
    %6712 = vmatpush1.bf16.msra.mxu0 0
    %6713 = vmatprep.subr.bf16.mxu0 0
    %6714 = vmatpush1.bf16.msra.mxu0 0
    %6715 = vmatprep.mubr.bf16.mxu0 0
    %6716 = vmatmul.mubr.bf16.gmra.mrb[0].mxu0 %v6680
    %v6717 = vpop.f32.mrb[0].mxu0
    %v6718 = vadd.f32 %v6681, %v6717
    %v6719 = vpop.f32.mrb[0].mxu0
    %v6720 = vpop.f32.mrb[0].mxu0
    %v6721 = vadd.f32 %v6682, %v6720
    %v6722 = vpop.f32.mrb[0].mxu0
    %6723 = vdwg.mxu0
    %v6724 = vld [vmem:[#allocation3 + $0x1c8] sm:$0xff]
    %v6725 = vld [vmem:[#allocation3 + $0x1e8] sm:$0xff]
    %6726 = vmatprep.subr.bf16.mxu0 0
    %6727 = vmatpush1.bf16.msra.mxu0 %v5256
    %6728 = vmatprep.subr.bf16.mxu0 0
    %6729 = vmatpush1.bf16.msra.mxu0 %v5257
    %6730 = vmatprep.subr.bf16.mxu0 0
    %6731 = vmatpush1.bf16.msra.mxu0 %v5258
    %6732 = vmatprep.subr.bf16.mxu0 0
    %6733 = vmatpush1.bf16.msra.mxu0 %v5259
    %6734 = vmatprep.subr.bf16.mxu0 0
    %6735 = vmatpush1.bf16.msra.mxu0 %v5260
    %6736 = vmatprep.subr.bf16.mxu0 0
    %6737 = vmatpush1.bf16.msra.mxu0 %v5261
    %6738 = vmatprep.subr.bf16.mxu0 0
    %6739 = vmatpush1.bf16.msra.mxu0 %v5262
    %6740 = vmatprep.subr.bf16.mxu0 0
    %6741 = vmatpush1.bf16.msra.mxu0 %v5263
    %6742 = vmatprep.subr.bf16.mxu0 0
    %6743 = vmatpush1.bf16.msra.mxu0 0
    %6744 = vmatprep.subr.bf16.mxu0 0
    %6745 = vmatpush1.bf16.msra.mxu0 0
    %6746 = vmatprep.subr.bf16.mxu0 0
    %6747 = vmatpush1.bf16.msra.mxu0 0
    %6748 = vmatprep.subr.bf16.mxu0 0
    %6749 = vmatpush1.bf16.msra.mxu0 0
    %6750 = vmatprep.subr.bf16.mxu0 0
    %6751 = vmatpush1.bf16.msra.mxu0 0
    %6752 = vmatprep.subr.bf16.mxu0 0
    %6753 = vmatpush1.bf16.msra.mxu0 0
    %6754 = vmatprep.subr.bf16.mxu0 0
    %6755 = vmatpush1.bf16.msra.mxu0 0
    %6756 = vmatprep.subr.bf16.mxu0 0
    %6757 = vmatpush1.bf16.msra.mxu0 0
    %6758 = vmatprep.mubr.bf16.mxu0 0
    %6759 = vmatmul.mubr.bf16.gmra.mrb[0].mxu0 %v6680
    %v6760 = vpop.f32.mrb[0].mxu0
    %v6761 = vadd.f32 %v6724, %v6760
    %v6762 = vpop.f32.mrb[0].mxu0
    %v6763 = vpop.f32.mrb[0].mxu0
    %v6764 = vadd.f32 %v6725, %v6763
    %v6765 = vpop.f32.mrb[0].mxu0
    %6766 = vdwg.mxu0
    %v6767 = vld [vmem:[#allocation3 + $0x1d0] sm:$0xff]
    %v6768 = vld [vmem:[#allocation3 + $0x1f0] sm:$0xff]
    %6769 = vmatprep.subr.bf16.mxu0 0
    %6770 = vmatpush1.bf16.msra.mxu0 %v5363
    %6771 = vmatprep.subr.bf16.mxu0 0
    %6772 = vmatpush1.bf16.msra.mxu0 %v5364
    %6773 = vmatprep.subr.bf16.mxu0 0
    %6774 = vmatpush1.bf16.msra.mxu0 %v5365
    %6775 = vmatprep.subr.bf16.mxu0 0
    %6776 = vmatpush1.bf16.msra.mxu0 %v5366
    %6777 = vmatprep.subr.bf16.mxu0 0
    %6778 = vmatpush1.bf16.msra.mxu0 %v5367
    %6779 = vmatprep.subr.bf16.mxu0 0
    %6780 = vmatpush1.bf16.msra.mxu0 %v5368
    %6781 = vmatprep.subr.bf16.mxu0 0
    %6782 = vmatpush1.bf16.msra.mxu0 %v5369
    %6783 = vmatprep.subr.bf16.mxu0 0
    %6784 = vmatpush1.bf16.msra.mxu0 %v5370
    %6785 = vmatprep.subr.bf16.mxu0 0
    %6786 = vmatpush1.bf16.msra.mxu0 0
    %6787 = vmatprep.subr.bf16.mxu0 0
    %6788 = vmatpush1.bf16.msra.mxu0 0
    %6789 = vmatprep.subr.bf16.mxu0 0
    %6790 = vmatpush1.bf16.msra.mxu0 0
    %6791 = vmatprep.subr.bf16.mxu0 0
    %6792 = vmatpush1.bf16.msra.mxu0 0
    %6793 = vmatprep.subr.bf16.mxu0 0
    %6794 = vmatpush1.bf16.msra.mxu0 0
    %6795 = vmatprep.subr.bf16.mxu0 0
    %6796 = vmatpush1.bf16.msra.mxu0 0
    %6797 = vmatprep.subr.bf16.mxu0 0
    %6798 = vmatpush1.bf16.msra.mxu0 0
    %6799 = vmatprep.subr.bf16.mxu0 0
    %6800 = vmatpush1.bf16.msra.mxu0 0
    %6801 = vmatprep.mubr.bf16.mxu0 0
    %6802 = vmatmul.mubr.bf16.gmra.mrb[0].mxu0 %v6680
    %v6803 = vpop.f32.mrb[0].mxu0
    %v6804 = vadd.f32 %v6767, %v6803
    %v6805 = vpop.f32.mrb[0].mxu0
    %v6806 = vpop.f32.mrb[0].mxu0
    %v6807 = vadd.f32 %v6768, %v6806
    %v6808 = vpop.f32.mrb[0].mxu0
    %6809 = vdwg.mxu0
    %v6810 = vld [vmem:[#allocation3 + $0x1d8] sm:$0xff]
    %v6811 = vld [vmem:[#allocation3 + $0x1f8] sm:$0xff]
    %6812 = vmatprep.subr.bf16.mxu0 0
    %6813 = vmatpush1.bf16.msra.mxu0 %v5470
    %6814 = vmatprep.subr.bf16.mxu0 0
    %6815 = vmatpush1.bf16.msra.mxu0 %v5471
    %6816 = vmatprep.subr.bf16.mxu0 0
    %6817 = vmatpush1.bf16.msra.mxu0 %v5472
    %6818 = vmatprep.subr.bf16.mxu0 0
    %6819 = vmatpush1.bf16.msra.mxu0 %v5473
    %6820 = vmatprep.subr.bf16.mxu0 0
    %6821 = vmatpush1.bf16.msra.mxu0 %v5474
    %6822 = vmatprep.subr.bf16.mxu0 0
    %6823 = vmatpush1.bf16.msra.mxu0 %v5475
    %6824 = vmatprep.subr.bf16.mxu0 0
    %6825 = vmatpush1.bf16.msra.mxu0 %v5476
    %6826 = vmatprep.subr.bf16.mxu0 0
    %6827 = vmatpush1.bf16.msra.mxu0 %v5477
    %6828 = vmatprep.subr.bf16.mxu0 0
    %6829 = vmatpush1.bf16.msra.mxu0 0
    %6830 = vmatprep.subr.bf16.mxu0 0
    %6831 = vmatpush1.bf16.msra.mxu0 0
    %6832 = vmatprep.subr.bf16.mxu0 0
    %6833 = vmatpush1.bf16.msra.mxu0 0
    %6834 = vmatprep.subr.bf16.mxu0 0
    %6835 = vmatpush1.bf16.msra.mxu0 0
    %6836 = vmatprep.subr.bf16.mxu0 0
    %6837 = vmatpush1.bf16.msra.mxu0 0
    %6838 = vmatprep.subr.bf16.mxu0 0
    %6839 = vmatpush1.bf16.msra.mxu0 0
    %6840 = vmatprep.subr.bf16.mxu0 0
    %6841 = vmatpush1.bf16.msra.mxu0 0
    %6842 = vmatprep.subr.bf16.mxu0 0
    %6843 = vmatpush1.bf16.msra.mxu0 0
    %6844 = vmatprep.mubr.bf16.mxu0 0
    %6845 = vmatmul.mubr.bf16.gmra.mrb[0].mxu0 %v6680
    %v6846 = vpop.f32.mrb[0].mxu0
    %v6847 = vadd.f32 %v6810, %v6846
    %v6848 = vpop.f32.mrb[0].mxu0
    %v6849 = vpop.f32.mrb[0].mxu0
    %v6850 = vadd.f32 %v6811, %v6849
    %v6851 = vpop.f32.mrb[0].mxu0
    %6852 = vdwg.mxu0
    %v6853 = vxor.u32 %v6718, 2147483648
    %v6854 = vxor.u32 %v6721, 2147483648
    %v6855 = vmul.f32 %v6853, 1.442695
    %v6856 = vpow.pop %v6855
    %v6857 = vmul.f32 %v6854, 1.442695
    %v6858 = vpow.pop %v6857
    %v6859 = vadd.f32 %v6856, 1.0
    %v6860 = vadd.f32 %v6858, 1.0
    %v6861 = vrcp.pop %v6859
    %v6862 = vmul.f32 1.0, %v6861
    %v6863 = vrcp.pop %v6860
    %v6864 = vmul.f32 1.0, %v6863
    %v6865 = vxor.u32 %v6761, 2147483648
    %v6866 = vxor.u32 %v6764, 2147483648
    %v6867 = vmul.f32 %v6865, 1.442695
    %v6868 = vpow.pop %v6867
    %v6869 = vmul.f32 %v6866, 1.442695
    %v6870 = vpow.pop %v6869
    %v6871 = vadd.f32 %v6868, 1.0
    %v6872 = vadd.f32 %v6870, 1.0
    %v6873 = vrcp.pop %v6871
    %v6874 = vmul.f32 1.0, %v6873
    %v6875 = vrcp.pop %v6872
    %v6876 = vmul.f32 1.0, %v6875
    %v6877 = vtanh.pop %v6804
    %v6878 = vtanh.pop %v6807
    %v6879 = vxor.u32 %v6847, 2147483648
    %v6880 = vxor.u32 %v6850, 2147483648
    %v6881 = vmul.f32 %v6879, 1.442695
    %v6882 = vpow.pop %v6881
    %v6883 = vmul.f32 %v6880, 1.442695
    %v6884 = vpow.pop %v6883
    %v6885 = vadd.f32 %v6882, 1.0
    %v6886 = vadd.f32 %v6884, 1.0
    %v6887 = vrcp.pop %v6885
    %v6888 = vmul.f32 1.0, %v6887
    %v6889 = vrcp.pop %v6886
    %v6890 = vmul.f32 1.0, %v6889
    %v6891 = vmul.f32 %v6874, %v6674
    %v6892 = vmul.f32 %v6876, %v6675
    %v6893 = vmul.f32 %v6862, %v6877
    %v6894 = vmul.f32 %v6864, %v6878
    %v6895 = vadd.f32 %v6891, %v6893
    %v6896 = vadd.f32 %v6892, %v6894
    %v6897 = vtanh.pop %v6895
    %v6898 = vtanh.pop %v6896
    %v6899 = vmul.f32 %v6888, %v6897
    %v6900 = vmul.f32 %v6890, %v6898
    %v6901 = vld [vmem:[#allocation9] sm:$0xff]
    %v6902 = vld [vmem:[#allocation9 + $0x8] sm:$0xff]
    %v6903 = vld [vmem:[#allocation9 + $0x10] sm:$0xff]
    %v6904 = vld [vmem:[#allocation9 + $0x18] sm:$0xff]
    %v6905 = vld [vmem:[#allocation9 + $0x20] sm:$0xff]
    %v6906 = vld [vmem:[#allocation9 + $0x28] sm:$0xff]
    %v6907 = vld [vmem:[#allocation9 + $0x30] sm:$0xff]
    %v6908 = vld [vmem:[#allocation9 + $0x38] sm:$0xff]
    %v6909 = vld [vmem:[#allocation9 + $0x40] sm:$0xff]
    %v6910 = vld [vmem:[#allocation9 + $0x48] sm:$0xff]
    %v6911 = vld [vmem:[#allocation9 + $0x50] sm:$0xff]
    %v6912 = vld [vmem:[#allocation9 + $0x58] sm:$0xff]
    %v6913 = vld [vmem:[#allocation9 + $0x60] sm:$0xff]
    %v6914 = vld [vmem:[#allocation9 + $0x68] sm:$0xff]
    %v6915 = vld [vmem:[#allocation9 + $0x70] sm:$0xff]
    %v6916 = vld [vmem:[#allocation9 + $0x78] sm:$0xff]
    %v6917 = vld [vmem:[%s8] sm:$0x1]
    %v6919 = vlaneseq
    %v6920 = vshrl.u32 %v6919, 7
    %v6921 = vsub.s32 0, %v6920
    %v6922 = vrot.slane %v6917, %v6921
    %6924 = vmatprep.subr.mxu0 0.0
    %6925 = vmatpush1.msra.mxu0 %v6901
    %6926 = vmatprep.subr.mxu0 0.0
    %6927 = vmatpush1.msra.mxu0 %v6902
    %6928 = vmatprep.subr.mxu0 0.0
    %6929 = vmatpush1.msra.mxu0 %v6903
    %6930 = vmatprep.subr.mxu0 0.0
    %6931 = vmatpush1.msra.mxu0 %v6904
    %6932 = vmatprep.subr.mxu0 0.0
    %6933 = vmatpush1.msra.mxu0 %v6905
    %6934 = vmatprep.subr.mxu0 0.0
    %6935 = vmatpush1.msra.mxu0 %v6906
    %6936 = vmatprep.subr.mxu0 0.0
    %6937 = vmatpush1.msra.mxu0 %v6907
    %6938 = vmatprep.subr.mxu0 0.0
    %6939 = vmatpush1.msra.mxu0 %v6908
    %6940 = vmatprep.subr.mxu0 0.0
    %6941 = vmatpush1.msra.mxu0 %v6909
    %6942 = vmatprep.subr.mxu0 0.0
    %6943 = vmatpush1.msra.mxu0 %v6910
    %6944 = vmatprep.subr.mxu0 0.0
    %6945 = vmatpush1.msra.mxu0 %v6911
    %6946 = vmatprep.subr.mxu0 0.0
    %6947 = vmatpush1.msra.mxu0 %v6912
    %6948 = vmatprep.subr.mxu0 0.0
    %6949 = vmatpush1.msra.mxu0 %v6913
    %6950 = vmatprep.subr.mxu0 0.0
    %6951 = vmatpush1.msra.mxu0 %v6914
    %6952 = vmatprep.subr.mxu0 0.0
    %6953 = vmatpush1.msra.mxu0 %v6915
    %6954 = vmatprep.subr.mxu0 0.0
    %6955 = vmatpush1.msra.mxu0 %v6916
    %6956 = vmatprep.subr.mxu0 0.0
    %6957 = vmatpush1.msra.mxu0 0.0
    %6958 = vmatprep.subr.mxu0 0.0
    %6959 = vmatpush1.msra.mxu0 0.0
    %6960 = vmatprep.subr.mxu0 0.0
    %6961 = vmatpush1.msra.mxu0 0.0
    %6962 = vmatprep.subr.mxu0 0.0
    %6963 = vmatpush1.msra.mxu0 0.0
    %6964 = vmatprep.subr.mxu0 0.0
    %6965 = vmatpush1.msra.mxu0 0.0
    %6966 = vmatprep.subr.mxu0 0.0
    %6967 = vmatpush1.msra.mxu0 0.0
    %6968 = vmatprep.subr.mxu0 0.0
    %6969 = vmatpush1.msra.mxu0 0.0
    %6970 = vmatprep.subr.mxu0 0.0
    %6971 = vmatpush1.msra.mxu0 0.0
    %6972 = vmatprep.subr.mxu0 0.0
    %6973 = vmatpush1.msra.mxu0 0.0
    %6974 = vmatprep.subr.mxu0 0.0
    %6975 = vmatpush1.msra.mxu0 0.0
    %6976 = vmatprep.subr.mxu0 0.0
    %6977 = vmatpush1.msra.mxu0 0.0
    %6978 = vmatprep.subr.mxu0 0.0
    %6979 = vmatpush1.msra.mxu0 0.0
    %6980 = vmatprep.subr.mxu0 0.0
    %6981 = vmatpush1.msra.mxu0 0.0
    %6982 = vmatprep.subr.mxu0 0.0
    %6983 = vmatpush1.msra.mxu0 0.0
    %6984 = vmatprep.subr.mxu0 0.0
    %6985 = vmatpush1.msra.mxu0 0.0
    %6986 = vmatprep.subr.mxu0 0.0
    %6987 = vmatpush1.msra.mxu0 0.0
    %6988 = vmatprep.mubr.f32.mxu0 0.0
    %6989 = vmatmul.mubr.f32.gmra.mrb[0].mxu0 %v6899
    %v6990 = vpop.f32.mrb[0].mxu0
    %v6991 = vadd.f32 %v6922, %v6990
    %v6992 = vpop.f32.mrb[0].mxu0
    %6993 = vmatprep.mubr.f32.mxu0 0.0
    %6994 = vmatmul.mubr.f32.gmra.mrb[0].mxu0 %v6900
    %v6995 = vpop.f32.mrb[0].mxu0
    %v6996 = vadd.f32 %v6922, %v6995
    %v6997 = vpop.f32.mrb[0].mxu0
    %6998 = vdwg.mxu0
    %6999 = vst [vmem:[%s9] sm:$0xff] %v6991
    %7000 = vst [vmem:[%s9 + $0x8] sm:$0xff] %v6996
    // Predicated region
    $region54: #{lstm_model_forward.1} parent=1 // pred_check
      _
    $region55: #{lstm_model_forward.1} parent=1 // pred_check_branch
      %7002 = sbr.rel (0) target = $region57
    $region56: #{lstm_model_forward.1} parent=1 // pred_region
      _
    $region57: #{lstm_model_forward.1} parent=1 // pred_fallthru
      _
    // Predicated region
    $region58: #{lstm_model_forward.1} parent=1 // pred_check
      _
    $region59: #{lstm_model_forward.1} parent=1 // pred_check_branch
      %7004 = sbr.rel (0) target = $region61
    $region60: #{lstm_model_forward.1} parent=1 // pred_region
      _
    $region61: #{lstm_model_forward.1} parent=1 // pred_fallthru
      _
    %7005 = vsyncpa [#allocation5], 1
    %7006 = vsyncpa [#allocation7], 1
    %7007 = vsyncpa [#allocation10], 1

</llo_original>
